<compile_context>
chip_gen: v5e
topology: v5e:2x2
jax: 0.10.0
libtpu: 0.0.40
codegen_flags: <defaults>
</compile_context>

<pallas_src>
import functools

import jax
import jax.numpy as jnp
from jax import lax
from jax.experimental import pallas as pl
from jax.experimental.pallas import tpu as pltpu

EPS = 1e-5


def convpool_kernel(x_ref, w_ref, b_ref, mask_ref, sel_ref, o_ref,
                    p0_ref, p1_ref, p2_ref, *, D, H, W, Cin, Cout):
    # x_ref:    (Cin, Pp + tail)   zero-padded, channel-first, flattened (d,h,w) volume
    # w_ref:    (27, Cout, Cin)    conv weight per tap, tap j = (kd*3 + kh)*3 + kw
    # b_ref:    (Cout, 1)          conv bias
    # mask_ref: (1, Pp)            1.0 at the D*H*W valid flat positions, 0.0 elsewhere
    # sel_ref:  (Pp, D2*H2*W2)     one-hot gather matrix picking the pooled-output lanes
    # o_ref:    (Cout, D2*H2*W2)   pooled output (channel-first, flattened spatial)
    # p*_ref:   (Cout, PW)         zero-guarded scratches for the 3 separable pool stages
    f32 = jnp.float32
    Dp, Hp, Wp = D + 2, H + 2, W + 2
    SD, SH = Hp * Wp, Wp                       # flat strides of d and h
    Pp = Dp * Hp * Wp
    P = D * H * W
    L = ((SD + SH + 1 + 127) // 128) * 128     # left guard (>= max negative pool offset), aligned
    PW = p0_ref.shape[1]

    # ---- Conv3d(k=3, p=1): 27 accumulating MXU dots over lane-shifted windows ----------
    acc = None
    j = 0
    for kd in range(3):
        for kh in range(3):
            for kw in range(3):
                off = kd * SD + kh * SH + kw                    # static lane offset, 0..2*(SD+SH+1)
                shifted = x_ref[:, pl.ds(off, Pp)]              # (Cin, Pp), lane-dense read
                part = jnp.dot(w_ref[j], shifted, preferred_element_type=f32)
                acc = part if acc is None else acc + part       # (Cout, Pp) f32
                j += 1
    acc = acc + b_ref[...]                                      # bias broadcast over lanes

    # ---- InstanceNorm3d (affine=False, biased var, eps=1e-5), two-pass, masked ----------
    mask = mask_ref[...]                                        # (1, Pp)
    inv_p = 1.0 / float(P)
    mean = jnp.sum(acc * mask, axis=1, keepdims=True) * inv_p   # (Cout, 1)
    cen = acc - mean
    var = jnp.sum(cen * cen * mask, axis=1, keepdims=True) * inv_p
    y = jnp.maximum(cen * lax.rsqrt(var + EPS), 0.0) * mask     # ReLU; garbage lanes -> 0

    # ---- MaxPool3d(k=3, s=2, p=1): separable 3-tap maxes in flat-lane space -------------
    # Zero guards are valid pool padding because y >= 0 post-ReLU; invalid (garbage) lanes
    # are already zeroed by the mask, so every out-of-window alias reads a zero.
    zeros = jnp.zeros((Cout, PW), f32)
    p0_ref[...] = zeros
    p1_ref[...] = zeros
    p2_ref[...] = zeros

    p0_ref[:, pl.ds(L, Pp)] = y
    zw = jnp.maximum(jnp.maximum(p0_ref[:, pl.ds(L - 1, Pp)], y),
                     p0_ref[:, pl.ds(L + 1, Pp)])               # max over w-1, w, w+1
    p1_ref[:, pl.ds(L, Pp)] = zw
    zh = jnp.maximum(jnp.maximum(p1_ref[:, pl.ds(L - SH, Pp)], zw),
                     p1_ref[:, pl.ds(L + SH, Pp)])              # max over h-1, h, h+1
    p2_ref[:, pl.ds(L, Pp)] = zh
    zd = jnp.maximum(jnp.maximum(p2_ref[:, pl.ds(L - SD, Pp)], zh),
                     p2_ref[:, pl.ds(L + SD, Pp)])              # max over d-1, d, d+1

    # Defensive: keep only valid lanes finite/zero before the gather matmul (selected lanes
    # are all valid, so this never changes the result).
    zd = jnp.where(mask > 0.5, zd, 0.0)

    # ---- stride-2 subsampling as a one-hot gather matmul + ONE full-width output store --
    o_ref[...] = jnp.dot(zd, sel_ref[...], preferred_element_type=f32).astype(o_ref.dtype)


def conv_pool(x, w, b):
    """x: (N, D, H, W, Cin); w: (3,3,3,Cin,Cout); b: (Cout,) -> (N, D//2, H//2, W//2, Cout)."""
    N, D, H, W, Cin = x.shape
    Cout = w.shape[-1]
    assert D % 2 == 0 and H % 2 == 0 and W % 2 == 0
    D2, H2, W2 = D // 2, H // 2, W // 2
    Dp, Hp, Wp = D + 2, H + 2, W + 2
    SD, SH = Hp * Wp, Wp
    Pp = Dp * Hp * Wp
    TAIL = 2 * (SD + SH + 1)                   # max conv tap offset
    PpT = Pp + TAIL
    P2 = D2 * H2 * W2
    L = ((SD + SH + 1 + 127) // 128) * 128
    PW = ((L + Pp + SD + SH + 1 + 127) // 128) * 128
    f32 = jnp.float32

    # channel-first, zero-padded, flattened (+ zero tail) input: (N, Cin, PpT) -- lane-dense DMA
    x_cf = jnp.transpose(x.astype(f32), (0, 4, 1, 2, 3))                 # (N, Cin, D, H, W)
    x_p = jnp.pad(x_cf, ((0, 0), (0, 0), (1, 1), (1, 1), (1, 1)))        # (N, Cin, Dp, Hp, Wp)
    x_flat = jnp.pad(x_p.reshape(N, Cin, Pp), ((0, 0), (0, 0), (0, TAIL)))

    w_taps = w.astype(f32).reshape(27, Cin, Cout).transpose(0, 2, 1)     # (27, Cout, Cin)
    b2 = b.astype(f32).reshape(Cout, 1)

    # validity mask over the flat padded index space
    q = jnp.arange(Pp, dtype=jnp.int32)
    valid = (q // SD < D) & ((q % SD) // SH < H) & (q % SH < W)
    mask = valid.astype(f32).reshape(1, Pp)

    # one-hot gather matrix picking the pooled-output lanes (centers at even coords)
    dd = jnp.arange(D2, dtype=jnp.int32)
    hh = jnp.arange(H2, dtype=jnp.int32)
    ww = jnp.arange(W2, dtype=jnp.int32)
    sel = 2 * (dd[:, None, None] * SD + hh[None, :, None] * SH + ww[None, None, :])
    sel = sel.reshape(P2)
    sel_mat = (q[:, None] == sel[None, :]).astype(f32)                   # (Pp, P2)

    kernel = functools.partial(convpool_kernel, D=D, H=H, W=W, Cin=Cin, Cout=Cout)
    out_cf = pl.pallas_call(
        kernel,
        out_shape=jax.ShapeDtypeStruct((N, Cout, P2), f32),
        grid_spec=pltpu.PrefetchScalarGridSpec(
            num_scalar_prefetch=0,
            grid=(N,),
            in_specs=[
                pl.BlockSpec((None, Cin, PpT), lambda n: (n, 0, 0)),
                pl.BlockSpec((27, Cout, Cin), lambda n: (0, 0, 0)),
                pl.BlockSpec((Cout, 1), lambda n: (0, 0)),
                pl.BlockSpec((1, Pp), lambda n: (0, 0)),
                pl.BlockSpec((Pp, P2), lambda n: (0, 0)),
            ],
            out_specs=pl.BlockSpec((None, Cout, P2), lambda n: (n, 0, 0)),
            scratch_shapes=[pltpu.VMEM((Cout, PW), f32)] * 3,
        ),
        compiler_params=pltpu.CompilerParams(
            dimension_semantics=("parallel",),   # batch elements are independent (v7x: 2 TCs)
            vmem_limit_bytes=32 * 1024 * 1024,
        ),
    )(x_flat, w_taps, b2, mask, sel_mat)

    # free metadata reshape + tiny transpose back to NDHWC
    out = out_cf.reshape(N, Cout, D2, H2, W2)
    return jnp.transpose(out, (0, 2, 3, 4, 1))


def reference(x, w, b):
    """Pure-JAX reference mirroring the PyTorch module (NDHWC layout)."""
    y = lax.conv_general_dilated(
        x, w, window_strides=(1, 1, 1),
        padding=((1, 1), (1, 1), (1, 1)),
        dimension_numbers=("NDHWC", "DHWIO", "NDHWC"))
    y = y + b.reshape(1, 1, 1, 1, -1)
    mean = jnp.mean(y, axis=(1, 2, 3), keepdims=True)
    var = jnp.var(y, axis=(1, 2, 3), keepdims=True)
    y = (y - mean) / jnp.sqrt(var + EPS)
    y = jnp.maximum(y, 0.0)
    y = lax.reduce_window(
        y, -jnp.inf, lax.max,
        window_dimensions=(1, 3, 3, 3, 1),
        window_strides=(1, 2, 2, 2, 1),
        padding=((0, 0), (1, 1), (1, 1), (1, 1), (0, 0)))
    return y


if __name__ == "__main__":
    N, Cin, Cout, D, H, W = 2, 4, 8, 8, 8, 8

    key = jax.random.PRNGKey(0)
    kx, kw, kb = jax.random.split(key, 3)
    x = jax.random.normal(kx, (N, D, H, W, Cin), jnp.float32)
    w = jax.random.normal(kw, (3, 3, 3, Cin, Cout), jnp.float32) * 0.1
    b = jax.random.normal(kb, (Cout,), jnp.float32) * 0.1

    out = jax.block_until_ready(conv_pool(x, w, b))
    ref = jax.block_until_ready(reference(x, w, b))

    assert out.shape == (N, D // 2, H // 2, W // 2, Cout), out.shape
    assert jnp.allclose(out, ref, atol=2e-3, rtol=2e-3), float(jnp.max(jnp.abs(out - ref)))
    print("KERNEL_OK")
</pallas_src>

<mosaic_0001>
module attributes {stable_mosaic.version = 11 : i64} {
  func.func @convpool_kernel(%arg0: i32, %arg1: memref<1x4x1222xf32, #tpu.memory_space<vmem>>, %arg2: memref<27x8x4xf32, #tpu.memory_space<vmem>>, %arg3: memref<8x1xf32, #tpu.memory_space<vmem>>, %arg4: memref<1x1000xf32, #tpu.memory_space<vmem>>, %arg5: memref<1000x64xf32, #tpu.memory_space<vmem>>, %arg6: memref<1x8x64xf32, #tpu.memory_space<vmem>>, %arg7: memref<8x1280xf32, #tpu.memory_space<vmem>>, %arg8: memref<8x1280xf32, #tpu.memory_space<vmem>>, %arg9: memref<8x1280xf32, #tpu.memory_space<vmem>>) attributes {dimension_semantics = [#tpu.dimension_semantics<parallel>], iteration_bounds = array<i64: 2>, scalar_prefetch = 0 : i64, scratch_operands = 3 : i64, tpu.core_type = #tpu.core_type<tc>, window_params = [{transform_indices = @transform_0, window_bounds = array<i64: 1, 4, 1222>}, {pipeline_mode = #tpu.pipeline_mode<synchronous>, transform_indices = @transform_1, window_bounds = array<i64: 27, 8, 4>}, {pipeline_mode = #tpu.pipeline_mode<synchronous>, transform_indices = @transform_2, window_bounds = array<i64: 8, 1>}, {pipeline_mode = #tpu.pipeline_mode<synchronous>, transform_indices = @transform_3, window_bounds = array<i64: 1, 1000>}, {pipeline_mode = #tpu.pipeline_mode<synchronous>, transform_indices = @transform_4, window_bounds = array<i64: 1000, 64>}, {transform_indices = @transform_5, window_bounds = array<i64: 1, 8, 64>}]} {
    %c0 = arith.constant 0 : index
    %c0_0 = arith.constant 0 : index
    %c0_1 = arith.constant 0 : index
    %0 = vector.load %arg1[%c0, %c0_0, %c0_1] : memref<1x4x1222xf32, #tpu.memory_space<vmem>>, vector<1x4x1000xf32>
    %1 = vector.shape_cast %0 : vector<1x4x1000xf32> to vector<4x1000xf32>
    %c0_2 = arith.constant 0 : index
    %c0_3 = arith.constant 0 : index
    %c0_4 = arith.constant 0 : index
    %2 = vector.load %arg2[%c0_2, %c0_3, %c0_4] : memref<27x8x4xf32, #tpu.memory_space<vmem>>, vector<1x8x4xf32>
    %3 = vector.shape_cast %2 : vector<1x8x4xf32> to vector<8x4xf32>
    %cst = arith.constant dense<0.000000e+00> : vector<8x1000xf32>
    %4 = tpu.matmul %3, %1, %cst {dimension_numbers = #tpu.dot_dimension_numbers<[1], [0], [0], [1], [0, 0, 1, 1], [], []>} : vector<8x4xf32>, vector<4x1000xf32>, vector<8x1000xf32> -> vector<8x1000xf32>
    %c0_5 = arith.constant 0 : index
    %c0_6 = arith.constant 0 : index
    %c1 = arith.constant 1 : index
    %5 = vector.load %arg1[%c0_5, %c0_6, %c1] : memref<1x4x1222xf32, #tpu.memory_space<vmem>>, vector<1x4x1000xf32>
    %6 = vector.shape_cast %5 : vector<1x4x1000xf32> to vector<4x1000xf32>
    %c1_7 = arith.constant 1 : index
    %c0_8 = arith.constant 0 : index
    %c0_9 = arith.constant 0 : index
    %7 = vector.load %arg2[%c1_7, %c0_8, %c0_9] : memref<27x8x4xf32, #tpu.memory_space<vmem>>, vector<1x8x4xf32>
    %8 = vector.shape_cast %7 : vector<1x8x4xf32> to vector<8x4xf32>
    %cst_10 = arith.constant dense<0.000000e+00> : vector<8x1000xf32>
    %9 = tpu.matmul %8, %6, %cst_10 {dimension_numbers = #tpu.dot_dimension_numbers<[1], [0], [0], [1], [0, 0, 1, 1], [], []>} : vector<8x4xf32>, vector<4x1000xf32>, vector<8x1000xf32> -> vector<8x1000xf32>
    %10 = arith.addf %4, %9 : vector<8x1000xf32>
    %c0_11 = arith.constant 0 : index
    %c0_12 = arith.constant 0 : index
    %c2 = arith.constant 2 : index
    %11 = vector.load %arg1[%c0_11, %c0_12, %c2] : memref<1x4x1222xf32, #tpu.memory_space<vmem>>, vector<1x4x1000xf32>
    %12 = vector.shape_cast %11 : vector<1x4x1000xf32> to vector<4x1000xf32>
    %c2_13 = arith.constant 2 : index
    %c0_14 = arith.constant 0 : index
    %c0_15 = arith.constant 0 : index
    %13 = vector.load %arg2[%c2_13, %c0_14, %c0_15] : memref<27x8x4xf32, #tpu.memory_space<vmem>>, vector<1x8x4xf32>
    %14 = vector.shape_cast %13 : vector<1x8x4xf32> to vector<8x4xf32>
    %cst_16 = arith.constant dense<0.000000e+00> : vector<8x1000xf32>
    %15 = tpu.matmul %14, %12, %cst_16 {dimension_numbers = #tpu.dot_dimension_numbers<[1], [0], [0], [1], [0, 0, 1, 1], [], []>} : vector<8x4xf32>, vector<4x1000xf32>, vector<8x1000xf32> -> vector<8x1000xf32>
    %16 = arith.addf %10, %15 : vector<8x1000xf32>
    %c0_17 = arith.constant 0 : index
    %c0_18 = arith.constant 0 : index
    %c10 = arith.constant 10 : index
    %17 = vector.load %arg1[%c0_17, %c0_18, %c10] : memref<1x4x1222xf32, #tpu.memory_space<vmem>>, vector<1x4x1000xf32>
    %18 = vector.shape_cast %17 : vector<1x4x1000xf32> to vector<4x1000xf32>
    %c3 = arith.constant 3 : index
    %c0_19 = arith.constant 0 : index
    %c0_20 = arith.constant 0 : index
    %19 = vector.load %arg2[%c3, %c0_19, %c0_20] : memref<27x8x4xf32, #tpu.memory_space<vmem>>, vector<1x8x4xf32>
    %20 = vector.shape_cast %19 : vector<1x8x4xf32> to vector<8x4xf32>
    %cst_21 = arith.constant dense<0.000000e+00> : vector<8x1000xf32>
    %21 = tpu.matmul %20, %18, %cst_21 {dimension_numbers = #tpu.dot_dimension_numbers<[1], [0], [0], [1], [0, 0, 1, 1], [], []>} : vector<8x4xf32>, vector<4x1000xf32>, vector<8x1000xf32> -> vector<8x1000xf32>
    %22 = arith.addf %16, %21 : vector<8x1000xf32>
    %c0_22 = arith.constant 0 : index
    %c0_23 = arith.constant 0 : index
    %c11 = arith.constant 11 : index
    %23 = vector.load %arg1[%c0_22, %c0_23, %c11] : memref<1x4x1222xf32, #tpu.memory_space<vmem>>, vector<1x4x1000xf32>
    %24 = vector.shape_cast %23 : vector<1x4x1000xf32> to vector<4x1000xf32>
    %c4 = arith.constant 4 : index
    %c0_24 = arith.constant 0 : index
    %c0_25 = arith.constant 0 : index
    %25 = vector.load %arg2[%c4, %c0_24, %c0_25] : memref<27x8x4xf32, #tpu.memory_space<vmem>>, vector<1x8x4xf32>
    %26 = vector.shape_cast %25 : vector<1x8x4xf32> to vector<8x4xf32>
    %cst_26 = arith.constant dense<0.000000e+00> : vector<8x1000xf32>
    %27 = tpu.matmul %26, %24, %cst_26 {dimension_numbers = #tpu.dot_dimension_numbers<[1], [0], [0], [1], [0, 0, 1, 1], [], []>} : vector<8x4xf32>, vector<4x1000xf32>, vector<8x1000xf32> -> vector<8x1000xf32>
    %28 = arith.addf %22, %27 : vector<8x1000xf32>
    %c0_27 = arith.constant 0 : index
    %c0_28 = arith.constant 0 : index
    %c12 = arith.constant 12 : index
    %29 = vector.load %arg1[%c0_27, %c0_28, %c12] : memref<1x4x1222xf32, #tpu.memory_space<vmem>>, vector<1x4x1000xf32>
    %30 = vector.shape_cast %29 : vector<1x4x1000xf32> to vector<4x1000xf32>
    %c5 = arith.constant 5 : index
    %c0_29 = arith.constant 0 : index
    %c0_30 = arith.constant 0 : index
    %31 = vector.load %arg2[%c5, %c0_29, %c0_30] : memref<27x8x4xf32, #tpu.memory_space<vmem>>, vector<1x8x4xf32>
    %32 = vector.shape_cast %31 : vector<1x8x4xf32> to vector<8x4xf32>
    %cst_31 = arith.constant dense<0.000000e+00> : vector<8x1000xf32>
    %33 = tpu.matmul %32, %30, %cst_31 {dimension_numbers = #tpu.dot_dimension_numbers<[1], [0], [0], [1], [0, 0, 1, 1], [], []>} : vector<8x4xf32>, vector<4x1000xf32>, vector<8x1000xf32> -> vector<8x1000xf32>
    %34 = arith.addf %28, %33 : vector<8x1000xf32>
    %c0_32 = arith.constant 0 : index
    %c0_33 = arith.constant 0 : index
    %c20 = arith.constant 20 : index
    %35 = vector.load %arg1[%c0_32, %c0_33, %c20] : memref<1x4x1222xf32, #tpu.memory_space<vmem>>, vector<1x4x1000xf32>
    %36 = vector.shape_cast %35 : vector<1x4x1000xf32> to vector<4x1000xf32>
    %c6 = arith.constant 6 : index
    %c0_34 = arith.constant 0 : index
    %c0_35 = arith.constant 0 : index
    %37 = vector.load %arg2[%c6, %c0_34, %c0_35] : memref<27x8x4xf32, #tpu.memory_space<vmem>>, vector<1x8x4xf32>
    %38 = vector.shape_cast %37 : vector<1x8x4xf32> to vector<8x4xf32>
    %cst_36 = arith.constant dense<0.000000e+00> : vector<8x1000xf32>
    %39 = tpu.matmul %38, %36, %cst_36 {dimension_numbers = #tpu.dot_dimension_numbers<[1], [0], [0], [1], [0, 0, 1, 1], [], []>} : vector<8x4xf32>, vector<4x1000xf32>, vector<8x1000xf32> -> vector<8x1000xf32>
    %40 = arith.addf %34, %39 : vector<8x1000xf32>
    %c0_37 = arith.constant 0 : index
    %c0_38 = arith.constant 0 : index
    %c21 = arith.constant 21 : index
    %41 = vector.load %arg1[%c0_37, %c0_38, %c21] : memref<1x4x1222xf32, #tpu.memory_space<vmem>>, vector<1x4x1000xf32>
    %42 = vector.shape_cast %41 : vector<1x4x1000xf32> to vector<4x1000xf32>
    %c7 = arith.constant 7 : index
    %c0_39 = arith.constant 0 : index
    %c0_40 = arith.constant 0 : index
    %43 = vector.load %arg2[%c7, %c0_39, %c0_40] : memref<27x8x4xf32, #tpu.memory_space<vmem>>, vector<1x8x4xf32>
    %44 = vector.shape_cast %43 : vector<1x8x4xf32> to vector<8x4xf32>
    %cst_41 = arith.constant dense<0.000000e+00> : vector<8x1000xf32>
    %45 = tpu.matmul %44, %42, %cst_41 {dimension_numbers = #tpu.dot_dimension_numbers<[1], [0], [0], [1], [0, 0, 1, 1], [], []>} : vector<8x4xf32>, vector<4x1000xf32>, vector<8x1000xf32> -> vector<8x1000xf32>
    %46 = arith.addf %40, %45 : vector<8x1000xf32>
    %c0_42 = arith.constant 0 : index
    %c0_43 = arith.constant 0 : index
    %c22 = arith.constant 22 : index
    %47 = vector.load %arg1[%c0_42, %c0_43, %c22] : memref<1x4x1222xf32, #tpu.memory_space<vmem>>, vector<1x4x1000xf32>
    %48 = vector.shape_cast %47 : vector<1x4x1000xf32> to vector<4x1000xf32>
    %c8 = arith.constant 8 : index
    %c0_44 = arith.constant 0 : index
    %c0_45 = arith.constant 0 : index
    %49 = vector.load %arg2[%c8, %c0_44, %c0_45] : memref<27x8x4xf32, #tpu.memory_space<vmem>>, vector<1x8x4xf32>
    %50 = vector.shape_cast %49 : vector<1x8x4xf32> to vector<8x4xf32>
    %cst_46 = arith.constant dense<0.000000e+00> : vector<8x1000xf32>
    %51 = tpu.matmul %50, %48, %cst_46 {dimension_numbers = #tpu.dot_dimension_numbers<[1], [0], [0], [1], [0, 0, 1, 1], [], []>} : vector<8x4xf32>, vector<4x1000xf32>, vector<8x1000xf32> -> vector<8x1000xf32>
    %52 = arith.addf %46, %51 : vector<8x1000xf32>
    %c0_47 = arith.constant 0 : index
    %c0_48 = arith.constant 0 : index
    %c100 = arith.constant 100 : index
    %53 = vector.load %arg1[%c0_47, %c0_48, %c100] : memref<1x4x1222xf32, #tpu.memory_space<vmem>>, vector<1x4x1000xf32>
    %54 = vector.shape_cast %53 : vector<1x4x1000xf32> to vector<4x1000xf32>
    %c9 = arith.constant 9 : index
    %c0_49 = arith.constant 0 : index
    %c0_50 = arith.constant 0 : index
    %55 = vector.load %arg2[%c9, %c0_49, %c0_50] : memref<27x8x4xf32, #tpu.memory_space<vmem>>, vector<1x8x4xf32>
    %56 = vector.shape_cast %55 : vector<1x8x4xf32> to vector<8x4xf32>
    %cst_51 = arith.constant dense<0.000000e+00> : vector<8x1000xf32>
    %57 = tpu.matmul %56, %54, %cst_51 {dimension_numbers = #tpu.dot_dimension_numbers<[1], [0], [0], [1], [0, 0, 1, 1], [], []>} : vector<8x4xf32>, vector<4x1000xf32>, vector<8x1000xf32> -> vector<8x1000xf32>
    %58 = arith.addf %52, %57 : vector<8x1000xf32>
    %c0_52 = arith.constant 0 : index
    %c0_53 = arith.constant 0 : index
    %c101 = arith.constant 101 : index
    %59 = vector.load %arg1[%c0_52, %c0_53, %c101] : memref<1x4x1222xf32, #tpu.memory_space<vmem>>, vector<1x4x1000xf32>
    %60 = vector.shape_cast %59 : vector<1x4x1000xf32> to vector<4x1000xf32>
    %c10_54 = arith.constant 10 : index
    %c0_55 = arith.constant 0 : index
    %c0_56 = arith.constant 0 : index
    %61 = vector.load %arg2[%c10_54, %c0_55, %c0_56] : memref<27x8x4xf32, #tpu.memory_space<vmem>>, vector<1x8x4xf32>
    %62 = vector.shape_cast %61 : vector<1x8x4xf32> to vector<8x4xf32>
    %cst_57 = arith.constant dense<0.000000e+00> : vector<8x1000xf32>
    %63 = tpu.matmul %62, %60, %cst_57 {dimension_numbers = #tpu.dot_dimension_numbers<[1], [0], [0], [1], [0, 0, 1, 1], [], []>} : vector<8x4xf32>, vector<4x1000xf32>, vector<8x1000xf32> -> vector<8x1000xf32>
    %64 = arith.addf %58, %63 : vector<8x1000xf32>
    %c0_58 = arith.constant 0 : index
    %c0_59 = arith.constant 0 : index
    %c102 = arith.constant 102 : index
    %65 = vector.load %arg1[%c0_58, %c0_59, %c102] : memref<1x4x1222xf32, #tpu.memory_space<vmem>>, vector<1x4x1000xf32>
    %66 = vector.shape_cast %65 : vector<1x4x1000xf32> to vector<4x1000xf32>
    %c11_60 = arith.constant 11 : index
    %c0_61 = arith.constant 0 : index
    %c0_62 = arith.constant 0 : index
    %67 = vector.load %arg2[%c11_60, %c0_61, %c0_62] : memref<27x8x4xf32, #tpu.memory_space<vmem>>, vector<1x8x4xf32>
    %68 = vector.shape_cast %67 : vector<1x8x4xf32> to vector<8x4xf32>
    %cst_63 = arith.constant dense<0.000000e+00> : vector<8x1000xf32>
    %69 = tpu.matmul %68, %66, %cst_63 {dimension_numbers = #tpu.dot_dimension_numbers<[1], [0], [0], [1], [0, 0, 1, 1], [], []>} : vector<8x4xf32>, vector<4x1000xf32>, vector<8x1000xf32> -> vector<8x1000xf32>
    %70 = arith.addf %64, %69 : vector<8x1000xf32>
    %c0_64 = arith.constant 0 : index
    %c0_65 = arith.constant 0 : index
    %c110 = arith.constant 110 : index
    %71 = vector.load %arg1[%c0_64, %c0_65, %c110] : memref<1x4x1222xf32, #tpu.memory_space<vmem>>, vector<1x4x1000xf32>
    %72 = vector.shape_cast %71 : vector<1x4x1000xf32> to vector<4x1000xf32>
    %c12_66 = arith.constant 12 : index
    %c0_67 = arith.constant 0 : index
    %c0_68 = arith.constant 0 : index
    %73 = vector.load %arg2[%c12_66, %c0_67, %c0_68] : memref<27x8x4xf32, #tpu.memory_space<vmem>>, vector<1x8x4xf32>
    %74 = vector.shape_cast %73 : vector<1x8x4xf32> to vector<8x4xf32>
    %cst_69 = arith.constant dense<0.000000e+00> : vector<8x1000xf32>
    %75 = tpu.matmul %74, %72, %cst_69 {dimension_numbers = #tpu.dot_dimension_numbers<[1], [0], [0], [1], [0, 0, 1, 1], [], []>} : vector<8x4xf32>, vector<4x1000xf32>, vector<8x1000xf32> -> vector<8x1000xf32>
    %76 = arith.addf %70, %75 : vector<8x1000xf32>
    %c0_70 = arith.constant 0 : index
    %c0_71 = arith.constant 0 : index
    %c111 = arith.constant 111 : index
    %77 = vector.load %arg1[%c0_70, %c0_71, %c111] : memref<1x4x1222xf32, #tpu.memory_space<vmem>>, vector<1x4x1000xf32>
    %78 = vector.shape_cast %77 : vector<1x4x1000xf32> to vector<4x1000xf32>
    %c13 = arith.constant 13 : index
    %c0_72 = arith.constant 0 : index
    %c0_73 = arith.constant 0 : index
    %79 = vector.load %arg2[%c13, %c0_72, %c0_73] : memref<27x8x4xf32, #tpu.memory_space<vmem>>, vector<1x8x4xf32>
    %80 = vector.shape_cast %79 : vector<1x8x4xf32> to vector<8x4xf32>
    %cst_74 = arith.constant dense<0.000000e+00> : vector<8x1000xf32>
    %81 = tpu.matmul %80, %78, %cst_74 {dimension_numbers = #tpu.dot_dimension_numbers<[1], [0], [0], [1], [0, 0, 1, 1], [], []>} : vector<8x4xf32>, vector<4x1000xf32>, vector<8x1000xf32> -> vector<8x1000xf32>
    %82 = arith.addf %76, %81 : vector<8x1000xf32>
    %c0_75 = arith.constant 0 : index
    %c0_76 = arith.constant 0 : index
    %c112 = arith.constant 112 : index
    %83 = vector.load %arg1[%c0_75, %c0_76, %c112] : memref<1x4x1222xf32, #tpu.memory_space<vmem>>, vector<1x4x1000xf32>
    %84 = vector.shape_cast %83 : vector<1x4x1000xf32> to vector<4x1000xf32>
    %c14 = arith.constant 14 : index
    %c0_77 = arith.constant 0 : index
    %c0_78 = arith.constant 0 : index
    %85 = vector.load %arg2[%c14, %c0_77, %c0_78] : memref<27x8x4xf32, #tpu.memory_space<vmem>>, vector<1x8x4xf32>
    %86 = vector.shape_cast %85 : vector<1x8x4xf32> to vector<8x4xf32>
    %cst_79 = arith.constant dense<0.000000e+00> : vector<8x1000xf32>
    %87 = tpu.matmul %86, %84, %cst_79 {dimension_numbers = #tpu.dot_dimension_numbers<[1], [0], [0], [1], [0, 0, 1, 1], [], []>} : vector<8x4xf32>, vector<4x1000xf32>, vector<8x1000xf32> -> vector<8x1000xf32>
    %88 = arith.addf %82, %87 : vector<8x1000xf32>
    %c0_80 = arith.constant 0 : index
    %c0_81 = arith.constant 0 : index
    %c120 = arith.constant 120 : index
    %89 = vector.load %arg1[%c0_80, %c0_81, %c120] : memref<1x4x1222xf32, #tpu.memory_space<vmem>>, vector<1x4x1000xf32>
    %90 = vector.shape_cast %89 : vector<1x4x1000xf32> to vector<4x1000xf32>
    %c15 = arith.constant 15 : index
    %c0_82 = arith.constant 0 : index
    %c0_83 = arith.constant 0 : index
    %91 = vector.load %arg2[%c15, %c0_82, %c0_83] : memref<27x8x4xf32, #tpu.memory_space<vmem>>, vector<1x8x4xf32>
    %92 = vector.shape_cast %91 : vector<1x8x4xf32> to vector<8x4xf32>
    %cst_84 = arith.constant dense<0.000000e+00> : vector<8x1000xf32>
    %93 = tpu.matmul %92, %90, %cst_84 {dimension_numbers = #tpu.dot_dimension_numbers<[1], [0], [0], [1], [0, 0, 1, 1], [], []>} : vector<8x4xf32>, vector<4x1000xf32>, vector<8x1000xf32> -> vector<8x1000xf32>
    %94 = arith.addf %88, %93 : vector<8x1000xf32>
    %c0_85 = arith.constant 0 : index
    %c0_86 = arith.constant 0 : index
    %c121 = arith.constant 121 : index
    %95 = vector.load %arg1[%c0_85, %c0_86, %c121] : memref<1x4x1222xf32, #tpu.memory_space<vmem>>, vector<1x4x1000xf32>
    %96 = vector.shape_cast %95 : vector<1x4x1000xf32> to vector<4x1000xf32>
    %c16 = arith.constant 16 : index
    %c0_87 = arith.constant 0 : index
    %c0_88 = arith.constant 0 : index
    %97 = vector.load %arg2[%c16, %c0_87, %c0_88] : memref<27x8x4xf32, #tpu.memory_space<vmem>>, vector<1x8x4xf32>
    %98 = vector.shape_cast %97 : vector<1x8x4xf32> to vector<8x4xf32>
    %cst_89 = arith.constant dense<0.000000e+00> : vector<8x1000xf32>
    %99 = tpu.matmul %98, %96, %cst_89 {dimension_numbers = #tpu.dot_dimension_numbers<[1], [0], [0], [1], [0, 0, 1, 1], [], []>} : vector<8x4xf32>, vector<4x1000xf32>, vector<8x1000xf32> -> vector<8x1000xf32>
    %100 = arith.addf %94, %99 : vector<8x1000xf32>
    %c0_90 = arith.constant 0 : index
    %c0_91 = arith.constant 0 : index
    %c122 = arith.constant 122 : index
    %101 = vector.load %arg1[%c0_90, %c0_91, %c122] : memref<1x4x1222xf32, #tpu.memory_space<vmem>>, vector<1x4x1000xf32>
    %102 = vector.shape_cast %101 : vector<1x4x1000xf32> to vector<4x1000xf32>
    %c17 = arith.constant 17 : index
    %c0_92 = arith.constant 0 : index
    %c0_93 = arith.constant 0 : index
    %103 = vector.load %arg2[%c17, %c0_92, %c0_93] : memref<27x8x4xf32, #tpu.memory_space<vmem>>, vector<1x8x4xf32>
    %104 = vector.shape_cast %103 : vector<1x8x4xf32> to vector<8x4xf32>
    %cst_94 = arith.constant dense<0.000000e+00> : vector<8x1000xf32>
    %105 = tpu.matmul %104, %102, %cst_94 {dimension_numbers = #tpu.dot_dimension_numbers<[1], [0], [0], [1], [0, 0, 1, 1], [], []>} : vector<8x4xf32>, vector<4x1000xf32>, vector<8x1000xf32> -> vector<8x1000xf32>
    %106 = arith.addf %100, %105 : vector<8x1000xf32>
    %c0_95 = arith.constant 0 : index
    %c0_96 = arith.constant 0 : index
    %c200 = arith.constant 200 : index
    %107 = vector.load %arg1[%c0_95, %c0_96, %c200] : memref<1x4x1222xf32, #tpu.memory_space<vmem>>, vector<1x4x1000xf32>
    %108 = vector.shape_cast %107 : vector<1x4x1000xf32> to vector<4x1000xf32>
    %c18 = arith.constant 18 : index
    %c0_97 = arith.constant 0 : index
    %c0_98 = arith.constant 0 : index
    %109 = vector.load %arg2[%c18, %c0_97, %c0_98] : memref<27x8x4xf32, #tpu.memory_space<vmem>>, vector<1x8x4xf32>
    %110 = vector.shape_cast %109 : vector<1x8x4xf32> to vector<8x4xf32>
    %cst_99 = arith.constant dense<0.000000e+00> : vector<8x1000xf32>
    %111 = tpu.matmul %110, %108, %cst_99 {dimension_numbers = #tpu.dot_dimension_numbers<[1], [0], [0], [1], [0, 0, 1, 1], [], []>} : vector<8x4xf32>, vector<4x1000xf32>, vector<8x1000xf32> -> vector<8x1000xf32>
    %112 = arith.addf %106, %111 : vector<8x1000xf32>
    %c0_100 = arith.constant 0 : index
    %c0_101 = arith.constant 0 : index
    %c201 = arith.constant 201 : index
    %113 = vector.load %arg1[%c0_100, %c0_101, %c201] : memref<1x4x1222xf32, #tpu.memory_space<vmem>>, vector<1x4x1000xf32>
    %114 = vector.shape_cast %113 : vector<1x4x1000xf32> to vector<4x1000xf32>
    %c19 = arith.constant 19 : index
    %c0_102 = arith.constant 0 : index
    %c0_103 = arith.constant 0 : index
    %115 = vector.load %arg2[%c19, %c0_102, %c0_103] : memref<27x8x4xf32, #tpu.memory_space<vmem>>, vector<1x8x4xf32>
    %116 = vector.shape_cast %115 : vector<1x8x4xf32> to vector<8x4xf32>
    %cst_104 = arith.constant dense<0.000000e+00> : vector<8x1000xf32>
    %117 = tpu.matmul %116, %114, %cst_104 {dimension_numbers = #tpu.dot_dimension_numbers<[1], [0], [0], [1], [0, 0, 1, 1], [], []>} : vector<8x4xf32>, vector<4x1000xf32>, vector<8x1000xf32> -> vector<8x1000xf32>
    %118 = arith.addf %112, %117 : vector<8x1000xf32>
    %c0_105 = arith.constant 0 : index
    %c0_106 = arith.constant 0 : index
    %c202 = arith.constant 202 : index
    %119 = vector.load %arg1[%c0_105, %c0_106, %c202] : memref<1x4x1222xf32, #tpu.memory_space<vmem>>, vector<1x4x1000xf32>
    %120 = vector.shape_cast %119 : vector<1x4x1000xf32> to vector<4x1000xf32>
    %c20_107 = arith.constant 20 : index
    %c0_108 = arith.constant 0 : index
    %c0_109 = arith.constant 0 : index
    %121 = vector.load %arg2[%c20_107, %c0_108, %c0_109] : memref<27x8x4xf32, #tpu.memory_space<vmem>>, vector<1x8x4xf32>
    %122 = vector.shape_cast %121 : vector<1x8x4xf32> to vector<8x4xf32>
    %cst_110 = arith.constant dense<0.000000e+00> : vector<8x1000xf32>
    %123 = tpu.matmul %122, %120, %cst_110 {dimension_numbers = #tpu.dot_dimension_numbers<[1], [0], [0], [1], [0, 0, 1, 1], [], []>} : vector<8x4xf32>, vector<4x1000xf32>, vector<8x1000xf32> -> vector<8x1000xf32>
    %124 = arith.addf %118, %123 : vector<8x1000xf32>
    %c0_111 = arith.constant 0 : index
    %c0_112 = arith.constant 0 : index
    %c210 = arith.constant 210 : index
    %125 = vector.load %arg1[%c0_111, %c0_112, %c210] : memref<1x4x1222xf32, #tpu.memory_space<vmem>>, vector<1x4x1000xf32>
    %126 = vector.shape_cast %125 : vector<1x4x1000xf32> to vector<4x1000xf32>
    %c21_113 = arith.constant 21 : index
    %c0_114 = arith.constant 0 : index
    %c0_115 = arith.constant 0 : index
    %127 = vector.load %arg2[%c21_113, %c0_114, %c0_115] : memref<27x8x4xf32, #tpu.memory_space<vmem>>, vector<1x8x4xf32>
    %128 = vector.shape_cast %127 : vector<1x8x4xf32> to vector<8x4xf32>
    %cst_116 = arith.constant dense<0.000000e+00> : vector<8x1000xf32>
    %129 = tpu.matmul %128, %126, %cst_116 {dimension_numbers = #tpu.dot_dimension_numbers<[1], [0], [0], [1], [0, 0, 1, 1], [], []>} : vector<8x4xf32>, vector<4x1000xf32>, vector<8x1000xf32> -> vector<8x1000xf32>
    %130 = arith.addf %124, %129 : vector<8x1000xf32>
    %c0_117 = arith.constant 0 : index
    %c0_118 = arith.constant 0 : index
    %c211 = arith.constant 211 : index
    %131 = vector.load %arg1[%c0_117, %c0_118, %c211] : memref<1x4x1222xf32, #tpu.memory_space<vmem>>, vector<1x4x1000xf32>
    %132 = vector.shape_cast %131 : vector<1x4x1000xf32> to vector<4x1000xf32>
    %c22_119 = arith.constant 22 : index
    %c0_120 = arith.constant 0 : index
    %c0_121 = arith.constant 0 : index
    %133 = vector.load %arg2[%c22_119, %c0_120, %c0_121] : memref<27x8x4xf32, #tpu.memory_space<vmem>>, vector<1x8x4xf32>
    %134 = vector.shape_cast %133 : vector<1x8x4xf32> to vector<8x4xf32>
    %cst_122 = arith.constant dense<0.000000e+00> : vector<8x1000xf32>
    %135 = tpu.matmul %134, %132, %cst_122 {dimension_numbers = #tpu.dot_dimension_numbers<[1], [0], [0], [1], [0, 0, 1, 1], [], []>} : vector<8x4xf32>, vector<4x1000xf32>, vector<8x1000xf32> -> vector<8x1000xf32>
    %136 = arith.addf %130, %135 : vector<8x1000xf32>
    %c0_123 = arith.constant 0 : index
    %c0_124 = arith.constant 0 : index
    %c212 = arith.constant 212 : index
    %137 = vector.load %arg1[%c0_123, %c0_124, %c212] : memref<1x4x1222xf32, #tpu.memory_space<vmem>>, vector<1x4x1000xf32>
    %138 = vector.shape_cast %137 : vector<1x4x1000xf32> to vector<4x1000xf32>
    %c23 = arith.constant 23 : index
    %c0_125 = arith.constant 0 : index
    %c0_126 = arith.constant 0 : index
    %139 = vector.load %arg2[%c23, %c0_125, %c0_126] : memref<27x8x4xf32, #tpu.memory_space<vmem>>, vector<1x8x4xf32>
    %140 = vector.shape_cast %139 : vector<1x8x4xf32> to vector<8x4xf32>
    %cst_127 = arith.constant dense<0.000000e+00> : vector<8x1000xf32>
    %141 = tpu.matmul %140, %138, %cst_127 {dimension_numbers = #tpu.dot_dimension_numbers<[1], [0], [0], [1], [0, 0, 1, 1], [], []>} : vector<8x4xf32>, vector<4x1000xf32>, vector<8x1000xf32> -> vector<8x1000xf32>
    %142 = arith.addf %136, %141 : vector<8x1000xf32>
    %c0_128 = arith.constant 0 : index
    %c0_129 = arith.constant 0 : index
    %c220 = arith.constant 220 : index
    %143 = vector.load %arg1[%c0_128, %c0_129, %c220] : memref<1x4x1222xf32, #tpu.memory_space<vmem>>, vector<1x4x1000xf32>
    %144 = vector.shape_cast %143 : vector<1x4x1000xf32> to vector<4x1000xf32>
    %c24 = arith.constant 24 : index
    %c0_130 = arith.constant 0 : index
    %c0_131 = arith.constant 0 : index
    %145 = vector.load %arg2[%c24, %c0_130, %c0_131] : memref<27x8x4xf32, #tpu.memory_space<vmem>>, vector<1x8x4xf32>
    %146 = vector.shape_cast %145 : vector<1x8x4xf32> to vector<8x4xf32>
    %cst_132 = arith.constant dense<0.000000e+00> : vector<8x1000xf32>
    %147 = tpu.matmul %146, %144, %cst_132 {dimension_numbers = #tpu.dot_dimension_numbers<[1], [0], [0], [1], [0, 0, 1, 1], [], []>} : vector<8x4xf32>, vector<4x1000xf32>, vector<8x1000xf32> -> vector<8x1000xf32>
    %148 = arith.addf %142, %147 : vector<8x1000xf32>
    %c0_133 = arith.constant 0 : index
    %c0_134 = arith.constant 0 : index
    %c221 = arith.constant 221 : index
    %149 = vector.load %arg1[%c0_133, %c0_134, %c221] : memref<1x4x1222xf32, #tpu.memory_space<vmem>>, vector<1x4x1000xf32>
    %150 = vector.shape_cast %149 : vector<1x4x1000xf32> to vector<4x1000xf32>
    %c25 = arith.constant 25 : index
    %c0_135 = arith.constant 0 : index
    %c0_136 = arith.constant 0 : index
    %151 = vector.load %arg2[%c25, %c0_135, %c0_136] : memref<27x8x4xf32, #tpu.memory_space<vmem>>, vector<1x8x4xf32>
    %152 = vector.shape_cast %151 : vector<1x8x4xf32> to vector<8x4xf32>
    %cst_137 = arith.constant dense<0.000000e+00> : vector<8x1000xf32>
    %153 = tpu.matmul %152, %150, %cst_137 {dimension_numbers = #tpu.dot_dimension_numbers<[1], [0], [0], [1], [0, 0, 1, 1], [], []>} : vector<8x4xf32>, vector<4x1000xf32>, vector<8x1000xf32> -> vector<8x1000xf32>
    %154 = arith.addf %148, %153 : vector<8x1000xf32>
    %c0_138 = arith.constant 0 : index
    %c0_139 = arith.constant 0 : index
    %c222 = arith.constant 222 : index
    %155 = vector.load %arg1[%c0_138, %c0_139, %c222] : memref<1x4x1222xf32, #tpu.memory_space<vmem>>, vector<1x4x1000xf32>
    %156 = vector.shape_cast %155 : vector<1x4x1000xf32> to vector<4x1000xf32>
    %c26 = arith.constant 26 : index
    %c0_140 = arith.constant 0 : index
    %c0_141 = arith.constant 0 : index
    %157 = vector.load %arg2[%c26, %c0_140, %c0_141] : memref<27x8x4xf32, #tpu.memory_space<vmem>>, vector<1x8x4xf32>
    %158 = vector.shape_cast %157 : vector<1x8x4xf32> to vector<8x4xf32>
    %cst_142 = arith.constant dense<0.000000e+00> : vector<8x1000xf32>
    %159 = tpu.matmul %158, %156, %cst_142 {dimension_numbers = #tpu.dot_dimension_numbers<[1], [0], [0], [1], [0, 0, 1, 1], [], []>} : vector<8x4xf32>, vector<4x1000xf32>, vector<8x1000xf32> -> vector<8x1000xf32>
    %160 = arith.addf %154, %159 : vector<8x1000xf32>
    %c0_143 = arith.constant 0 : index
    %c0_144 = arith.constant 0 : index
    %161 = vector.load %arg3[%c0_143, %c0_144] : memref<8x1xf32, #tpu.memory_space<vmem>>, vector<8x1xf32>
    %162 = vector.broadcast %161 : vector<8x1xf32> to vector<8x1000xf32>
    %163 = arith.addf %160, %162 : vector<8x1000xf32>
    %c0_145 = arith.constant 0 : index
    %c0_146 = arith.constant 0 : index
    %164 = vector.load %arg4[%c0_145, %c0_146] : memref<1x1000xf32, #tpu.memory_space<vmem>>, vector<1x1000xf32>
    %165 = vector.broadcast %164 : vector<1x1000xf32> to vector<8x1000xf32>
    %166 = arith.mulf %163, %165 : vector<8x1000xf32>
    %cst_147 = arith.constant dense<0.000000e+00> : vector<8xf32>
    %167 = vector.multi_reduction <add>, %166, %cst_147 [1] : vector<8x1000xf32> to vector<8xf32>
    %168 = vector.shape_cast %167 : vector<8xf32> to vector<8x1xf32>
    %cst_148 = arith.constant 0.001953125 : f32
    %169 = vector.broadcast %cst_148 : f32 to vector<8x1xf32>
    %170 = arith.mulf %168, %169 : vector<8x1xf32>
    %171 = vector.broadcast %170 : vector<8x1xf32> to vector<8x1000xf32>
    %172 = arith.subf %163, %171 : vector<8x1000xf32>
    %173 = arith.mulf %172, %172 : vector<8x1000xf32>
    %174 = vector.broadcast %164 : vector<1x1000xf32> to vector<8x1000xf32>
    %175 = arith.mulf %173, %174 : vector<8x1000xf32>
    %cst_149 = arith.constant dense<0.000000e+00> : vector<8xf32>
    %176 = vector.multi_reduction <add>, %175, %cst_149 [1] : vector<8x1000xf32> to vector<8xf32>
    %177 = vector.shape_cast %176 : vector<8xf32> to vector<8x1xf32>
    %cst_150 = arith.constant 0.001953125 : f32
    %178 = vector.broadcast %cst_150 : f32 to vector<8x1xf32>
    %179 = arith.mulf %177, %178 : vector<8x1xf32>
    %cst_151 = arith.constant 9.99999974E-6 : f32
    %180 = vector.broadcast %cst_151 : f32 to vector<8x1xf32>
    %181 = arith.addf %179, %180 : vector<8x1xf32>
    %182 = math.rsqrt %181 : vector<8x1xf32>
    %183 = vector.broadcast %182 : vector<8x1xf32> to vector<8x1000xf32>
    %184 = arith.mulf %172, %183 : vector<8x1000xf32>
    %cst_152 = arith.constant 0.000000e+00 : f32
    %185 = vector.broadcast %cst_152 : f32 to vector<8x1000xf32>
    %186 = arith.maximumf %184, %185 : vector<8x1000xf32>
    %187 = vector.broadcast %164 : vector<1x1000xf32> to vector<8x1000xf32>
    %188 = arith.mulf %186, %187 : vector<8x1000xf32>
    %cst_153 = arith.constant 0.000000e+00 : f32
    %189 = vector.broadcast %cst_153 : f32 to vector<8x1280xf32>
    %c0_154 = arith.constant 0 : index
    %c0_155 = arith.constant 0 : index
    %190 = vector.load %arg7[%c0_154, %c0_155] : memref<8x1280xf32, #tpu.memory_space<vmem>>, vector<8x1280xf32>
    tpu.vector_store %arg7[%c0_154, %c0_155], %189 {strides = array<i32>} : memref<8x1280xf32, #tpu.memory_space<vmem>>, vector<8x1280xf32>,
    %c0_156 = arith.constant 0 : index
    %c0_157 = arith.constant 0 : index
    %191 = vector.load %arg8[%c0_156, %c0_157] : memref<8x1280xf32, #tpu.memory_space<vmem>>, vector<8x1280xf32>
    tpu.vector_store %arg8[%c0_156, %c0_157], %189 {strides = array<i32>} : memref<8x1280xf32, #tpu.memory_space<vmem>>, vector<8x1280xf32>,
    %c0_158 = arith.constant 0 : index
    %c0_159 = arith.constant 0 : index
    %192 = vector.load %arg9[%c0_158, %c0_159] : memref<8x1280xf32, #tpu.memory_space<vmem>>, vector<8x1280xf32>
    tpu.vector_store %arg9[%c0_158, %c0_159], %189 {strides = array<i32>} : memref<8x1280xf32, #tpu.memory_space<vmem>>, vector<8x1280xf32>,
    %c0_160 = arith.constant 0 : index
    %c128 = arith.constant 128 : index
    %193 = vector.load %arg7[%c0_160, %c128] : memref<8x1280xf32, #tpu.memory_space<vmem>>, vector<8x1000xf32>
    tpu.vector_store %arg7[%c0_160, %c128], %188 {strides = array<i32>} : memref<8x1280xf32, #tpu.memory_space<vmem>>, vector<8x1000xf32>,
    %c0_161 = arith.constant 0 : index
    %c127 = arith.constant 127 : index
    %194 = vector.load %arg7[%c0_161, %c127] : memref<8x1280xf32, #tpu.memory_space<vmem>>, vector<8x1000xf32>
    %195 = arith.maximumf %194, %188 : vector<8x1000xf32>
    %c0_162 = arith.constant 0 : index
    %c129 = arith.constant 129 : index
    %196 = vector.load %arg7[%c0_162, %c129] : memref<8x1280xf32, #tpu.memory_space<vmem>>, vector<8x1000xf32>
    %197 = arith.maximumf %195, %196 : vector<8x1000xf32>
    %c0_163 = arith.constant 0 : index
    %c128_164 = arith.constant 128 : index
    %198 = vector.load %arg8[%c0_163, %c128_164] : memref<8x1280xf32, #tpu.memory_space<vmem>>, vector<8x1000xf32>
    tpu.vector_store %arg8[%c0_163, %c128_164], %197 {strides = array<i32>} : memref<8x1280xf32, #tpu.memory_space<vmem>>, vector<8x1000xf32>,
    %c0_165 = arith.constant 0 : index
    %c118 = arith.constant 118 : index
    %199 = vector.load %arg8[%c0_165, %c118] : memref<8x1280xf32, #tpu.memory_space<vmem>>, vector<8x1000xf32>
    %200 = arith.maximumf %199, %197 : vector<8x1000xf32>
    %c0_166 = arith.constant 0 : index
    %c138 = arith.constant 138 : index
    %201 = vector.load %arg8[%c0_166, %c138] : memref<8x1280xf32, #tpu.memory_space<vmem>>, vector<8x1000xf32>
    %202 = arith.maximumf %200, %201 : vector<8x1000xf32>
    %c0_167 = arith.constant 0 : index
    %c128_168 = arith.constant 128 : index
    %203 = vector.load %arg9[%c0_167, %c128_168] : memref<8x1280xf32, #tpu.memory_space<vmem>>, vector<8x1000xf32>
    tpu.vector_store %arg9[%c0_167, %c128_168], %202 {strides = array<i32>} : memref<8x1280xf32, #tpu.memory_space<vmem>>, vector<8x1000xf32>,
    %c0_169 = arith.constant 0 : index
    %c28 = arith.constant 28 : index
    %204 = vector.load %arg9[%c0_169, %c28] : memref<8x1280xf32, #tpu.memory_space<vmem>>, vector<8x1000xf32>
    %205 = arith.maximumf %204, %202 : vector<8x1000xf32>
    %c0_170 = arith.constant 0 : index
    %c228 = arith.constant 228 : index
    %206 = vector.load %arg9[%c0_170, %c228] : memref<8x1280xf32, #tpu.memory_space<vmem>>, vector<8x1000xf32>
    %207 = arith.maximumf %205, %206 : vector<8x1000xf32>
    %cst_171 = arith.constant 5.000000e-01 : f32
    %208 = vector.broadcast %cst_171 : f32 to vector<1x1000xf32>
    %209 = arith.cmpf ogt, %164, %208 : vector<1x1000xf32>
    %cst_172 = arith.constant 0.000000e+00 : f32
    %210 = vector.shape_cast %209 : vector<1x1000xi1> to vector<1x1000xi1>
    %211 = vector.broadcast %210 : vector<1x1000xi1> to vector<8x1000xi1>
    %212 = vector.broadcast %cst_172 : f32 to vector<8x1000xf32>
    %213 = arith.select %211, %207, %212 : vector<8x1000xi1>, vector<8x1000xf32>
    %c0_173 = arith.constant 0 : index
    %c0_174 = arith.constant 0 : index
    %214 = vector.load %arg5[%c0_173, %c0_174] : memref<1000x64xf32, #tpu.memory_space<vmem>>, vector<1000x64xf32>
    %cst_175 = arith.constant dense<0.000000e+00> : vector<8x64xf32>
    %215 = tpu.matmul %213, %214, %cst_175 {dimension_numbers = #tpu.dot_dimension_numbers<[1], [0], [0], [1], [0, 0, 1, 1], [], []>} : vector<8x1000xf32>, vector<1000x64xf32>, vector<8x64xf32> -> vector<8x64xf32>
    %c0_176 = arith.constant 0 : index
    %c0_177 = arith.constant 0 : index
    %c0_178 = arith.constant 0 : index
    %216 = vector.load %arg6[%c0_176, %c0_177, %c0_178] : memref<1x8x64xf32, #tpu.memory_space<vmem>>, vector<1x8x64xf32>
    %217 = vector.shape_cast %216 : vector<1x8x64xf32> to vector<8x64xf32>
    %218 = vector.shape_cast %215 : vector<8x64xf32> to vector<1x8x64xf32>
    tpu.vector_store %arg6[%c0_176, %c0_177, %c0_178], %218 {strides = array<i32>} : memref<1x8x64xf32, #tpu.memory_space<vmem>>, vector<1x8x64xf32>,
    return
  }
  func.func @transform_0(%arg0: i32) -> (i32, i32, i32) {
    %c0_i32 = arith.constant 0 : i32
    %c0_i32_0 = arith.constant 0 : i32
    %c0_i32_1 = arith.constant 0 : i32
    return %arg0, %c0_i32, %c0_i32_0 : i32, i32, i32
  }
  func.func @transform_1(%arg0: i32) -> (i32, i32, i32) {
    %c0_i32 = arith.constant 0 : i32
    %c0_i32_0 = arith.constant 0 : i32
    %c0_i32_1 = arith.constant 0 : i32
    %c0_i32_2 = arith.constant 0 : i32
    return %c0_i32, %c0_i32_0, %c0_i32_1 : i32, i32, i32
  }
  func.func @transform_2(%arg0: i32) -> (i32, i32) {
    %c0_i32 = arith.constant 0 : i32
    %c0_i32_0 = arith.constant 0 : i32
    %c0_i32_1 = arith.constant 0 : i32
    return %c0_i32, %c0_i32_0 : i32, i32
  }
  func.func @transform_3(%arg0: i32) -> (i32, i32) {
    %c0_i32 = arith.constant 0 : i32
    %c0_i32_0 = arith.constant 0 : i32
    %c0_i32_1 = arith.constant 0 : i32
    return %c0_i32, %c0_i32_0 : i32, i32
  }
  func.func @transform_4(%arg0: i32) -> (i32, i32) {
    %c0_i32 = arith.constant 0 : i32
    %c0_i32_0 = arith.constant 0 : i32
    %c0_i32_1 = arith.constant 0 : i32
    return %c0_i32, %c0_i32_0 : i32, i32
  }
  func.func @transform_5(%arg0: i32) -> (i32, i32, i32) {
    %c0_i32 = arith.constant 0 : i32
    %c0_i32_0 = arith.constant 0 : i32
    %c0_i32_1 = arith.constant 0 : i32
    return %arg0, %c0_i32, %c0_i32_0 : i32, i32, i32
  }
}

</mosaic_0001>

<llo_original>
// kernel: tpu_custom_call.1
$region0: #{tpu_custom_call.1}
  #allocation0 [shape = 'u32[]', space=smem, size = 0x4, offset = 0x4, fixed_abs, tag = 'smem constant byte address 0x4 - core index']
  #allocation1 [shape = 'u32[72,128]{1,0:T(1,128)}', space=vmem, size = 0x9000, scoped, tag = 'internal scratch']
  #allocation2 [shape = 'f32[8,1280]{1,0:T(8,128)}', space=vmem, size = 0xa000, scoped, tag = 'scratch operand']
  #allocation3 [shape = 'f32[8,1280]{1,0:T(8,128)}', space=vmem, size = 0xa000, scoped, tag = 'scratch operand']
  #allocation4 [shape = 'f32[8,1280]{1,0:T(8,128)}', space=vmem, size = 0xa000, scoped, tag = 'scratch operand']
  %s0 = inlined_call_operand.vmem [shape: f32[2,4,1222], index: 0, kind: input, shape index: {}]
  %s1 = inlined_call_operand.vmem [shape: f32[27,8,4], index: 1, kind: input, shape index: {}]
  %s2 = inlined_call_operand.vmem [shape: f32[8,1], index: 2, kind: input, shape index: {}]
  %s3 = inlined_call_operand.vmem [shape: f32[1,1000], index: 3, kind: input, shape index: {}]
  %s4 = inlined_call_operand.vmem [shape: f32[1000,64], index: 4, kind: input, shape index: {}]
  %s5 = inlined_call_operand.hbm [shape: f32[2,8,64], index: 5, kind: output, shape index: {}]
  %s6 = sld [smem:[#allocation0]]
  $region53: #{tpu_custom_call.1} parent=0
    _
  %s8 = ssub.s32 1, %s6
  %s9 = scalar_select 0, %s8, %s6
  $region1: #{tpu_custom_call.1} parent=0
    #allocation5 [shape = 'u8[8192]{0}', space=vmem, size = 0x2000, scoped, tag = 'output window, operand 0']
    #allocation6 [shape = 's32[2]{0}', space=sflag, size = 0x8, scoped, tag = 'scoped memory for tpu_custom_call.1']
    %10 = vsyncpa [#allocation6], 0
    %s11 = scalar_lea.sflag [#allocation6], 1
    %12 = vsyncpa %s11, 0
    loop: start=0, step=1, limit=4
    $region2: #{tpu_custom_call.1} parent=1 // loop_pre_header
      _
    $region3: #{tpu_custom_call.1} parent=1 // loop_header
      %s14 = sphi 0, %s18
      %p15 = scmp.ge.s32.totalorder %s14, 4
      %s24 = sphi 0, %s26
      %s27 = sphi 0, %s24
      %s28 = sphi 0, %s27
      %s44 = sphi 0, %s28
      %s48 = sphi 0, %s48
      %s50 = sphi 0, %s48
      %s51 = sphi 0, %s50
      %s65 = sphi 0, %s51
      %s69 = sphi 0, %s69
      %s71 = sphi 0, %s69
      %s72 = sphi 0, %s71
      %s86 = sphi 0, %s72
      %s90 = sphi 0, %s90
      %s92 = sphi 0, %s90
      %s93 = sphi 0, %s92
      %s107 = sphi 0, %s93
      %s111 = sphi 0, %s111
      %s113 = sphi 0, %s111
      %s114 = sphi 0, %s113
      %s128 = sphi 0, %s114
      %s134 = sphi 0, %s136
      %s137 = sphi 0, %s134
      %s138 = sphi 0, %s137
      %s154 = sphi 0, %s138
    $region4: #{tpu_custom_call.1} parent=1 // loop_header_branch
      %17 = sbr.rel (%p15) target = $region8
    $region5: #{tpu_custom_call.1} parent=1 // loop_body
      %s19 = ssub.s32 %s14, 1
      %s20 = ssub.s32 %s14, 2
      %s21 = sadd.s32 %s14, 1
      %s22 = ssub.s32 %s14, %s21
      %p23 = scmp.eq.s32.totalorder %s22, 0
      %s25 = sadd.s32 %s24, 1
      %s26 = scalar_select %p23, %s24, %s25
      %p29 = pneg %p23
      %p30 = scmp.eq.s32.totalorder %s14, 1
      %p31 = por %p29, %p30
      %p32 = scmp.ne.s32.totalorder %s24, %s27
      %p33 = scmp.eq.s32.totalorder %s14, 0
      %p34 = por %p32, %p33
      %p35 = scmp.ne.s32.totalorder %s24, %s27
      %p36 = scmp.eq.s32.totalorder %s19, 1
      %p37 = por %p35, %p36
      %p38 = scmp.ne.s32.totalorder %s27, %s28
      %p39 = scmp.eq.s32.totalorder %s19, 0
      %p40 = por %p38, %p39
      %p41 = scmp.ne.s32.totalorder %s27, %s28
      %p42 = scmp.eq.s32.totalorder %s20, 1
      %p43 = por %p41, %p42
      %p45 = scmp.ne.s32.totalorder %s28, %s44
      %p46 = scmp.eq.s32.totalorder %s20, 0
      %p47 = por %p45, %p46
      %s49 = sadd.s32 %s48, 1
      %p52 = scmp.eq.s32.totalorder %s14, 1
      %p53 = scmp.ne.s32.totalorder %s48, %s50
      %p54 = scmp.eq.s32.totalorder %s14, 0
      %p55 = por %p53, %p54
      %p56 = scmp.ne.s32.totalorder %s48, %s50
      %p57 = scmp.eq.s32.totalorder %s19, 1
      %p58 = por %p56, %p57
      %p59 = scmp.ne.s32.totalorder %s50, %s51
      %p60 = scmp.eq.s32.totalorder %s19, 0
      %p61 = por %p59, %p60
      %p62 = scmp.ne.s32.totalorder %s50, %s51
      %p63 = scmp.eq.s32.totalorder %s20, 1
      %p64 = por %p62, %p63
      %p66 = scmp.ne.s32.totalorder %s51, %s65
      %p67 = scmp.eq.s32.totalorder %s20, 0
      %p68 = por %p66, %p67
      %s70 = sadd.s32 %s69, 1
      %p73 = scmp.eq.s32.totalorder %s14, 1
      %p74 = scmp.ne.s32.totalorder %s69, %s71
      %p75 = scmp.eq.s32.totalorder %s14, 0
      %p76 = por %p74, %p75
      %p77 = scmp.ne.s32.totalorder %s69, %s71
      %p78 = scmp.eq.s32.totalorder %s19, 1
      %p79 = por %p77, %p78
      %p80 = scmp.ne.s32.totalorder %s71, %s72
      %p81 = scmp.eq.s32.totalorder %s19, 0
      %p82 = por %p80, %p81
      %p83 = scmp.ne.s32.totalorder %s71, %s72
      %p84 = scmp.eq.s32.totalorder %s20, 1
      %p85 = por %p83, %p84
      %p87 = scmp.ne.s32.totalorder %s72, %s86
      %p88 = scmp.eq.s32.totalorder %s20, 0
      %p89 = por %p87, %p88
      %s91 = sadd.s32 %s90, 1
      %p94 = scmp.eq.s32.totalorder %s14, 1
      %p95 = scmp.ne.s32.totalorder %s90, %s92
      %p96 = scmp.eq.s32.totalorder %s14, 0
      %p97 = por %p95, %p96
      %p98 = scmp.ne.s32.totalorder %s90, %s92
      %p99 = scmp.eq.s32.totalorder %s19, 1
      %p100 = por %p98, %p99
      %p101 = scmp.ne.s32.totalorder %s92, %s93
      %p102 = scmp.eq.s32.totalorder %s19, 0
      %p103 = por %p101, %p102
      %p104 = scmp.ne.s32.totalorder %s92, %s93
      %p105 = scmp.eq.s32.totalorder %s20, 1
      %p106 = por %p104, %p105
      %p108 = scmp.ne.s32.totalorder %s93, %s107
      %p109 = scmp.eq.s32.totalorder %s20, 0
      %p110 = por %p108, %p109
      %s112 = sadd.s32 %s111, 1
      %p115 = scmp.eq.s32.totalorder %s14, 1
      %p116 = scmp.ne.s32.totalorder %s111, %s113
      %p117 = scmp.eq.s32.totalorder %s14, 0
      %p118 = por %p116, %p117
      %p119 = scmp.ne.s32.totalorder %s111, %s113
      %p120 = scmp.eq.s32.totalorder %s19, 1
      %p121 = por %p119, %p120
      %p122 = scmp.ne.s32.totalorder %s113, %s114
      %p123 = scmp.eq.s32.totalorder %s19, 0
      %p124 = por %p122, %p123
      %p125 = scmp.ne.s32.totalorder %s113, %s114
      %p126 = scmp.eq.s32.totalorder %s20, 1
      %p127 = por %p125, %p126
      %p129 = scmp.ne.s32.totalorder %s114, %s128
      %p130 = scmp.eq.s32.totalorder %s20, 0
      %p131 = por %p129, %p130
      %s132 = ssub.s32 %s14, %s21
      %p133 = scmp.eq.s32.totalorder %s132, 0
      %s135 = sadd.s32 %s134, 1
      %s136 = scalar_select %p133, %s134, %s135
      %p139 = pneg %p133
      %p140 = scmp.eq.s32.totalorder %s14, 1
      %p141 = por %p139, %p140
      %p142 = scmp.ne.s32.totalorder %s134, %s137
      %p143 = scmp.eq.s32.totalorder %s14, 0
      %p144 = por %p142, %p143
      %p145 = scmp.ne.s32.totalorder %s134, %s137
      %p146 = scmp.eq.s32.totalorder %s19, 1
      %p147 = por %p145, %p146
      %p148 = scmp.ne.s32.totalorder %s137, %s138
      %p149 = scmp.eq.s32.totalorder %s19, 0
      %p150 = por %p148, %p149
      %p151 = scmp.ne.s32.totalorder %s137, %s138
      %p152 = scmp.eq.s32.totalorder %s20, 1
      %p153 = por %p151, %p152
      %p155 = scmp.ne.s32.totalorder %s138, %s154
      %p156 = scmp.eq.s32.totalorder %s20, 0
      %p157 = por %p155, %p156
      %p158 = scmp.le.s32.totalorder 1, %s14
      %p159 = scmp.lt.s32.totalorder %s14, 3
      %p160 = pnand %p158, %p159
      %p161 = pneg %p160
      // Predicated region
      $region9: #{tpu_custom_call.1} parent=5 // pred_check
        _
      $region10: #{tpu_custom_call.1} parent=5 // pred_check_branch
        %163 = sbr.rel (%p160) target = $region12
      $region11: #{tpu_custom_call.1} parent=5 // pred_region
        %s164 = ssub.s32 %s14, 1
        // Predicated region
        $region13: #{tpu_custom_call.1} parent=11 // pred_check
          %p165 = pneg %p61
        $region14: #{tpu_custom_call.1} parent=11 // pred_check_branch
          %167 = sbr.rel (%p165) target = $region16
        $region15: #{tpu_custom_call.1} parent=11 // pred_region
          _
        $region16: #{tpu_custom_call.1} parent=11 // pred_fallthru
          _
        // Predicated region
        $region17: #{tpu_custom_call.1} parent=11 // pred_check
          %p168 = pneg %p82
        $region18: #{tpu_custom_call.1} parent=11 // pred_check_branch
          %170 = sbr.rel (%p168) target = $region20
        $region19: #{tpu_custom_call.1} parent=11 // pred_region
          _
        $region20: #{tpu_custom_call.1} parent=11 // pred_fallthru
          _
        // Predicated region
        $region21: #{tpu_custom_call.1} parent=11 // pred_check
          %p171 = pneg %p103
        $region22: #{tpu_custom_call.1} parent=11 // pred_check_branch
          %173 = sbr.rel (%p171) target = $region24
        $region23: #{tpu_custom_call.1} parent=11 // pred_region
          _
        $region24: #{tpu_custom_call.1} parent=11 // pred_fallthru
          _
        // Predicated region
        $region25: #{tpu_custom_call.1} parent=11 // pred_check
          %p174 = pneg %p124
        $region26: #{tpu_custom_call.1} parent=11 // pred_check_branch
          %176 = sbr.rel (%p174) target = $region28
        $region27: #{tpu_custom_call.1} parent=11 // pred_region
          _
        $region28: #{tpu_custom_call.1} parent=11 // pred_fallthru
          _
      $region12: #{tpu_custom_call.1} parent=5 // pred_fallthru
        _
      %p177 = scmp.lt.s32.totalorder %s14, 2
      // Predicated region
      $region29: #{tpu_custom_call.1} parent=5 // pred_check
        %p178 = pneg %p177
      $region30: #{tpu_custom_call.1} parent=5 // pred_check_branch
        %180 = sbr.rel (%p178) target = $region32
      $region31: #{tpu_custom_call.1} parent=5 // pred_region
        // Predicated region
        $region33: #{tpu_custom_call.1} parent=31 // pred_check
          %p181 = pneg %p34
        $region34: #{tpu_custom_call.1} parent=31 // pred_check_branch
          %183 = sbr.rel (%p181) target = $region36
        $region35: #{tpu_custom_call.1} parent=31 // pred_region
          %p184 = scmp.lt.s32.totalorder %s14, 1
          %s185 = scalar_select %p184, %s14, 1
          %s186 = smul.addr %s185, 10
          %s187 = smul.addr %s186, 4
          %s188 = scalar_lea.vmem %s0, %s187
        $region36: #{tpu_custom_call.1} parent=31 // pred_fallthru
          _
      $region32: #{tpu_custom_call.1} parent=5 // pred_fallthru
        _
      %p189 = scmp.le.s32.totalorder 1, %s14
      %p190 = scmp.lt.s32.totalorder %s14, 3
      %p191 = pnand %p189, %p190
      %p192 = pneg %p191
      // Predicated region
      $region37: #{tpu_custom_call.1} parent=5 // pred_check
        _
      $region38: #{tpu_custom_call.1} parent=5 // pred_check_branch
        %194 = sbr.rel (%p191) target = $region40
      $region39: #{tpu_custom_call.1} parent=5 // pred_region
        %s195 = ssub.s32 %s14, 1
        %p196 = scmp.lt.s32.totalorder %s19, 1
        %s197 = scalar_select %p196, %s19, 1
        %s198 = smul.addr %s197, 10
        %s199 = smul.addr %s198, 4
        %s200 = scalar_lea.vmem %s0, %s199
        %p201 = pneg %p40
        %p202 = pneg %p37
        %p203 = pneg %p61
        %p204 = pneg %p58
        %p205 = pneg %p82
        %p206 = pneg %p79
        %p207 = pneg %p103
        %p208 = pneg %p100
        %p209 = pneg %p124
        %p210 = pneg %p121
        %p211 = pneg %p150
        %p212 = pneg %p147
        %s213 = sand.u32 %s137, 1
        %s214 = scalar_lea.sflag [#allocation6], %s213
        %s215 = sand.u32 %s137, 1
        %s216 = smul.addr %s215, 8
        %s217 = scalar_lea.vmem [#allocation5], %s216
        %p218 = scmp.lt.s32.totalorder %s19, 1
        %s219 = scalar_select %p218, %s19, 1
        %s220 = smul.addr %s219, 10
        %s221 = smul.addr %s220, 4
        %s222 = scalar_lea.vmem %s0, %s221
        %v223 = vld [vmem:[%s222] sm:$0xff]
        %v224 = vld [vmem:[%s222 + $0x8] sm:$0xff]
        %v225 = vld [vmem:[%s222 + $0x10] sm:$0xff]
        %v226 = vld [vmem:[%s222 + $0x18] sm:$0xff]
        %v227 = vld [vmem:[%s1] sm:$0xff]
        %s228 = scalar_lea.vmem %s1, 8
        %v229 = vld [vmem:[%s228] sm:$0xff]
        %234 = vst [vmem:[#allocation1] ss:$2 sm:$0xff] %v223
        %s235 = scalar_lea.vmem [#allocation1], 16
        %236 = vst [vmem:[%s235] ss:$2 sm:$0xff] %v224
        %s237 = scalar_lea.vmem [#allocation1], 32
        %238 = vst [vmem:[%s237] ss:$2 sm:$0xff] %v225
        %s239 = scalar_lea.vmem [#allocation1], 48
        %240 = vst [vmem:[%s239] ss:$2 sm:$0xff] %v226
        %v241 = vld.sshfl [vmem:[#allocation1] sm:$0xff pattern:$0x75316420]
        %v242 = vld.sshfl [vmem:[#allocation1 + $0x8] sm:$0xff pattern:$0x75316420]
        %v243 = vld.sshfl [vmem:[#allocation1 + $0x10] sm:$0xff pattern:$0x75316420]
        %v244 = vld.sshfl [vmem:[#allocation1 + $0x18] sm:$0xff pattern:$0x75316420]
        %v245 = vld.sshfl [vmem:[#allocation1 + $0x20] sm:$0xff pattern:$0x75316420]
        %v246 = vld.sshfl [vmem:[#allocation1 + $0x28] sm:$0xff pattern:$0x75316420]
        %v247 = vld.sshfl [vmem:[#allocation1 + $0x30] sm:$0xff pattern:$0x75316420]
        %v248 = vld.sshfl [vmem:[#allocation1 + $0x38] sm:$0xff pattern:$0x75316420]
        %249 = vrot.lane.b32.xlu0 %v241, 127
        %v250 = vpop.permute.xlu0 %249
        %251 = vrot.lane.b32.xlu0 %v242, 127
        %v252 = vpop.permute.xlu0 %251
        %253 = vrot.lane.b32.xlu0 %v243, 127
        %v254 = vpop.permute.xlu0 %253
        %255 = vrot.lane.b32.xlu0 %v244, 127
        %v256 = vpop.permute.xlu0 %255
        %257 = vrot.lane.b32.xlu0 %v245, 127
        %v258 = vpop.permute.xlu0 %257
        %259 = vrot.lane.b32.xlu0 %v246, 127
        %v260 = vpop.permute.xlu0 %259
        %261 = vrot.lane.b32.xlu0 %v247, 127
        %v262 = vpop.permute.xlu0 %261
        %263 = vrot.lane.b32.xlu0 %v248, 127
        %v264 = vpop.permute.xlu0 %263
        %vm265 = vcmask 1039360
        %v266 = vsel %vm265, %v250, %v252
        %v267 = vsel %vm265, %v252, %v254
        %v268 = vsel %vm265, %v254, %v256
        %v269 = vsel %vm265, %v256, %v258
        %v270 = vsel %vm265, %v258, %v260
        %v271 = vsel %vm265, %v260, %v262
        %v272 = vsel %vm265, %v262, %v264
        %vm273 = vcmask 31744
        %v275 = vsel %vm273, %v229, 0
        %vm277 = vcmask 1043456
        %v278 = vsel %vm277, %v266, 0
        %v280 = vsel %vm277, %v267, 0
        %v282 = vsel %vm277, %v268, 0
        %v284 = vsel %vm277, %v269, 0
        %v286 = vsel %vm277, %v270, 0
        %v288 = vsel %vm277, %v271, 0
        %v290 = vsel %vm277, %v272, 0
        %v292 = vsel %vm277, %v264, 0
        %294 = vmatpush.msra.mxu0 0.0
        %295 = vmatpush.msra.mxu0 0.0
        %296 = vmatpush.msra.mxu0 0.0
        %297 = vmatpush.msra.mxu0 0.0
        %298 = vmatpush.msra.mxu0 0.0
        %299 = vmatpush.msra.mxu0 0.0
        %300 = vmatpush.msra.mxu0 0.0
        %301 = vmatpush.msra.mxu0 0.0
        %302 = vmatpush.msra.mxu0 0.0
        %303 = vmatpush.msra.mxu0 0.0
        %304 = vmatpush.msra.mxu0 0.0
        %305 = vmatpush.msra.mxu0 0.0
        %306 = vmatpush.msra.mxu0 0.0
        %307 = vmatpush.msra.mxu0 0.0
        %308 = vmatpush.msra.mxu0 0.0
        %309 = vmatpush.msra.mxu0 %v278
        %310 = vmatmul.f32.gmra.mxu0 %v275
        %v311 = vpop.f32.mrf.mxu0
        %v312 = vadd.f32 0.0, %v311
        %313 = vdwg.mxu0
        %314 = vmatpush.msra.mxu0 0.0
        %315 = vmatpush.msra.mxu0 0.0
        %316 = vmatpush.msra.mxu0 0.0
        %317 = vmatpush.msra.mxu0 0.0
        %318 = vmatpush.msra.mxu0 0.0
        %319 = vmatpush.msra.mxu0 0.0
        %320 = vmatpush.msra.mxu0 0.0
        %321 = vmatpush.msra.mxu0 0.0
        %322 = vmatpush.msra.mxu0 0.0
        %323 = vmatpush.msra.mxu0 0.0
        %324 = vmatpush.msra.mxu0 0.0
        %325 = vmatpush.msra.mxu0 0.0
        %326 = vmatpush.msra.mxu0 0.0
        %327 = vmatpush.msra.mxu0 0.0
        %328 = vmatpush.msra.mxu0 0.0
        %329 = vmatpush.msra.mxu0 %v280
        %330 = vmatmul.f32.gmra.mxu0 %v275
        %v331 = vpop.f32.mrf.mxu0
        %v332 = vadd.f32 0.0, %v331
        %333 = vdwg.mxu0
        %334 = vmatpush.msra.mxu0 0.0
        %335 = vmatpush.msra.mxu0 0.0
        %336 = vmatpush.msra.mxu0 0.0
        %337 = vmatpush.msra.mxu0 0.0
        %338 = vmatpush.msra.mxu0 0.0
        %339 = vmatpush.msra.mxu0 0.0
        %340 = vmatpush.msra.mxu0 0.0
        %341 = vmatpush.msra.mxu0 0.0
        %342 = vmatpush.msra.mxu0 0.0
        %343 = vmatpush.msra.mxu0 0.0
        %344 = vmatpush.msra.mxu0 0.0
        %345 = vmatpush.msra.mxu0 0.0
        %346 = vmatpush.msra.mxu0 0.0
        %347 = vmatpush.msra.mxu0 0.0
        %348 = vmatpush.msra.mxu0 0.0
        %349 = vmatpush.msra.mxu0 %v282
        %350 = vmatmul.f32.gmra.mxu0 %v275
        %v351 = vpop.f32.mrf.mxu0
        %v352 = vadd.f32 0.0, %v351
        %353 = vdwg.mxu0
        %354 = vmatpush.msra.mxu0 0.0
        %355 = vmatpush.msra.mxu0 0.0
        %356 = vmatpush.msra.mxu0 0.0
        %357 = vmatpush.msra.mxu0 0.0
        %358 = vmatpush.msra.mxu0 0.0
        %359 = vmatpush.msra.mxu0 0.0
        %360 = vmatpush.msra.mxu0 0.0
        %361 = vmatpush.msra.mxu0 0.0
        %362 = vmatpush.msra.mxu0 0.0
        %363 = vmatpush.msra.mxu0 0.0
        %364 = vmatpush.msra.mxu0 0.0
        %365 = vmatpush.msra.mxu0 0.0
        %366 = vmatpush.msra.mxu0 0.0
        %367 = vmatpush.msra.mxu0 0.0
        %368 = vmatpush.msra.mxu0 0.0
        %369 = vmatpush.msra.mxu0 %v284
        %370 = vmatmul.f32.gmra.mxu0 %v275
        %v371 = vpop.f32.mrf.mxu0
        %v372 = vadd.f32 0.0, %v371
        %373 = vdwg.mxu0
        %374 = vmatpush.msra.mxu0 0.0
        %375 = vmatpush.msra.mxu0 0.0
        %376 = vmatpush.msra.mxu0 0.0
        %377 = vmatpush.msra.mxu0 0.0
        %378 = vmatpush.msra.mxu0 0.0
        %379 = vmatpush.msra.mxu0 0.0
        %380 = vmatpush.msra.mxu0 0.0
        %381 = vmatpush.msra.mxu0 0.0
        %382 = vmatpush.msra.mxu0 0.0
        %383 = vmatpush.msra.mxu0 0.0
        %384 = vmatpush.msra.mxu0 0.0
        %385 = vmatpush.msra.mxu0 0.0
        %386 = vmatpush.msra.mxu0 0.0
        %387 = vmatpush.msra.mxu0 0.0
        %388 = vmatpush.msra.mxu0 0.0
        %389 = vmatpush.msra.mxu0 %v286
        %390 = vmatmul.f32.gmra.mxu0 %v275
        %v391 = vpop.f32.mrf.mxu0
        %v392 = vadd.f32 0.0, %v391
        %393 = vdwg.mxu0
        %394 = vmatpush.msra.mxu0 0.0
        %395 = vmatpush.msra.mxu0 0.0
        %396 = vmatpush.msra.mxu0 0.0
        %397 = vmatpush.msra.mxu0 0.0
        %398 = vmatpush.msra.mxu0 0.0
        %399 = vmatpush.msra.mxu0 0.0
        %400 = vmatpush.msra.mxu0 0.0
        %401 = vmatpush.msra.mxu0 0.0
        %402 = vmatpush.msra.mxu0 0.0
        %403 = vmatpush.msra.mxu0 0.0
        %404 = vmatpush.msra.mxu0 0.0
        %405 = vmatpush.msra.mxu0 0.0
        %406 = vmatpush.msra.mxu0 0.0
        %407 = vmatpush.msra.mxu0 0.0
        %408 = vmatpush.msra.mxu0 0.0
        %409 = vmatpush.msra.mxu0 %v288
        %410 = vmatmul.f32.gmra.mxu0 %v275
        %v411 = vpop.f32.mrf.mxu0
        %v412 = vadd.f32 0.0, %v411
        %413 = vdwg.mxu0
        %414 = vmatpush.msra.mxu0 0.0
        %415 = vmatpush.msra.mxu0 0.0
        %416 = vmatpush.msra.mxu0 0.0
        %417 = vmatpush.msra.mxu0 0.0
        %418 = vmatpush.msra.mxu0 0.0
        %419 = vmatpush.msra.mxu0 0.0
        %420 = vmatpush.msra.mxu0 0.0
        %421 = vmatpush.msra.mxu0 0.0
        %422 = vmatpush.msra.mxu0 0.0
        %423 = vmatpush.msra.mxu0 0.0
        %424 = vmatpush.msra.mxu0 0.0
        %425 = vmatpush.msra.mxu0 0.0
        %426 = vmatpush.msra.mxu0 0.0
        %427 = vmatpush.msra.mxu0 0.0
        %428 = vmatpush.msra.mxu0 0.0
        %429 = vmatpush.msra.mxu0 %v290
        %430 = vmatmul.f32.gmra.mxu0 %v275
        %v431 = vpop.f32.mrf.mxu0
        %v432 = vadd.f32 0.0, %v431
        %433 = vdwg.mxu0
        %434 = vmatpush.msra.mxu0 0.0
        %435 = vmatpush.msra.mxu0 0.0
        %436 = vmatpush.msra.mxu0 0.0
        %437 = vmatpush.msra.mxu0 0.0
        %438 = vmatpush.msra.mxu0 0.0
        %439 = vmatpush.msra.mxu0 0.0
        %440 = vmatpush.msra.mxu0 0.0
        %441 = vmatpush.msra.mxu0 0.0
        %442 = vmatpush.msra.mxu0 0.0
        %443 = vmatpush.msra.mxu0 0.0
        %444 = vmatpush.msra.mxu0 0.0
        %445 = vmatpush.msra.mxu0 0.0
        %446 = vmatpush.msra.mxu0 0.0
        %447 = vmatpush.msra.mxu0 0.0
        %448 = vmatpush.msra.mxu0 0.0
        %449 = vmatpush.msra.mxu0 %v292
        %450 = vmatmul.f32.gmra.mxu0 %v275
        %v451 = vpop.f32.mrf.mxu0
        %v452 = vadd.f32 0.0, %v451
        %453 = vdwg.mxu0
        %454 = vst [vmem:[#allocation1] ss:$2 sm:$0xff] %v223
        %s455 = scalar_lea.vmem [#allocation1], 16
        %456 = vst [vmem:[%s455] ss:$2 sm:$0xff] %v224
        %s457 = scalar_lea.vmem [#allocation1], 32
        %458 = vst [vmem:[%s457] ss:$2 sm:$0xff] %v225
        %s459 = scalar_lea.vmem [#allocation1], 48
        %460 = vst [vmem:[%s459] ss:$2 sm:$0xff] %v226
        %v461 = vld.sshfl [vmem:[#allocation1] sm:$0xff pattern:$0x75316420]
        %v462 = vld.sshfl [vmem:[#allocation1 + $0x8] sm:$0xff pattern:$0x75316420]
        %v463 = vld.sshfl [vmem:[#allocation1 + $0x10] sm:$0xff pattern:$0x75316420]
        %v464 = vld.sshfl [vmem:[#allocation1 + $0x18] sm:$0xff pattern:$0x75316420]
        %v465 = vld.sshfl [vmem:[#allocation1 + $0x20] sm:$0xff pattern:$0x75316420]
        %v466 = vld.sshfl [vmem:[#allocation1 + $0x28] sm:$0xff pattern:$0x75316420]
        %v467 = vld.sshfl [vmem:[#allocation1 + $0x30] sm:$0xff pattern:$0x75316420]
        %v468 = vld.sshfl [vmem:[#allocation1 + $0x38] sm:$0xff pattern:$0x75316420]
        %v470 = vsel %vm273, %v227, 0
        %v472 = vsel %vm277, %v461, 0
        %v474 = vsel %vm277, %v462, 0
        %v476 = vsel %vm277, %v463, 0
        %v478 = vsel %vm277, %v464, 0
        %v480 = vsel %vm277, %v465, 0
        %v482 = vsel %vm277, %v466, 0
        %v484 = vsel %vm277, %v467, 0
        %v486 = vsel %vm277, %v468, 0
        %488 = vmatpush.msra.mxu0 0.0
        %489 = vmatpush.msra.mxu0 0.0
        %490 = vmatpush.msra.mxu0 0.0
        %491 = vmatpush.msra.mxu0 0.0
        %492 = vmatpush.msra.mxu0 0.0
        %493 = vmatpush.msra.mxu0 0.0
        %494 = vmatpush.msra.mxu0 0.0
        %495 = vmatpush.msra.mxu0 0.0
        %496 = vmatpush.msra.mxu0 0.0
        %497 = vmatpush.msra.mxu0 0.0
        %498 = vmatpush.msra.mxu0 0.0
        %499 = vmatpush.msra.mxu0 0.0
        %500 = vmatpush.msra.mxu0 0.0
        %501 = vmatpush.msra.mxu0 0.0
        %502 = vmatpush.msra.mxu0 0.0
        %503 = vmatpush.msra.mxu0 %v472
        %504 = vmatmul.f32.gmra.mxu0 %v470
        %v505 = vpop.f32.mrf.mxu0
        %v506 = vadd.f32 %v312, %v505
        %507 = vdwg.mxu0
        %508 = vmatpush.msra.mxu0 0.0
        %509 = vmatpush.msra.mxu0 0.0
        %510 = vmatpush.msra.mxu0 0.0
        %511 = vmatpush.msra.mxu0 0.0
        %512 = vmatpush.msra.mxu0 0.0
        %513 = vmatpush.msra.mxu0 0.0
        %514 = vmatpush.msra.mxu0 0.0
        %515 = vmatpush.msra.mxu0 0.0
        %516 = vmatpush.msra.mxu0 0.0
        %517 = vmatpush.msra.mxu0 0.0
        %518 = vmatpush.msra.mxu0 0.0
        %519 = vmatpush.msra.mxu0 0.0
        %520 = vmatpush.msra.mxu0 0.0
        %521 = vmatpush.msra.mxu0 0.0
        %522 = vmatpush.msra.mxu0 0.0
        %523 = vmatpush.msra.mxu0 %v474
        %524 = vmatmul.f32.gmra.mxu0 %v470
        %v525 = vpop.f32.mrf.mxu0
        %v526 = vadd.f32 %v332, %v525
        %527 = vdwg.mxu0
        %528 = vmatpush.msra.mxu0 0.0
        %529 = vmatpush.msra.mxu0 0.0
        %530 = vmatpush.msra.mxu0 0.0
        %531 = vmatpush.msra.mxu0 0.0
        %532 = vmatpush.msra.mxu0 0.0
        %533 = vmatpush.msra.mxu0 0.0
        %534 = vmatpush.msra.mxu0 0.0
        %535 = vmatpush.msra.mxu0 0.0
        %536 = vmatpush.msra.mxu0 0.0
        %537 = vmatpush.msra.mxu0 0.0
        %538 = vmatpush.msra.mxu0 0.0
        %539 = vmatpush.msra.mxu0 0.0
        %540 = vmatpush.msra.mxu0 0.0
        %541 = vmatpush.msra.mxu0 0.0
        %542 = vmatpush.msra.mxu0 0.0
        %543 = vmatpush.msra.mxu0 %v476
        %544 = vmatmul.f32.gmra.mxu0 %v470
        %v545 = vpop.f32.mrf.mxu0
        %v546 = vadd.f32 %v352, %v545
        %547 = vdwg.mxu0
        %548 = vmatpush.msra.mxu0 0.0
        %549 = vmatpush.msra.mxu0 0.0
        %550 = vmatpush.msra.mxu0 0.0
        %551 = vmatpush.msra.mxu0 0.0
        %552 = vmatpush.msra.mxu0 0.0
        %553 = vmatpush.msra.mxu0 0.0
        %554 = vmatpush.msra.mxu0 0.0
        %555 = vmatpush.msra.mxu0 0.0
        %556 = vmatpush.msra.mxu0 0.0
        %557 = vmatpush.msra.mxu0 0.0
        %558 = vmatpush.msra.mxu0 0.0
        %559 = vmatpush.msra.mxu0 0.0
        %560 = vmatpush.msra.mxu0 0.0
        %561 = vmatpush.msra.mxu0 0.0
        %562 = vmatpush.msra.mxu0 0.0
        %563 = vmatpush.msra.mxu0 %v478
        %564 = vmatmul.f32.gmra.mxu0 %v470
        %v565 = vpop.f32.mrf.mxu0
        %v566 = vadd.f32 %v372, %v565
        %567 = vdwg.mxu0
        %568 = vmatpush.msra.mxu0 0.0
        %569 = vmatpush.msra.mxu0 0.0
        %570 = vmatpush.msra.mxu0 0.0
        %571 = vmatpush.msra.mxu0 0.0
        %572 = vmatpush.msra.mxu0 0.0
        %573 = vmatpush.msra.mxu0 0.0
        %574 = vmatpush.msra.mxu0 0.0
        %575 = vmatpush.msra.mxu0 0.0
        %576 = vmatpush.msra.mxu0 0.0
        %577 = vmatpush.msra.mxu0 0.0
        %578 = vmatpush.msra.mxu0 0.0
        %579 = vmatpush.msra.mxu0 0.0
        %580 = vmatpush.msra.mxu0 0.0
        %581 = vmatpush.msra.mxu0 0.0
        %582 = vmatpush.msra.mxu0 0.0
        %583 = vmatpush.msra.mxu0 %v480
        %584 = vmatmul.f32.gmra.mxu0 %v470
        %v585 = vpop.f32.mrf.mxu0
        %v586 = vadd.f32 %v392, %v585
        %587 = vdwg.mxu0
        %588 = vmatpush.msra.mxu0 0.0
        %589 = vmatpush.msra.mxu0 0.0
        %590 = vmatpush.msra.mxu0 0.0
        %591 = vmatpush.msra.mxu0 0.0
        %592 = vmatpush.msra.mxu0 0.0
        %593 = vmatpush.msra.mxu0 0.0
        %594 = vmatpush.msra.mxu0 0.0
        %595 = vmatpush.msra.mxu0 0.0
        %596 = vmatpush.msra.mxu0 0.0
        %597 = vmatpush.msra.mxu0 0.0
        %598 = vmatpush.msra.mxu0 0.0
        %599 = vmatpush.msra.mxu0 0.0
        %600 = vmatpush.msra.mxu0 0.0
        %601 = vmatpush.msra.mxu0 0.0
        %602 = vmatpush.msra.mxu0 0.0
        %603 = vmatpush.msra.mxu0 %v482
        %604 = vmatmul.f32.gmra.mxu0 %v470
        %v605 = vpop.f32.mrf.mxu0
        %v606 = vadd.f32 %v412, %v605
        %607 = vdwg.mxu0
        %608 = vmatpush.msra.mxu0 0.0
        %609 = vmatpush.msra.mxu0 0.0
        %610 = vmatpush.msra.mxu0 0.0
        %611 = vmatpush.msra.mxu0 0.0
        %612 = vmatpush.msra.mxu0 0.0
        %613 = vmatpush.msra.mxu0 0.0
        %614 = vmatpush.msra.mxu0 0.0
        %615 = vmatpush.msra.mxu0 0.0
        %616 = vmatpush.msra.mxu0 0.0
        %617 = vmatpush.msra.mxu0 0.0
        %618 = vmatpush.msra.mxu0 0.0
        %619 = vmatpush.msra.mxu0 0.0
        %620 = vmatpush.msra.mxu0 0.0
        %621 = vmatpush.msra.mxu0 0.0
        %622 = vmatpush.msra.mxu0 0.0
        %623 = vmatpush.msra.mxu0 %v484
        %624 = vmatmul.f32.gmra.mxu0 %v470
        %v625 = vpop.f32.mrf.mxu0
        %v626 = vadd.f32 %v432, %v625
        %627 = vdwg.mxu0
        %628 = vmatpush.msra.mxu0 0.0
        %629 = vmatpush.msra.mxu0 0.0
        %630 = vmatpush.msra.mxu0 0.0
        %631 = vmatpush.msra.mxu0 0.0
        %632 = vmatpush.msra.mxu0 0.0
        %633 = vmatpush.msra.mxu0 0.0
        %634 = vmatpush.msra.mxu0 0.0
        %635 = vmatpush.msra.mxu0 0.0
        %636 = vmatpush.msra.mxu0 0.0
        %637 = vmatpush.msra.mxu0 0.0
        %638 = vmatpush.msra.mxu0 0.0
        %639 = vmatpush.msra.mxu0 0.0
        %640 = vmatpush.msra.mxu0 0.0
        %641 = vmatpush.msra.mxu0 0.0
        %642 = vmatpush.msra.mxu0 0.0
        %643 = vmatpush.msra.mxu0 %v486
        %644 = vmatmul.f32.gmra.mxu0 %v470
        %v645 = vpop.f32.mrf.mxu0
        %v646 = vadd.f32 %v452, %v645
        %647 = vdwg.mxu0
        %v648 = vld [vmem:[%s222] sm:$0xff]
        %v649 = vld [vmem:[%s222 + $0x8] sm:$0xff]
        %v650 = vld [vmem:[%s222 + $0x10] sm:$0xff]
        %v651 = vld [vmem:[%s222 + $0x18] sm:$0xff]
        %s652 = scalar_lea.vmem %s1, 16
        %v653 = vld [vmem:[%s652] sm:$0xff]
        %658 = vst [vmem:[#allocation1] ss:$2 sm:$0xff] %v648
        %s659 = scalar_lea.vmem [#allocation1], 16
        %660 = vst [vmem:[%s659] ss:$2 sm:$0xff] %v649
        %s661 = scalar_lea.vmem [#allocation1], 32
        %662 = vst [vmem:[%s661] ss:$2 sm:$0xff] %v650
        %s663 = scalar_lea.vmem [#allocation1], 48
        %664 = vst [vmem:[%s663] ss:$2 sm:$0xff] %v651
        %v665 = vld.sshfl [vmem:[#allocation1] sm:$0xff pattern:$0x75316420]
        %v666 = vld.sshfl [vmem:[#allocation1 + $0x8] sm:$0xff pattern:$0x75316420]
        %v667 = vld.sshfl [vmem:[#allocation1 + $0x10] sm:$0xff pattern:$0x75316420]
        %v668 = vld.sshfl [vmem:[#allocation1 + $0x18] sm:$0xff pattern:$0x75316420]
        %v669 = vld.sshfl [vmem:[#allocation1 + $0x20] sm:$0xff pattern:$0x75316420]
        %v670 = vld.sshfl [vmem:[#allocation1 + $0x28] sm:$0xff pattern:$0x75316420]
        %v671 = vld.sshfl [vmem:[#allocation1 + $0x30] sm:$0xff pattern:$0x75316420]
        %v672 = vld.sshfl [vmem:[#allocation1 + $0x38] sm:$0xff pattern:$0x75316420]
        %673 = vrot.lane.b32.xlu0 %v665, 126
        %v674 = vpop.permute.xlu0 %673
        %675 = vrot.lane.b32.xlu0 %v666, 126
        %v676 = vpop.permute.xlu0 %675
        %677 = vrot.lane.b32.xlu0 %v667, 126
        %v678 = vpop.permute.xlu0 %677
        %679 = vrot.lane.b32.xlu0 %v668, 126
        %v680 = vpop.permute.xlu0 %679
        %681 = vrot.lane.b32.xlu0 %v669, 126
        %v682 = vpop.permute.xlu0 %681
        %683 = vrot.lane.b32.xlu0 %v670, 126
        %v684 = vpop.permute.xlu0 %683
        %685 = vrot.lane.b32.xlu0 %v671, 126
        %v686 = vpop.permute.xlu0 %685
        %687 = vrot.lane.b32.xlu0 %v672, 126
        %v688 = vpop.permute.xlu0 %687
        %vm689 = vcmask 1031168
        %v690 = vsel %vm689, %v674, %v676
        %v691 = vsel %vm689, %v676, %v678
        %v692 = vsel %vm689, %v678, %v680
        %v693 = vsel %vm689, %v680, %v682
        %v694 = vsel %vm689, %v682, %v684
        %v695 = vsel %vm689, %v684, %v686
        %v696 = vsel %vm689, %v686, %v688
        %v698 = vsel %vm273, %v653, 0
        %v700 = vsel %vm277, %v690, 0
        %v702 = vsel %vm277, %v691, 0
        %v704 = vsel %vm277, %v692, 0
        %v706 = vsel %vm277, %v693, 0
        %v708 = vsel %vm277, %v694, 0
        %v710 = vsel %vm277, %v695, 0
        %v712 = vsel %vm277, %v696, 0
        %v714 = vsel %vm277, %v688, 0
        %716 = vmatpush.msra.mxu0 0.0
        %717 = vmatpush.msra.mxu0 0.0
        %718 = vmatpush.msra.mxu0 0.0
        %719 = vmatpush.msra.mxu0 0.0
        %720 = vmatpush.msra.mxu0 0.0
        %721 = vmatpush.msra.mxu0 0.0
        %722 = vmatpush.msra.mxu0 0.0
        %723 = vmatpush.msra.mxu0 0.0
        %724 = vmatpush.msra.mxu0 0.0
        %725 = vmatpush.msra.mxu0 0.0
        %726 = vmatpush.msra.mxu0 0.0
        %727 = vmatpush.msra.mxu0 0.0
        %728 = vmatpush.msra.mxu0 0.0
        %729 = vmatpush.msra.mxu0 0.0
        %730 = vmatpush.msra.mxu0 0.0
        %731 = vmatpush.msra.mxu0 %v700
        %732 = vmatmul.f32.gmra.mxu0 %v698
        %v733 = vpop.f32.mrf.mxu0
        %v734 = vadd.f32 0.0, %v733
        %735 = vdwg.mxu0
        %736 = vmatpush.msra.mxu0 0.0
        %737 = vmatpush.msra.mxu0 0.0
        %738 = vmatpush.msra.mxu0 0.0
        %739 = vmatpush.msra.mxu0 0.0
        %740 = vmatpush.msra.mxu0 0.0
        %741 = vmatpush.msra.mxu0 0.0
        %742 = vmatpush.msra.mxu0 0.0
        %743 = vmatpush.msra.mxu0 0.0
        %744 = vmatpush.msra.mxu0 0.0
        %745 = vmatpush.msra.mxu0 0.0
        %746 = vmatpush.msra.mxu0 0.0
        %747 = vmatpush.msra.mxu0 0.0
        %748 = vmatpush.msra.mxu0 0.0
        %749 = vmatpush.msra.mxu0 0.0
        %750 = vmatpush.msra.mxu0 0.0
        %751 = vmatpush.msra.mxu0 %v702
        %752 = vmatmul.f32.gmra.mxu0 %v698
        %v753 = vpop.f32.mrf.mxu0
        %v754 = vadd.f32 0.0, %v753
        %755 = vdwg.mxu0
        %756 = vmatpush.msra.mxu0 0.0
        %757 = vmatpush.msra.mxu0 0.0
        %758 = vmatpush.msra.mxu0 0.0
        %759 = vmatpush.msra.mxu0 0.0
        %760 = vmatpush.msra.mxu0 0.0
        %761 = vmatpush.msra.mxu0 0.0
        %762 = vmatpush.msra.mxu0 0.0
        %763 = vmatpush.msra.mxu0 0.0
        %764 = vmatpush.msra.mxu0 0.0
        %765 = vmatpush.msra.mxu0 0.0
        %766 = vmatpush.msra.mxu0 0.0
        %767 = vmatpush.msra.mxu0 0.0
        %768 = vmatpush.msra.mxu0 0.0
        %769 = vmatpush.msra.mxu0 0.0
        %770 = vmatpush.msra.mxu0 0.0
        %771 = vmatpush.msra.mxu0 %v704
        %772 = vmatmul.f32.gmra.mxu0 %v698
        %v773 = vpop.f32.mrf.mxu0
        %v774 = vadd.f32 0.0, %v773
        %775 = vdwg.mxu0
        %776 = vmatpush.msra.mxu0 0.0
        %777 = vmatpush.msra.mxu0 0.0
        %778 = vmatpush.msra.mxu0 0.0
        %779 = vmatpush.msra.mxu0 0.0
        %780 = vmatpush.msra.mxu0 0.0
        %781 = vmatpush.msra.mxu0 0.0
        %782 = vmatpush.msra.mxu0 0.0
        %783 = vmatpush.msra.mxu0 0.0
        %784 = vmatpush.msra.mxu0 0.0
        %785 = vmatpush.msra.mxu0 0.0
        %786 = vmatpush.msra.mxu0 0.0
        %787 = vmatpush.msra.mxu0 0.0
        %788 = vmatpush.msra.mxu0 0.0
        %789 = vmatpush.msra.mxu0 0.0
        %790 = vmatpush.msra.mxu0 0.0
        %791 = vmatpush.msra.mxu0 %v706
        %792 = vmatmul.f32.gmra.mxu0 %v698
        %v793 = vpop.f32.mrf.mxu0
        %v794 = vadd.f32 0.0, %v793
        %795 = vdwg.mxu0
        %796 = vmatpush.msra.mxu0 0.0
        %797 = vmatpush.msra.mxu0 0.0
        %798 = vmatpush.msra.mxu0 0.0
        %799 = vmatpush.msra.mxu0 0.0
        %800 = vmatpush.msra.mxu0 0.0
        %801 = vmatpush.msra.mxu0 0.0
        %802 = vmatpush.msra.mxu0 0.0
        %803 = vmatpush.msra.mxu0 0.0
        %804 = vmatpush.msra.mxu0 0.0
        %805 = vmatpush.msra.mxu0 0.0
        %806 = vmatpush.msra.mxu0 0.0
        %807 = vmatpush.msra.mxu0 0.0
        %808 = vmatpush.msra.mxu0 0.0
        %809 = vmatpush.msra.mxu0 0.0
        %810 = vmatpush.msra.mxu0 0.0
        %811 = vmatpush.msra.mxu0 %v708
        %812 = vmatmul.f32.gmra.mxu0 %v698
        %v813 = vpop.f32.mrf.mxu0
        %v814 = vadd.f32 0.0, %v813
        %815 = vdwg.mxu0
        %816 = vmatpush.msra.mxu0 0.0
        %817 = vmatpush.msra.mxu0 0.0
        %818 = vmatpush.msra.mxu0 0.0
        %819 = vmatpush.msra.mxu0 0.0
        %820 = vmatpush.msra.mxu0 0.0
        %821 = vmatpush.msra.mxu0 0.0
        %822 = vmatpush.msra.mxu0 0.0
        %823 = vmatpush.msra.mxu0 0.0
        %824 = vmatpush.msra.mxu0 0.0
        %825 = vmatpush.msra.mxu0 0.0
        %826 = vmatpush.msra.mxu0 0.0
        %827 = vmatpush.msra.mxu0 0.0
        %828 = vmatpush.msra.mxu0 0.0
        %829 = vmatpush.msra.mxu0 0.0
        %830 = vmatpush.msra.mxu0 0.0
        %831 = vmatpush.msra.mxu0 %v710
        %832 = vmatmul.f32.gmra.mxu0 %v698
        %v833 = vpop.f32.mrf.mxu0
        %v834 = vadd.f32 0.0, %v833
        %835 = vdwg.mxu0
        %836 = vmatpush.msra.mxu0 0.0
        %837 = vmatpush.msra.mxu0 0.0
        %838 = vmatpush.msra.mxu0 0.0
        %839 = vmatpush.msra.mxu0 0.0
        %840 = vmatpush.msra.mxu0 0.0
        %841 = vmatpush.msra.mxu0 0.0
        %842 = vmatpush.msra.mxu0 0.0
        %843 = vmatpush.msra.mxu0 0.0
        %844 = vmatpush.msra.mxu0 0.0
        %845 = vmatpush.msra.mxu0 0.0
        %846 = vmatpush.msra.mxu0 0.0
        %847 = vmatpush.msra.mxu0 0.0
        %848 = vmatpush.msra.mxu0 0.0
        %849 = vmatpush.msra.mxu0 0.0
        %850 = vmatpush.msra.mxu0 0.0
        %851 = vmatpush.msra.mxu0 %v712
        %852 = vmatmul.f32.gmra.mxu0 %v698
        %v853 = vpop.f32.mrf.mxu0
        %v854 = vadd.f32 0.0, %v853
        %855 = vdwg.mxu0
        %856 = vmatpush.msra.mxu0 0.0
        %857 = vmatpush.msra.mxu0 0.0
        %858 = vmatpush.msra.mxu0 0.0
        %859 = vmatpush.msra.mxu0 0.0
        %860 = vmatpush.msra.mxu0 0.0
        %861 = vmatpush.msra.mxu0 0.0
        %862 = vmatpush.msra.mxu0 0.0
        %863 = vmatpush.msra.mxu0 0.0
        %864 = vmatpush.msra.mxu0 0.0
        %865 = vmatpush.msra.mxu0 0.0
        %866 = vmatpush.msra.mxu0 0.0
        %867 = vmatpush.msra.mxu0 0.0
        %868 = vmatpush.msra.mxu0 0.0
        %869 = vmatpush.msra.mxu0 0.0
        %870 = vmatpush.msra.mxu0 0.0
        %871 = vmatpush.msra.mxu0 %v714
        %872 = vmatmul.f32.gmra.mxu0 %v698
        %v873 = vpop.f32.mrf.mxu0
        %v874 = vadd.f32 0.0, %v873
        %875 = vdwg.mxu0
        %v876 = vadd.f32 %v506, %v734
        %v877 = vadd.f32 %v526, %v754
        %v878 = vadd.f32 %v546, %v774
        %v879 = vadd.f32 %v566, %v794
        %v880 = vadd.f32 %v586, %v814
        %v881 = vadd.f32 %v606, %v834
        %v882 = vadd.f32 %v626, %v854
        %v883 = vadd.f32 %v646, %v874
        %v884 = vld [vmem:[%s222] sm:$0xff]
        %v885 = vld [vmem:[%s222 + $0x8] sm:$0xff]
        %v886 = vld [vmem:[%s222 + $0x10] sm:$0xff]
        %v887 = vld [vmem:[%s222 + $0x18] sm:$0xff]
        %s888 = scalar_lea.vmem %s1, 24
        %v889 = vld [vmem:[%s888] sm:$0xff]
        %894 = vst [vmem:[#allocation1] ss:$2 sm:$0xff] %v884
        %s895 = scalar_lea.vmem [#allocation1], 16
        %896 = vst [vmem:[%s895] ss:$2 sm:$0xff] %v885
        %s897 = scalar_lea.vmem [#allocation1], 32
        %898 = vst [vmem:[%s897] ss:$2 sm:$0xff] %v886
        %s899 = scalar_lea.vmem [#allocation1], 48
        %900 = vst [vmem:[%s899] ss:$2 sm:$0xff] %v887
        %v901 = vld.sshfl [vmem:[#allocation1] sm:$0xff pattern:$0x75316420]
        %v902 = vld.sshfl [vmem:[#allocation1 + $0x8] sm:$0xff pattern:$0x75316420]
        %v903 = vld.sshfl [vmem:[#allocation1 + $0x10] sm:$0xff pattern:$0x75316420]
        %v904 = vld.sshfl [vmem:[#allocation1 + $0x18] sm:$0xff pattern:$0x75316420]
        %v905 = vld.sshfl [vmem:[#allocation1 + $0x20] sm:$0xff pattern:$0x75316420]
        %v906 = vld.sshfl [vmem:[#allocation1 + $0x28] sm:$0xff pattern:$0x75316420]
        %v907 = vld.sshfl [vmem:[#allocation1 + $0x30] sm:$0xff pattern:$0x75316420]
        %v908 = vld.sshfl [vmem:[#allocation1 + $0x38] sm:$0xff pattern:$0x75316420]
        %909 = vrot.lane.b32.xlu0 %v901, 118
        %v910 = vpop.permute.xlu0 %909
        %911 = vrot.lane.b32.xlu0 %v902, 118
        %v912 = vpop.permute.xlu0 %911
        %913 = vrot.lane.b32.xlu0 %v903, 118
        %v914 = vpop.permute.xlu0 %913
        %915 = vrot.lane.b32.xlu0 %v904, 118
        %v916 = vpop.permute.xlu0 %915
        %917 = vrot.lane.b32.xlu0 %v905, 118
        %v918 = vpop.permute.xlu0 %917
        %919 = vrot.lane.b32.xlu0 %v906, 118
        %v920 = vpop.permute.xlu0 %919
        %921 = vrot.lane.b32.xlu0 %v907, 118
        %v922 = vpop.permute.xlu0 %921
        %923 = vrot.lane.b32.xlu0 %v908, 118
        %v924 = vpop.permute.xlu0 %923
        %vm925 = vcmask 965632
        %v926 = vsel %vm925, %v910, %v912
        %v927 = vsel %vm925, %v912, %v914
        %v928 = vsel %vm925, %v914, %v916
        %v929 = vsel %vm925, %v916, %v918
        %v930 = vsel %vm925, %v918, %v920
        %v931 = vsel %vm925, %v920, %v922
        %v932 = vsel %vm925, %v922, %v924
        %v934 = vsel %vm273, %v889, 0
        %v936 = vsel %vm277, %v926, 0
        %v938 = vsel %vm277, %v927, 0
        %v940 = vsel %vm277, %v928, 0
        %v942 = vsel %vm277, %v929, 0
        %v944 = vsel %vm277, %v930, 0
        %v946 = vsel %vm277, %v931, 0
        %v948 = vsel %vm277, %v932, 0
        %v950 = vsel %vm277, %v924, 0
        %952 = vmatpush.msra.mxu0 0.0
        %953 = vmatpush.msra.mxu0 0.0
        %954 = vmatpush.msra.mxu0 0.0
        %955 = vmatpush.msra.mxu0 0.0
        %956 = vmatpush.msra.mxu0 0.0
        %957 = vmatpush.msra.mxu0 0.0
        %958 = vmatpush.msra.mxu0 0.0
        %959 = vmatpush.msra.mxu0 0.0
        %960 = vmatpush.msra.mxu0 0.0
        %961 = vmatpush.msra.mxu0 0.0
        %962 = vmatpush.msra.mxu0 0.0
        %963 = vmatpush.msra.mxu0 0.0
        %964 = vmatpush.msra.mxu0 0.0
        %965 = vmatpush.msra.mxu0 0.0
        %966 = vmatpush.msra.mxu0 0.0
        %967 = vmatpush.msra.mxu0 %v936
        %968 = vmatmul.f32.gmra.mxu0 %v934
        %v969 = vpop.f32.mrf.mxu0
        %v970 = vadd.f32 0.0, %v969
        %971 = vdwg.mxu0
        %972 = vmatpush.msra.mxu0 0.0
        %973 = vmatpush.msra.mxu0 0.0
        %974 = vmatpush.msra.mxu0 0.0
        %975 = vmatpush.msra.mxu0 0.0
        %976 = vmatpush.msra.mxu0 0.0
        %977 = vmatpush.msra.mxu0 0.0
        %978 = vmatpush.msra.mxu0 0.0
        %979 = vmatpush.msra.mxu0 0.0
        %980 = vmatpush.msra.mxu0 0.0
        %981 = vmatpush.msra.mxu0 0.0
        %982 = vmatpush.msra.mxu0 0.0
        %983 = vmatpush.msra.mxu0 0.0
        %984 = vmatpush.msra.mxu0 0.0
        %985 = vmatpush.msra.mxu0 0.0
        %986 = vmatpush.msra.mxu0 0.0
        %987 = vmatpush.msra.mxu0 %v938
        %988 = vmatmul.f32.gmra.mxu0 %v934
        %v989 = vpop.f32.mrf.mxu0
        %v990 = vadd.f32 0.0, %v989
        %991 = vdwg.mxu0
        %992 = vmatpush.msra.mxu0 0.0
        %993 = vmatpush.msra.mxu0 0.0
        %994 = vmatpush.msra.mxu0 0.0
        %995 = vmatpush.msra.mxu0 0.0
        %996 = vmatpush.msra.mxu0 0.0
        %997 = vmatpush.msra.mxu0 0.0
        %998 = vmatpush.msra.mxu0 0.0
        %999 = vmatpush.msra.mxu0 0.0
        %1000 = vmatpush.msra.mxu0 0.0
        %1001 = vmatpush.msra.mxu0 0.0
        %1002 = vmatpush.msra.mxu0 0.0
        %1003 = vmatpush.msra.mxu0 0.0
        %1004 = vmatpush.msra.mxu0 0.0
        %1005 = vmatpush.msra.mxu0 0.0
        %1006 = vmatpush.msra.mxu0 0.0
        %1007 = vmatpush.msra.mxu0 %v940
        %1008 = vmatmul.f32.gmra.mxu0 %v934
        %v1009 = vpop.f32.mrf.mxu0
        %v1010 = vadd.f32 0.0, %v1009
        %1011 = vdwg.mxu0
        %1012 = vmatpush.msra.mxu0 0.0
        %1013 = vmatpush.msra.mxu0 0.0
        %1014 = vmatpush.msra.mxu0 0.0
        %1015 = vmatpush.msra.mxu0 0.0
        %1016 = vmatpush.msra.mxu0 0.0
        %1017 = vmatpush.msra.mxu0 0.0
        %1018 = vmatpush.msra.mxu0 0.0
        %1019 = vmatpush.msra.mxu0 0.0
        %1020 = vmatpush.msra.mxu0 0.0
        %1021 = vmatpush.msra.mxu0 0.0
        %1022 = vmatpush.msra.mxu0 0.0
        %1023 = vmatpush.msra.mxu0 0.0
        %1024 = vmatpush.msra.mxu0 0.0
        %1025 = vmatpush.msra.mxu0 0.0
        %1026 = vmatpush.msra.mxu0 0.0
        %1027 = vmatpush.msra.mxu0 %v942
        %1028 = vmatmul.f32.gmra.mxu0 %v934
        %v1029 = vpop.f32.mrf.mxu0
        %v1030 = vadd.f32 0.0, %v1029
        %1031 = vdwg.mxu0
        %1032 = vmatpush.msra.mxu0 0.0
        %1033 = vmatpush.msra.mxu0 0.0
        %1034 = vmatpush.msra.mxu0 0.0
        %1035 = vmatpush.msra.mxu0 0.0
        %1036 = vmatpush.msra.mxu0 0.0
        %1037 = vmatpush.msra.mxu0 0.0
        %1038 = vmatpush.msra.mxu0 0.0
        %1039 = vmatpush.msra.mxu0 0.0
        %1040 = vmatpush.msra.mxu0 0.0
        %1041 = vmatpush.msra.mxu0 0.0
        %1042 = vmatpush.msra.mxu0 0.0
        %1043 = vmatpush.msra.mxu0 0.0
        %1044 = vmatpush.msra.mxu0 0.0
        %1045 = vmatpush.msra.mxu0 0.0
        %1046 = vmatpush.msra.mxu0 0.0
        %1047 = vmatpush.msra.mxu0 %v944
        %1048 = vmatmul.f32.gmra.mxu0 %v934
        %v1049 = vpop.f32.mrf.mxu0
        %v1050 = vadd.f32 0.0, %v1049
        %1051 = vdwg.mxu0
        %1052 = vmatpush.msra.mxu0 0.0
        %1053 = vmatpush.msra.mxu0 0.0
        %1054 = vmatpush.msra.mxu0 0.0
        %1055 = vmatpush.msra.mxu0 0.0
        %1056 = vmatpush.msra.mxu0 0.0
        %1057 = vmatpush.msra.mxu0 0.0
        %1058 = vmatpush.msra.mxu0 0.0
        %1059 = vmatpush.msra.mxu0 0.0
        %1060 = vmatpush.msra.mxu0 0.0
        %1061 = vmatpush.msra.mxu0 0.0
        %1062 = vmatpush.msra.mxu0 0.0
        %1063 = vmatpush.msra.mxu0 0.0
        %1064 = vmatpush.msra.mxu0 0.0
        %1065 = vmatpush.msra.mxu0 0.0
        %1066 = vmatpush.msra.mxu0 0.0
        %1067 = vmatpush.msra.mxu0 %v946
        %1068 = vmatmul.f32.gmra.mxu0 %v934
        %v1069 = vpop.f32.mrf.mxu0
        %v1070 = vadd.f32 0.0, %v1069
        %1071 = vdwg.mxu0
        %1072 = vmatpush.msra.mxu0 0.0
        %1073 = vmatpush.msra.mxu0 0.0
        %1074 = vmatpush.msra.mxu0 0.0
        %1075 = vmatpush.msra.mxu0 0.0
        %1076 = vmatpush.msra.mxu0 0.0
        %1077 = vmatpush.msra.mxu0 0.0
        %1078 = vmatpush.msra.mxu0 0.0
        %1079 = vmatpush.msra.mxu0 0.0
        %1080 = vmatpush.msra.mxu0 0.0
        %1081 = vmatpush.msra.mxu0 0.0
        %1082 = vmatpush.msra.mxu0 0.0
        %1083 = vmatpush.msra.mxu0 0.0
        %1084 = vmatpush.msra.mxu0 0.0
        %1085 = vmatpush.msra.mxu0 0.0
        %1086 = vmatpush.msra.mxu0 0.0
        %1087 = vmatpush.msra.mxu0 %v948
        %1088 = vmatmul.f32.gmra.mxu0 %v934
        %v1089 = vpop.f32.mrf.mxu0
        %v1090 = vadd.f32 0.0, %v1089
        %1091 = vdwg.mxu0
        %1092 = vmatpush.msra.mxu0 0.0
        %1093 = vmatpush.msra.mxu0 0.0
        %1094 = vmatpush.msra.mxu0 0.0
        %1095 = vmatpush.msra.mxu0 0.0
        %1096 = vmatpush.msra.mxu0 0.0
        %1097 = vmatpush.msra.mxu0 0.0
        %1098 = vmatpush.msra.mxu0 0.0
        %1099 = vmatpush.msra.mxu0 0.0
        %1100 = vmatpush.msra.mxu0 0.0
        %1101 = vmatpush.msra.mxu0 0.0
        %1102 = vmatpush.msra.mxu0 0.0
        %1103 = vmatpush.msra.mxu0 0.0
        %1104 = vmatpush.msra.mxu0 0.0
        %1105 = vmatpush.msra.mxu0 0.0
        %1106 = vmatpush.msra.mxu0 0.0
        %1107 = vmatpush.msra.mxu0 %v950
        %1108 = vmatmul.f32.gmra.mxu0 %v934
        %v1109 = vpop.f32.mrf.mxu0
        %v1110 = vadd.f32 0.0, %v1109
        %1111 = vdwg.mxu0
        %v1112 = vadd.f32 %v876, %v970
        %v1113 = vadd.f32 %v877, %v990
        %v1114 = vadd.f32 %v878, %v1010
        %v1115 = vadd.f32 %v879, %v1030
        %v1116 = vadd.f32 %v880, %v1050
        %v1117 = vadd.f32 %v881, %v1070
        %v1118 = vadd.f32 %v882, %v1090
        %v1119 = vadd.f32 %v883, %v1110
        %v1120 = vld [vmem:[%s222] sm:$0xff]
        %v1121 = vld [vmem:[%s222 + $0x8] sm:$0xff]
        %v1122 = vld [vmem:[%s222 + $0x10] sm:$0xff]
        %v1123 = vld [vmem:[%s222 + $0x18] sm:$0xff]
        %s1124 = scalar_lea.vmem %s1, 32
        %v1125 = vld [vmem:[%s1124] sm:$0xff]
        %1130 = vst [vmem:[#allocation1] ss:$2 sm:$0xff] %v1120
        %s1131 = scalar_lea.vmem [#allocation1], 16
        %1132 = vst [vmem:[%s1131] ss:$2 sm:$0xff] %v1121
        %s1133 = scalar_lea.vmem [#allocation1], 32
        %1134 = vst [vmem:[%s1133] ss:$2 sm:$0xff] %v1122
        %s1135 = scalar_lea.vmem [#allocation1], 48
        %1136 = vst [vmem:[%s1135] ss:$2 sm:$0xff] %v1123
        %v1137 = vld.sshfl [vmem:[#allocation1] sm:$0xff pattern:$0x75316420]
        %v1138 = vld.sshfl [vmem:[#allocation1 + $0x8] sm:$0xff pattern:$0x75316420]
        %v1139 = vld.sshfl [vmem:[#allocation1 + $0x10] sm:$0xff pattern:$0x75316420]
        %v1140 = vld.sshfl [vmem:[#allocation1 + $0x18] sm:$0xff pattern:$0x75316420]
        %v1141 = vld.sshfl [vmem:[#allocation1 + $0x20] sm:$0xff pattern:$0x75316420]
        %v1142 = vld.sshfl [vmem:[#allocation1 + $0x28] sm:$0xff pattern:$0x75316420]
        %v1143 = vld.sshfl [vmem:[#allocation1 + $0x30] sm:$0xff pattern:$0x75316420]
        %v1144 = vld.sshfl [vmem:[#allocation1 + $0x38] sm:$0xff pattern:$0x75316420]
        %1145 = vrot.lane.b32.xlu0 %v1137, 117
        %v1146 = vpop.permute.xlu0 %1145
        %1147 = vrot.lane.b32.xlu0 %v1138, 117
        %v1148 = vpop.permute.xlu0 %1147
        %1149 = vrot.lane.b32.xlu0 %v1139, 117
        %v1150 = vpop.permute.xlu0 %1149
        %1151 = vrot.lane.b32.xlu0 %v1140, 117
        %v1152 = vpop.permute.xlu0 %1151
        %1153 = vrot.lane.b32.xlu0 %v1141, 117
        %v1154 = vpop.permute.xlu0 %1153
        %1155 = vrot.lane.b32.xlu0 %v1142, 117
        %v1156 = vpop.permute.xlu0 %1155
        %1157 = vrot.lane.b32.xlu0 %v1143, 117
        %v1158 = vpop.permute.xlu0 %1157
        %1159 = vrot.lane.b32.xlu0 %v1144, 117
        %v1160 = vpop.permute.xlu0 %1159
        %vm1161 = vcmask 957440
        %v1162 = vsel %vm1161, %v1146, %v1148
        %v1163 = vsel %vm1161, %v1148, %v1150
        %v1164 = vsel %vm1161, %v1150, %v1152
        %v1165 = vsel %vm1161, %v1152, %v1154
        %v1166 = vsel %vm1161, %v1154, %v1156
        %v1167 = vsel %vm1161, %v1156, %v1158
        %v1168 = vsel %vm1161, %v1158, %v1160
        %v1170 = vsel %vm273, %v1125, 0
        %v1172 = vsel %vm277, %v1162, 0
        %v1174 = vsel %vm277, %v1163, 0
        %v1176 = vsel %vm277, %v1164, 0
        %v1178 = vsel %vm277, %v1165, 0
        %v1180 = vsel %vm277, %v1166, 0
        %v1182 = vsel %vm277, %v1167, 0
        %v1184 = vsel %vm277, %v1168, 0
        %v1186 = vsel %vm277, %v1160, 0
        %1188 = vmatpush.msra.mxu0 0.0
        %1189 = vmatpush.msra.mxu0 0.0
        %1190 = vmatpush.msra.mxu0 0.0
        %1191 = vmatpush.msra.mxu0 0.0
        %1192 = vmatpush.msra.mxu0 0.0
        %1193 = vmatpush.msra.mxu0 0.0
        %1194 = vmatpush.msra.mxu0 0.0
        %1195 = vmatpush.msra.mxu0 0.0
        %1196 = vmatpush.msra.mxu0 0.0
        %1197 = vmatpush.msra.mxu0 0.0
        %1198 = vmatpush.msra.mxu0 0.0
        %1199 = vmatpush.msra.mxu0 0.0
        %1200 = vmatpush.msra.mxu0 0.0
        %1201 = vmatpush.msra.mxu0 0.0
        %1202 = vmatpush.msra.mxu0 0.0
        %1203 = vmatpush.msra.mxu0 %v1172
        %1204 = vmatmul.f32.gmra.mxu0 %v1170
        %v1205 = vpop.f32.mrf.mxu0
        %v1206 = vadd.f32 0.0, %v1205
        %1207 = vdwg.mxu0
        %1208 = vmatpush.msra.mxu0 0.0
        %1209 = vmatpush.msra.mxu0 0.0
        %1210 = vmatpush.msra.mxu0 0.0
        %1211 = vmatpush.msra.mxu0 0.0
        %1212 = vmatpush.msra.mxu0 0.0
        %1213 = vmatpush.msra.mxu0 0.0
        %1214 = vmatpush.msra.mxu0 0.0
        %1215 = vmatpush.msra.mxu0 0.0
        %1216 = vmatpush.msra.mxu0 0.0
        %1217 = vmatpush.msra.mxu0 0.0
        %1218 = vmatpush.msra.mxu0 0.0
        %1219 = vmatpush.msra.mxu0 0.0
        %1220 = vmatpush.msra.mxu0 0.0
        %1221 = vmatpush.msra.mxu0 0.0
        %1222 = vmatpush.msra.mxu0 0.0
        %1223 = vmatpush.msra.mxu0 %v1174
        %1224 = vmatmul.f32.gmra.mxu0 %v1170
        %v1225 = vpop.f32.mrf.mxu0
        %v1226 = vadd.f32 0.0, %v1225
        %1227 = vdwg.mxu0
        %1228 = vmatpush.msra.mxu0 0.0
        %1229 = vmatpush.msra.mxu0 0.0
        %1230 = vmatpush.msra.mxu0 0.0
        %1231 = vmatpush.msra.mxu0 0.0
        %1232 = vmatpush.msra.mxu0 0.0
        %1233 = vmatpush.msra.mxu0 0.0
        %1234 = vmatpush.msra.mxu0 0.0
        %1235 = vmatpush.msra.mxu0 0.0
        %1236 = vmatpush.msra.mxu0 0.0
        %1237 = vmatpush.msra.mxu0 0.0
        %1238 = vmatpush.msra.mxu0 0.0
        %1239 = vmatpush.msra.mxu0 0.0
        %1240 = vmatpush.msra.mxu0 0.0
        %1241 = vmatpush.msra.mxu0 0.0
        %1242 = vmatpush.msra.mxu0 0.0
        %1243 = vmatpush.msra.mxu0 %v1176
        %1244 = vmatmul.f32.gmra.mxu0 %v1170
        %v1245 = vpop.f32.mrf.mxu0
        %v1246 = vadd.f32 0.0, %v1245
        %1247 = vdwg.mxu0
        %1248 = vmatpush.msra.mxu0 0.0
        %1249 = vmatpush.msra.mxu0 0.0
        %1250 = vmatpush.msra.mxu0 0.0
        %1251 = vmatpush.msra.mxu0 0.0
        %1252 = vmatpush.msra.mxu0 0.0
        %1253 = vmatpush.msra.mxu0 0.0
        %1254 = vmatpush.msra.mxu0 0.0
        %1255 = vmatpush.msra.mxu0 0.0
        %1256 = vmatpush.msra.mxu0 0.0
        %1257 = vmatpush.msra.mxu0 0.0
        %1258 = vmatpush.msra.mxu0 0.0
        %1259 = vmatpush.msra.mxu0 0.0
        %1260 = vmatpush.msra.mxu0 0.0
        %1261 = vmatpush.msra.mxu0 0.0
        %1262 = vmatpush.msra.mxu0 0.0
        %1263 = vmatpush.msra.mxu0 %v1178
        %1264 = vmatmul.f32.gmra.mxu0 %v1170
        %v1265 = vpop.f32.mrf.mxu0
        %v1266 = vadd.f32 0.0, %v1265
        %1267 = vdwg.mxu0
        %1268 = vmatpush.msra.mxu0 0.0
        %1269 = vmatpush.msra.mxu0 0.0
        %1270 = vmatpush.msra.mxu0 0.0
        %1271 = vmatpush.msra.mxu0 0.0
        %1272 = vmatpush.msra.mxu0 0.0
        %1273 = vmatpush.msra.mxu0 0.0
        %1274 = vmatpush.msra.mxu0 0.0
        %1275 = vmatpush.msra.mxu0 0.0
        %1276 = vmatpush.msra.mxu0 0.0
        %1277 = vmatpush.msra.mxu0 0.0
        %1278 = vmatpush.msra.mxu0 0.0
        %1279 = vmatpush.msra.mxu0 0.0
        %1280 = vmatpush.msra.mxu0 0.0
        %1281 = vmatpush.msra.mxu0 0.0
        %1282 = vmatpush.msra.mxu0 0.0
        %1283 = vmatpush.msra.mxu0 %v1180
        %1284 = vmatmul.f32.gmra.mxu0 %v1170
        %v1285 = vpop.f32.mrf.mxu0
        %v1286 = vadd.f32 0.0, %v1285
        %1287 = vdwg.mxu0
        %1288 = vmatpush.msra.mxu0 0.0
        %1289 = vmatpush.msra.mxu0 0.0
        %1290 = vmatpush.msra.mxu0 0.0
        %1291 = vmatpush.msra.mxu0 0.0
        %1292 = vmatpush.msra.mxu0 0.0
        %1293 = vmatpush.msra.mxu0 0.0
        %1294 = vmatpush.msra.mxu0 0.0
        %1295 = vmatpush.msra.mxu0 0.0
        %1296 = vmatpush.msra.mxu0 0.0
        %1297 = vmatpush.msra.mxu0 0.0
        %1298 = vmatpush.msra.mxu0 0.0
        %1299 = vmatpush.msra.mxu0 0.0
        %1300 = vmatpush.msra.mxu0 0.0
        %1301 = vmatpush.msra.mxu0 0.0
        %1302 = vmatpush.msra.mxu0 0.0
        %1303 = vmatpush.msra.mxu0 %v1182
        %1304 = vmatmul.f32.gmra.mxu0 %v1170
        %v1305 = vpop.f32.mrf.mxu0
        %v1306 = vadd.f32 0.0, %v1305
        %1307 = vdwg.mxu0
        %1308 = vmatpush.msra.mxu0 0.0
        %1309 = vmatpush.msra.mxu0 0.0
        %1310 = vmatpush.msra.mxu0 0.0
        %1311 = vmatpush.msra.mxu0 0.0
        %1312 = vmatpush.msra.mxu0 0.0
        %1313 = vmatpush.msra.mxu0 0.0
        %1314 = vmatpush.msra.mxu0 0.0
        %1315 = vmatpush.msra.mxu0 0.0
        %1316 = vmatpush.msra.mxu0 0.0
        %1317 = vmatpush.msra.mxu0 0.0
        %1318 = vmatpush.msra.mxu0 0.0
        %1319 = vmatpush.msra.mxu0 0.0
        %1320 = vmatpush.msra.mxu0 0.0
        %1321 = vmatpush.msra.mxu0 0.0
        %1322 = vmatpush.msra.mxu0 0.0
        %1323 = vmatpush.msra.mxu0 %v1184
        %1324 = vmatmul.f32.gmra.mxu0 %v1170
        %v1325 = vpop.f32.mrf.mxu0
        %v1326 = vadd.f32 0.0, %v1325
        %1327 = vdwg.mxu0
        %1328 = vmatpush.msra.mxu0 0.0
        %1329 = vmatpush.msra.mxu0 0.0
        %1330 = vmatpush.msra.mxu0 0.0
        %1331 = vmatpush.msra.mxu0 0.0
        %1332 = vmatpush.msra.mxu0 0.0
        %1333 = vmatpush.msra.mxu0 0.0
        %1334 = vmatpush.msra.mxu0 0.0
        %1335 = vmatpush.msra.mxu0 0.0
        %1336 = vmatpush.msra.mxu0 0.0
        %1337 = vmatpush.msra.mxu0 0.0
        %1338 = vmatpush.msra.mxu0 0.0
        %1339 = vmatpush.msra.mxu0 0.0
        %1340 = vmatpush.msra.mxu0 0.0
        %1341 = vmatpush.msra.mxu0 0.0
        %1342 = vmatpush.msra.mxu0 0.0
        %1343 = vmatpush.msra.mxu0 %v1186
        %1344 = vmatmul.f32.gmra.mxu0 %v1170
        %v1345 = vpop.f32.mrf.mxu0
        %v1346 = vadd.f32 0.0, %v1345
        %1347 = vdwg.mxu0
        %v1348 = vadd.f32 %v1112, %v1206
        %v1349 = vadd.f32 %v1113, %v1226
        %v1350 = vadd.f32 %v1114, %v1246
        %v1351 = vadd.f32 %v1115, %v1266
        %v1352 = vadd.f32 %v1116, %v1286
        %v1353 = vadd.f32 %v1117, %v1306
        %v1354 = vadd.f32 %v1118, %v1326
        %v1355 = vadd.f32 %v1119, %v1346
        %v1356 = vld [vmem:[%s222] sm:$0xff]
        %v1357 = vld [vmem:[%s222 + $0x8] sm:$0xff]
        %v1358 = vld [vmem:[%s222 + $0x10] sm:$0xff]
        %v1359 = vld [vmem:[%s222 + $0x18] sm:$0xff]
        %s1360 = scalar_lea.vmem %s1, 40
        %v1361 = vld [vmem:[%s1360] sm:$0xff]
        %1366 = vst [vmem:[#allocation1] ss:$2 sm:$0xff] %v1356
        %s1367 = scalar_lea.vmem [#allocation1], 16
        %1368 = vst [vmem:[%s1367] ss:$2 sm:$0xff] %v1357
        %s1369 = scalar_lea.vmem [#allocation1], 32
        %1370 = vst [vmem:[%s1369] ss:$2 sm:$0xff] %v1358
        %s1371 = scalar_lea.vmem [#allocation1], 48
        %1372 = vst [vmem:[%s1371] ss:$2 sm:$0xff] %v1359
        %v1373 = vld.sshfl [vmem:[#allocation1] sm:$0xff pattern:$0x75316420]
        %v1374 = vld.sshfl [vmem:[#allocation1 + $0x8] sm:$0xff pattern:$0x75316420]
        %v1375 = vld.sshfl [vmem:[#allocation1 + $0x10] sm:$0xff pattern:$0x75316420]
        %v1376 = vld.sshfl [vmem:[#allocation1 + $0x18] sm:$0xff pattern:$0x75316420]
        %v1377 = vld.sshfl [vmem:[#allocation1 + $0x20] sm:$0xff pattern:$0x75316420]
        %v1378 = vld.sshfl [vmem:[#allocation1 + $0x28] sm:$0xff pattern:$0x75316420]
        %v1379 = vld.sshfl [vmem:[#allocation1 + $0x30] sm:$0xff pattern:$0x75316420]
        %v1380 = vld.sshfl [vmem:[#allocation1 + $0x38] sm:$0xff pattern:$0x75316420]
        %1381 = vrot.lane.b32.xlu0 %v1373, 116
        %v1382 = vpop.permute.xlu0 %1381
        %1383 = vrot.lane.b32.xlu0 %v1374, 116
        %v1384 = vpop.permute.xlu0 %1383
        %1385 = vrot.lane.b32.xlu0 %v1375, 116
        %v1386 = vpop.permute.xlu0 %1385
        %1387 = vrot.lane.b32.xlu0 %v1376, 116
        %v1388 = vpop.permute.xlu0 %1387
        %1389 = vrot.lane.b32.xlu0 %v1377, 116
        %v1390 = vpop.permute.xlu0 %1389
        %1391 = vrot.lane.b32.xlu0 %v1378, 116
        %v1392 = vpop.permute.xlu0 %1391
        %1393 = vrot.lane.b32.xlu0 %v1379, 116
        %v1394 = vpop.permute.xlu0 %1393
        %1395 = vrot.lane.b32.xlu0 %v1380, 116
        %v1396 = vpop.permute.xlu0 %1395
        %vm1397 = vcmask 949248
        %v1398 = vsel %vm1397, %v1382, %v1384
        %v1399 = vsel %vm1397, %v1384, %v1386
        %v1400 = vsel %vm1397, %v1386, %v1388
        %v1401 = vsel %vm1397, %v1388, %v1390
        %v1402 = vsel %vm1397, %v1390, %v1392
        %v1403 = vsel %vm1397, %v1392, %v1394
        %v1404 = vsel %vm1397, %v1394, %v1396
        %v1406 = vsel %vm273, %v1361, 0
        %v1408 = vsel %vm277, %v1398, 0
        %v1410 = vsel %vm277, %v1399, 0
        %v1412 = vsel %vm277, %v1400, 0
        %v1414 = vsel %vm277, %v1401, 0
        %v1416 = vsel %vm277, %v1402, 0
        %v1418 = vsel %vm277, %v1403, 0
        %v1420 = vsel %vm277, %v1404, 0
        %v1422 = vsel %vm277, %v1396, 0
        %1424 = vmatpush.msra.mxu0 0.0
        %1425 = vmatpush.msra.mxu0 0.0
        %1426 = vmatpush.msra.mxu0 0.0
        %1427 = vmatpush.msra.mxu0 0.0
        %1428 = vmatpush.msra.mxu0 0.0
        %1429 = vmatpush.msra.mxu0 0.0
        %1430 = vmatpush.msra.mxu0 0.0
        %1431 = vmatpush.msra.mxu0 0.0
        %1432 = vmatpush.msra.mxu0 0.0
        %1433 = vmatpush.msra.mxu0 0.0
        %1434 = vmatpush.msra.mxu0 0.0
        %1435 = vmatpush.msra.mxu0 0.0
        %1436 = vmatpush.msra.mxu0 0.0
        %1437 = vmatpush.msra.mxu0 0.0
        %1438 = vmatpush.msra.mxu0 0.0
        %1439 = vmatpush.msra.mxu0 %v1408
        %1440 = vmatmul.f32.gmra.mxu0 %v1406
        %v1441 = vpop.f32.mrf.mxu0
        %v1442 = vadd.f32 0.0, %v1441
        %1443 = vdwg.mxu0
        %1444 = vmatpush.msra.mxu0 0.0
        %1445 = vmatpush.msra.mxu0 0.0
        %1446 = vmatpush.msra.mxu0 0.0
        %1447 = vmatpush.msra.mxu0 0.0
        %1448 = vmatpush.msra.mxu0 0.0
        %1449 = vmatpush.msra.mxu0 0.0
        %1450 = vmatpush.msra.mxu0 0.0
        %1451 = vmatpush.msra.mxu0 0.0
        %1452 = vmatpush.msra.mxu0 0.0
        %1453 = vmatpush.msra.mxu0 0.0
        %1454 = vmatpush.msra.mxu0 0.0
        %1455 = vmatpush.msra.mxu0 0.0
        %1456 = vmatpush.msra.mxu0 0.0
        %1457 = vmatpush.msra.mxu0 0.0
        %1458 = vmatpush.msra.mxu0 0.0
        %1459 = vmatpush.msra.mxu0 %v1410
        %1460 = vmatmul.f32.gmra.mxu0 %v1406
        %v1461 = vpop.f32.mrf.mxu0
        %v1462 = vadd.f32 0.0, %v1461
        %1463 = vdwg.mxu0
        %1464 = vmatpush.msra.mxu0 0.0
        %1465 = vmatpush.msra.mxu0 0.0
        %1466 = vmatpush.msra.mxu0 0.0
        %1467 = vmatpush.msra.mxu0 0.0
        %1468 = vmatpush.msra.mxu0 0.0
        %1469 = vmatpush.msra.mxu0 0.0
        %1470 = vmatpush.msra.mxu0 0.0
        %1471 = vmatpush.msra.mxu0 0.0
        %1472 = vmatpush.msra.mxu0 0.0
        %1473 = vmatpush.msra.mxu0 0.0
        %1474 = vmatpush.msra.mxu0 0.0
        %1475 = vmatpush.msra.mxu0 0.0
        %1476 = vmatpush.msra.mxu0 0.0
        %1477 = vmatpush.msra.mxu0 0.0
        %1478 = vmatpush.msra.mxu0 0.0
        %1479 = vmatpush.msra.mxu0 %v1412
        %1480 = vmatmul.f32.gmra.mxu0 %v1406
        %v1481 = vpop.f32.mrf.mxu0
        %v1482 = vadd.f32 0.0, %v1481
        %1483 = vdwg.mxu0
        %1484 = vmatpush.msra.mxu0 0.0
        %1485 = vmatpush.msra.mxu0 0.0
        %1486 = vmatpush.msra.mxu0 0.0
        %1487 = vmatpush.msra.mxu0 0.0
        %1488 = vmatpush.msra.mxu0 0.0
        %1489 = vmatpush.msra.mxu0 0.0
        %1490 = vmatpush.msra.mxu0 0.0
        %1491 = vmatpush.msra.mxu0 0.0
        %1492 = vmatpush.msra.mxu0 0.0
        %1493 = vmatpush.msra.mxu0 0.0
        %1494 = vmatpush.msra.mxu0 0.0
        %1495 = vmatpush.msra.mxu0 0.0
        %1496 = vmatpush.msra.mxu0 0.0
        %1497 = vmatpush.msra.mxu0 0.0
        %1498 = vmatpush.msra.mxu0 0.0
        %1499 = vmatpush.msra.mxu0 %v1414
        %1500 = vmatmul.f32.gmra.mxu0 %v1406
        %v1501 = vpop.f32.mrf.mxu0
        %v1502 = vadd.f32 0.0, %v1501
        %1503 = vdwg.mxu0
        %1504 = vmatpush.msra.mxu0 0.0
        %1505 = vmatpush.msra.mxu0 0.0
        %1506 = vmatpush.msra.mxu0 0.0
        %1507 = vmatpush.msra.mxu0 0.0
        %1508 = vmatpush.msra.mxu0 0.0
        %1509 = vmatpush.msra.mxu0 0.0
        %1510 = vmatpush.msra.mxu0 0.0
        %1511 = vmatpush.msra.mxu0 0.0
        %1512 = vmatpush.msra.mxu0 0.0
        %1513 = vmatpush.msra.mxu0 0.0
        %1514 = vmatpush.msra.mxu0 0.0
        %1515 = vmatpush.msra.mxu0 0.0
        %1516 = vmatpush.msra.mxu0 0.0
        %1517 = vmatpush.msra.mxu0 0.0
        %1518 = vmatpush.msra.mxu0 0.0
        %1519 = vmatpush.msra.mxu0 %v1416
        %1520 = vmatmul.f32.gmra.mxu0 %v1406
        %v1521 = vpop.f32.mrf.mxu0
        %v1522 = vadd.f32 0.0, %v1521
        %1523 = vdwg.mxu0
        %1524 = vmatpush.msra.mxu0 0.0
        %1525 = vmatpush.msra.mxu0 0.0
        %1526 = vmatpush.msra.mxu0 0.0
        %1527 = vmatpush.msra.mxu0 0.0
        %1528 = vmatpush.msra.mxu0 0.0
        %1529 = vmatpush.msra.mxu0 0.0
        %1530 = vmatpush.msra.mxu0 0.0
        %1531 = vmatpush.msra.mxu0 0.0
        %1532 = vmatpush.msra.mxu0 0.0
        %1533 = vmatpush.msra.mxu0 0.0
        %1534 = vmatpush.msra.mxu0 0.0
        %1535 = vmatpush.msra.mxu0 0.0
        %1536 = vmatpush.msra.mxu0 0.0
        %1537 = vmatpush.msra.mxu0 0.0
        %1538 = vmatpush.msra.mxu0 0.0
        %1539 = vmatpush.msra.mxu0 %v1418
        %1540 = vmatmul.f32.gmra.mxu0 %v1406
        %v1541 = vpop.f32.mrf.mxu0
        %v1542 = vadd.f32 0.0, %v1541
        %1543 = vdwg.mxu0
        %1544 = vmatpush.msra.mxu0 0.0
        %1545 = vmatpush.msra.mxu0 0.0
        %1546 = vmatpush.msra.mxu0 0.0
        %1547 = vmatpush.msra.mxu0 0.0
        %1548 = vmatpush.msra.mxu0 0.0
        %1549 = vmatpush.msra.mxu0 0.0
        %1550 = vmatpush.msra.mxu0 0.0
        %1551 = vmatpush.msra.mxu0 0.0
        %1552 = vmatpush.msra.mxu0 0.0
        %1553 = vmatpush.msra.mxu0 0.0
        %1554 = vmatpush.msra.mxu0 0.0
        %1555 = vmatpush.msra.mxu0 0.0
        %1556 = vmatpush.msra.mxu0 0.0
        %1557 = vmatpush.msra.mxu0 0.0
        %1558 = vmatpush.msra.mxu0 0.0
        %1559 = vmatpush.msra.mxu0 %v1420
        %1560 = vmatmul.f32.gmra.mxu0 %v1406
        %v1561 = vpop.f32.mrf.mxu0
        %v1562 = vadd.f32 0.0, %v1561
        %1563 = vdwg.mxu0
        %1564 = vmatpush.msra.mxu0 0.0
        %1565 = vmatpush.msra.mxu0 0.0
        %1566 = vmatpush.msra.mxu0 0.0
        %1567 = vmatpush.msra.mxu0 0.0
        %1568 = vmatpush.msra.mxu0 0.0
        %1569 = vmatpush.msra.mxu0 0.0
        %1570 = vmatpush.msra.mxu0 0.0
        %1571 = vmatpush.msra.mxu0 0.0
        %1572 = vmatpush.msra.mxu0 0.0
        %1573 = vmatpush.msra.mxu0 0.0
        %1574 = vmatpush.msra.mxu0 0.0
        %1575 = vmatpush.msra.mxu0 0.0
        %1576 = vmatpush.msra.mxu0 0.0
        %1577 = vmatpush.msra.mxu0 0.0
        %1578 = vmatpush.msra.mxu0 0.0
        %1579 = vmatpush.msra.mxu0 %v1422
        %1580 = vmatmul.f32.gmra.mxu0 %v1406
        %v1581 = vpop.f32.mrf.mxu0
        %v1582 = vadd.f32 0.0, %v1581
        %1583 = vdwg.mxu0
        %v1584 = vadd.f32 %v1348, %v1442
        %v1585 = vadd.f32 %v1349, %v1462
        %v1586 = vadd.f32 %v1350, %v1482
        %v1587 = vadd.f32 %v1351, %v1502
        %v1588 = vadd.f32 %v1352, %v1522
        %v1589 = vadd.f32 %v1353, %v1542
        %v1590 = vadd.f32 %v1354, %v1562
        %v1591 = vadd.f32 %v1355, %v1582
        %v1592 = vld [vmem:[%s222] sm:$0xff]
        %v1593 = vld [vmem:[%s222 + $0x8] sm:$0xff]
        %v1594 = vld [vmem:[%s222 + $0x10] sm:$0xff]
        %v1595 = vld [vmem:[%s222 + $0x18] sm:$0xff]
        %s1596 = scalar_lea.vmem %s1, 48
        %v1597 = vld [vmem:[%s1596] sm:$0xff]
        %1602 = vst [vmem:[#allocation1] ss:$2 sm:$0xff] %v1592
        %s1603 = scalar_lea.vmem [#allocation1], 16
        %1604 = vst [vmem:[%s1603] ss:$2 sm:$0xff] %v1593
        %s1605 = scalar_lea.vmem [#allocation1], 32
        %1606 = vst [vmem:[%s1605] ss:$2 sm:$0xff] %v1594
        %s1607 = scalar_lea.vmem [#allocation1], 48
        %1608 = vst [vmem:[%s1607] ss:$2 sm:$0xff] %v1595
        %v1609 = vld.sshfl [vmem:[#allocation1] sm:$0xff pattern:$0x75316420]
        %v1610 = vld.sshfl [vmem:[#allocation1 + $0x8] sm:$0xff pattern:$0x75316420]
        %v1611 = vld.sshfl [vmem:[#allocation1 + $0x10] sm:$0xff pattern:$0x75316420]
        %v1612 = vld.sshfl [vmem:[#allocation1 + $0x18] sm:$0xff pattern:$0x75316420]
        %v1613 = vld.sshfl [vmem:[#allocation1 + $0x20] sm:$0xff pattern:$0x75316420]
        %v1614 = vld.sshfl [vmem:[#allocation1 + $0x28] sm:$0xff pattern:$0x75316420]
        %v1615 = vld.sshfl [vmem:[#allocation1 + $0x30] sm:$0xff pattern:$0x75316420]
        %v1616 = vld.sshfl [vmem:[#allocation1 + $0x38] sm:$0xff pattern:$0x75316420]
        %1617 = vrot.lane.b32.xlu0 %v1609, 108
        %v1618 = vpop.permute.xlu0 %1617
        %1619 = vrot.lane.b32.xlu0 %v1610, 108
        %v1620 = vpop.permute.xlu0 %1619
        %1621 = vrot.lane.b32.xlu0 %v1611, 108
        %v1622 = vpop.permute.xlu0 %1621
        %1623 = vrot.lane.b32.xlu0 %v1612, 108
        %v1624 = vpop.permute.xlu0 %1623
        %1625 = vrot.lane.b32.xlu0 %v1613, 108
        %v1626 = vpop.permute.xlu0 %1625
        %1627 = vrot.lane.b32.xlu0 %v1614, 108
        %v1628 = vpop.permute.xlu0 %1627
        %1629 = vrot.lane.b32.xlu0 %v1615, 108
        %v1630 = vpop.permute.xlu0 %1629
        %1631 = vrot.lane.b32.xlu0 %v1616, 108
        %v1632 = vpop.permute.xlu0 %1631
        %vm1633 = vcmask 883712
        %v1634 = vsel %vm1633, %v1618, %v1620
        %v1635 = vsel %vm1633, %v1620, %v1622
        %v1636 = vsel %vm1633, %v1622, %v1624
        %v1637 = vsel %vm1633, %v1624, %v1626
        %v1638 = vsel %vm1633, %v1626, %v1628
        %v1639 = vsel %vm1633, %v1628, %v1630
        %v1640 = vsel %vm1633, %v1630, %v1632
        %v1642 = vsel %vm273, %v1597, 0
        %v1644 = vsel %vm277, %v1634, 0
        %v1646 = vsel %vm277, %v1635, 0
        %v1648 = vsel %vm277, %v1636, 0
        %v1650 = vsel %vm277, %v1637, 0
        %v1652 = vsel %vm277, %v1638, 0
        %v1654 = vsel %vm277, %v1639, 0
        %v1656 = vsel %vm277, %v1640, 0
        %v1658 = vsel %vm277, %v1632, 0
        %1660 = vmatpush.msra.mxu0 0.0
        %1661 = vmatpush.msra.mxu0 0.0
        %1662 = vmatpush.msra.mxu0 0.0
        %1663 = vmatpush.msra.mxu0 0.0
        %1664 = vmatpush.msra.mxu0 0.0
        %1665 = vmatpush.msra.mxu0 0.0
        %1666 = vmatpush.msra.mxu0 0.0
        %1667 = vmatpush.msra.mxu0 0.0
        %1668 = vmatpush.msra.mxu0 0.0
        %1669 = vmatpush.msra.mxu0 0.0
        %1670 = vmatpush.msra.mxu0 0.0
        %1671 = vmatpush.msra.mxu0 0.0
        %1672 = vmatpush.msra.mxu0 0.0
        %1673 = vmatpush.msra.mxu0 0.0
        %1674 = vmatpush.msra.mxu0 0.0
        %1675 = vmatpush.msra.mxu0 %v1644
        %1676 = vmatmul.f32.gmra.mxu0 %v1642
        %v1677 = vpop.f32.mrf.mxu0
        %v1678 = vadd.f32 0.0, %v1677
        %1679 = vdwg.mxu0
        %1680 = vmatpush.msra.mxu0 0.0
        %1681 = vmatpush.msra.mxu0 0.0
        %1682 = vmatpush.msra.mxu0 0.0
        %1683 = vmatpush.msra.mxu0 0.0
        %1684 = vmatpush.msra.mxu0 0.0
        %1685 = vmatpush.msra.mxu0 0.0
        %1686 = vmatpush.msra.mxu0 0.0
        %1687 = vmatpush.msra.mxu0 0.0
        %1688 = vmatpush.msra.mxu0 0.0
        %1689 = vmatpush.msra.mxu0 0.0
        %1690 = vmatpush.msra.mxu0 0.0
        %1691 = vmatpush.msra.mxu0 0.0
        %1692 = vmatpush.msra.mxu0 0.0
        %1693 = vmatpush.msra.mxu0 0.0
        %1694 = vmatpush.msra.mxu0 0.0
        %1695 = vmatpush.msra.mxu0 %v1646
        %1696 = vmatmul.f32.gmra.mxu0 %v1642
        %v1697 = vpop.f32.mrf.mxu0
        %v1698 = vadd.f32 0.0, %v1697
        %1699 = vdwg.mxu0
        %1700 = vmatpush.msra.mxu0 0.0
        %1701 = vmatpush.msra.mxu0 0.0
        %1702 = vmatpush.msra.mxu0 0.0
        %1703 = vmatpush.msra.mxu0 0.0
        %1704 = vmatpush.msra.mxu0 0.0
        %1705 = vmatpush.msra.mxu0 0.0
        %1706 = vmatpush.msra.mxu0 0.0
        %1707 = vmatpush.msra.mxu0 0.0
        %1708 = vmatpush.msra.mxu0 0.0
        %1709 = vmatpush.msra.mxu0 0.0
        %1710 = vmatpush.msra.mxu0 0.0
        %1711 = vmatpush.msra.mxu0 0.0
        %1712 = vmatpush.msra.mxu0 0.0
        %1713 = vmatpush.msra.mxu0 0.0
        %1714 = vmatpush.msra.mxu0 0.0
        %1715 = vmatpush.msra.mxu0 %v1648
        %1716 = vmatmul.f32.gmra.mxu0 %v1642
        %v1717 = vpop.f32.mrf.mxu0
        %v1718 = vadd.f32 0.0, %v1717
        %1719 = vdwg.mxu0
        %1720 = vmatpush.msra.mxu0 0.0
        %1721 = vmatpush.msra.mxu0 0.0
        %1722 = vmatpush.msra.mxu0 0.0
        %1723 = vmatpush.msra.mxu0 0.0
        %1724 = vmatpush.msra.mxu0 0.0
        %1725 = vmatpush.msra.mxu0 0.0
        %1726 = vmatpush.msra.mxu0 0.0
        %1727 = vmatpush.msra.mxu0 0.0
        %1728 = vmatpush.msra.mxu0 0.0
        %1729 = vmatpush.msra.mxu0 0.0
        %1730 = vmatpush.msra.mxu0 0.0
        %1731 = vmatpush.msra.mxu0 0.0
        %1732 = vmatpush.msra.mxu0 0.0
        %1733 = vmatpush.msra.mxu0 0.0
        %1734 = vmatpush.msra.mxu0 0.0
        %1735 = vmatpush.msra.mxu0 %v1650
        %1736 = vmatmul.f32.gmra.mxu0 %v1642
        %v1737 = vpop.f32.mrf.mxu0
        %v1738 = vadd.f32 0.0, %v1737
        %1739 = vdwg.mxu0
        %1740 = vmatpush.msra.mxu0 0.0
        %1741 = vmatpush.msra.mxu0 0.0
        %1742 = vmatpush.msra.mxu0 0.0
        %1743 = vmatpush.msra.mxu0 0.0
        %1744 = vmatpush.msra.mxu0 0.0
        %1745 = vmatpush.msra.mxu0 0.0
        %1746 = vmatpush.msra.mxu0 0.0
        %1747 = vmatpush.msra.mxu0 0.0
        %1748 = vmatpush.msra.mxu0 0.0
        %1749 = vmatpush.msra.mxu0 0.0
        %1750 = vmatpush.msra.mxu0 0.0
        %1751 = vmatpush.msra.mxu0 0.0
        %1752 = vmatpush.msra.mxu0 0.0
        %1753 = vmatpush.msra.mxu0 0.0
        %1754 = vmatpush.msra.mxu0 0.0
        %1755 = vmatpush.msra.mxu0 %v1652
        %1756 = vmatmul.f32.gmra.mxu0 %v1642
        %v1757 = vpop.f32.mrf.mxu0
        %v1758 = vadd.f32 0.0, %v1757
        %1759 = vdwg.mxu0
        %1760 = vmatpush.msra.mxu0 0.0
        %1761 = vmatpush.msra.mxu0 0.0
        %1762 = vmatpush.msra.mxu0 0.0
        %1763 = vmatpush.msra.mxu0 0.0
        %1764 = vmatpush.msra.mxu0 0.0
        %1765 = vmatpush.msra.mxu0 0.0
        %1766 = vmatpush.msra.mxu0 0.0
        %1767 = vmatpush.msra.mxu0 0.0
        %1768 = vmatpush.msra.mxu0 0.0
        %1769 = vmatpush.msra.mxu0 0.0
        %1770 = vmatpush.msra.mxu0 0.0
        %1771 = vmatpush.msra.mxu0 0.0
        %1772 = vmatpush.msra.mxu0 0.0
        %1773 = vmatpush.msra.mxu0 0.0
        %1774 = vmatpush.msra.mxu0 0.0
        %1775 = vmatpush.msra.mxu0 %v1654
        %1776 = vmatmul.f32.gmra.mxu0 %v1642
        %v1777 = vpop.f32.mrf.mxu0
        %v1778 = vadd.f32 0.0, %v1777
        %1779 = vdwg.mxu0
        %1780 = vmatpush.msra.mxu0 0.0
        %1781 = vmatpush.msra.mxu0 0.0
        %1782 = vmatpush.msra.mxu0 0.0
        %1783 = vmatpush.msra.mxu0 0.0
        %1784 = vmatpush.msra.mxu0 0.0
        %1785 = vmatpush.msra.mxu0 0.0
        %1786 = vmatpush.msra.mxu0 0.0
        %1787 = vmatpush.msra.mxu0 0.0
        %1788 = vmatpush.msra.mxu0 0.0
        %1789 = vmatpush.msra.mxu0 0.0
        %1790 = vmatpush.msra.mxu0 0.0
        %1791 = vmatpush.msra.mxu0 0.0
        %1792 = vmatpush.msra.mxu0 0.0
        %1793 = vmatpush.msra.mxu0 0.0
        %1794 = vmatpush.msra.mxu0 0.0
        %1795 = vmatpush.msra.mxu0 %v1656
        %1796 = vmatmul.f32.gmra.mxu0 %v1642
        %v1797 = vpop.f32.mrf.mxu0
        %v1798 = vadd.f32 0.0, %v1797
        %1799 = vdwg.mxu0
        %1800 = vmatpush.msra.mxu0 0.0
        %1801 = vmatpush.msra.mxu0 0.0
        %1802 = vmatpush.msra.mxu0 0.0
        %1803 = vmatpush.msra.mxu0 0.0
        %1804 = vmatpush.msra.mxu0 0.0
        %1805 = vmatpush.msra.mxu0 0.0
        %1806 = vmatpush.msra.mxu0 0.0
        %1807 = vmatpush.msra.mxu0 0.0
        %1808 = vmatpush.msra.mxu0 0.0
        %1809 = vmatpush.msra.mxu0 0.0
        %1810 = vmatpush.msra.mxu0 0.0
        %1811 = vmatpush.msra.mxu0 0.0
        %1812 = vmatpush.msra.mxu0 0.0
        %1813 = vmatpush.msra.mxu0 0.0
        %1814 = vmatpush.msra.mxu0 0.0
        %1815 = vmatpush.msra.mxu0 %v1658
        %1816 = vmatmul.f32.gmra.mxu0 %v1642
        %v1817 = vpop.f32.mrf.mxu0
        %v1818 = vadd.f32 0.0, %v1817
        %1819 = vdwg.mxu0
        %v1820 = vadd.f32 %v1584, %v1678
        %v1821 = vadd.f32 %v1585, %v1698
        %v1822 = vadd.f32 %v1586, %v1718
        %v1823 = vadd.f32 %v1587, %v1738
        %v1824 = vadd.f32 %v1588, %v1758
        %v1825 = vadd.f32 %v1589, %v1778
        %v1826 = vadd.f32 %v1590, %v1798
        %v1827 = vadd.f32 %v1591, %v1818
        %v1828 = vld [vmem:[%s222] sm:$0xff]
        %v1829 = vld [vmem:[%s222 + $0x8] sm:$0xff]
        %v1830 = vld [vmem:[%s222 + $0x10] sm:$0xff]
        %v1831 = vld [vmem:[%s222 + $0x18] sm:$0xff]
        %s1832 = scalar_lea.vmem %s1, 56
        %v1833 = vld [vmem:[%s1832] sm:$0xff]
        %1838 = vst [vmem:[#allocation1] ss:$2 sm:$0xff] %v1828
        %s1839 = scalar_lea.vmem [#allocation1], 16
        %1840 = vst [vmem:[%s1839] ss:$2 sm:$0xff] %v1829
        %s1841 = scalar_lea.vmem [#allocation1], 32
        %1842 = vst [vmem:[%s1841] ss:$2 sm:$0xff] %v1830
        %s1843 = scalar_lea.vmem [#allocation1], 48
        %1844 = vst [vmem:[%s1843] ss:$2 sm:$0xff] %v1831
        %v1845 = vld.sshfl [vmem:[#allocation1] sm:$0xff pattern:$0x75316420]
        %v1846 = vld.sshfl [vmem:[#allocation1 + $0x8] sm:$0xff pattern:$0x75316420]
        %v1847 = vld.sshfl [vmem:[#allocation1 + $0x10] sm:$0xff pattern:$0x75316420]
        %v1848 = vld.sshfl [vmem:[#allocation1 + $0x18] sm:$0xff pattern:$0x75316420]
        %v1849 = vld.sshfl [vmem:[#allocation1 + $0x20] sm:$0xff pattern:$0x75316420]
        %v1850 = vld.sshfl [vmem:[#allocation1 + $0x28] sm:$0xff pattern:$0x75316420]
        %v1851 = vld.sshfl [vmem:[#allocation1 + $0x30] sm:$0xff pattern:$0x75316420]
        %v1852 = vld.sshfl [vmem:[#allocation1 + $0x38] sm:$0xff pattern:$0x75316420]
        %1853 = vrot.lane.b32.xlu0 %v1845, 107
        %v1854 = vpop.permute.xlu0 %1853
        %1855 = vrot.lane.b32.xlu0 %v1846, 107
        %v1856 = vpop.permute.xlu0 %1855
        %1857 = vrot.lane.b32.xlu0 %v1847, 107
        %v1858 = vpop.permute.xlu0 %1857
        %1859 = vrot.lane.b32.xlu0 %v1848, 107
        %v1860 = vpop.permute.xlu0 %1859
        %1861 = vrot.lane.b32.xlu0 %v1849, 107
        %v1862 = vpop.permute.xlu0 %1861
        %1863 = vrot.lane.b32.xlu0 %v1850, 107
        %v1864 = vpop.permute.xlu0 %1863
        %1865 = vrot.lane.b32.xlu0 %v1851, 107
        %v1866 = vpop.permute.xlu0 %1865
        %1867 = vrot.lane.b32.xlu0 %v1852, 107
        %v1868 = vpop.permute.xlu0 %1867
        %vm1869 = vcmask 875520
        %v1870 = vsel %vm1869, %v1854, %v1856
        %v1871 = vsel %vm1869, %v1856, %v1858
        %v1872 = vsel %vm1869, %v1858, %v1860
        %v1873 = vsel %vm1869, %v1860, %v1862
        %v1874 = vsel %vm1869, %v1862, %v1864
        %v1875 = vsel %vm1869, %v1864, %v1866
        %v1876 = vsel %vm1869, %v1866, %v1868
        %v1878 = vsel %vm273, %v1833, 0
        %v1880 = vsel %vm277, %v1870, 0
        %v1882 = vsel %vm277, %v1871, 0
        %v1884 = vsel %vm277, %v1872, 0
        %v1886 = vsel %vm277, %v1873, 0
        %v1888 = vsel %vm277, %v1874, 0
        %v1890 = vsel %vm277, %v1875, 0
        %v1892 = vsel %vm277, %v1876, 0
        %v1894 = vsel %vm277, %v1868, 0
        %1896 = vmatpush.msra.mxu0 0.0
        %1897 = vmatpush.msra.mxu0 0.0
        %1898 = vmatpush.msra.mxu0 0.0
        %1899 = vmatpush.msra.mxu0 0.0
        %1900 = vmatpush.msra.mxu0 0.0
        %1901 = vmatpush.msra.mxu0 0.0
        %1902 = vmatpush.msra.mxu0 0.0
        %1903 = vmatpush.msra.mxu0 0.0
        %1904 = vmatpush.msra.mxu0 0.0
        %1905 = vmatpush.msra.mxu0 0.0
        %1906 = vmatpush.msra.mxu0 0.0
        %1907 = vmatpush.msra.mxu0 0.0
        %1908 = vmatpush.msra.mxu0 0.0
        %1909 = vmatpush.msra.mxu0 0.0
        %1910 = vmatpush.msra.mxu0 0.0
        %1911 = vmatpush.msra.mxu0 %v1880
        %1912 = vmatmul.f32.gmra.mxu0 %v1878
        %v1913 = vpop.f32.mrf.mxu0
        %v1914 = vadd.f32 0.0, %v1913
        %1915 = vdwg.mxu0
        %1916 = vmatpush.msra.mxu0 0.0
        %1917 = vmatpush.msra.mxu0 0.0
        %1918 = vmatpush.msra.mxu0 0.0
        %1919 = vmatpush.msra.mxu0 0.0
        %1920 = vmatpush.msra.mxu0 0.0
        %1921 = vmatpush.msra.mxu0 0.0
        %1922 = vmatpush.msra.mxu0 0.0
        %1923 = vmatpush.msra.mxu0 0.0
        %1924 = vmatpush.msra.mxu0 0.0
        %1925 = vmatpush.msra.mxu0 0.0
        %1926 = vmatpush.msra.mxu0 0.0
        %1927 = vmatpush.msra.mxu0 0.0
        %1928 = vmatpush.msra.mxu0 0.0
        %1929 = vmatpush.msra.mxu0 0.0
        %1930 = vmatpush.msra.mxu0 0.0
        %1931 = vmatpush.msra.mxu0 %v1882
        %1932 = vmatmul.f32.gmra.mxu0 %v1878
        %v1933 = vpop.f32.mrf.mxu0
        %v1934 = vadd.f32 0.0, %v1933
        %1935 = vdwg.mxu0
        %1936 = vmatpush.msra.mxu0 0.0
        %1937 = vmatpush.msra.mxu0 0.0
        %1938 = vmatpush.msra.mxu0 0.0
        %1939 = vmatpush.msra.mxu0 0.0
        %1940 = vmatpush.msra.mxu0 0.0
        %1941 = vmatpush.msra.mxu0 0.0
        %1942 = vmatpush.msra.mxu0 0.0
        %1943 = vmatpush.msra.mxu0 0.0
        %1944 = vmatpush.msra.mxu0 0.0
        %1945 = vmatpush.msra.mxu0 0.0
        %1946 = vmatpush.msra.mxu0 0.0
        %1947 = vmatpush.msra.mxu0 0.0
        %1948 = vmatpush.msra.mxu0 0.0
        %1949 = vmatpush.msra.mxu0 0.0
        %1950 = vmatpush.msra.mxu0 0.0
        %1951 = vmatpush.msra.mxu0 %v1884
        %1952 = vmatmul.f32.gmra.mxu0 %v1878
        %v1953 = vpop.f32.mrf.mxu0
        %v1954 = vadd.f32 0.0, %v1953
        %1955 = vdwg.mxu0
        %1956 = vmatpush.msra.mxu0 0.0
        %1957 = vmatpush.msra.mxu0 0.0
        %1958 = vmatpush.msra.mxu0 0.0
        %1959 = vmatpush.msra.mxu0 0.0
        %1960 = vmatpush.msra.mxu0 0.0
        %1961 = vmatpush.msra.mxu0 0.0
        %1962 = vmatpush.msra.mxu0 0.0
        %1963 = vmatpush.msra.mxu0 0.0
        %1964 = vmatpush.msra.mxu0 0.0
        %1965 = vmatpush.msra.mxu0 0.0
        %1966 = vmatpush.msra.mxu0 0.0
        %1967 = vmatpush.msra.mxu0 0.0
        %1968 = vmatpush.msra.mxu0 0.0
        %1969 = vmatpush.msra.mxu0 0.0
        %1970 = vmatpush.msra.mxu0 0.0
        %1971 = vmatpush.msra.mxu0 %v1886
        %1972 = vmatmul.f32.gmra.mxu0 %v1878
        %v1973 = vpop.f32.mrf.mxu0
        %v1974 = vadd.f32 0.0, %v1973
        %1975 = vdwg.mxu0
        %1976 = vmatpush.msra.mxu0 0.0
        %1977 = vmatpush.msra.mxu0 0.0
        %1978 = vmatpush.msra.mxu0 0.0
        %1979 = vmatpush.msra.mxu0 0.0
        %1980 = vmatpush.msra.mxu0 0.0
        %1981 = vmatpush.msra.mxu0 0.0
        %1982 = vmatpush.msra.mxu0 0.0
        %1983 = vmatpush.msra.mxu0 0.0
        %1984 = vmatpush.msra.mxu0 0.0
        %1985 = vmatpush.msra.mxu0 0.0
        %1986 = vmatpush.msra.mxu0 0.0
        %1987 = vmatpush.msra.mxu0 0.0
        %1988 = vmatpush.msra.mxu0 0.0
        %1989 = vmatpush.msra.mxu0 0.0
        %1990 = vmatpush.msra.mxu0 0.0
        %1991 = vmatpush.msra.mxu0 %v1888
        %1992 = vmatmul.f32.gmra.mxu0 %v1878
        %v1993 = vpop.f32.mrf.mxu0
        %v1994 = vadd.f32 0.0, %v1993
        %1995 = vdwg.mxu0
        %1996 = vmatpush.msra.mxu0 0.0
        %1997 = vmatpush.msra.mxu0 0.0
        %1998 = vmatpush.msra.mxu0 0.0
        %1999 = vmatpush.msra.mxu0 0.0
        %2000 = vmatpush.msra.mxu0 0.0
        %2001 = vmatpush.msra.mxu0 0.0
        %2002 = vmatpush.msra.mxu0 0.0
        %2003 = vmatpush.msra.mxu0 0.0
        %2004 = vmatpush.msra.mxu0 0.0
        %2005 = vmatpush.msra.mxu0 0.0
        %2006 = vmatpush.msra.mxu0 0.0
        %2007 = vmatpush.msra.mxu0 0.0
        %2008 = vmatpush.msra.mxu0 0.0
        %2009 = vmatpush.msra.mxu0 0.0
        %2010 = vmatpush.msra.mxu0 0.0
        %2011 = vmatpush.msra.mxu0 %v1890
        %2012 = vmatmul.f32.gmra.mxu0 %v1878
        %v2013 = vpop.f32.mrf.mxu0
        %v2014 = vadd.f32 0.0, %v2013
        %2015 = vdwg.mxu0
        %2016 = vmatpush.msra.mxu0 0.0
        %2017 = vmatpush.msra.mxu0 0.0
        %2018 = vmatpush.msra.mxu0 0.0
        %2019 = vmatpush.msra.mxu0 0.0
        %2020 = vmatpush.msra.mxu0 0.0
        %2021 = vmatpush.msra.mxu0 0.0
        %2022 = vmatpush.msra.mxu0 0.0
        %2023 = vmatpush.msra.mxu0 0.0
        %2024 = vmatpush.msra.mxu0 0.0
        %2025 = vmatpush.msra.mxu0 0.0
        %2026 = vmatpush.msra.mxu0 0.0
        %2027 = vmatpush.msra.mxu0 0.0
        %2028 = vmatpush.msra.mxu0 0.0
        %2029 = vmatpush.msra.mxu0 0.0
        %2030 = vmatpush.msra.mxu0 0.0
        %2031 = vmatpush.msra.mxu0 %v1892
        %2032 = vmatmul.f32.gmra.mxu0 %v1878
        %v2033 = vpop.f32.mrf.mxu0
        %v2034 = vadd.f32 0.0, %v2033
        %2035 = vdwg.mxu0
        %2036 = vmatpush.msra.mxu0 0.0
        %2037 = vmatpush.msra.mxu0 0.0
        %2038 = vmatpush.msra.mxu0 0.0
        %2039 = vmatpush.msra.mxu0 0.0
        %2040 = vmatpush.msra.mxu0 0.0
        %2041 = vmatpush.msra.mxu0 0.0
        %2042 = vmatpush.msra.mxu0 0.0
        %2043 = vmatpush.msra.mxu0 0.0
        %2044 = vmatpush.msra.mxu0 0.0
        %2045 = vmatpush.msra.mxu0 0.0
        %2046 = vmatpush.msra.mxu0 0.0
        %2047 = vmatpush.msra.mxu0 0.0
        %2048 = vmatpush.msra.mxu0 0.0
        %2049 = vmatpush.msra.mxu0 0.0
        %2050 = vmatpush.msra.mxu0 0.0
        %2051 = vmatpush.msra.mxu0 %v1894
        %2052 = vmatmul.f32.gmra.mxu0 %v1878
        %v2053 = vpop.f32.mrf.mxu0
        %v2054 = vadd.f32 0.0, %v2053
        %2055 = vdwg.mxu0
        %v2056 = vadd.f32 %v1820, %v1914
        %v2057 = vadd.f32 %v1821, %v1934
        %v2058 = vadd.f32 %v1822, %v1954
        %v2059 = vadd.f32 %v1823, %v1974
        %v2060 = vadd.f32 %v1824, %v1994
        %v2061 = vadd.f32 %v1825, %v2014
        %v2062 = vadd.f32 %v1826, %v2034
        %v2063 = vadd.f32 %v1827, %v2054
        %v2064 = vld [vmem:[%s222] sm:$0xff]
        %v2065 = vld [vmem:[%s222 + $0x8] sm:$0xff]
        %v2066 = vld [vmem:[%s222 + $0x10] sm:$0xff]
        %v2067 = vld [vmem:[%s222 + $0x18] sm:$0xff]
        %s2068 = scalar_lea.vmem %s1, 64
        %v2069 = vld [vmem:[%s2068] sm:$0xff]
        %2074 = vst [vmem:[#allocation1] ss:$2 sm:$0xff] %v2064
        %s2075 = scalar_lea.vmem [#allocation1], 16
        %2076 = vst [vmem:[%s2075] ss:$2 sm:$0xff] %v2065
        %s2077 = scalar_lea.vmem [#allocation1], 32
        %2078 = vst [vmem:[%s2077] ss:$2 sm:$0xff] %v2066
        %s2079 = scalar_lea.vmem [#allocation1], 48
        %2080 = vst [vmem:[%s2079] ss:$2 sm:$0xff] %v2067
        %v2081 = vld.sshfl [vmem:[#allocation1] sm:$0xff pattern:$0x75316420]
        %v2082 = vld.sshfl [vmem:[#allocation1 + $0x8] sm:$0xff pattern:$0x75316420]
        %v2083 = vld.sshfl [vmem:[#allocation1 + $0x10] sm:$0xff pattern:$0x75316420]
        %v2084 = vld.sshfl [vmem:[#allocation1 + $0x18] sm:$0xff pattern:$0x75316420]
        %v2085 = vld.sshfl [vmem:[#allocation1 + $0x20] sm:$0xff pattern:$0x75316420]
        %v2086 = vld.sshfl [vmem:[#allocation1 + $0x28] sm:$0xff pattern:$0x75316420]
        %v2087 = vld.sshfl [vmem:[#allocation1 + $0x30] sm:$0xff pattern:$0x75316420]
        %v2088 = vld.sshfl [vmem:[#allocation1 + $0x38] sm:$0xff pattern:$0x75316420]
        %2089 = vrot.lane.b32.xlu0 %v2081, 106
        %v2090 = vpop.permute.xlu0 %2089
        %2091 = vrot.lane.b32.xlu0 %v2082, 106
        %v2092 = vpop.permute.xlu0 %2091
        %2093 = vrot.lane.b32.xlu0 %v2083, 106
        %v2094 = vpop.permute.xlu0 %2093
        %2095 = vrot.lane.b32.xlu0 %v2084, 106
        %v2096 = vpop.permute.xlu0 %2095
        %2097 = vrot.lane.b32.xlu0 %v2085, 106
        %v2098 = vpop.permute.xlu0 %2097
        %2099 = vrot.lane.b32.xlu0 %v2086, 106
        %v2100 = vpop.permute.xlu0 %2099
        %2101 = vrot.lane.b32.xlu0 %v2087, 106
        %v2102 = vpop.permute.xlu0 %2101
        %2103 = vrot.lane.b32.xlu0 %v2088, 106
        %v2104 = vpop.permute.xlu0 %2103
        %vm2105 = vcmask 867328
        %v2106 = vsel %vm2105, %v2090, %v2092
        %v2107 = vsel %vm2105, %v2092, %v2094
        %v2108 = vsel %vm2105, %v2094, %v2096
        %v2109 = vsel %vm2105, %v2096, %v2098
        %v2110 = vsel %vm2105, %v2098, %v2100
        %v2111 = vsel %vm2105, %v2100, %v2102
        %v2112 = vsel %vm2105, %v2102, %v2104
        %v2114 = vsel %vm273, %v2069, 0
        %v2116 = vsel %vm277, %v2106, 0
        %v2118 = vsel %vm277, %v2107, 0
        %v2120 = vsel %vm277, %v2108, 0
        %v2122 = vsel %vm277, %v2109, 0
        %v2124 = vsel %vm277, %v2110, 0
        %v2126 = vsel %vm277, %v2111, 0
        %v2128 = vsel %vm277, %v2112, 0
        %v2130 = vsel %vm277, %v2104, 0
        %2132 = vmatpush.msra.mxu0 0.0
        %2133 = vmatpush.msra.mxu0 0.0
        %2134 = vmatpush.msra.mxu0 0.0
        %2135 = vmatpush.msra.mxu0 0.0
        %2136 = vmatpush.msra.mxu0 0.0
        %2137 = vmatpush.msra.mxu0 0.0
        %2138 = vmatpush.msra.mxu0 0.0
        %2139 = vmatpush.msra.mxu0 0.0
        %2140 = vmatpush.msra.mxu0 0.0
        %2141 = vmatpush.msra.mxu0 0.0
        %2142 = vmatpush.msra.mxu0 0.0
        %2143 = vmatpush.msra.mxu0 0.0
        %2144 = vmatpush.msra.mxu0 0.0
        %2145 = vmatpush.msra.mxu0 0.0
        %2146 = vmatpush.msra.mxu0 0.0
        %2147 = vmatpush.msra.mxu0 %v2116
        %2148 = vmatmul.f32.gmra.mxu0 %v2114
        %v2149 = vpop.f32.mrf.mxu0
        %v2150 = vadd.f32 0.0, %v2149
        %2151 = vdwg.mxu0
        %2152 = vmatpush.msra.mxu0 0.0
        %2153 = vmatpush.msra.mxu0 0.0
        %2154 = vmatpush.msra.mxu0 0.0
        %2155 = vmatpush.msra.mxu0 0.0
        %2156 = vmatpush.msra.mxu0 0.0
        %2157 = vmatpush.msra.mxu0 0.0
        %2158 = vmatpush.msra.mxu0 0.0
        %2159 = vmatpush.msra.mxu0 0.0
        %2160 = vmatpush.msra.mxu0 0.0
        %2161 = vmatpush.msra.mxu0 0.0
        %2162 = vmatpush.msra.mxu0 0.0
        %2163 = vmatpush.msra.mxu0 0.0
        %2164 = vmatpush.msra.mxu0 0.0
        %2165 = vmatpush.msra.mxu0 0.0
        %2166 = vmatpush.msra.mxu0 0.0
        %2167 = vmatpush.msra.mxu0 %v2118
        %2168 = vmatmul.f32.gmra.mxu0 %v2114
        %v2169 = vpop.f32.mrf.mxu0
        %v2170 = vadd.f32 0.0, %v2169
        %2171 = vdwg.mxu0
        %2172 = vmatpush.msra.mxu0 0.0
        %2173 = vmatpush.msra.mxu0 0.0
        %2174 = vmatpush.msra.mxu0 0.0
        %2175 = vmatpush.msra.mxu0 0.0
        %2176 = vmatpush.msra.mxu0 0.0
        %2177 = vmatpush.msra.mxu0 0.0
        %2178 = vmatpush.msra.mxu0 0.0
        %2179 = vmatpush.msra.mxu0 0.0
        %2180 = vmatpush.msra.mxu0 0.0
        %2181 = vmatpush.msra.mxu0 0.0
        %2182 = vmatpush.msra.mxu0 0.0
        %2183 = vmatpush.msra.mxu0 0.0
        %2184 = vmatpush.msra.mxu0 0.0
        %2185 = vmatpush.msra.mxu0 0.0
        %2186 = vmatpush.msra.mxu0 0.0
        %2187 = vmatpush.msra.mxu0 %v2120
        %2188 = vmatmul.f32.gmra.mxu0 %v2114
        %v2189 = vpop.f32.mrf.mxu0
        %v2190 = vadd.f32 0.0, %v2189
        %2191 = vdwg.mxu0
        %2192 = vmatpush.msra.mxu0 0.0
        %2193 = vmatpush.msra.mxu0 0.0
        %2194 = vmatpush.msra.mxu0 0.0
        %2195 = vmatpush.msra.mxu0 0.0
        %2196 = vmatpush.msra.mxu0 0.0
        %2197 = vmatpush.msra.mxu0 0.0
        %2198 = vmatpush.msra.mxu0 0.0
        %2199 = vmatpush.msra.mxu0 0.0
        %2200 = vmatpush.msra.mxu0 0.0
        %2201 = vmatpush.msra.mxu0 0.0
        %2202 = vmatpush.msra.mxu0 0.0
        %2203 = vmatpush.msra.mxu0 0.0
        %2204 = vmatpush.msra.mxu0 0.0
        %2205 = vmatpush.msra.mxu0 0.0
        %2206 = vmatpush.msra.mxu0 0.0
        %2207 = vmatpush.msra.mxu0 %v2122
        %2208 = vmatmul.f32.gmra.mxu0 %v2114
        %v2209 = vpop.f32.mrf.mxu0
        %v2210 = vadd.f32 0.0, %v2209
        %2211 = vdwg.mxu0
        %2212 = vmatpush.msra.mxu0 0.0
        %2213 = vmatpush.msra.mxu0 0.0
        %2214 = vmatpush.msra.mxu0 0.0
        %2215 = vmatpush.msra.mxu0 0.0
        %2216 = vmatpush.msra.mxu0 0.0
        %2217 = vmatpush.msra.mxu0 0.0
        %2218 = vmatpush.msra.mxu0 0.0
        %2219 = vmatpush.msra.mxu0 0.0
        %2220 = vmatpush.msra.mxu0 0.0
        %2221 = vmatpush.msra.mxu0 0.0
        %2222 = vmatpush.msra.mxu0 0.0
        %2223 = vmatpush.msra.mxu0 0.0
        %2224 = vmatpush.msra.mxu0 0.0
        %2225 = vmatpush.msra.mxu0 0.0
        %2226 = vmatpush.msra.mxu0 0.0
        %2227 = vmatpush.msra.mxu0 %v2124
        %2228 = vmatmul.f32.gmra.mxu0 %v2114
        %v2229 = vpop.f32.mrf.mxu0
        %v2230 = vadd.f32 0.0, %v2229
        %2231 = vdwg.mxu0
        %2232 = vmatpush.msra.mxu0 0.0
        %2233 = vmatpush.msra.mxu0 0.0
        %2234 = vmatpush.msra.mxu0 0.0
        %2235 = vmatpush.msra.mxu0 0.0
        %2236 = vmatpush.msra.mxu0 0.0
        %2237 = vmatpush.msra.mxu0 0.0
        %2238 = vmatpush.msra.mxu0 0.0
        %2239 = vmatpush.msra.mxu0 0.0
        %2240 = vmatpush.msra.mxu0 0.0
        %2241 = vmatpush.msra.mxu0 0.0
        %2242 = vmatpush.msra.mxu0 0.0
        %2243 = vmatpush.msra.mxu0 0.0
        %2244 = vmatpush.msra.mxu0 0.0
        %2245 = vmatpush.msra.mxu0 0.0
        %2246 = vmatpush.msra.mxu0 0.0
        %2247 = vmatpush.msra.mxu0 %v2126
        %2248 = vmatmul.f32.gmra.mxu0 %v2114
        %v2249 = vpop.f32.mrf.mxu0
        %v2250 = vadd.f32 0.0, %v2249
        %2251 = vdwg.mxu0
        %2252 = vmatpush.msra.mxu0 0.0
        %2253 = vmatpush.msra.mxu0 0.0
        %2254 = vmatpush.msra.mxu0 0.0
        %2255 = vmatpush.msra.mxu0 0.0
        %2256 = vmatpush.msra.mxu0 0.0
        %2257 = vmatpush.msra.mxu0 0.0
        %2258 = vmatpush.msra.mxu0 0.0
        %2259 = vmatpush.msra.mxu0 0.0
        %2260 = vmatpush.msra.mxu0 0.0
        %2261 = vmatpush.msra.mxu0 0.0
        %2262 = vmatpush.msra.mxu0 0.0
        %2263 = vmatpush.msra.mxu0 0.0
        %2264 = vmatpush.msra.mxu0 0.0
        %2265 = vmatpush.msra.mxu0 0.0
        %2266 = vmatpush.msra.mxu0 0.0
        %2267 = vmatpush.msra.mxu0 %v2128
        %2268 = vmatmul.f32.gmra.mxu0 %v2114
        %v2269 = vpop.f32.mrf.mxu0
        %v2270 = vadd.f32 0.0, %v2269
        %2271 = vdwg.mxu0
        %2272 = vmatpush.msra.mxu0 0.0
        %2273 = vmatpush.msra.mxu0 0.0
        %2274 = vmatpush.msra.mxu0 0.0
        %2275 = vmatpush.msra.mxu0 0.0
        %2276 = vmatpush.msra.mxu0 0.0
        %2277 = vmatpush.msra.mxu0 0.0
        %2278 = vmatpush.msra.mxu0 0.0
        %2279 = vmatpush.msra.mxu0 0.0
        %2280 = vmatpush.msra.mxu0 0.0
        %2281 = vmatpush.msra.mxu0 0.0
        %2282 = vmatpush.msra.mxu0 0.0
        %2283 = vmatpush.msra.mxu0 0.0
        %2284 = vmatpush.msra.mxu0 0.0
        %2285 = vmatpush.msra.mxu0 0.0
        %2286 = vmatpush.msra.mxu0 0.0
        %2287 = vmatpush.msra.mxu0 %v2130
        %2288 = vmatmul.f32.gmra.mxu0 %v2114
        %v2289 = vpop.f32.mrf.mxu0
        %v2290 = vadd.f32 0.0, %v2289
        %2291 = vdwg.mxu0
        %v2292 = vadd.f32 %v2056, %v2150
        %v2293 = vadd.f32 %v2057, %v2170
        %v2294 = vadd.f32 %v2058, %v2190
        %v2295 = vadd.f32 %v2059, %v2210
        %v2296 = vadd.f32 %v2060, %v2230
        %v2297 = vadd.f32 %v2061, %v2250
        %v2298 = vadd.f32 %v2062, %v2270
        %v2299 = vadd.f32 %v2063, %v2290
        %v2300 = vld [vmem:[%s222] sm:$0xff]
        %v2301 = vld [vmem:[%s222 + $0x8] sm:$0xff]
        %v2302 = vld [vmem:[%s222 + $0x10] sm:$0xff]
        %v2303 = vld [vmem:[%s222 + $0x18] sm:$0xff]
        %v2304 = vld [vmem:[%s222 + $0x20] sm:$0xf]
        %s2305 = scalar_lea.vmem %s1, 72
        %v2306 = vld [vmem:[%s2305] sm:$0xff]
        %2312 = vst [vmem:[#allocation1] ss:$2 sm:$0xff] %v2300
        %s2313 = scalar_lea.vmem [#allocation1], 16
        %2314 = vst [vmem:[%s2313] ss:$2 sm:$0xff] %v2301
        %s2315 = scalar_lea.vmem [#allocation1], 32
        %2316 = vst [vmem:[%s2315] ss:$2 sm:$0xff] %v2302
        %s2317 = scalar_lea.vmem [#allocation1], 48
        %2318 = vst [vmem:[%s2317] ss:$2 sm:$0xff] %v2303
        %v2319 = vld.sshfl [vmem:[#allocation1] sm:$0xff pattern:$0x75316420]
        %v2320 = vld.sshfl [vmem:[#allocation1 + $0x8] sm:$0xff pattern:$0x75316420]
        %v2321 = vld.sshfl [vmem:[#allocation1 + $0x10] sm:$0xff pattern:$0x75316420]
        %v2322 = vld.sshfl [vmem:[#allocation1 + $0x18] sm:$0xff pattern:$0x75316420]
        %v2323 = vld.sshfl [vmem:[#allocation1 + $0x20] sm:$0xff pattern:$0x75316420]
        %v2324 = vld.sshfl [vmem:[#allocation1 + $0x28] sm:$0xff pattern:$0x75316420]
        %v2325 = vld.sshfl [vmem:[#allocation1 + $0x30] sm:$0xff pattern:$0x75316420]
        %v2326 = vld.sshfl [vmem:[#allocation1 + $0x38] sm:$0xff pattern:$0x75316420]
        %2327 = vst [vmem:[#allocation1] ss:$2 sm:$0xff] %v2304
        %v2328 = vld.sshfl [vmem:[#allocation1] sm:$0xff pattern:$0x75316420]
        %2329 = vrot.lane.b32.xlu0 %v2319, 28
        %v2330 = vpop.permute.xlu0 %2329
        %2331 = vrot.lane.b32.xlu0 %v2320, 28
        %v2332 = vpop.permute.xlu0 %2331
        %2333 = vrot.lane.b32.xlu0 %v2321, 28
        %v2334 = vpop.permute.xlu0 %2333
        %2335 = vrot.lane.b32.xlu0 %v2322, 28
        %v2336 = vpop.permute.xlu0 %2335
        %2337 = vrot.lane.b32.xlu0 %v2323, 28
        %v2338 = vpop.permute.xlu0 %2337
        %2339 = vrot.lane.b32.xlu0 %v2324, 28
        %v2340 = vpop.permute.xlu0 %2339
        %2341 = vrot.lane.b32.xlu0 %v2325, 28
        %v2342 = vpop.permute.xlu0 %2341
        %2343 = vrot.lane.b32.xlu0 %v2326, 28
        %v2344 = vpop.permute.xlu0 %2343
        %2345 = vrot.lane.b32.xlu0 %v2328, 28
        %v2346 = vpop.permute.xlu0 %2345
        %vm2347 = vcmask 228352
        %v2348 = vsel %vm2347, %v2330, %v2332
        %v2349 = vsel %vm2347, %v2332, %v2334
        %v2350 = vsel %vm2347, %v2334, %v2336
        %v2351 = vsel %vm2347, %v2336, %v2338
        %v2352 = vsel %vm2347, %v2338, %v2340
        %v2353 = vsel %vm2347, %v2340, %v2342
        %v2354 = vsel %vm2347, %v2342, %v2344
        %v2355 = vsel %vm2347, %v2344, %v2346
        %v2357 = vsel %vm273, %v2306, 0
        %v2359 = vsel %vm277, %v2348, 0
        %v2361 = vsel %vm277, %v2349, 0
        %v2363 = vsel %vm277, %v2350, 0
        %v2365 = vsel %vm277, %v2351, 0
        %v2367 = vsel %vm277, %v2352, 0
        %v2369 = vsel %vm277, %v2353, 0
        %v2371 = vsel %vm277, %v2354, 0
        %v2373 = vsel %vm277, %v2355, 0
        %2375 = vmatpush.msra.mxu0 0.0
        %2376 = vmatpush.msra.mxu0 0.0
        %2377 = vmatpush.msra.mxu0 0.0
        %2378 = vmatpush.msra.mxu0 0.0
        %2379 = vmatpush.msra.mxu0 0.0
        %2380 = vmatpush.msra.mxu0 0.0
        %2381 = vmatpush.msra.mxu0 0.0
        %2382 = vmatpush.msra.mxu0 0.0
        %2383 = vmatpush.msra.mxu0 0.0
        %2384 = vmatpush.msra.mxu0 0.0
        %2385 = vmatpush.msra.mxu0 0.0
        %2386 = vmatpush.msra.mxu0 0.0
        %2387 = vmatpush.msra.mxu0 0.0
        %2388 = vmatpush.msra.mxu0 0.0
        %2389 = vmatpush.msra.mxu0 0.0
        %2390 = vmatpush.msra.mxu0 %v2359
        %2391 = vmatmul.f32.gmra.mxu0 %v2357
        %v2392 = vpop.f32.mrf.mxu0
        %v2393 = vadd.f32 0.0, %v2392
        %2394 = vdwg.mxu0
        %2395 = vmatpush.msra.mxu0 0.0
        %2396 = vmatpush.msra.mxu0 0.0
        %2397 = vmatpush.msra.mxu0 0.0
        %2398 = vmatpush.msra.mxu0 0.0
        %2399 = vmatpush.msra.mxu0 0.0
        %2400 = vmatpush.msra.mxu0 0.0
        %2401 = vmatpush.msra.mxu0 0.0
        %2402 = vmatpush.msra.mxu0 0.0
        %2403 = vmatpush.msra.mxu0 0.0
        %2404 = vmatpush.msra.mxu0 0.0
        %2405 = vmatpush.msra.mxu0 0.0
        %2406 = vmatpush.msra.mxu0 0.0
        %2407 = vmatpush.msra.mxu0 0.0
        %2408 = vmatpush.msra.mxu0 0.0
        %2409 = vmatpush.msra.mxu0 0.0
        %2410 = vmatpush.msra.mxu0 %v2361
        %2411 = vmatmul.f32.gmra.mxu0 %v2357
        %v2412 = vpop.f32.mrf.mxu0
        %v2413 = vadd.f32 0.0, %v2412
        %2414 = vdwg.mxu0
        %2415 = vmatpush.msra.mxu0 0.0
        %2416 = vmatpush.msra.mxu0 0.0
        %2417 = vmatpush.msra.mxu0 0.0
        %2418 = vmatpush.msra.mxu0 0.0
        %2419 = vmatpush.msra.mxu0 0.0
        %2420 = vmatpush.msra.mxu0 0.0
        %2421 = vmatpush.msra.mxu0 0.0
        %2422 = vmatpush.msra.mxu0 0.0
        %2423 = vmatpush.msra.mxu0 0.0
        %2424 = vmatpush.msra.mxu0 0.0
        %2425 = vmatpush.msra.mxu0 0.0
        %2426 = vmatpush.msra.mxu0 0.0
        %2427 = vmatpush.msra.mxu0 0.0
        %2428 = vmatpush.msra.mxu0 0.0
        %2429 = vmatpush.msra.mxu0 0.0
        %2430 = vmatpush.msra.mxu0 %v2363
        %2431 = vmatmul.f32.gmra.mxu0 %v2357
        %v2432 = vpop.f32.mrf.mxu0
        %v2433 = vadd.f32 0.0, %v2432
        %2434 = vdwg.mxu0
        %2435 = vmatpush.msra.mxu0 0.0
        %2436 = vmatpush.msra.mxu0 0.0
        %2437 = vmatpush.msra.mxu0 0.0
        %2438 = vmatpush.msra.mxu0 0.0
        %2439 = vmatpush.msra.mxu0 0.0
        %2440 = vmatpush.msra.mxu0 0.0
        %2441 = vmatpush.msra.mxu0 0.0
        %2442 = vmatpush.msra.mxu0 0.0
        %2443 = vmatpush.msra.mxu0 0.0
        %2444 = vmatpush.msra.mxu0 0.0
        %2445 = vmatpush.msra.mxu0 0.0
        %2446 = vmatpush.msra.mxu0 0.0
        %2447 = vmatpush.msra.mxu0 0.0
        %2448 = vmatpush.msra.mxu0 0.0
        %2449 = vmatpush.msra.mxu0 0.0
        %2450 = vmatpush.msra.mxu0 %v2365
        %2451 = vmatmul.f32.gmra.mxu0 %v2357
        %v2452 = vpop.f32.mrf.mxu0
        %v2453 = vadd.f32 0.0, %v2452
        %2454 = vdwg.mxu0
        %2455 = vmatpush.msra.mxu0 0.0
        %2456 = vmatpush.msra.mxu0 0.0
        %2457 = vmatpush.msra.mxu0 0.0
        %2458 = vmatpush.msra.mxu0 0.0
        %2459 = vmatpush.msra.mxu0 0.0
        %2460 = vmatpush.msra.mxu0 0.0
        %2461 = vmatpush.msra.mxu0 0.0
        %2462 = vmatpush.msra.mxu0 0.0
        %2463 = vmatpush.msra.mxu0 0.0
        %2464 = vmatpush.msra.mxu0 0.0
        %2465 = vmatpush.msra.mxu0 0.0
        %2466 = vmatpush.msra.mxu0 0.0
        %2467 = vmatpush.msra.mxu0 0.0
        %2468 = vmatpush.msra.mxu0 0.0
        %2469 = vmatpush.msra.mxu0 0.0
        %2470 = vmatpush.msra.mxu0 %v2367
        %2471 = vmatmul.f32.gmra.mxu0 %v2357
        %v2472 = vpop.f32.mrf.mxu0
        %v2473 = vadd.f32 0.0, %v2472
        %2474 = vdwg.mxu0
        %2475 = vmatpush.msra.mxu0 0.0
        %2476 = vmatpush.msra.mxu0 0.0
        %2477 = vmatpush.msra.mxu0 0.0
        %2478 = vmatpush.msra.mxu0 0.0
        %2479 = vmatpush.msra.mxu0 0.0
        %2480 = vmatpush.msra.mxu0 0.0
        %2481 = vmatpush.msra.mxu0 0.0
        %2482 = vmatpush.msra.mxu0 0.0
        %2483 = vmatpush.msra.mxu0 0.0
        %2484 = vmatpush.msra.mxu0 0.0
        %2485 = vmatpush.msra.mxu0 0.0
        %2486 = vmatpush.msra.mxu0 0.0
        %2487 = vmatpush.msra.mxu0 0.0
        %2488 = vmatpush.msra.mxu0 0.0
        %2489 = vmatpush.msra.mxu0 0.0
        %2490 = vmatpush.msra.mxu0 %v2369
        %2491 = vmatmul.f32.gmra.mxu0 %v2357
        %v2492 = vpop.f32.mrf.mxu0
        %v2493 = vadd.f32 0.0, %v2492
        %2494 = vdwg.mxu0
        %2495 = vmatpush.msra.mxu0 0.0
        %2496 = vmatpush.msra.mxu0 0.0
        %2497 = vmatpush.msra.mxu0 0.0
        %2498 = vmatpush.msra.mxu0 0.0
        %2499 = vmatpush.msra.mxu0 0.0
        %2500 = vmatpush.msra.mxu0 0.0
        %2501 = vmatpush.msra.mxu0 0.0
        %2502 = vmatpush.msra.mxu0 0.0
        %2503 = vmatpush.msra.mxu0 0.0
        %2504 = vmatpush.msra.mxu0 0.0
        %2505 = vmatpush.msra.mxu0 0.0
        %2506 = vmatpush.msra.mxu0 0.0
        %2507 = vmatpush.msra.mxu0 0.0
        %2508 = vmatpush.msra.mxu0 0.0
        %2509 = vmatpush.msra.mxu0 0.0
        %2510 = vmatpush.msra.mxu0 %v2371
        %2511 = vmatmul.f32.gmra.mxu0 %v2357
        %v2512 = vpop.f32.mrf.mxu0
        %v2513 = vadd.f32 0.0, %v2512
        %2514 = vdwg.mxu0
        %2515 = vmatpush.msra.mxu0 0.0
        %2516 = vmatpush.msra.mxu0 0.0
        %2517 = vmatpush.msra.mxu0 0.0
        %2518 = vmatpush.msra.mxu0 0.0
        %2519 = vmatpush.msra.mxu0 0.0
        %2520 = vmatpush.msra.mxu0 0.0
        %2521 = vmatpush.msra.mxu0 0.0
        %2522 = vmatpush.msra.mxu0 0.0
        %2523 = vmatpush.msra.mxu0 0.0
        %2524 = vmatpush.msra.mxu0 0.0
        %2525 = vmatpush.msra.mxu0 0.0
        %2526 = vmatpush.msra.mxu0 0.0
        %2527 = vmatpush.msra.mxu0 0.0
        %2528 = vmatpush.msra.mxu0 0.0
        %2529 = vmatpush.msra.mxu0 0.0
        %2530 = vmatpush.msra.mxu0 %v2373
        %2531 = vmatmul.f32.gmra.mxu0 %v2357
        %v2532 = vpop.f32.mrf.mxu0
        %v2533 = vadd.f32 0.0, %v2532
        %2534 = vdwg.mxu0
        %v2535 = vadd.f32 %v2292, %v2393
        %v2536 = vadd.f32 %v2293, %v2413
        %v2537 = vadd.f32 %v2294, %v2433
        %v2538 = vadd.f32 %v2295, %v2453
        %v2539 = vadd.f32 %v2296, %v2473
        %v2540 = vadd.f32 %v2297, %v2493
        %v2541 = vadd.f32 %v2298, %v2513
        %v2542 = vadd.f32 %v2299, %v2533
        %v2543 = vld [vmem:[%s222] sm:$0xff]
        %v2544 = vld [vmem:[%s222 + $0x8] sm:$0xff]
        %v2545 = vld [vmem:[%s222 + $0x10] sm:$0xff]
        %v2546 = vld [vmem:[%s222 + $0x18] sm:$0xff]
        %v2547 = vld [vmem:[%s222 + $0x20] sm:$0xf]
        %s2548 = scalar_lea.vmem %s1, 80
        %v2549 = vld [vmem:[%s2548] sm:$0xff]
        %2555 = vst [vmem:[#allocation1] ss:$2 sm:$0xff] %v2543
        %s2556 = scalar_lea.vmem [#allocation1], 16
        %2557 = vst [vmem:[%s2556] ss:$2 sm:$0xff] %v2544
        %s2558 = scalar_lea.vmem [#allocation1], 32
        %2559 = vst [vmem:[%s2558] ss:$2 sm:$0xff] %v2545
        %s2560 = scalar_lea.vmem [#allocation1], 48
        %2561 = vst [vmem:[%s2560] ss:$2 sm:$0xff] %v2546
        %v2562 = vld.sshfl [vmem:[#allocation1] sm:$0xff pattern:$0x75316420]
        %v2563 = vld.sshfl [vmem:[#allocation1 + $0x8] sm:$0xff pattern:$0x75316420]
        %v2564 = vld.sshfl [vmem:[#allocation1 + $0x10] sm:$0xff pattern:$0x75316420]
        %v2565 = vld.sshfl [vmem:[#allocation1 + $0x18] sm:$0xff pattern:$0x75316420]
        %v2566 = vld.sshfl [vmem:[#allocation1 + $0x20] sm:$0xff pattern:$0x75316420]
        %v2567 = vld.sshfl [vmem:[#allocation1 + $0x28] sm:$0xff pattern:$0x75316420]
        %v2568 = vld.sshfl [vmem:[#allocation1 + $0x30] sm:$0xff pattern:$0x75316420]
        %v2569 = vld.sshfl [vmem:[#allocation1 + $0x38] sm:$0xff pattern:$0x75316420]
        %2570 = vst [vmem:[#allocation1] ss:$2 sm:$0xff] %v2547
        %v2571 = vld.sshfl [vmem:[#allocation1] sm:$0xff pattern:$0x75316420]
        %2572 = vrot.lane.b32.xlu0 %v2562, 27
        %v2573 = vpop.permute.xlu0 %2572
        %2574 = vrot.lane.b32.xlu0 %v2563, 27
        %v2575 = vpop.permute.xlu0 %2574
        %2576 = vrot.lane.b32.xlu0 %v2564, 27
        %v2577 = vpop.permute.xlu0 %2576
        %2578 = vrot.lane.b32.xlu0 %v2565, 27
        %v2579 = vpop.permute.xlu0 %2578
        %2580 = vrot.lane.b32.xlu0 %v2566, 27
        %v2581 = vpop.permute.xlu0 %2580
        %2582 = vrot.lane.b32.xlu0 %v2567, 27
        %v2583 = vpop.permute.xlu0 %2582
        %2584 = vrot.lane.b32.xlu0 %v2568, 27
        %v2585 = vpop.permute.xlu0 %2584
        %2586 = vrot.lane.b32.xlu0 %v2569, 27
        %v2587 = vpop.permute.xlu0 %2586
        %2588 = vrot.lane.b32.xlu0 %v2571, 27
        %v2589 = vpop.permute.xlu0 %2588
        %vm2590 = vcmask 220160
        %v2591 = vsel %vm2590, %v2573, %v2575
        %v2592 = vsel %vm2590, %v2575, %v2577
        %v2593 = vsel %vm2590, %v2577, %v2579
        %v2594 = vsel %vm2590, %v2579, %v2581
        %v2595 = vsel %vm2590, %v2581, %v2583
        %v2596 = vsel %vm2590, %v2583, %v2585
        %v2597 = vsel %vm2590, %v2585, %v2587
        %v2598 = vsel %vm2590, %v2587, %v2589
        %v2600 = vsel %vm273, %v2549, 0
        %v2602 = vsel %vm277, %v2591, 0
        %v2604 = vsel %vm277, %v2592, 0
        %v2606 = vsel %vm277, %v2593, 0
        %v2608 = vsel %vm277, %v2594, 0
        %v2610 = vsel %vm277, %v2595, 0
        %v2612 = vsel %vm277, %v2596, 0
        %v2614 = vsel %vm277, %v2597, 0
        %v2616 = vsel %vm277, %v2598, 0
        %2618 = vmatpush.msra.mxu0 0.0
        %2619 = vmatpush.msra.mxu0 0.0
        %2620 = vmatpush.msra.mxu0 0.0
        %2621 = vmatpush.msra.mxu0 0.0
        %2622 = vmatpush.msra.mxu0 0.0
        %2623 = vmatpush.msra.mxu0 0.0
        %2624 = vmatpush.msra.mxu0 0.0
        %2625 = vmatpush.msra.mxu0 0.0
        %2626 = vmatpush.msra.mxu0 0.0
        %2627 = vmatpush.msra.mxu0 0.0
        %2628 = vmatpush.msra.mxu0 0.0
        %2629 = vmatpush.msra.mxu0 0.0
        %2630 = vmatpush.msra.mxu0 0.0
        %2631 = vmatpush.msra.mxu0 0.0
        %2632 = vmatpush.msra.mxu0 0.0
        %2633 = vmatpush.msra.mxu0 %v2602
        %2634 = vmatmul.f32.gmra.mxu0 %v2600
        %v2635 = vpop.f32.mrf.mxu0
        %v2636 = vadd.f32 0.0, %v2635
        %2637 = vdwg.mxu0
        %2638 = vmatpush.msra.mxu0 0.0
        %2639 = vmatpush.msra.mxu0 0.0
        %2640 = vmatpush.msra.mxu0 0.0
        %2641 = vmatpush.msra.mxu0 0.0
        %2642 = vmatpush.msra.mxu0 0.0
        %2643 = vmatpush.msra.mxu0 0.0
        %2644 = vmatpush.msra.mxu0 0.0
        %2645 = vmatpush.msra.mxu0 0.0
        %2646 = vmatpush.msra.mxu0 0.0
        %2647 = vmatpush.msra.mxu0 0.0
        %2648 = vmatpush.msra.mxu0 0.0
        %2649 = vmatpush.msra.mxu0 0.0
        %2650 = vmatpush.msra.mxu0 0.0
        %2651 = vmatpush.msra.mxu0 0.0
        %2652 = vmatpush.msra.mxu0 0.0
        %2653 = vmatpush.msra.mxu0 %v2604
        %2654 = vmatmul.f32.gmra.mxu0 %v2600
        %v2655 = vpop.f32.mrf.mxu0
        %v2656 = vadd.f32 0.0, %v2655
        %2657 = vdwg.mxu0
        %2658 = vmatpush.msra.mxu0 0.0
        %2659 = vmatpush.msra.mxu0 0.0
        %2660 = vmatpush.msra.mxu0 0.0
        %2661 = vmatpush.msra.mxu0 0.0
        %2662 = vmatpush.msra.mxu0 0.0
        %2663 = vmatpush.msra.mxu0 0.0
        %2664 = vmatpush.msra.mxu0 0.0
        %2665 = vmatpush.msra.mxu0 0.0
        %2666 = vmatpush.msra.mxu0 0.0
        %2667 = vmatpush.msra.mxu0 0.0
        %2668 = vmatpush.msra.mxu0 0.0
        %2669 = vmatpush.msra.mxu0 0.0
        %2670 = vmatpush.msra.mxu0 0.0
        %2671 = vmatpush.msra.mxu0 0.0
        %2672 = vmatpush.msra.mxu0 0.0
        %2673 = vmatpush.msra.mxu0 %v2606
        %2674 = vmatmul.f32.gmra.mxu0 %v2600
        %v2675 = vpop.f32.mrf.mxu0
        %v2676 = vadd.f32 0.0, %v2675
        %2677 = vdwg.mxu0
        %2678 = vmatpush.msra.mxu0 0.0
        %2679 = vmatpush.msra.mxu0 0.0
        %2680 = vmatpush.msra.mxu0 0.0
        %2681 = vmatpush.msra.mxu0 0.0
        %2682 = vmatpush.msra.mxu0 0.0
        %2683 = vmatpush.msra.mxu0 0.0
        %2684 = vmatpush.msra.mxu0 0.0
        %2685 = vmatpush.msra.mxu0 0.0
        %2686 = vmatpush.msra.mxu0 0.0
        %2687 = vmatpush.msra.mxu0 0.0
        %2688 = vmatpush.msra.mxu0 0.0
        %2689 = vmatpush.msra.mxu0 0.0
        %2690 = vmatpush.msra.mxu0 0.0
        %2691 = vmatpush.msra.mxu0 0.0
        %2692 = vmatpush.msra.mxu0 0.0
        %2693 = vmatpush.msra.mxu0 %v2608
        %2694 = vmatmul.f32.gmra.mxu0 %v2600
        %v2695 = vpop.f32.mrf.mxu0
        %v2696 = vadd.f32 0.0, %v2695
        %2697 = vdwg.mxu0
        %2698 = vmatpush.msra.mxu0 0.0
        %2699 = vmatpush.msra.mxu0 0.0
        %2700 = vmatpush.msra.mxu0 0.0
        %2701 = vmatpush.msra.mxu0 0.0
        %2702 = vmatpush.msra.mxu0 0.0
        %2703 = vmatpush.msra.mxu0 0.0
        %2704 = vmatpush.msra.mxu0 0.0
        %2705 = vmatpush.msra.mxu0 0.0
        %2706 = vmatpush.msra.mxu0 0.0
        %2707 = vmatpush.msra.mxu0 0.0
        %2708 = vmatpush.msra.mxu0 0.0
        %2709 = vmatpush.msra.mxu0 0.0
        %2710 = vmatpush.msra.mxu0 0.0
        %2711 = vmatpush.msra.mxu0 0.0
        %2712 = vmatpush.msra.mxu0 0.0
        %2713 = vmatpush.msra.mxu0 %v2610
        %2714 = vmatmul.f32.gmra.mxu0 %v2600
        %v2715 = vpop.f32.mrf.mxu0
        %v2716 = vadd.f32 0.0, %v2715
        %2717 = vdwg.mxu0
        %2718 = vmatpush.msra.mxu0 0.0
        %2719 = vmatpush.msra.mxu0 0.0
        %2720 = vmatpush.msra.mxu0 0.0
        %2721 = vmatpush.msra.mxu0 0.0
        %2722 = vmatpush.msra.mxu0 0.0
        %2723 = vmatpush.msra.mxu0 0.0
        %2724 = vmatpush.msra.mxu0 0.0
        %2725 = vmatpush.msra.mxu0 0.0
        %2726 = vmatpush.msra.mxu0 0.0
        %2727 = vmatpush.msra.mxu0 0.0
        %2728 = vmatpush.msra.mxu0 0.0
        %2729 = vmatpush.msra.mxu0 0.0
        %2730 = vmatpush.msra.mxu0 0.0
        %2731 = vmatpush.msra.mxu0 0.0
        %2732 = vmatpush.msra.mxu0 0.0
        %2733 = vmatpush.msra.mxu0 %v2612
        %2734 = vmatmul.f32.gmra.mxu0 %v2600
        %v2735 = vpop.f32.mrf.mxu0
        %v2736 = vadd.f32 0.0, %v2735
        %2737 = vdwg.mxu0
        %2738 = vmatpush.msra.mxu0 0.0
        %2739 = vmatpush.msra.mxu0 0.0
        %2740 = vmatpush.msra.mxu0 0.0
        %2741 = vmatpush.msra.mxu0 0.0
        %2742 = vmatpush.msra.mxu0 0.0
        %2743 = vmatpush.msra.mxu0 0.0
        %2744 = vmatpush.msra.mxu0 0.0
        %2745 = vmatpush.msra.mxu0 0.0
        %2746 = vmatpush.msra.mxu0 0.0
        %2747 = vmatpush.msra.mxu0 0.0
        %2748 = vmatpush.msra.mxu0 0.0
        %2749 = vmatpush.msra.mxu0 0.0
        %2750 = vmatpush.msra.mxu0 0.0
        %2751 = vmatpush.msra.mxu0 0.0
        %2752 = vmatpush.msra.mxu0 0.0
        %2753 = vmatpush.msra.mxu0 %v2614
        %2754 = vmatmul.f32.gmra.mxu0 %v2600
        %v2755 = vpop.f32.mrf.mxu0
        %v2756 = vadd.f32 0.0, %v2755
        %2757 = vdwg.mxu0
        %2758 = vmatpush.msra.mxu0 0.0
        %2759 = vmatpush.msra.mxu0 0.0
        %2760 = vmatpush.msra.mxu0 0.0
        %2761 = vmatpush.msra.mxu0 0.0
        %2762 = vmatpush.msra.mxu0 0.0
        %2763 = vmatpush.msra.mxu0 0.0
        %2764 = vmatpush.msra.mxu0 0.0
        %2765 = vmatpush.msra.mxu0 0.0
        %2766 = vmatpush.msra.mxu0 0.0
        %2767 = vmatpush.msra.mxu0 0.0
        %2768 = vmatpush.msra.mxu0 0.0
        %2769 = vmatpush.msra.mxu0 0.0
        %2770 = vmatpush.msra.mxu0 0.0
        %2771 = vmatpush.msra.mxu0 0.0
        %2772 = vmatpush.msra.mxu0 0.0
        %2773 = vmatpush.msra.mxu0 %v2616
        %2774 = vmatmul.f32.gmra.mxu0 %v2600
        %v2775 = vpop.f32.mrf.mxu0
        %v2776 = vadd.f32 0.0, %v2775
        %2777 = vdwg.mxu0
        %v2778 = vadd.f32 %v2535, %v2636
        %v2779 = vadd.f32 %v2536, %v2656
        %v2780 = vadd.f32 %v2537, %v2676
        %v2781 = vadd.f32 %v2538, %v2696
        %v2782 = vadd.f32 %v2539, %v2716
        %v2783 = vadd.f32 %v2540, %v2736
        %v2784 = vadd.f32 %v2541, %v2756
        %v2785 = vadd.f32 %v2542, %v2776
        %v2786 = vld [vmem:[%s222] sm:$0xff]
        %v2787 = vld [vmem:[%s222 + $0x8] sm:$0xff]
        %v2788 = vld [vmem:[%s222 + $0x10] sm:$0xff]
        %v2789 = vld [vmem:[%s222 + $0x18] sm:$0xff]
        %v2790 = vld [vmem:[%s222 + $0x20] sm:$0xf]
        %s2791 = scalar_lea.vmem %s1, 88
        %v2792 = vld [vmem:[%s2791] sm:$0xff]
        %2798 = vst [vmem:[#allocation1] ss:$2 sm:$0xff] %v2786
        %s2799 = scalar_lea.vmem [#allocation1], 16
        %2800 = vst [vmem:[%s2799] ss:$2 sm:$0xff] %v2787
        %s2801 = scalar_lea.vmem [#allocation1], 32
        %2802 = vst [vmem:[%s2801] ss:$2 sm:$0xff] %v2788
        %s2803 = scalar_lea.vmem [#allocation1], 48
        %2804 = vst [vmem:[%s2803] ss:$2 sm:$0xff] %v2789
        %v2805 = vld.sshfl [vmem:[#allocation1] sm:$0xff pattern:$0x75316420]
        %v2806 = vld.sshfl [vmem:[#allocation1 + $0x8] sm:$0xff pattern:$0x75316420]
        %v2807 = vld.sshfl [vmem:[#allocation1 + $0x10] sm:$0xff pattern:$0x75316420]
        %v2808 = vld.sshfl [vmem:[#allocation1 + $0x18] sm:$0xff pattern:$0x75316420]
        %v2809 = vld.sshfl [vmem:[#allocation1 + $0x20] sm:$0xff pattern:$0x75316420]
        %v2810 = vld.sshfl [vmem:[#allocation1 + $0x28] sm:$0xff pattern:$0x75316420]
        %v2811 = vld.sshfl [vmem:[#allocation1 + $0x30] sm:$0xff pattern:$0x75316420]
        %v2812 = vld.sshfl [vmem:[#allocation1 + $0x38] sm:$0xff pattern:$0x75316420]
        %2813 = vst [vmem:[#allocation1] ss:$2 sm:$0xff] %v2790
        %v2814 = vld.sshfl [vmem:[#allocation1] sm:$0xff pattern:$0x75316420]
        %2815 = vrot.lane.b32.xlu0 %v2805, 26
        %v2816 = vpop.permute.xlu0 %2815
        %2817 = vrot.lane.b32.xlu0 %v2806, 26
        %v2818 = vpop.permute.xlu0 %2817
        %2819 = vrot.lane.b32.xlu0 %v2807, 26
        %v2820 = vpop.permute.xlu0 %2819
        %2821 = vrot.lane.b32.xlu0 %v2808, 26
        %v2822 = vpop.permute.xlu0 %2821
        %2823 = vrot.lane.b32.xlu0 %v2809, 26
        %v2824 = vpop.permute.xlu0 %2823
        %2825 = vrot.lane.b32.xlu0 %v2810, 26
        %v2826 = vpop.permute.xlu0 %2825
        %2827 = vrot.lane.b32.xlu0 %v2811, 26
        %v2828 = vpop.permute.xlu0 %2827
        %2829 = vrot.lane.b32.xlu0 %v2812, 26
        %v2830 = vpop.permute.xlu0 %2829
        %2831 = vrot.lane.b32.xlu0 %v2814, 26
        %v2832 = vpop.permute.xlu0 %2831
        %vm2833 = vcmask 211968
        %v2834 = vsel %vm2833, %v2816, %v2818
        %v2835 = vsel %vm2833, %v2818, %v2820
        %v2836 = vsel %vm2833, %v2820, %v2822
        %v2837 = vsel %vm2833, %v2822, %v2824
        %v2838 = vsel %vm2833, %v2824, %v2826
        %v2839 = vsel %vm2833, %v2826, %v2828
        %v2840 = vsel %vm2833, %v2828, %v2830
        %v2841 = vsel %vm2833, %v2830, %v2832
        %v2843 = vsel %vm273, %v2792, 0
        %v2845 = vsel %vm277, %v2834, 0
        %v2847 = vsel %vm277, %v2835, 0
        %v2849 = vsel %vm277, %v2836, 0
        %v2851 = vsel %vm277, %v2837, 0
        %v2853 = vsel %vm277, %v2838, 0
        %v2855 = vsel %vm277, %v2839, 0
        %v2857 = vsel %vm277, %v2840, 0
        %v2859 = vsel %vm277, %v2841, 0
        %2861 = vmatpush.msra.mxu0 0.0
        %2862 = vmatpush.msra.mxu0 0.0
        %2863 = vmatpush.msra.mxu0 0.0
        %2864 = vmatpush.msra.mxu0 0.0
        %2865 = vmatpush.msra.mxu0 0.0
        %2866 = vmatpush.msra.mxu0 0.0
        %2867 = vmatpush.msra.mxu0 0.0
        %2868 = vmatpush.msra.mxu0 0.0
        %2869 = vmatpush.msra.mxu0 0.0
        %2870 = vmatpush.msra.mxu0 0.0
        %2871 = vmatpush.msra.mxu0 0.0
        %2872 = vmatpush.msra.mxu0 0.0
        %2873 = vmatpush.msra.mxu0 0.0
        %2874 = vmatpush.msra.mxu0 0.0
        %2875 = vmatpush.msra.mxu0 0.0
        %2876 = vmatpush.msra.mxu0 %v2845
        %2877 = vmatmul.f32.gmra.mxu0 %v2843
        %v2878 = vpop.f32.mrf.mxu0
        %v2879 = vadd.f32 0.0, %v2878
        %2880 = vdwg.mxu0
        %2881 = vmatpush.msra.mxu0 0.0
        %2882 = vmatpush.msra.mxu0 0.0
        %2883 = vmatpush.msra.mxu0 0.0
        %2884 = vmatpush.msra.mxu0 0.0
        %2885 = vmatpush.msra.mxu0 0.0
        %2886 = vmatpush.msra.mxu0 0.0
        %2887 = vmatpush.msra.mxu0 0.0
        %2888 = vmatpush.msra.mxu0 0.0
        %2889 = vmatpush.msra.mxu0 0.0
        %2890 = vmatpush.msra.mxu0 0.0
        %2891 = vmatpush.msra.mxu0 0.0
        %2892 = vmatpush.msra.mxu0 0.0
        %2893 = vmatpush.msra.mxu0 0.0
        %2894 = vmatpush.msra.mxu0 0.0
        %2895 = vmatpush.msra.mxu0 0.0
        %2896 = vmatpush.msra.mxu0 %v2847
        %2897 = vmatmul.f32.gmra.mxu0 %v2843
        %v2898 = vpop.f32.mrf.mxu0
        %v2899 = vadd.f32 0.0, %v2898
        %2900 = vdwg.mxu0
        %2901 = vmatpush.msra.mxu0 0.0
        %2902 = vmatpush.msra.mxu0 0.0
        %2903 = vmatpush.msra.mxu0 0.0
        %2904 = vmatpush.msra.mxu0 0.0
        %2905 = vmatpush.msra.mxu0 0.0
        %2906 = vmatpush.msra.mxu0 0.0
        %2907 = vmatpush.msra.mxu0 0.0
        %2908 = vmatpush.msra.mxu0 0.0
        %2909 = vmatpush.msra.mxu0 0.0
        %2910 = vmatpush.msra.mxu0 0.0
        %2911 = vmatpush.msra.mxu0 0.0
        %2912 = vmatpush.msra.mxu0 0.0
        %2913 = vmatpush.msra.mxu0 0.0
        %2914 = vmatpush.msra.mxu0 0.0
        %2915 = vmatpush.msra.mxu0 0.0
        %2916 = vmatpush.msra.mxu0 %v2849
        %2917 = vmatmul.f32.gmra.mxu0 %v2843
        %v2918 = vpop.f32.mrf.mxu0
        %v2919 = vadd.f32 0.0, %v2918
        %2920 = vdwg.mxu0
        %2921 = vmatpush.msra.mxu0 0.0
        %2922 = vmatpush.msra.mxu0 0.0
        %2923 = vmatpush.msra.mxu0 0.0
        %2924 = vmatpush.msra.mxu0 0.0
        %2925 = vmatpush.msra.mxu0 0.0
        %2926 = vmatpush.msra.mxu0 0.0
        %2927 = vmatpush.msra.mxu0 0.0
        %2928 = vmatpush.msra.mxu0 0.0
        %2929 = vmatpush.msra.mxu0 0.0
        %2930 = vmatpush.msra.mxu0 0.0
        %2931 = vmatpush.msra.mxu0 0.0
        %2932 = vmatpush.msra.mxu0 0.0
        %2933 = vmatpush.msra.mxu0 0.0
        %2934 = vmatpush.msra.mxu0 0.0
        %2935 = vmatpush.msra.mxu0 0.0
        %2936 = vmatpush.msra.mxu0 %v2851
        %2937 = vmatmul.f32.gmra.mxu0 %v2843
        %v2938 = vpop.f32.mrf.mxu0
        %v2939 = vadd.f32 0.0, %v2938
        %2940 = vdwg.mxu0
        %2941 = vmatpush.msra.mxu0 0.0
        %2942 = vmatpush.msra.mxu0 0.0
        %2943 = vmatpush.msra.mxu0 0.0
        %2944 = vmatpush.msra.mxu0 0.0
        %2945 = vmatpush.msra.mxu0 0.0
        %2946 = vmatpush.msra.mxu0 0.0
        %2947 = vmatpush.msra.mxu0 0.0
        %2948 = vmatpush.msra.mxu0 0.0
        %2949 = vmatpush.msra.mxu0 0.0
        %2950 = vmatpush.msra.mxu0 0.0
        %2951 = vmatpush.msra.mxu0 0.0
        %2952 = vmatpush.msra.mxu0 0.0
        %2953 = vmatpush.msra.mxu0 0.0
        %2954 = vmatpush.msra.mxu0 0.0
        %2955 = vmatpush.msra.mxu0 0.0
        %2956 = vmatpush.msra.mxu0 %v2853
        %2957 = vmatmul.f32.gmra.mxu0 %v2843
        %v2958 = vpop.f32.mrf.mxu0
        %v2959 = vadd.f32 0.0, %v2958
        %2960 = vdwg.mxu0
        %2961 = vmatpush.msra.mxu0 0.0
        %2962 = vmatpush.msra.mxu0 0.0
        %2963 = vmatpush.msra.mxu0 0.0
        %2964 = vmatpush.msra.mxu0 0.0
        %2965 = vmatpush.msra.mxu0 0.0
        %2966 = vmatpush.msra.mxu0 0.0
        %2967 = vmatpush.msra.mxu0 0.0
        %2968 = vmatpush.msra.mxu0 0.0
        %2969 = vmatpush.msra.mxu0 0.0
        %2970 = vmatpush.msra.mxu0 0.0
        %2971 = vmatpush.msra.mxu0 0.0
        %2972 = vmatpush.msra.mxu0 0.0
        %2973 = vmatpush.msra.mxu0 0.0
        %2974 = vmatpush.msra.mxu0 0.0
        %2975 = vmatpush.msra.mxu0 0.0
        %2976 = vmatpush.msra.mxu0 %v2855
        %2977 = vmatmul.f32.gmra.mxu0 %v2843
        %v2978 = vpop.f32.mrf.mxu0
        %v2979 = vadd.f32 0.0, %v2978
        %2980 = vdwg.mxu0
        %2981 = vmatpush.msra.mxu0 0.0
        %2982 = vmatpush.msra.mxu0 0.0
        %2983 = vmatpush.msra.mxu0 0.0
        %2984 = vmatpush.msra.mxu0 0.0
        %2985 = vmatpush.msra.mxu0 0.0
        %2986 = vmatpush.msra.mxu0 0.0
        %2987 = vmatpush.msra.mxu0 0.0
        %2988 = vmatpush.msra.mxu0 0.0
        %2989 = vmatpush.msra.mxu0 0.0
        %2990 = vmatpush.msra.mxu0 0.0
        %2991 = vmatpush.msra.mxu0 0.0
        %2992 = vmatpush.msra.mxu0 0.0
        %2993 = vmatpush.msra.mxu0 0.0
        %2994 = vmatpush.msra.mxu0 0.0
        %2995 = vmatpush.msra.mxu0 0.0
        %2996 = vmatpush.msra.mxu0 %v2857
        %2997 = vmatmul.f32.gmra.mxu0 %v2843
        %v2998 = vpop.f32.mrf.mxu0
        %v2999 = vadd.f32 0.0, %v2998
        %3000 = vdwg.mxu0
        %3001 = vmatpush.msra.mxu0 0.0
        %3002 = vmatpush.msra.mxu0 0.0
        %3003 = vmatpush.msra.mxu0 0.0
        %3004 = vmatpush.msra.mxu0 0.0
        %3005 = vmatpush.msra.mxu0 0.0
        %3006 = vmatpush.msra.mxu0 0.0
        %3007 = vmatpush.msra.mxu0 0.0
        %3008 = vmatpush.msra.mxu0 0.0
        %3009 = vmatpush.msra.mxu0 0.0
        %3010 = vmatpush.msra.mxu0 0.0
        %3011 = vmatpush.msra.mxu0 0.0
        %3012 = vmatpush.msra.mxu0 0.0
        %3013 = vmatpush.msra.mxu0 0.0
        %3014 = vmatpush.msra.mxu0 0.0
        %3015 = vmatpush.msra.mxu0 0.0
        %3016 = vmatpush.msra.mxu0 %v2859
        %3017 = vmatmul.f32.gmra.mxu0 %v2843
        %v3018 = vpop.f32.mrf.mxu0
        %v3019 = vadd.f32 0.0, %v3018
        %3020 = vdwg.mxu0
        %v3021 = vadd.f32 %v2778, %v2879
        %v3022 = vadd.f32 %v2779, %v2899
        %v3023 = vadd.f32 %v2780, %v2919
        %v3024 = vadd.f32 %v2781, %v2939
        %v3025 = vadd.f32 %v2782, %v2959
        %v3026 = vadd.f32 %v2783, %v2979
        %v3027 = vadd.f32 %v2784, %v2999
        %v3028 = vadd.f32 %v2785, %v3019
        %v3029 = vld [vmem:[%s222] sm:$0xff]
        %v3030 = vld [vmem:[%s222 + $0x8] sm:$0xff]
        %v3031 = vld [vmem:[%s222 + $0x10] sm:$0xff]
        %v3032 = vld [vmem:[%s222 + $0x18] sm:$0xff]
        %v3033 = vld [vmem:[%s222 + $0x20] sm:$0xf]
        %s3034 = scalar_lea.vmem %s1, 96
        %v3035 = vld [vmem:[%s3034] sm:$0xff]
        %3041 = vst [vmem:[#allocation1] ss:$2 sm:$0xff] %v3029
        %s3042 = scalar_lea.vmem [#allocation1], 16
        %3043 = vst [vmem:[%s3042] ss:$2 sm:$0xff] %v3030
        %s3044 = scalar_lea.vmem [#allocation1], 32
        %3045 = vst [vmem:[%s3044] ss:$2 sm:$0xff] %v3031
        %s3046 = scalar_lea.vmem [#allocation1], 48
        %3047 = vst [vmem:[%s3046] ss:$2 sm:$0xff] %v3032
        %v3048 = vld.sshfl [vmem:[#allocation1] sm:$0xff pattern:$0x75316420]
        %v3049 = vld.sshfl [vmem:[#allocation1 + $0x8] sm:$0xff pattern:$0x75316420]
        %v3050 = vld.sshfl [vmem:[#allocation1 + $0x10] sm:$0xff pattern:$0x75316420]
        %v3051 = vld.sshfl [vmem:[#allocation1 + $0x18] sm:$0xff pattern:$0x75316420]
        %v3052 = vld.sshfl [vmem:[#allocation1 + $0x20] sm:$0xff pattern:$0x75316420]
        %v3053 = vld.sshfl [vmem:[#allocation1 + $0x28] sm:$0xff pattern:$0x75316420]
        %v3054 = vld.sshfl [vmem:[#allocation1 + $0x30] sm:$0xff pattern:$0x75316420]
        %v3055 = vld.sshfl [vmem:[#allocation1 + $0x38] sm:$0xff pattern:$0x75316420]
        %3056 = vst [vmem:[#allocation1] ss:$2 sm:$0xff] %v3033
        %v3057 = vld.sshfl [vmem:[#allocation1] sm:$0xff pattern:$0x75316420]
        %3058 = vrot.lane.b32.xlu0 %v3048, 18
        %v3059 = vpop.permute.xlu0 %3058
        %3060 = vrot.lane.b32.xlu0 %v3049, 18
        %v3061 = vpop.permute.xlu0 %3060
        %3062 = vrot.lane.b32.xlu0 %v3050, 18
        %v3063 = vpop.permute.xlu0 %3062
        %3064 = vrot.lane.b32.xlu0 %v3051, 18
        %v3065 = vpop.permute.xlu0 %3064
        %3066 = vrot.lane.b32.xlu0 %v3052, 18
        %v3067 = vpop.permute.xlu0 %3066
        %3068 = vrot.lane.b32.xlu0 %v3053, 18
        %v3069 = vpop.permute.xlu0 %3068
        %3070 = vrot.lane.b32.xlu0 %v3054, 18
        %v3071 = vpop.permute.xlu0 %3070
        %3072 = vrot.lane.b32.xlu0 %v3055, 18
        %v3073 = vpop.permute.xlu0 %3072
        %3074 = vrot.lane.b32.xlu0 %v3057, 18
        %v3075 = vpop.permute.xlu0 %3074
        %vm3076 = vcmask 146432
        %v3077 = vsel %vm3076, %v3059, %v3061
        %v3078 = vsel %vm3076, %v3061, %v3063
        %v3079 = vsel %vm3076, %v3063, %v3065
        %v3080 = vsel %vm3076, %v3065, %v3067
        %v3081 = vsel %vm3076, %v3067, %v3069
        %v3082 = vsel %vm3076, %v3069, %v3071
        %v3083 = vsel %vm3076, %v3071, %v3073
        %v3084 = vsel %vm3076, %v3073, %v3075
        %v3086 = vsel %vm273, %v3035, 0
        %v3088 = vsel %vm277, %v3077, 0
        %v3090 = vsel %vm277, %v3078, 0
        %v3092 = vsel %vm277, %v3079, 0
        %v3094 = vsel %vm277, %v3080, 0
        %v3096 = vsel %vm277, %v3081, 0
        %v3098 = vsel %vm277, %v3082, 0
        %v3100 = vsel %vm277, %v3083, 0
        %v3102 = vsel %vm277, %v3084, 0
        %3104 = vmatpush.msra.mxu0 0.0
        %3105 = vmatpush.msra.mxu0 0.0
        %3106 = vmatpush.msra.mxu0 0.0
        %3107 = vmatpush.msra.mxu0 0.0
        %3108 = vmatpush.msra.mxu0 0.0
        %3109 = vmatpush.msra.mxu0 0.0
        %3110 = vmatpush.msra.mxu0 0.0
        %3111 = vmatpush.msra.mxu0 0.0
        %3112 = vmatpush.msra.mxu0 0.0
        %3113 = vmatpush.msra.mxu0 0.0
        %3114 = vmatpush.msra.mxu0 0.0
        %3115 = vmatpush.msra.mxu0 0.0
        %3116 = vmatpush.msra.mxu0 0.0
        %3117 = vmatpush.msra.mxu0 0.0
        %3118 = vmatpush.msra.mxu0 0.0
        %3119 = vmatpush.msra.mxu0 %v3088
        %3120 = vmatmul.f32.gmra.mxu0 %v3086
        %v3121 = vpop.f32.mrf.mxu0
        %v3122 = vadd.f32 0.0, %v3121
        %3123 = vdwg.mxu0
        %3124 = vmatpush.msra.mxu0 0.0
        %3125 = vmatpush.msra.mxu0 0.0
        %3126 = vmatpush.msra.mxu0 0.0
        %3127 = vmatpush.msra.mxu0 0.0
        %3128 = vmatpush.msra.mxu0 0.0
        %3129 = vmatpush.msra.mxu0 0.0
        %3130 = vmatpush.msra.mxu0 0.0
        %3131 = vmatpush.msra.mxu0 0.0
        %3132 = vmatpush.msra.mxu0 0.0
        %3133 = vmatpush.msra.mxu0 0.0
        %3134 = vmatpush.msra.mxu0 0.0
        %3135 = vmatpush.msra.mxu0 0.0
        %3136 = vmatpush.msra.mxu0 0.0
        %3137 = vmatpush.msra.mxu0 0.0
        %3138 = vmatpush.msra.mxu0 0.0
        %3139 = vmatpush.msra.mxu0 %v3090
        %3140 = vmatmul.f32.gmra.mxu0 %v3086
        %v3141 = vpop.f32.mrf.mxu0
        %v3142 = vadd.f32 0.0, %v3141
        %3143 = vdwg.mxu0
        %3144 = vmatpush.msra.mxu0 0.0
        %3145 = vmatpush.msra.mxu0 0.0
        %3146 = vmatpush.msra.mxu0 0.0
        %3147 = vmatpush.msra.mxu0 0.0
        %3148 = vmatpush.msra.mxu0 0.0
        %3149 = vmatpush.msra.mxu0 0.0
        %3150 = vmatpush.msra.mxu0 0.0
        %3151 = vmatpush.msra.mxu0 0.0
        %3152 = vmatpush.msra.mxu0 0.0
        %3153 = vmatpush.msra.mxu0 0.0
        %3154 = vmatpush.msra.mxu0 0.0
        %3155 = vmatpush.msra.mxu0 0.0
        %3156 = vmatpush.msra.mxu0 0.0
        %3157 = vmatpush.msra.mxu0 0.0
        %3158 = vmatpush.msra.mxu0 0.0
        %3159 = vmatpush.msra.mxu0 %v3092
        %3160 = vmatmul.f32.gmra.mxu0 %v3086
        %v3161 = vpop.f32.mrf.mxu0
        %v3162 = vadd.f32 0.0, %v3161
        %3163 = vdwg.mxu0
        %3164 = vmatpush.msra.mxu0 0.0
        %3165 = vmatpush.msra.mxu0 0.0
        %3166 = vmatpush.msra.mxu0 0.0
        %3167 = vmatpush.msra.mxu0 0.0
        %3168 = vmatpush.msra.mxu0 0.0
        %3169 = vmatpush.msra.mxu0 0.0
        %3170 = vmatpush.msra.mxu0 0.0
        %3171 = vmatpush.msra.mxu0 0.0
        %3172 = vmatpush.msra.mxu0 0.0
        %3173 = vmatpush.msra.mxu0 0.0
        %3174 = vmatpush.msra.mxu0 0.0
        %3175 = vmatpush.msra.mxu0 0.0
        %3176 = vmatpush.msra.mxu0 0.0
        %3177 = vmatpush.msra.mxu0 0.0
        %3178 = vmatpush.msra.mxu0 0.0
        %3179 = vmatpush.msra.mxu0 %v3094
        %3180 = vmatmul.f32.gmra.mxu0 %v3086
        %v3181 = vpop.f32.mrf.mxu0
        %v3182 = vadd.f32 0.0, %v3181
        %3183 = vdwg.mxu0
        %3184 = vmatpush.msra.mxu0 0.0
        %3185 = vmatpush.msra.mxu0 0.0
        %3186 = vmatpush.msra.mxu0 0.0
        %3187 = vmatpush.msra.mxu0 0.0
        %3188 = vmatpush.msra.mxu0 0.0
        %3189 = vmatpush.msra.mxu0 0.0
        %3190 = vmatpush.msra.mxu0 0.0
        %3191 = vmatpush.msra.mxu0 0.0
        %3192 = vmatpush.msra.mxu0 0.0
        %3193 = vmatpush.msra.mxu0 0.0
        %3194 = vmatpush.msra.mxu0 0.0
        %3195 = vmatpush.msra.mxu0 0.0
        %3196 = vmatpush.msra.mxu0 0.0
        %3197 = vmatpush.msra.mxu0 0.0
        %3198 = vmatpush.msra.mxu0 0.0
        %3199 = vmatpush.msra.mxu0 %v3096
        %3200 = vmatmul.f32.gmra.mxu0 %v3086
        %v3201 = vpop.f32.mrf.mxu0
        %v3202 = vadd.f32 0.0, %v3201
        %3203 = vdwg.mxu0
        %3204 = vmatpush.msra.mxu0 0.0
        %3205 = vmatpush.msra.mxu0 0.0
        %3206 = vmatpush.msra.mxu0 0.0
        %3207 = vmatpush.msra.mxu0 0.0
        %3208 = vmatpush.msra.mxu0 0.0
        %3209 = vmatpush.msra.mxu0 0.0
        %3210 = vmatpush.msra.mxu0 0.0
        %3211 = vmatpush.msra.mxu0 0.0
        %3212 = vmatpush.msra.mxu0 0.0
        %3213 = vmatpush.msra.mxu0 0.0
        %3214 = vmatpush.msra.mxu0 0.0
        %3215 = vmatpush.msra.mxu0 0.0
        %3216 = vmatpush.msra.mxu0 0.0
        %3217 = vmatpush.msra.mxu0 0.0
        %3218 = vmatpush.msra.mxu0 0.0
        %3219 = vmatpush.msra.mxu0 %v3098
        %3220 = vmatmul.f32.gmra.mxu0 %v3086
        %v3221 = vpop.f32.mrf.mxu0
        %v3222 = vadd.f32 0.0, %v3221
        %3223 = vdwg.mxu0
        %3224 = vmatpush.msra.mxu0 0.0
        %3225 = vmatpush.msra.mxu0 0.0
        %3226 = vmatpush.msra.mxu0 0.0
        %3227 = vmatpush.msra.mxu0 0.0
        %3228 = vmatpush.msra.mxu0 0.0
        %3229 = vmatpush.msra.mxu0 0.0
        %3230 = vmatpush.msra.mxu0 0.0
        %3231 = vmatpush.msra.mxu0 0.0
        %3232 = vmatpush.msra.mxu0 0.0
        %3233 = vmatpush.msra.mxu0 0.0
        %3234 = vmatpush.msra.mxu0 0.0
        %3235 = vmatpush.msra.mxu0 0.0
        %3236 = vmatpush.msra.mxu0 0.0
        %3237 = vmatpush.msra.mxu0 0.0
        %3238 = vmatpush.msra.mxu0 0.0
        %3239 = vmatpush.msra.mxu0 %v3100
        %3240 = vmatmul.f32.gmra.mxu0 %v3086
        %v3241 = vpop.f32.mrf.mxu0
        %v3242 = vadd.f32 0.0, %v3241
        %3243 = vdwg.mxu0
        %3244 = vmatpush.msra.mxu0 0.0
        %3245 = vmatpush.msra.mxu0 0.0
        %3246 = vmatpush.msra.mxu0 0.0
        %3247 = vmatpush.msra.mxu0 0.0
        %3248 = vmatpush.msra.mxu0 0.0
        %3249 = vmatpush.msra.mxu0 0.0
        %3250 = vmatpush.msra.mxu0 0.0
        %3251 = vmatpush.msra.mxu0 0.0
        %3252 = vmatpush.msra.mxu0 0.0
        %3253 = vmatpush.msra.mxu0 0.0
        %3254 = vmatpush.msra.mxu0 0.0
        %3255 = vmatpush.msra.mxu0 0.0
        %3256 = vmatpush.msra.mxu0 0.0
        %3257 = vmatpush.msra.mxu0 0.0
        %3258 = vmatpush.msra.mxu0 0.0
        %3259 = vmatpush.msra.mxu0 %v3102
        %3260 = vmatmul.f32.gmra.mxu0 %v3086
        %v3261 = vpop.f32.mrf.mxu0
        %v3262 = vadd.f32 0.0, %v3261
        %3263 = vdwg.mxu0
        %v3264 = vadd.f32 %v3021, %v3122
        %v3265 = vadd.f32 %v3022, %v3142
        %v3266 = vadd.f32 %v3023, %v3162
        %v3267 = vadd.f32 %v3024, %v3182
        %v3268 = vadd.f32 %v3025, %v3202
        %v3269 = vadd.f32 %v3026, %v3222
        %v3270 = vadd.f32 %v3027, %v3242
        %v3271 = vadd.f32 %v3028, %v3262
        %v3272 = vld [vmem:[%s222] sm:$0xff]
        %v3273 = vld [vmem:[%s222 + $0x8] sm:$0xff]
        %v3274 = vld [vmem:[%s222 + $0x10] sm:$0xff]
        %v3275 = vld [vmem:[%s222 + $0x18] sm:$0xff]
        %v3276 = vld [vmem:[%s222 + $0x20] sm:$0xf]
        %s3277 = scalar_lea.vmem %s1, 104
        %v3278 = vld [vmem:[%s3277] sm:$0xff]
        %3284 = vst [vmem:[#allocation1] ss:$2 sm:$0xff] %v3272
        %s3285 = scalar_lea.vmem [#allocation1], 16
        %3286 = vst [vmem:[%s3285] ss:$2 sm:$0xff] %v3273
        %s3287 = scalar_lea.vmem [#allocation1], 32
        %3288 = vst [vmem:[%s3287] ss:$2 sm:$0xff] %v3274
        %s3289 = scalar_lea.vmem [#allocation1], 48
        %3290 = vst [vmem:[%s3289] ss:$2 sm:$0xff] %v3275
        %v3291 = vld.sshfl [vmem:[#allocation1] sm:$0xff pattern:$0x75316420]
        %v3292 = vld.sshfl [vmem:[#allocation1 + $0x8] sm:$0xff pattern:$0x75316420]
        %v3293 = vld.sshfl [vmem:[#allocation1 + $0x10] sm:$0xff pattern:$0x75316420]
        %v3294 = vld.sshfl [vmem:[#allocation1 + $0x18] sm:$0xff pattern:$0x75316420]
        %v3295 = vld.sshfl [vmem:[#allocation1 + $0x20] sm:$0xff pattern:$0x75316420]
        %v3296 = vld.sshfl [vmem:[#allocation1 + $0x28] sm:$0xff pattern:$0x75316420]
        %v3297 = vld.sshfl [vmem:[#allocation1 + $0x30] sm:$0xff pattern:$0x75316420]
        %v3298 = vld.sshfl [vmem:[#allocation1 + $0x38] sm:$0xff pattern:$0x75316420]
        %3299 = vst [vmem:[#allocation1] ss:$2 sm:$0xff] %v3276
        %v3300 = vld.sshfl [vmem:[#allocation1] sm:$0xff pattern:$0x75316420]
        %3301 = vrot.lane.b32.xlu0 %v3291, 17
        %v3302 = vpop.permute.xlu0 %3301
        %3303 = vrot.lane.b32.xlu0 %v3292, 17
        %v3304 = vpop.permute.xlu0 %3303
        %3305 = vrot.lane.b32.xlu0 %v3293, 17
        %v3306 = vpop.permute.xlu0 %3305
        %3307 = vrot.lane.b32.xlu0 %v3294, 17
        %v3308 = vpop.permute.xlu0 %3307
        %3309 = vrot.lane.b32.xlu0 %v3295, 17
        %v3310 = vpop.permute.xlu0 %3309
        %3311 = vrot.lane.b32.xlu0 %v3296, 17
        %v3312 = vpop.permute.xlu0 %3311
        %3313 = vrot.lane.b32.xlu0 %v3297, 17
        %v3314 = vpop.permute.xlu0 %3313
        %3315 = vrot.lane.b32.xlu0 %v3298, 17
        %v3316 = vpop.permute.xlu0 %3315
        %3317 = vrot.lane.b32.xlu0 %v3300, 17
        %v3318 = vpop.permute.xlu0 %3317
        %vm3319 = vcmask 138240
        %v3320 = vsel %vm3319, %v3302, %v3304
        %v3321 = vsel %vm3319, %v3304, %v3306
        %v3322 = vsel %vm3319, %v3306, %v3308
        %v3323 = vsel %vm3319, %v3308, %v3310
        %v3324 = vsel %vm3319, %v3310, %v3312
        %v3325 = vsel %vm3319, %v3312, %v3314
        %v3326 = vsel %vm3319, %v3314, %v3316
        %v3327 = vsel %vm3319, %v3316, %v3318
        %v3329 = vsel %vm273, %v3278, 0
        %v3331 = vsel %vm277, %v3320, 0
        %v3333 = vsel %vm277, %v3321, 0
        %v3335 = vsel %vm277, %v3322, 0
        %v3337 = vsel %vm277, %v3323, 0
        %v3339 = vsel %vm277, %v3324, 0
        %v3341 = vsel %vm277, %v3325, 0
        %v3343 = vsel %vm277, %v3326, 0
        %v3345 = vsel %vm277, %v3327, 0
        %3347 = vmatpush.msra.mxu0 0.0
        %3348 = vmatpush.msra.mxu0 0.0
        %3349 = vmatpush.msra.mxu0 0.0
        %3350 = vmatpush.msra.mxu0 0.0
        %3351 = vmatpush.msra.mxu0 0.0
        %3352 = vmatpush.msra.mxu0 0.0
        %3353 = vmatpush.msra.mxu0 0.0
        %3354 = vmatpush.msra.mxu0 0.0
        %3355 = vmatpush.msra.mxu0 0.0
        %3356 = vmatpush.msra.mxu0 0.0
        %3357 = vmatpush.msra.mxu0 0.0
        %3358 = vmatpush.msra.mxu0 0.0
        %3359 = vmatpush.msra.mxu0 0.0
        %3360 = vmatpush.msra.mxu0 0.0
        %3361 = vmatpush.msra.mxu0 0.0
        %3362 = vmatpush.msra.mxu0 %v3331
        %3363 = vmatmul.f32.gmra.mxu0 %v3329
        %v3364 = vpop.f32.mrf.mxu0
        %v3365 = vadd.f32 0.0, %v3364
        %3366 = vdwg.mxu0
        %3367 = vmatpush.msra.mxu0 0.0
        %3368 = vmatpush.msra.mxu0 0.0
        %3369 = vmatpush.msra.mxu0 0.0
        %3370 = vmatpush.msra.mxu0 0.0
        %3371 = vmatpush.msra.mxu0 0.0
        %3372 = vmatpush.msra.mxu0 0.0
        %3373 = vmatpush.msra.mxu0 0.0
        %3374 = vmatpush.msra.mxu0 0.0
        %3375 = vmatpush.msra.mxu0 0.0
        %3376 = vmatpush.msra.mxu0 0.0
        %3377 = vmatpush.msra.mxu0 0.0
        %3378 = vmatpush.msra.mxu0 0.0
        %3379 = vmatpush.msra.mxu0 0.0
        %3380 = vmatpush.msra.mxu0 0.0
        %3381 = vmatpush.msra.mxu0 0.0
        %3382 = vmatpush.msra.mxu0 %v3333
        %3383 = vmatmul.f32.gmra.mxu0 %v3329
        %v3384 = vpop.f32.mrf.mxu0
        %v3385 = vadd.f32 0.0, %v3384
        %3386 = vdwg.mxu0
        %3387 = vmatpush.msra.mxu0 0.0
        %3388 = vmatpush.msra.mxu0 0.0
        %3389 = vmatpush.msra.mxu0 0.0
        %3390 = vmatpush.msra.mxu0 0.0
        %3391 = vmatpush.msra.mxu0 0.0
        %3392 = vmatpush.msra.mxu0 0.0
        %3393 = vmatpush.msra.mxu0 0.0
        %3394 = vmatpush.msra.mxu0 0.0
        %3395 = vmatpush.msra.mxu0 0.0
        %3396 = vmatpush.msra.mxu0 0.0
        %3397 = vmatpush.msra.mxu0 0.0
        %3398 = vmatpush.msra.mxu0 0.0
        %3399 = vmatpush.msra.mxu0 0.0
        %3400 = vmatpush.msra.mxu0 0.0
        %3401 = vmatpush.msra.mxu0 0.0
        %3402 = vmatpush.msra.mxu0 %v3335
        %3403 = vmatmul.f32.gmra.mxu0 %v3329
        %v3404 = vpop.f32.mrf.mxu0
        %v3405 = vadd.f32 0.0, %v3404
        %3406 = vdwg.mxu0
        %3407 = vmatpush.msra.mxu0 0.0
        %3408 = vmatpush.msra.mxu0 0.0
        %3409 = vmatpush.msra.mxu0 0.0
        %3410 = vmatpush.msra.mxu0 0.0
        %3411 = vmatpush.msra.mxu0 0.0
        %3412 = vmatpush.msra.mxu0 0.0
        %3413 = vmatpush.msra.mxu0 0.0
        %3414 = vmatpush.msra.mxu0 0.0
        %3415 = vmatpush.msra.mxu0 0.0
        %3416 = vmatpush.msra.mxu0 0.0
        %3417 = vmatpush.msra.mxu0 0.0
        %3418 = vmatpush.msra.mxu0 0.0
        %3419 = vmatpush.msra.mxu0 0.0
        %3420 = vmatpush.msra.mxu0 0.0
        %3421 = vmatpush.msra.mxu0 0.0
        %3422 = vmatpush.msra.mxu0 %v3337
        %3423 = vmatmul.f32.gmra.mxu0 %v3329
        %v3424 = vpop.f32.mrf.mxu0
        %v3425 = vadd.f32 0.0, %v3424
        %3426 = vdwg.mxu0
        %3427 = vmatpush.msra.mxu0 0.0
        %3428 = vmatpush.msra.mxu0 0.0
        %3429 = vmatpush.msra.mxu0 0.0
        %3430 = vmatpush.msra.mxu0 0.0
        %3431 = vmatpush.msra.mxu0 0.0
        %3432 = vmatpush.msra.mxu0 0.0
        %3433 = vmatpush.msra.mxu0 0.0
        %3434 = vmatpush.msra.mxu0 0.0
        %3435 = vmatpush.msra.mxu0 0.0
        %3436 = vmatpush.msra.mxu0 0.0
        %3437 = vmatpush.msra.mxu0 0.0
        %3438 = vmatpush.msra.mxu0 0.0
        %3439 = vmatpush.msra.mxu0 0.0
        %3440 = vmatpush.msra.mxu0 0.0
        %3441 = vmatpush.msra.mxu0 0.0
        %3442 = vmatpush.msra.mxu0 %v3339
        %3443 = vmatmul.f32.gmra.mxu0 %v3329
        %v3444 = vpop.f32.mrf.mxu0
        %v3445 = vadd.f32 0.0, %v3444
        %3446 = vdwg.mxu0
        %3447 = vmatpush.msra.mxu0 0.0
        %3448 = vmatpush.msra.mxu0 0.0
        %3449 = vmatpush.msra.mxu0 0.0
        %3450 = vmatpush.msra.mxu0 0.0
        %3451 = vmatpush.msra.mxu0 0.0
        %3452 = vmatpush.msra.mxu0 0.0
        %3453 = vmatpush.msra.mxu0 0.0
        %3454 = vmatpush.msra.mxu0 0.0
        %3455 = vmatpush.msra.mxu0 0.0
        %3456 = vmatpush.msra.mxu0 0.0
        %3457 = vmatpush.msra.mxu0 0.0
        %3458 = vmatpush.msra.mxu0 0.0
        %3459 = vmatpush.msra.mxu0 0.0
        %3460 = vmatpush.msra.mxu0 0.0
        %3461 = vmatpush.msra.mxu0 0.0
        %3462 = vmatpush.msra.mxu0 %v3341
        %3463 = vmatmul.f32.gmra.mxu0 %v3329
        %v3464 = vpop.f32.mrf.mxu0
        %v3465 = vadd.f32 0.0, %v3464
        %3466 = vdwg.mxu0
        %3467 = vmatpush.msra.mxu0 0.0
        %3468 = vmatpush.msra.mxu0 0.0
        %3469 = vmatpush.msra.mxu0 0.0
        %3470 = vmatpush.msra.mxu0 0.0
        %3471 = vmatpush.msra.mxu0 0.0
        %3472 = vmatpush.msra.mxu0 0.0
        %3473 = vmatpush.msra.mxu0 0.0
        %3474 = vmatpush.msra.mxu0 0.0
        %3475 = vmatpush.msra.mxu0 0.0
        %3476 = vmatpush.msra.mxu0 0.0
        %3477 = vmatpush.msra.mxu0 0.0
        %3478 = vmatpush.msra.mxu0 0.0
        %3479 = vmatpush.msra.mxu0 0.0
        %3480 = vmatpush.msra.mxu0 0.0
        %3481 = vmatpush.msra.mxu0 0.0
        %3482 = vmatpush.msra.mxu0 %v3343
        %3483 = vmatmul.f32.gmra.mxu0 %v3329
        %v3484 = vpop.f32.mrf.mxu0
        %v3485 = vadd.f32 0.0, %v3484
        %3486 = vdwg.mxu0
        %3487 = vmatpush.msra.mxu0 0.0
        %3488 = vmatpush.msra.mxu0 0.0
        %3489 = vmatpush.msra.mxu0 0.0
        %3490 = vmatpush.msra.mxu0 0.0
        %3491 = vmatpush.msra.mxu0 0.0
        %3492 = vmatpush.msra.mxu0 0.0
        %3493 = vmatpush.msra.mxu0 0.0
        %3494 = vmatpush.msra.mxu0 0.0
        %3495 = vmatpush.msra.mxu0 0.0
        %3496 = vmatpush.msra.mxu0 0.0
        %3497 = vmatpush.msra.mxu0 0.0
        %3498 = vmatpush.msra.mxu0 0.0
        %3499 = vmatpush.msra.mxu0 0.0
        %3500 = vmatpush.msra.mxu0 0.0
        %3501 = vmatpush.msra.mxu0 0.0
        %3502 = vmatpush.msra.mxu0 %v3345
        %3503 = vmatmul.f32.gmra.mxu0 %v3329
        %v3504 = vpop.f32.mrf.mxu0
        %v3505 = vadd.f32 0.0, %v3504
        %3506 = vdwg.mxu0
        %v3507 = vadd.f32 %v3264, %v3365
        %v3508 = vadd.f32 %v3265, %v3385
        %v3509 = vadd.f32 %v3266, %v3405
        %v3510 = vadd.f32 %v3267, %v3425
        %v3511 = vadd.f32 %v3268, %v3445
        %v3512 = vadd.f32 %v3269, %v3465
        %v3513 = vadd.f32 %v3270, %v3485
        %v3514 = vadd.f32 %v3271, %v3505
        %v3515 = vld [vmem:[%s222] sm:$0xff]
        %v3516 = vld [vmem:[%s222 + $0x8] sm:$0xff]
        %v3517 = vld [vmem:[%s222 + $0x10] sm:$0xff]
        %v3518 = vld [vmem:[%s222 + $0x18] sm:$0xff]
        %v3519 = vld [vmem:[%s222 + $0x20] sm:$0xf]
        %s3520 = scalar_lea.vmem %s1, 112
        %v3521 = vld [vmem:[%s3520] sm:$0xff]
        %3527 = vst [vmem:[#allocation1] ss:$2 sm:$0xff] %v3515
        %s3528 = scalar_lea.vmem [#allocation1], 16
        %3529 = vst [vmem:[%s3528] ss:$2 sm:$0xff] %v3516
        %s3530 = scalar_lea.vmem [#allocation1], 32
        %3531 = vst [vmem:[%s3530] ss:$2 sm:$0xff] %v3517
        %s3532 = scalar_lea.vmem [#allocation1], 48
        %3533 = vst [vmem:[%s3532] ss:$2 sm:$0xff] %v3518
        %v3534 = vld.sshfl [vmem:[#allocation1] sm:$0xff pattern:$0x75316420]
        %v3535 = vld.sshfl [vmem:[#allocation1 + $0x8] sm:$0xff pattern:$0x75316420]
        %v3536 = vld.sshfl [vmem:[#allocation1 + $0x10] sm:$0xff pattern:$0x75316420]
        %v3537 = vld.sshfl [vmem:[#allocation1 + $0x18] sm:$0xff pattern:$0x75316420]
        %v3538 = vld.sshfl [vmem:[#allocation1 + $0x20] sm:$0xff pattern:$0x75316420]
        %v3539 = vld.sshfl [vmem:[#allocation1 + $0x28] sm:$0xff pattern:$0x75316420]
        %v3540 = vld.sshfl [vmem:[#allocation1 + $0x30] sm:$0xff pattern:$0x75316420]
        %v3541 = vld.sshfl [vmem:[#allocation1 + $0x38] sm:$0xff pattern:$0x75316420]
        %3542 = vst [vmem:[#allocation1] ss:$2 sm:$0xff] %v3519
        %v3543 = vld.sshfl [vmem:[#allocation1] sm:$0xff pattern:$0x75316420]
        %3544 = vrot.lane.b32.xlu0 %v3534, 16
        %v3545 = vpop.permute.xlu0 %3544
        %3546 = vrot.lane.b32.xlu0 %v3535, 16
        %v3547 = vpop.permute.xlu0 %3546
        %3548 = vrot.lane.b32.xlu0 %v3536, 16
        %v3549 = vpop.permute.xlu0 %3548
        %3550 = vrot.lane.b32.xlu0 %v3537, 16
        %v3551 = vpop.permute.xlu0 %3550
        %3552 = vrot.lane.b32.xlu0 %v3538, 16
        %v3553 = vpop.permute.xlu0 %3552
        %3554 = vrot.lane.b32.xlu0 %v3539, 16
        %v3555 = vpop.permute.xlu0 %3554
        %3556 = vrot.lane.b32.xlu0 %v3540, 16
        %v3557 = vpop.permute.xlu0 %3556
        %3558 = vrot.lane.b32.xlu0 %v3541, 16
        %v3559 = vpop.permute.xlu0 %3558
        %3560 = vrot.lane.b32.xlu0 %v3543, 16
        %v3561 = vpop.permute.xlu0 %3560
        %vm3562 = vcmask 130048
        %v3563 = vsel %vm3562, %v3545, %v3547
        %v3564 = vsel %vm3562, %v3547, %v3549
        %v3565 = vsel %vm3562, %v3549, %v3551
        %v3566 = vsel %vm3562, %v3551, %v3553
        %v3567 = vsel %vm3562, %v3553, %v3555
        %v3568 = vsel %vm3562, %v3555, %v3557
        %v3569 = vsel %vm3562, %v3557, %v3559
        %v3570 = vsel %vm3562, %v3559, %v3561
        %v3572 = vsel %vm273, %v3521, 0
        %v3574 = vsel %vm277, %v3563, 0
        %v3576 = vsel %vm277, %v3564, 0
        %v3578 = vsel %vm277, %v3565, 0
        %v3580 = vsel %vm277, %v3566, 0
        %v3582 = vsel %vm277, %v3567, 0
        %v3584 = vsel %vm277, %v3568, 0
        %v3586 = vsel %vm277, %v3569, 0
        %v3588 = vsel %vm277, %v3570, 0
        %3590 = vmatpush.msra.mxu0 0.0
        %3591 = vmatpush.msra.mxu0 0.0
        %3592 = vmatpush.msra.mxu0 0.0
        %3593 = vmatpush.msra.mxu0 0.0
        %3594 = vmatpush.msra.mxu0 0.0
        %3595 = vmatpush.msra.mxu0 0.0
        %3596 = vmatpush.msra.mxu0 0.0
        %3597 = vmatpush.msra.mxu0 0.0
        %3598 = vmatpush.msra.mxu0 0.0
        %3599 = vmatpush.msra.mxu0 0.0
        %3600 = vmatpush.msra.mxu0 0.0
        %3601 = vmatpush.msra.mxu0 0.0
        %3602 = vmatpush.msra.mxu0 0.0
        %3603 = vmatpush.msra.mxu0 0.0
        %3604 = vmatpush.msra.mxu0 0.0
        %3605 = vmatpush.msra.mxu0 %v3574
        %3606 = vmatmul.f32.gmra.mxu0 %v3572
        %v3607 = vpop.f32.mrf.mxu0
        %v3608 = vadd.f32 0.0, %v3607
        %3609 = vdwg.mxu0
        %3610 = vmatpush.msra.mxu0 0.0
        %3611 = vmatpush.msra.mxu0 0.0
        %3612 = vmatpush.msra.mxu0 0.0
        %3613 = vmatpush.msra.mxu0 0.0
        %3614 = vmatpush.msra.mxu0 0.0
        %3615 = vmatpush.msra.mxu0 0.0
        %3616 = vmatpush.msra.mxu0 0.0
        %3617 = vmatpush.msra.mxu0 0.0
        %3618 = vmatpush.msra.mxu0 0.0
        %3619 = vmatpush.msra.mxu0 0.0
        %3620 = vmatpush.msra.mxu0 0.0
        %3621 = vmatpush.msra.mxu0 0.0
        %3622 = vmatpush.msra.mxu0 0.0
        %3623 = vmatpush.msra.mxu0 0.0
        %3624 = vmatpush.msra.mxu0 0.0
        %3625 = vmatpush.msra.mxu0 %v3576
        %3626 = vmatmul.f32.gmra.mxu0 %v3572
        %v3627 = vpop.f32.mrf.mxu0
        %v3628 = vadd.f32 0.0, %v3627
        %3629 = vdwg.mxu0
        %3630 = vmatpush.msra.mxu0 0.0
        %3631 = vmatpush.msra.mxu0 0.0
        %3632 = vmatpush.msra.mxu0 0.0
        %3633 = vmatpush.msra.mxu0 0.0
        %3634 = vmatpush.msra.mxu0 0.0
        %3635 = vmatpush.msra.mxu0 0.0
        %3636 = vmatpush.msra.mxu0 0.0
        %3637 = vmatpush.msra.mxu0 0.0
        %3638 = vmatpush.msra.mxu0 0.0
        %3639 = vmatpush.msra.mxu0 0.0
        %3640 = vmatpush.msra.mxu0 0.0
        %3641 = vmatpush.msra.mxu0 0.0
        %3642 = vmatpush.msra.mxu0 0.0
        %3643 = vmatpush.msra.mxu0 0.0
        %3644 = vmatpush.msra.mxu0 0.0
        %3645 = vmatpush.msra.mxu0 %v3578
        %3646 = vmatmul.f32.gmra.mxu0 %v3572
        %v3647 = vpop.f32.mrf.mxu0
        %v3648 = vadd.f32 0.0, %v3647
        %3649 = vdwg.mxu0
        %3650 = vmatpush.msra.mxu0 0.0
        %3651 = vmatpush.msra.mxu0 0.0
        %3652 = vmatpush.msra.mxu0 0.0
        %3653 = vmatpush.msra.mxu0 0.0
        %3654 = vmatpush.msra.mxu0 0.0
        %3655 = vmatpush.msra.mxu0 0.0
        %3656 = vmatpush.msra.mxu0 0.0
        %3657 = vmatpush.msra.mxu0 0.0
        %3658 = vmatpush.msra.mxu0 0.0
        %3659 = vmatpush.msra.mxu0 0.0
        %3660 = vmatpush.msra.mxu0 0.0
        %3661 = vmatpush.msra.mxu0 0.0
        %3662 = vmatpush.msra.mxu0 0.0
        %3663 = vmatpush.msra.mxu0 0.0
        %3664 = vmatpush.msra.mxu0 0.0
        %3665 = vmatpush.msra.mxu0 %v3580
        %3666 = vmatmul.f32.gmra.mxu0 %v3572
        %v3667 = vpop.f32.mrf.mxu0
        %v3668 = vadd.f32 0.0, %v3667
        %3669 = vdwg.mxu0
        %3670 = vmatpush.msra.mxu0 0.0
        %3671 = vmatpush.msra.mxu0 0.0
        %3672 = vmatpush.msra.mxu0 0.0
        %3673 = vmatpush.msra.mxu0 0.0
        %3674 = vmatpush.msra.mxu0 0.0
        %3675 = vmatpush.msra.mxu0 0.0
        %3676 = vmatpush.msra.mxu0 0.0
        %3677 = vmatpush.msra.mxu0 0.0
        %3678 = vmatpush.msra.mxu0 0.0
        %3679 = vmatpush.msra.mxu0 0.0
        %3680 = vmatpush.msra.mxu0 0.0
        %3681 = vmatpush.msra.mxu0 0.0
        %3682 = vmatpush.msra.mxu0 0.0
        %3683 = vmatpush.msra.mxu0 0.0
        %3684 = vmatpush.msra.mxu0 0.0
        %3685 = vmatpush.msra.mxu0 %v3582
        %3686 = vmatmul.f32.gmra.mxu0 %v3572
        %v3687 = vpop.f32.mrf.mxu0
        %v3688 = vadd.f32 0.0, %v3687
        %3689 = vdwg.mxu0
        %3690 = vmatpush.msra.mxu0 0.0
        %3691 = vmatpush.msra.mxu0 0.0
        %3692 = vmatpush.msra.mxu0 0.0
        %3693 = vmatpush.msra.mxu0 0.0
        %3694 = vmatpush.msra.mxu0 0.0
        %3695 = vmatpush.msra.mxu0 0.0
        %3696 = vmatpush.msra.mxu0 0.0
        %3697 = vmatpush.msra.mxu0 0.0
        %3698 = vmatpush.msra.mxu0 0.0
        %3699 = vmatpush.msra.mxu0 0.0
        %3700 = vmatpush.msra.mxu0 0.0
        %3701 = vmatpush.msra.mxu0 0.0
        %3702 = vmatpush.msra.mxu0 0.0
        %3703 = vmatpush.msra.mxu0 0.0
        %3704 = vmatpush.msra.mxu0 0.0
        %3705 = vmatpush.msra.mxu0 %v3584
        %3706 = vmatmul.f32.gmra.mxu0 %v3572
        %v3707 = vpop.f32.mrf.mxu0
        %v3708 = vadd.f32 0.0, %v3707
        %3709 = vdwg.mxu0
        %3710 = vmatpush.msra.mxu0 0.0
        %3711 = vmatpush.msra.mxu0 0.0
        %3712 = vmatpush.msra.mxu0 0.0
        %3713 = vmatpush.msra.mxu0 0.0
        %3714 = vmatpush.msra.mxu0 0.0
        %3715 = vmatpush.msra.mxu0 0.0
        %3716 = vmatpush.msra.mxu0 0.0
        %3717 = vmatpush.msra.mxu0 0.0
        %3718 = vmatpush.msra.mxu0 0.0
        %3719 = vmatpush.msra.mxu0 0.0
        %3720 = vmatpush.msra.mxu0 0.0
        %3721 = vmatpush.msra.mxu0 0.0
        %3722 = vmatpush.msra.mxu0 0.0
        %3723 = vmatpush.msra.mxu0 0.0
        %3724 = vmatpush.msra.mxu0 0.0
        %3725 = vmatpush.msra.mxu0 %v3586
        %3726 = vmatmul.f32.gmra.mxu0 %v3572
        %v3727 = vpop.f32.mrf.mxu0
        %v3728 = vadd.f32 0.0, %v3727
        %3729 = vdwg.mxu0
        %3730 = vmatpush.msra.mxu0 0.0
        %3731 = vmatpush.msra.mxu0 0.0
        %3732 = vmatpush.msra.mxu0 0.0
        %3733 = vmatpush.msra.mxu0 0.0
        %3734 = vmatpush.msra.mxu0 0.0
        %3735 = vmatpush.msra.mxu0 0.0
        %3736 = vmatpush.msra.mxu0 0.0
        %3737 = vmatpush.msra.mxu0 0.0
        %3738 = vmatpush.msra.mxu0 0.0
        %3739 = vmatpush.msra.mxu0 0.0
        %3740 = vmatpush.msra.mxu0 0.0
        %3741 = vmatpush.msra.mxu0 0.0
        %3742 = vmatpush.msra.mxu0 0.0
        %3743 = vmatpush.msra.mxu0 0.0
        %3744 = vmatpush.msra.mxu0 0.0
        %3745 = vmatpush.msra.mxu0 %v3588
        %3746 = vmatmul.f32.gmra.mxu0 %v3572
        %v3747 = vpop.f32.mrf.mxu0
        %v3748 = vadd.f32 0.0, %v3747
        %3749 = vdwg.mxu0
        %v3750 = vadd.f32 %v3507, %v3608
        %v3751 = vadd.f32 %v3508, %v3628
        %v3752 = vadd.f32 %v3509, %v3648
        %v3753 = vadd.f32 %v3510, %v3668
        %v3754 = vadd.f32 %v3511, %v3688
        %v3755 = vadd.f32 %v3512, %v3708
        %v3756 = vadd.f32 %v3513, %v3728
        %v3757 = vadd.f32 %v3514, %v3748
        %v3758 = vld [vmem:[%s222] sm:$0xff]
        %v3759 = vld [vmem:[%s222 + $0x8] sm:$0xff]
        %v3760 = vld [vmem:[%s222 + $0x10] sm:$0xff]
        %v3761 = vld [vmem:[%s222 + $0x18] sm:$0xff]
        %v3762 = vld [vmem:[%s222 + $0x20] sm:$0xf]
        %s3763 = scalar_lea.vmem %s1, 120
        %v3764 = vld [vmem:[%s3763] sm:$0xff]
        %3770 = vst [vmem:[#allocation1] ss:$2 sm:$0xff] %v3758
        %s3771 = scalar_lea.vmem [#allocation1], 16
        %3772 = vst [vmem:[%s3771] ss:$2 sm:$0xff] %v3759
        %s3773 = scalar_lea.vmem [#allocation1], 32
        %3774 = vst [vmem:[%s3773] ss:$2 sm:$0xff] %v3760
        %s3775 = scalar_lea.vmem [#allocation1], 48
        %3776 = vst [vmem:[%s3775] ss:$2 sm:$0xff] %v3761
        %v3777 = vld.sshfl [vmem:[#allocation1] sm:$0xff pattern:$0x75316420]
        %v3778 = vld.sshfl [vmem:[#allocation1 + $0x8] sm:$0xff pattern:$0x75316420]
        %v3779 = vld.sshfl [vmem:[#allocation1 + $0x10] sm:$0xff pattern:$0x75316420]
        %v3780 = vld.sshfl [vmem:[#allocation1 + $0x18] sm:$0xff pattern:$0x75316420]
        %v3781 = vld.sshfl [vmem:[#allocation1 + $0x20] sm:$0xff pattern:$0x75316420]
        %v3782 = vld.sshfl [vmem:[#allocation1 + $0x28] sm:$0xff pattern:$0x75316420]
        %v3783 = vld.sshfl [vmem:[#allocation1 + $0x30] sm:$0xff pattern:$0x75316420]
        %v3784 = vld.sshfl [vmem:[#allocation1 + $0x38] sm:$0xff pattern:$0x75316420]
        %3785 = vst [vmem:[#allocation1] ss:$2 sm:$0xff] %v3762
        %v3786 = vld.sshfl [vmem:[#allocation1] sm:$0xff pattern:$0x75316420]
        %3787 = vrot.lane.b32.xlu0 %v3777, 8
        %v3788 = vpop.permute.xlu0 %3787
        %3789 = vrot.lane.b32.xlu0 %v3778, 8
        %v3790 = vpop.permute.xlu0 %3789
        %3791 = vrot.lane.b32.xlu0 %v3779, 8
        %v3792 = vpop.permute.xlu0 %3791
        %3793 = vrot.lane.b32.xlu0 %v3780, 8
        %v3794 = vpop.permute.xlu0 %3793
        %3795 = vrot.lane.b32.xlu0 %v3781, 8
        %v3796 = vpop.permute.xlu0 %3795
        %3797 = vrot.lane.b32.xlu0 %v3782, 8
        %v3798 = vpop.permute.xlu0 %3797
        %3799 = vrot.lane.b32.xlu0 %v3783, 8
        %v3800 = vpop.permute.xlu0 %3799
        %3801 = vrot.lane.b32.xlu0 %v3784, 8
        %v3802 = vpop.permute.xlu0 %3801
        %3803 = vrot.lane.b32.xlu0 %v3786, 8
        %v3804 = vpop.permute.xlu0 %3803
        %vm3805 = vcmask 64512
        %v3806 = vsel %vm3805, %v3788, %v3790
        %v3807 = vsel %vm3805, %v3790, %v3792
        %v3808 = vsel %vm3805, %v3792, %v3794
        %v3809 = vsel %vm3805, %v3794, %v3796
        %v3810 = vsel %vm3805, %v3796, %v3798
        %v3811 = vsel %vm3805, %v3798, %v3800
        %v3812 = vsel %vm3805, %v3800, %v3802
        %v3813 = vsel %vm3805, %v3802, %v3804
        %v3815 = vsel %vm273, %v3764, 0
        %v3817 = vsel %vm277, %v3806, 0
        %v3819 = vsel %vm277, %v3807, 0
        %v3821 = vsel %vm277, %v3808, 0
        %v3823 = vsel %vm277, %v3809, 0
        %v3825 = vsel %vm277, %v3810, 0
        %v3827 = vsel %vm277, %v3811, 0
        %v3829 = vsel %vm277, %v3812, 0
        %v3831 = vsel %vm277, %v3813, 0
        %3833 = vmatpush.msra.mxu0 0.0
        %3834 = vmatpush.msra.mxu0 0.0
        %3835 = vmatpush.msra.mxu0 0.0
        %3836 = vmatpush.msra.mxu0 0.0
        %3837 = vmatpush.msra.mxu0 0.0
        %3838 = vmatpush.msra.mxu0 0.0
        %3839 = vmatpush.msra.mxu0 0.0
        %3840 = vmatpush.msra.mxu0 0.0
        %3841 = vmatpush.msra.mxu0 0.0
        %3842 = vmatpush.msra.mxu0 0.0
        %3843 = vmatpush.msra.mxu0 0.0
        %3844 = vmatpush.msra.mxu0 0.0
        %3845 = vmatpush.msra.mxu0 0.0
        %3846 = vmatpush.msra.mxu0 0.0
        %3847 = vmatpush.msra.mxu0 0.0
        %3848 = vmatpush.msra.mxu0 %v3817
        %3849 = vmatmul.f32.gmra.mxu0 %v3815
        %v3850 = vpop.f32.mrf.mxu0
        %v3851 = vadd.f32 0.0, %v3850
        %3852 = vdwg.mxu0
        %3853 = vmatpush.msra.mxu0 0.0
        %3854 = vmatpush.msra.mxu0 0.0
        %3855 = vmatpush.msra.mxu0 0.0
        %3856 = vmatpush.msra.mxu0 0.0
        %3857 = vmatpush.msra.mxu0 0.0
        %3858 = vmatpush.msra.mxu0 0.0
        %3859 = vmatpush.msra.mxu0 0.0
        %3860 = vmatpush.msra.mxu0 0.0
        %3861 = vmatpush.msra.mxu0 0.0
        %3862 = vmatpush.msra.mxu0 0.0
        %3863 = vmatpush.msra.mxu0 0.0
        %3864 = vmatpush.msra.mxu0 0.0
        %3865 = vmatpush.msra.mxu0 0.0
        %3866 = vmatpush.msra.mxu0 0.0
        %3867 = vmatpush.msra.mxu0 0.0
        %3868 = vmatpush.msra.mxu0 %v3819
        %3869 = vmatmul.f32.gmra.mxu0 %v3815
        %v3870 = vpop.f32.mrf.mxu0
        %v3871 = vadd.f32 0.0, %v3870
        %3872 = vdwg.mxu0
        %3873 = vmatpush.msra.mxu0 0.0
        %3874 = vmatpush.msra.mxu0 0.0
        %3875 = vmatpush.msra.mxu0 0.0
        %3876 = vmatpush.msra.mxu0 0.0
        %3877 = vmatpush.msra.mxu0 0.0
        %3878 = vmatpush.msra.mxu0 0.0
        %3879 = vmatpush.msra.mxu0 0.0
        %3880 = vmatpush.msra.mxu0 0.0
        %3881 = vmatpush.msra.mxu0 0.0
        %3882 = vmatpush.msra.mxu0 0.0
        %3883 = vmatpush.msra.mxu0 0.0
        %3884 = vmatpush.msra.mxu0 0.0
        %3885 = vmatpush.msra.mxu0 0.0
        %3886 = vmatpush.msra.mxu0 0.0
        %3887 = vmatpush.msra.mxu0 0.0
        %3888 = vmatpush.msra.mxu0 %v3821
        %3889 = vmatmul.f32.gmra.mxu0 %v3815
        %v3890 = vpop.f32.mrf.mxu0
        %v3891 = vadd.f32 0.0, %v3890
        %3892 = vdwg.mxu0
        %3893 = vmatpush.msra.mxu0 0.0
        %3894 = vmatpush.msra.mxu0 0.0
        %3895 = vmatpush.msra.mxu0 0.0
        %3896 = vmatpush.msra.mxu0 0.0
        %3897 = vmatpush.msra.mxu0 0.0
        %3898 = vmatpush.msra.mxu0 0.0
        %3899 = vmatpush.msra.mxu0 0.0
        %3900 = vmatpush.msra.mxu0 0.0
        %3901 = vmatpush.msra.mxu0 0.0
        %3902 = vmatpush.msra.mxu0 0.0
        %3903 = vmatpush.msra.mxu0 0.0
        %3904 = vmatpush.msra.mxu0 0.0
        %3905 = vmatpush.msra.mxu0 0.0
        %3906 = vmatpush.msra.mxu0 0.0
        %3907 = vmatpush.msra.mxu0 0.0
        %3908 = vmatpush.msra.mxu0 %v3823
        %3909 = vmatmul.f32.gmra.mxu0 %v3815
        %v3910 = vpop.f32.mrf.mxu0
        %v3911 = vadd.f32 0.0, %v3910
        %3912 = vdwg.mxu0
        %3913 = vmatpush.msra.mxu0 0.0
        %3914 = vmatpush.msra.mxu0 0.0
        %3915 = vmatpush.msra.mxu0 0.0
        %3916 = vmatpush.msra.mxu0 0.0
        %3917 = vmatpush.msra.mxu0 0.0
        %3918 = vmatpush.msra.mxu0 0.0
        %3919 = vmatpush.msra.mxu0 0.0
        %3920 = vmatpush.msra.mxu0 0.0
        %3921 = vmatpush.msra.mxu0 0.0
        %3922 = vmatpush.msra.mxu0 0.0
        %3923 = vmatpush.msra.mxu0 0.0
        %3924 = vmatpush.msra.mxu0 0.0
        %3925 = vmatpush.msra.mxu0 0.0
        %3926 = vmatpush.msra.mxu0 0.0
        %3927 = vmatpush.msra.mxu0 0.0
        %3928 = vmatpush.msra.mxu0 %v3825
        %3929 = vmatmul.f32.gmra.mxu0 %v3815
        %v3930 = vpop.f32.mrf.mxu0
        %v3931 = vadd.f32 0.0, %v3930
        %3932 = vdwg.mxu0
        %3933 = vmatpush.msra.mxu0 0.0
        %3934 = vmatpush.msra.mxu0 0.0
        %3935 = vmatpush.msra.mxu0 0.0
        %3936 = vmatpush.msra.mxu0 0.0
        %3937 = vmatpush.msra.mxu0 0.0
        %3938 = vmatpush.msra.mxu0 0.0
        %3939 = vmatpush.msra.mxu0 0.0
        %3940 = vmatpush.msra.mxu0 0.0
        %3941 = vmatpush.msra.mxu0 0.0
        %3942 = vmatpush.msra.mxu0 0.0
        %3943 = vmatpush.msra.mxu0 0.0
        %3944 = vmatpush.msra.mxu0 0.0
        %3945 = vmatpush.msra.mxu0 0.0
        %3946 = vmatpush.msra.mxu0 0.0
        %3947 = vmatpush.msra.mxu0 0.0
        %3948 = vmatpush.msra.mxu0 %v3827
        %3949 = vmatmul.f32.gmra.mxu0 %v3815
        %v3950 = vpop.f32.mrf.mxu0
        %v3951 = vadd.f32 0.0, %v3950
        %3952 = vdwg.mxu0
        %3953 = vmatpush.msra.mxu0 0.0
        %3954 = vmatpush.msra.mxu0 0.0
        %3955 = vmatpush.msra.mxu0 0.0
        %3956 = vmatpush.msra.mxu0 0.0
        %3957 = vmatpush.msra.mxu0 0.0
        %3958 = vmatpush.msra.mxu0 0.0
        %3959 = vmatpush.msra.mxu0 0.0
        %3960 = vmatpush.msra.mxu0 0.0
        %3961 = vmatpush.msra.mxu0 0.0
        %3962 = vmatpush.msra.mxu0 0.0
        %3963 = vmatpush.msra.mxu0 0.0
        %3964 = vmatpush.msra.mxu0 0.0
        %3965 = vmatpush.msra.mxu0 0.0
        %3966 = vmatpush.msra.mxu0 0.0
        %3967 = vmatpush.msra.mxu0 0.0
        %3968 = vmatpush.msra.mxu0 %v3829
        %3969 = vmatmul.f32.gmra.mxu0 %v3815
        %v3970 = vpop.f32.mrf.mxu0
        %v3971 = vadd.f32 0.0, %v3970
        %3972 = vdwg.mxu0
        %3973 = vmatpush.msra.mxu0 0.0
        %3974 = vmatpush.msra.mxu0 0.0
        %3975 = vmatpush.msra.mxu0 0.0
        %3976 = vmatpush.msra.mxu0 0.0
        %3977 = vmatpush.msra.mxu0 0.0
        %3978 = vmatpush.msra.mxu0 0.0
        %3979 = vmatpush.msra.mxu0 0.0
        %3980 = vmatpush.msra.mxu0 0.0
        %3981 = vmatpush.msra.mxu0 0.0
        %3982 = vmatpush.msra.mxu0 0.0
        %3983 = vmatpush.msra.mxu0 0.0
        %3984 = vmatpush.msra.mxu0 0.0
        %3985 = vmatpush.msra.mxu0 0.0
        %3986 = vmatpush.msra.mxu0 0.0
        %3987 = vmatpush.msra.mxu0 0.0
        %3988 = vmatpush.msra.mxu0 %v3831
        %3989 = vmatmul.f32.gmra.mxu0 %v3815
        %v3990 = vpop.f32.mrf.mxu0
        %v3991 = vadd.f32 0.0, %v3990
        %3992 = vdwg.mxu0
        %v3993 = vadd.f32 %v3750, %v3851
        %v3994 = vadd.f32 %v3751, %v3871
        %v3995 = vadd.f32 %v3752, %v3891
        %v3996 = vadd.f32 %v3753, %v3911
        %v3997 = vadd.f32 %v3754, %v3931
        %v3998 = vadd.f32 %v3755, %v3951
        %v3999 = vadd.f32 %v3756, %v3971
        %v4000 = vadd.f32 %v3757, %v3991
        %v4001 = vld [vmem:[%s222] sm:$0xff]
        %v4002 = vld [vmem:[%s222 + $0x8] sm:$0xff]
        %v4003 = vld [vmem:[%s222 + $0x10] sm:$0xff]
        %v4004 = vld [vmem:[%s222 + $0x18] sm:$0xff]
        %v4005 = vld [vmem:[%s222 + $0x20] sm:$0xf]
        %s4006 = scalar_lea.vmem %s1, 128
        %v4007 = vld [vmem:[%s4006] sm:$0xff]
        %4013 = vst [vmem:[#allocation1] ss:$2 sm:$0xff] %v4001
        %s4014 = scalar_lea.vmem [#allocation1], 16
        %4015 = vst [vmem:[%s4014] ss:$2 sm:$0xff] %v4002
        %s4016 = scalar_lea.vmem [#allocation1], 32
        %4017 = vst [vmem:[%s4016] ss:$2 sm:$0xff] %v4003
        %s4018 = scalar_lea.vmem [#allocation1], 48
        %4019 = vst [vmem:[%s4018] ss:$2 sm:$0xff] %v4004
        %v4020 = vld.sshfl [vmem:[#allocation1] sm:$0xff pattern:$0x75316420]
        %v4021 = vld.sshfl [vmem:[#allocation1 + $0x8] sm:$0xff pattern:$0x75316420]
        %v4022 = vld.sshfl [vmem:[#allocation1 + $0x10] sm:$0xff pattern:$0x75316420]
        %v4023 = vld.sshfl [vmem:[#allocation1 + $0x18] sm:$0xff pattern:$0x75316420]
        %v4024 = vld.sshfl [vmem:[#allocation1 + $0x20] sm:$0xff pattern:$0x75316420]
        %v4025 = vld.sshfl [vmem:[#allocation1 + $0x28] sm:$0xff pattern:$0x75316420]
        %v4026 = vld.sshfl [vmem:[#allocation1 + $0x30] sm:$0xff pattern:$0x75316420]
        %v4027 = vld.sshfl [vmem:[#allocation1 + $0x38] sm:$0xff pattern:$0x75316420]
        %4028 = vst [vmem:[#allocation1] ss:$2 sm:$0xff] %v4005
        %v4029 = vld.sshfl [vmem:[#allocation1] sm:$0xff pattern:$0x75316420]
        %4030 = vrot.lane.b32.xlu0 %v4020, 7
        %v4031 = vpop.permute.xlu0 %4030
        %4032 = vrot.lane.b32.xlu0 %v4021, 7
        %v4033 = vpop.permute.xlu0 %4032
        %4034 = vrot.lane.b32.xlu0 %v4022, 7
        %v4035 = vpop.permute.xlu0 %4034
        %4036 = vrot.lane.b32.xlu0 %v4023, 7
        %v4037 = vpop.permute.xlu0 %4036
        %4038 = vrot.lane.b32.xlu0 %v4024, 7
        %v4039 = vpop.permute.xlu0 %4038
        %4040 = vrot.lane.b32.xlu0 %v4025, 7
        %v4041 = vpop.permute.xlu0 %4040
        %4042 = vrot.lane.b32.xlu0 %v4026, 7
        %v4043 = vpop.permute.xlu0 %4042
        %4044 = vrot.lane.b32.xlu0 %v4027, 7
        %v4045 = vpop.permute.xlu0 %4044
        %4046 = vrot.lane.b32.xlu0 %v4029, 7
        %v4047 = vpop.permute.xlu0 %4046
        %vm4048 = vcmask 56320
        %v4049 = vsel %vm4048, %v4031, %v4033
        %v4050 = vsel %vm4048, %v4033, %v4035
        %v4051 = vsel %vm4048, %v4035, %v4037
        %v4052 = vsel %vm4048, %v4037, %v4039
        %v4053 = vsel %vm4048, %v4039, %v4041
        %v4054 = vsel %vm4048, %v4041, %v4043
        %v4055 = vsel %vm4048, %v4043, %v4045
        %v4056 = vsel %vm4048, %v4045, %v4047
        %v4058 = vsel %vm273, %v4007, 0
        %v4060 = vsel %vm277, %v4049, 0
        %v4062 = vsel %vm277, %v4050, 0
        %v4064 = vsel %vm277, %v4051, 0
        %v4066 = vsel %vm277, %v4052, 0
        %v4068 = vsel %vm277, %v4053, 0
        %v4070 = vsel %vm277, %v4054, 0
        %v4072 = vsel %vm277, %v4055, 0
        %v4074 = vsel %vm277, %v4056, 0
        %4076 = vmatpush.msra.mxu0 0.0
        %4077 = vmatpush.msra.mxu0 0.0
        %4078 = vmatpush.msra.mxu0 0.0
        %4079 = vmatpush.msra.mxu0 0.0
        %4080 = vmatpush.msra.mxu0 0.0
        %4081 = vmatpush.msra.mxu0 0.0
        %4082 = vmatpush.msra.mxu0 0.0
        %4083 = vmatpush.msra.mxu0 0.0
        %4084 = vmatpush.msra.mxu0 0.0
        %4085 = vmatpush.msra.mxu0 0.0
        %4086 = vmatpush.msra.mxu0 0.0
        %4087 = vmatpush.msra.mxu0 0.0
        %4088 = vmatpush.msra.mxu0 0.0
        %4089 = vmatpush.msra.mxu0 0.0
        %4090 = vmatpush.msra.mxu0 0.0
        %4091 = vmatpush.msra.mxu0 %v4060
        %4092 = vmatmul.f32.gmra.mxu0 %v4058
        %v4093 = vpop.f32.mrf.mxu0
        %v4094 = vadd.f32 0.0, %v4093
        %4095 = vdwg.mxu0
        %4096 = vmatpush.msra.mxu0 0.0
        %4097 = vmatpush.msra.mxu0 0.0
        %4098 = vmatpush.msra.mxu0 0.0
        %4099 = vmatpush.msra.mxu0 0.0
        %4100 = vmatpush.msra.mxu0 0.0
        %4101 = vmatpush.msra.mxu0 0.0
        %4102 = vmatpush.msra.mxu0 0.0
        %4103 = vmatpush.msra.mxu0 0.0
        %4104 = vmatpush.msra.mxu0 0.0
        %4105 = vmatpush.msra.mxu0 0.0
        %4106 = vmatpush.msra.mxu0 0.0
        %4107 = vmatpush.msra.mxu0 0.0
        %4108 = vmatpush.msra.mxu0 0.0
        %4109 = vmatpush.msra.mxu0 0.0
        %4110 = vmatpush.msra.mxu0 0.0
        %4111 = vmatpush.msra.mxu0 %v4062
        %4112 = vmatmul.f32.gmra.mxu0 %v4058
        %v4113 = vpop.f32.mrf.mxu0
        %v4114 = vadd.f32 0.0, %v4113
        %4115 = vdwg.mxu0
        %4116 = vmatpush.msra.mxu0 0.0
        %4117 = vmatpush.msra.mxu0 0.0
        %4118 = vmatpush.msra.mxu0 0.0
        %4119 = vmatpush.msra.mxu0 0.0
        %4120 = vmatpush.msra.mxu0 0.0
        %4121 = vmatpush.msra.mxu0 0.0
        %4122 = vmatpush.msra.mxu0 0.0
        %4123 = vmatpush.msra.mxu0 0.0
        %4124 = vmatpush.msra.mxu0 0.0
        %4125 = vmatpush.msra.mxu0 0.0
        %4126 = vmatpush.msra.mxu0 0.0
        %4127 = vmatpush.msra.mxu0 0.0
        %4128 = vmatpush.msra.mxu0 0.0
        %4129 = vmatpush.msra.mxu0 0.0
        %4130 = vmatpush.msra.mxu0 0.0
        %4131 = vmatpush.msra.mxu0 %v4064
        %4132 = vmatmul.f32.gmra.mxu0 %v4058
        %v4133 = vpop.f32.mrf.mxu0
        %v4134 = vadd.f32 0.0, %v4133
        %4135 = vdwg.mxu0
        %4136 = vmatpush.msra.mxu0 0.0
        %4137 = vmatpush.msra.mxu0 0.0
        %4138 = vmatpush.msra.mxu0 0.0
        %4139 = vmatpush.msra.mxu0 0.0
        %4140 = vmatpush.msra.mxu0 0.0
        %4141 = vmatpush.msra.mxu0 0.0
        %4142 = vmatpush.msra.mxu0 0.0
        %4143 = vmatpush.msra.mxu0 0.0
        %4144 = vmatpush.msra.mxu0 0.0
        %4145 = vmatpush.msra.mxu0 0.0
        %4146 = vmatpush.msra.mxu0 0.0
        %4147 = vmatpush.msra.mxu0 0.0
        %4148 = vmatpush.msra.mxu0 0.0
        %4149 = vmatpush.msra.mxu0 0.0
        %4150 = vmatpush.msra.mxu0 0.0
        %4151 = vmatpush.msra.mxu0 %v4066
        %4152 = vmatmul.f32.gmra.mxu0 %v4058
        %v4153 = vpop.f32.mrf.mxu0
        %v4154 = vadd.f32 0.0, %v4153
        %4155 = vdwg.mxu0
        %4156 = vmatpush.msra.mxu0 0.0
        %4157 = vmatpush.msra.mxu0 0.0
        %4158 = vmatpush.msra.mxu0 0.0
        %4159 = vmatpush.msra.mxu0 0.0
        %4160 = vmatpush.msra.mxu0 0.0
        %4161 = vmatpush.msra.mxu0 0.0
        %4162 = vmatpush.msra.mxu0 0.0
        %4163 = vmatpush.msra.mxu0 0.0
        %4164 = vmatpush.msra.mxu0 0.0
        %4165 = vmatpush.msra.mxu0 0.0
        %4166 = vmatpush.msra.mxu0 0.0
        %4167 = vmatpush.msra.mxu0 0.0
        %4168 = vmatpush.msra.mxu0 0.0
        %4169 = vmatpush.msra.mxu0 0.0
        %4170 = vmatpush.msra.mxu0 0.0
        %4171 = vmatpush.msra.mxu0 %v4068
        %4172 = vmatmul.f32.gmra.mxu0 %v4058
        %v4173 = vpop.f32.mrf.mxu0
        %v4174 = vadd.f32 0.0, %v4173
        %4175 = vdwg.mxu0
        %4176 = vmatpush.msra.mxu0 0.0
        %4177 = vmatpush.msra.mxu0 0.0
        %4178 = vmatpush.msra.mxu0 0.0
        %4179 = vmatpush.msra.mxu0 0.0
        %4180 = vmatpush.msra.mxu0 0.0
        %4181 = vmatpush.msra.mxu0 0.0
        %4182 = vmatpush.msra.mxu0 0.0
        %4183 = vmatpush.msra.mxu0 0.0
        %4184 = vmatpush.msra.mxu0 0.0
        %4185 = vmatpush.msra.mxu0 0.0
        %4186 = vmatpush.msra.mxu0 0.0
        %4187 = vmatpush.msra.mxu0 0.0
        %4188 = vmatpush.msra.mxu0 0.0
        %4189 = vmatpush.msra.mxu0 0.0
        %4190 = vmatpush.msra.mxu0 0.0
        %4191 = vmatpush.msra.mxu0 %v4070
        %4192 = vmatmul.f32.gmra.mxu0 %v4058
        %v4193 = vpop.f32.mrf.mxu0
        %v4194 = vadd.f32 0.0, %v4193
        %4195 = vdwg.mxu0
        %4196 = vmatpush.msra.mxu0 0.0
        %4197 = vmatpush.msra.mxu0 0.0
        %4198 = vmatpush.msra.mxu0 0.0
        %4199 = vmatpush.msra.mxu0 0.0
        %4200 = vmatpush.msra.mxu0 0.0
        %4201 = vmatpush.msra.mxu0 0.0
        %4202 = vmatpush.msra.mxu0 0.0
        %4203 = vmatpush.msra.mxu0 0.0
        %4204 = vmatpush.msra.mxu0 0.0
        %4205 = vmatpush.msra.mxu0 0.0
        %4206 = vmatpush.msra.mxu0 0.0
        %4207 = vmatpush.msra.mxu0 0.0
        %4208 = vmatpush.msra.mxu0 0.0
        %4209 = vmatpush.msra.mxu0 0.0
        %4210 = vmatpush.msra.mxu0 0.0
        %4211 = vmatpush.msra.mxu0 %v4072
        %4212 = vmatmul.f32.gmra.mxu0 %v4058
        %v4213 = vpop.f32.mrf.mxu0
        %v4214 = vadd.f32 0.0, %v4213
        %4215 = vdwg.mxu0
        %4216 = vmatpush.msra.mxu0 0.0
        %4217 = vmatpush.msra.mxu0 0.0
        %4218 = vmatpush.msra.mxu0 0.0
        %4219 = vmatpush.msra.mxu0 0.0
        %4220 = vmatpush.msra.mxu0 0.0
        %4221 = vmatpush.msra.mxu0 0.0
        %4222 = vmatpush.msra.mxu0 0.0
        %4223 = vmatpush.msra.mxu0 0.0
        %4224 = vmatpush.msra.mxu0 0.0
        %4225 = vmatpush.msra.mxu0 0.0
        %4226 = vmatpush.msra.mxu0 0.0
        %4227 = vmatpush.msra.mxu0 0.0
        %4228 = vmatpush.msra.mxu0 0.0
        %4229 = vmatpush.msra.mxu0 0.0
        %4230 = vmatpush.msra.mxu0 0.0
        %4231 = vmatpush.msra.mxu0 %v4074
        %4232 = vmatmul.f32.gmra.mxu0 %v4058
        %v4233 = vpop.f32.mrf.mxu0
        %v4234 = vadd.f32 0.0, %v4233
        %4235 = vdwg.mxu0
        %v4236 = vadd.f32 %v3993, %v4094
        %v4237 = vadd.f32 %v3994, %v4114
        %v4238 = vadd.f32 %v3995, %v4134
        %v4239 = vadd.f32 %v3996, %v4154
        %v4240 = vadd.f32 %v3997, %v4174
        %v4241 = vadd.f32 %v3998, %v4194
        %v4242 = vadd.f32 %v3999, %v4214
        %v4243 = vadd.f32 %v4000, %v4234
        %v4244 = vld [vmem:[%s222] sm:$0xff]
        %v4245 = vld [vmem:[%s222 + $0x8] sm:$0xff]
        %v4246 = vld [vmem:[%s222 + $0x10] sm:$0xff]
        %v4247 = vld [vmem:[%s222 + $0x18] sm:$0xff]
        %v4248 = vld [vmem:[%s222 + $0x20] sm:$0xf]
        %s4249 = scalar_lea.vmem %s1, 136
        %v4250 = vld [vmem:[%s4249] sm:$0xff]
        %4256 = vst [vmem:[#allocation1] ss:$2 sm:$0xff] %v4244
        %s4257 = scalar_lea.vmem [#allocation1], 16
        %4258 = vst [vmem:[%s4257] ss:$2 sm:$0xff] %v4245
        %s4259 = scalar_lea.vmem [#allocation1], 32
        %4260 = vst [vmem:[%s4259] ss:$2 sm:$0xff] %v4246
        %s4261 = scalar_lea.vmem [#allocation1], 48
        %4262 = vst [vmem:[%s4261] ss:$2 sm:$0xff] %v4247
        %v4263 = vld.sshfl [vmem:[#allocation1] sm:$0xff pattern:$0x75316420]
        %v4264 = vld.sshfl [vmem:[#allocation1 + $0x8] sm:$0xff pattern:$0x75316420]
        %v4265 = vld.sshfl [vmem:[#allocation1 + $0x10] sm:$0xff pattern:$0x75316420]
        %v4266 = vld.sshfl [vmem:[#allocation1 + $0x18] sm:$0xff pattern:$0x75316420]
        %v4267 = vld.sshfl [vmem:[#allocation1 + $0x20] sm:$0xff pattern:$0x75316420]
        %v4268 = vld.sshfl [vmem:[#allocation1 + $0x28] sm:$0xff pattern:$0x75316420]
        %v4269 = vld.sshfl [vmem:[#allocation1 + $0x30] sm:$0xff pattern:$0x75316420]
        %v4270 = vld.sshfl [vmem:[#allocation1 + $0x38] sm:$0xff pattern:$0x75316420]
        %4271 = vst [vmem:[#allocation1] ss:$2 sm:$0xff] %v4248
        %v4272 = vld.sshfl [vmem:[#allocation1] sm:$0xff pattern:$0x75316420]
        %4273 = vrot.lane.b32.xlu0 %v4263, 6
        %v4274 = vpop.permute.xlu0 %4273
        %4275 = vrot.lane.b32.xlu0 %v4264, 6
        %v4276 = vpop.permute.xlu0 %4275
        %4277 = vrot.lane.b32.xlu0 %v4265, 6
        %v4278 = vpop.permute.xlu0 %4277
        %4279 = vrot.lane.b32.xlu0 %v4266, 6
        %v4280 = vpop.permute.xlu0 %4279
        %4281 = vrot.lane.b32.xlu0 %v4267, 6
        %v4282 = vpop.permute.xlu0 %4281
        %4283 = vrot.lane.b32.xlu0 %v4268, 6
        %v4284 = vpop.permute.xlu0 %4283
        %4285 = vrot.lane.b32.xlu0 %v4269, 6
        %v4286 = vpop.permute.xlu0 %4285
        %4287 = vrot.lane.b32.xlu0 %v4270, 6
        %v4288 = vpop.permute.xlu0 %4287
        %4289 = vrot.lane.b32.xlu0 %v4272, 6
        %v4290 = vpop.permute.xlu0 %4289
        %vm4291 = vcmask 48128
        %v4292 = vsel %vm4291, %v4274, %v4276
        %v4293 = vsel %vm4291, %v4276, %v4278
        %v4294 = vsel %vm4291, %v4278, %v4280
        %v4295 = vsel %vm4291, %v4280, %v4282
        %v4296 = vsel %vm4291, %v4282, %v4284
        %v4297 = vsel %vm4291, %v4284, %v4286
        %v4298 = vsel %vm4291, %v4286, %v4288
        %v4299 = vsel %vm4291, %v4288, %v4290
        %v4301 = vsel %vm273, %v4250, 0
        %v4303 = vsel %vm277, %v4292, 0
        %v4305 = vsel %vm277, %v4293, 0
        %v4307 = vsel %vm277, %v4294, 0
        %v4309 = vsel %vm277, %v4295, 0
        %v4311 = vsel %vm277, %v4296, 0
        %v4313 = vsel %vm277, %v4297, 0
        %v4315 = vsel %vm277, %v4298, 0
        %v4317 = vsel %vm277, %v4299, 0
        %4319 = vmatpush.msra.mxu0 0.0
        %4320 = vmatpush.msra.mxu0 0.0
        %4321 = vmatpush.msra.mxu0 0.0
        %4322 = vmatpush.msra.mxu0 0.0
        %4323 = vmatpush.msra.mxu0 0.0
        %4324 = vmatpush.msra.mxu0 0.0
        %4325 = vmatpush.msra.mxu0 0.0
        %4326 = vmatpush.msra.mxu0 0.0
        %4327 = vmatpush.msra.mxu0 0.0
        %4328 = vmatpush.msra.mxu0 0.0
        %4329 = vmatpush.msra.mxu0 0.0
        %4330 = vmatpush.msra.mxu0 0.0
        %4331 = vmatpush.msra.mxu0 0.0
        %4332 = vmatpush.msra.mxu0 0.0
        %4333 = vmatpush.msra.mxu0 0.0
        %4334 = vmatpush.msra.mxu0 %v4303
        %4335 = vmatmul.f32.gmra.mxu0 %v4301
        %v4336 = vpop.f32.mrf.mxu0
        %v4337 = vadd.f32 0.0, %v4336
        %4338 = vdwg.mxu0
        %4339 = vmatpush.msra.mxu0 0.0
        %4340 = vmatpush.msra.mxu0 0.0
        %4341 = vmatpush.msra.mxu0 0.0
        %4342 = vmatpush.msra.mxu0 0.0
        %4343 = vmatpush.msra.mxu0 0.0
        %4344 = vmatpush.msra.mxu0 0.0
        %4345 = vmatpush.msra.mxu0 0.0
        %4346 = vmatpush.msra.mxu0 0.0
        %4347 = vmatpush.msra.mxu0 0.0
        %4348 = vmatpush.msra.mxu0 0.0
        %4349 = vmatpush.msra.mxu0 0.0
        %4350 = vmatpush.msra.mxu0 0.0
        %4351 = vmatpush.msra.mxu0 0.0
        %4352 = vmatpush.msra.mxu0 0.0
        %4353 = vmatpush.msra.mxu0 0.0
        %4354 = vmatpush.msra.mxu0 %v4305
        %4355 = vmatmul.f32.gmra.mxu0 %v4301
        %v4356 = vpop.f32.mrf.mxu0
        %v4357 = vadd.f32 0.0, %v4356
        %4358 = vdwg.mxu0
        %4359 = vmatpush.msra.mxu0 0.0
        %4360 = vmatpush.msra.mxu0 0.0
        %4361 = vmatpush.msra.mxu0 0.0
        %4362 = vmatpush.msra.mxu0 0.0
        %4363 = vmatpush.msra.mxu0 0.0
        %4364 = vmatpush.msra.mxu0 0.0
        %4365 = vmatpush.msra.mxu0 0.0
        %4366 = vmatpush.msra.mxu0 0.0
        %4367 = vmatpush.msra.mxu0 0.0
        %4368 = vmatpush.msra.mxu0 0.0
        %4369 = vmatpush.msra.mxu0 0.0
        %4370 = vmatpush.msra.mxu0 0.0
        %4371 = vmatpush.msra.mxu0 0.0
        %4372 = vmatpush.msra.mxu0 0.0
        %4373 = vmatpush.msra.mxu0 0.0
        %4374 = vmatpush.msra.mxu0 %v4307
        %4375 = vmatmul.f32.gmra.mxu0 %v4301
        %v4376 = vpop.f32.mrf.mxu0
        %v4377 = vadd.f32 0.0, %v4376
        %4378 = vdwg.mxu0
        %4379 = vmatpush.msra.mxu0 0.0
        %4380 = vmatpush.msra.mxu0 0.0
        %4381 = vmatpush.msra.mxu0 0.0
        %4382 = vmatpush.msra.mxu0 0.0
        %4383 = vmatpush.msra.mxu0 0.0
        %4384 = vmatpush.msra.mxu0 0.0
        %4385 = vmatpush.msra.mxu0 0.0
        %4386 = vmatpush.msra.mxu0 0.0
        %4387 = vmatpush.msra.mxu0 0.0
        %4388 = vmatpush.msra.mxu0 0.0
        %4389 = vmatpush.msra.mxu0 0.0
        %4390 = vmatpush.msra.mxu0 0.0
        %4391 = vmatpush.msra.mxu0 0.0
        %4392 = vmatpush.msra.mxu0 0.0
        %4393 = vmatpush.msra.mxu0 0.0
        %4394 = vmatpush.msra.mxu0 %v4309
        %4395 = vmatmul.f32.gmra.mxu0 %v4301
        %v4396 = vpop.f32.mrf.mxu0
        %v4397 = vadd.f32 0.0, %v4396
        %4398 = vdwg.mxu0
        %4399 = vmatpush.msra.mxu0 0.0
        %4400 = vmatpush.msra.mxu0 0.0
        %4401 = vmatpush.msra.mxu0 0.0
        %4402 = vmatpush.msra.mxu0 0.0
        %4403 = vmatpush.msra.mxu0 0.0
        %4404 = vmatpush.msra.mxu0 0.0
        %4405 = vmatpush.msra.mxu0 0.0
        %4406 = vmatpush.msra.mxu0 0.0
        %4407 = vmatpush.msra.mxu0 0.0
        %4408 = vmatpush.msra.mxu0 0.0
        %4409 = vmatpush.msra.mxu0 0.0
        %4410 = vmatpush.msra.mxu0 0.0
        %4411 = vmatpush.msra.mxu0 0.0
        %4412 = vmatpush.msra.mxu0 0.0
        %4413 = vmatpush.msra.mxu0 0.0
        %4414 = vmatpush.msra.mxu0 %v4311
        %4415 = vmatmul.f32.gmra.mxu0 %v4301
        %v4416 = vpop.f32.mrf.mxu0
        %v4417 = vadd.f32 0.0, %v4416
        %4418 = vdwg.mxu0
        %4419 = vmatpush.msra.mxu0 0.0
        %4420 = vmatpush.msra.mxu0 0.0
        %4421 = vmatpush.msra.mxu0 0.0
        %4422 = vmatpush.msra.mxu0 0.0
        %4423 = vmatpush.msra.mxu0 0.0
        %4424 = vmatpush.msra.mxu0 0.0
        %4425 = vmatpush.msra.mxu0 0.0
        %4426 = vmatpush.msra.mxu0 0.0
        %4427 = vmatpush.msra.mxu0 0.0
        %4428 = vmatpush.msra.mxu0 0.0
        %4429 = vmatpush.msra.mxu0 0.0
        %4430 = vmatpush.msra.mxu0 0.0
        %4431 = vmatpush.msra.mxu0 0.0
        %4432 = vmatpush.msra.mxu0 0.0
        %4433 = vmatpush.msra.mxu0 0.0
        %4434 = vmatpush.msra.mxu0 %v4313
        %4435 = vmatmul.f32.gmra.mxu0 %v4301
        %v4436 = vpop.f32.mrf.mxu0
        %v4437 = vadd.f32 0.0, %v4436
        %4438 = vdwg.mxu0
        %4439 = vmatpush.msra.mxu0 0.0
        %4440 = vmatpush.msra.mxu0 0.0
        %4441 = vmatpush.msra.mxu0 0.0
        %4442 = vmatpush.msra.mxu0 0.0
        %4443 = vmatpush.msra.mxu0 0.0
        %4444 = vmatpush.msra.mxu0 0.0
        %4445 = vmatpush.msra.mxu0 0.0
        %4446 = vmatpush.msra.mxu0 0.0
        %4447 = vmatpush.msra.mxu0 0.0
        %4448 = vmatpush.msra.mxu0 0.0
        %4449 = vmatpush.msra.mxu0 0.0
        %4450 = vmatpush.msra.mxu0 0.0
        %4451 = vmatpush.msra.mxu0 0.0
        %4452 = vmatpush.msra.mxu0 0.0
        %4453 = vmatpush.msra.mxu0 0.0
        %4454 = vmatpush.msra.mxu0 %v4315
        %4455 = vmatmul.f32.gmra.mxu0 %v4301
        %v4456 = vpop.f32.mrf.mxu0
        %v4457 = vadd.f32 0.0, %v4456
        %4458 = vdwg.mxu0
        %4459 = vmatpush.msra.mxu0 0.0
        %4460 = vmatpush.msra.mxu0 0.0
        %4461 = vmatpush.msra.mxu0 0.0
        %4462 = vmatpush.msra.mxu0 0.0
        %4463 = vmatpush.msra.mxu0 0.0
        %4464 = vmatpush.msra.mxu0 0.0
        %4465 = vmatpush.msra.mxu0 0.0
        %4466 = vmatpush.msra.mxu0 0.0
        %4467 = vmatpush.msra.mxu0 0.0
        %4468 = vmatpush.msra.mxu0 0.0
        %4469 = vmatpush.msra.mxu0 0.0
        %4470 = vmatpush.msra.mxu0 0.0
        %4471 = vmatpush.msra.mxu0 0.0
        %4472 = vmatpush.msra.mxu0 0.0
        %4473 = vmatpush.msra.mxu0 0.0
        %4474 = vmatpush.msra.mxu0 %v4317
        %4475 = vmatmul.f32.gmra.mxu0 %v4301
        %v4476 = vpop.f32.mrf.mxu0
        %v4477 = vadd.f32 0.0, %v4476
        %4478 = vdwg.mxu0
        %v4479 = vadd.f32 %v4236, %v4337
        %v4480 = vadd.f32 %v4237, %v4357
        %v4481 = vadd.f32 %v4238, %v4377
        %v4482 = vadd.f32 %v4239, %v4397
        %v4483 = vadd.f32 %v4240, %v4417
        %v4484 = vadd.f32 %v4241, %v4437
        %v4485 = vadd.f32 %v4242, %v4457
        %v4486 = vadd.f32 %v4243, %v4477
        %v4487 = vld [vmem:[%s222 + $0x4] sm:$0xff]
        %v4488 = vld [vmem:[%s222 + $0xc] sm:$0xff]
        %v4489 = vld [vmem:[%s222 + $0x14] sm:$0xff]
        %v4490 = vld [vmem:[%s222 + $0x1c] sm:$0xff]
        %v4491 = vld [vmem:[%s222 + $0x24] sm:$0xf]
        %s4492 = scalar_lea.vmem %s1, 144
        %v4493 = vld [vmem:[%s4492] sm:$0xff]
        %4499 = vst [vmem:[#allocation1] ss:$2 sm:$0xff] %v4487
        %s4500 = scalar_lea.vmem [#allocation1], 16
        %4501 = vst [vmem:[%s4500] ss:$2 sm:$0xff] %v4488
        %s4502 = scalar_lea.vmem [#allocation1], 32
        %4503 = vst [vmem:[%s4502] ss:$2 sm:$0xff] %v4489
        %s4504 = scalar_lea.vmem [#allocation1], 48
        %4505 = vst [vmem:[%s4504] ss:$2 sm:$0xff] %v4490
        %v4506 = vld.sshfl [vmem:[#allocation1] sm:$0xff pattern:$0x75316420]
        %v4507 = vld.sshfl [vmem:[#allocation1 + $0x8] sm:$0xff pattern:$0x75316420]
        %v4508 = vld.sshfl [vmem:[#allocation1 + $0x10] sm:$0xff pattern:$0x75316420]
        %v4509 = vld.sshfl [vmem:[#allocation1 + $0x18] sm:$0xff pattern:$0x75316420]
        %v4510 = vld.sshfl [vmem:[#allocation1 + $0x20] sm:$0xff pattern:$0x75316420]
        %v4511 = vld.sshfl [vmem:[#allocation1 + $0x28] sm:$0xff pattern:$0x75316420]
        %v4512 = vld.sshfl [vmem:[#allocation1 + $0x30] sm:$0xff pattern:$0x75316420]
        %v4513 = vld.sshfl [vmem:[#allocation1 + $0x38] sm:$0xff pattern:$0x75316420]
        %4514 = vst [vmem:[#allocation1] ss:$2 sm:$0xff] %v4491
        %v4515 = vld.sshfl [vmem:[#allocation1] sm:$0xff pattern:$0x75316420]
        %4516 = vrot.lane.b32.xlu0 %v4506, 56
        %v4517 = vpop.permute.xlu0 %4516
        %4518 = vrot.lane.b32.xlu0 %v4507, 56
        %v4519 = vpop.permute.xlu0 %4518
        %4520 = vrot.lane.b32.xlu0 %v4508, 56
        %v4521 = vpop.permute.xlu0 %4520
        %4522 = vrot.lane.b32.xlu0 %v4509, 56
        %v4523 = vpop.permute.xlu0 %4522
        %4524 = vrot.lane.b32.xlu0 %v4510, 56
        %v4525 = vpop.permute.xlu0 %4524
        %4526 = vrot.lane.b32.xlu0 %v4511, 56
        %v4527 = vpop.permute.xlu0 %4526
        %4528 = vrot.lane.b32.xlu0 %v4512, 56
        %v4529 = vpop.permute.xlu0 %4528
        %4530 = vrot.lane.b32.xlu0 %v4513, 56
        %v4531 = vpop.permute.xlu0 %4530
        %4532 = vrot.lane.b32.xlu0 %v4515, 56
        %v4533 = vpop.permute.xlu0 %4532
        %vm4534 = vcmask 457728
        %v4535 = vsel %vm4534, %v4517, %v4519
        %v4536 = vsel %vm4534, %v4519, %v4521
        %v4537 = vsel %vm4534, %v4521, %v4523
        %v4538 = vsel %vm4534, %v4523, %v4525
        %v4539 = vsel %vm4534, %v4525, %v4527
        %v4540 = vsel %vm4534, %v4527, %v4529
        %v4541 = vsel %vm4534, %v4529, %v4531
        %v4542 = vsel %vm4534, %v4531, %v4533
        %v4544 = vsel %vm273, %v4493, 0
        %v4546 = vsel %vm277, %v4535, 0
        %v4548 = vsel %vm277, %v4536, 0
        %v4550 = vsel %vm277, %v4537, 0
        %v4552 = vsel %vm277, %v4538, 0
        %v4554 = vsel %vm277, %v4539, 0
        %v4556 = vsel %vm277, %v4540, 0
        %v4558 = vsel %vm277, %v4541, 0
        %v4560 = vsel %vm277, %v4542, 0
        %4562 = vmatpush.msra.mxu0 0.0
        %4563 = vmatpush.msra.mxu0 0.0
        %4564 = vmatpush.msra.mxu0 0.0
        %4565 = vmatpush.msra.mxu0 0.0
        %4566 = vmatpush.msra.mxu0 0.0
        %4567 = vmatpush.msra.mxu0 0.0
        %4568 = vmatpush.msra.mxu0 0.0
        %4569 = vmatpush.msra.mxu0 0.0
        %4570 = vmatpush.msra.mxu0 0.0
        %4571 = vmatpush.msra.mxu0 0.0
        %4572 = vmatpush.msra.mxu0 0.0
        %4573 = vmatpush.msra.mxu0 0.0
        %4574 = vmatpush.msra.mxu0 0.0
        %4575 = vmatpush.msra.mxu0 0.0
        %4576 = vmatpush.msra.mxu0 0.0
        %4577 = vmatpush.msra.mxu0 %v4546
        %4578 = vmatmul.f32.gmra.mxu0 %v4544
        %v4579 = vpop.f32.mrf.mxu0
        %v4580 = vadd.f32 0.0, %v4579
        %4581 = vdwg.mxu0
        %4582 = vmatpush.msra.mxu0 0.0
        %4583 = vmatpush.msra.mxu0 0.0
        %4584 = vmatpush.msra.mxu0 0.0
        %4585 = vmatpush.msra.mxu0 0.0
        %4586 = vmatpush.msra.mxu0 0.0
        %4587 = vmatpush.msra.mxu0 0.0
        %4588 = vmatpush.msra.mxu0 0.0
        %4589 = vmatpush.msra.mxu0 0.0
        %4590 = vmatpush.msra.mxu0 0.0
        %4591 = vmatpush.msra.mxu0 0.0
        %4592 = vmatpush.msra.mxu0 0.0
        %4593 = vmatpush.msra.mxu0 0.0
        %4594 = vmatpush.msra.mxu0 0.0
        %4595 = vmatpush.msra.mxu0 0.0
        %4596 = vmatpush.msra.mxu0 0.0
        %4597 = vmatpush.msra.mxu0 %v4548
        %4598 = vmatmul.f32.gmra.mxu0 %v4544
        %v4599 = vpop.f32.mrf.mxu0
        %v4600 = vadd.f32 0.0, %v4599
        %4601 = vdwg.mxu0
        %4602 = vmatpush.msra.mxu0 0.0
        %4603 = vmatpush.msra.mxu0 0.0
        %4604 = vmatpush.msra.mxu0 0.0
        %4605 = vmatpush.msra.mxu0 0.0
        %4606 = vmatpush.msra.mxu0 0.0
        %4607 = vmatpush.msra.mxu0 0.0
        %4608 = vmatpush.msra.mxu0 0.0
        %4609 = vmatpush.msra.mxu0 0.0
        %4610 = vmatpush.msra.mxu0 0.0
        %4611 = vmatpush.msra.mxu0 0.0
        %4612 = vmatpush.msra.mxu0 0.0
        %4613 = vmatpush.msra.mxu0 0.0
        %4614 = vmatpush.msra.mxu0 0.0
        %4615 = vmatpush.msra.mxu0 0.0
        %4616 = vmatpush.msra.mxu0 0.0
        %4617 = vmatpush.msra.mxu0 %v4550
        %4618 = vmatmul.f32.gmra.mxu0 %v4544
        %v4619 = vpop.f32.mrf.mxu0
        %v4620 = vadd.f32 0.0, %v4619
        %4621 = vdwg.mxu0
        %4622 = vmatpush.msra.mxu0 0.0
        %4623 = vmatpush.msra.mxu0 0.0
        %4624 = vmatpush.msra.mxu0 0.0
        %4625 = vmatpush.msra.mxu0 0.0
        %4626 = vmatpush.msra.mxu0 0.0
        %4627 = vmatpush.msra.mxu0 0.0
        %4628 = vmatpush.msra.mxu0 0.0
        %4629 = vmatpush.msra.mxu0 0.0
        %4630 = vmatpush.msra.mxu0 0.0
        %4631 = vmatpush.msra.mxu0 0.0
        %4632 = vmatpush.msra.mxu0 0.0
        %4633 = vmatpush.msra.mxu0 0.0
        %4634 = vmatpush.msra.mxu0 0.0
        %4635 = vmatpush.msra.mxu0 0.0
        %4636 = vmatpush.msra.mxu0 0.0
        %4637 = vmatpush.msra.mxu0 %v4552
        %4638 = vmatmul.f32.gmra.mxu0 %v4544
        %v4639 = vpop.f32.mrf.mxu0
        %v4640 = vadd.f32 0.0, %v4639
        %4641 = vdwg.mxu0
        %4642 = vmatpush.msra.mxu0 0.0
        %4643 = vmatpush.msra.mxu0 0.0
        %4644 = vmatpush.msra.mxu0 0.0
        %4645 = vmatpush.msra.mxu0 0.0
        %4646 = vmatpush.msra.mxu0 0.0
        %4647 = vmatpush.msra.mxu0 0.0
        %4648 = vmatpush.msra.mxu0 0.0
        %4649 = vmatpush.msra.mxu0 0.0
        %4650 = vmatpush.msra.mxu0 0.0
        %4651 = vmatpush.msra.mxu0 0.0
        %4652 = vmatpush.msra.mxu0 0.0
        %4653 = vmatpush.msra.mxu0 0.0
        %4654 = vmatpush.msra.mxu0 0.0
        %4655 = vmatpush.msra.mxu0 0.0
        %4656 = vmatpush.msra.mxu0 0.0
        %4657 = vmatpush.msra.mxu0 %v4554
        %4658 = vmatmul.f32.gmra.mxu0 %v4544
        %v4659 = vpop.f32.mrf.mxu0
        %v4660 = vadd.f32 0.0, %v4659
        %4661 = vdwg.mxu0
        %4662 = vmatpush.msra.mxu0 0.0
        %4663 = vmatpush.msra.mxu0 0.0
        %4664 = vmatpush.msra.mxu0 0.0
        %4665 = vmatpush.msra.mxu0 0.0
        %4666 = vmatpush.msra.mxu0 0.0
        %4667 = vmatpush.msra.mxu0 0.0
        %4668 = vmatpush.msra.mxu0 0.0
        %4669 = vmatpush.msra.mxu0 0.0
        %4670 = vmatpush.msra.mxu0 0.0
        %4671 = vmatpush.msra.mxu0 0.0
        %4672 = vmatpush.msra.mxu0 0.0
        %4673 = vmatpush.msra.mxu0 0.0
        %4674 = vmatpush.msra.mxu0 0.0
        %4675 = vmatpush.msra.mxu0 0.0
        %4676 = vmatpush.msra.mxu0 0.0
        %4677 = vmatpush.msra.mxu0 %v4556
        %4678 = vmatmul.f32.gmra.mxu0 %v4544
        %v4679 = vpop.f32.mrf.mxu0
        %v4680 = vadd.f32 0.0, %v4679
        %4681 = vdwg.mxu0
        %4682 = vmatpush.msra.mxu0 0.0
        %4683 = vmatpush.msra.mxu0 0.0
        %4684 = vmatpush.msra.mxu0 0.0
        %4685 = vmatpush.msra.mxu0 0.0
        %4686 = vmatpush.msra.mxu0 0.0
        %4687 = vmatpush.msra.mxu0 0.0
        %4688 = vmatpush.msra.mxu0 0.0
        %4689 = vmatpush.msra.mxu0 0.0
        %4690 = vmatpush.msra.mxu0 0.0
        %4691 = vmatpush.msra.mxu0 0.0
        %4692 = vmatpush.msra.mxu0 0.0
        %4693 = vmatpush.msra.mxu0 0.0
        %4694 = vmatpush.msra.mxu0 0.0
        %4695 = vmatpush.msra.mxu0 0.0
        %4696 = vmatpush.msra.mxu0 0.0
        %4697 = vmatpush.msra.mxu0 %v4558
        %4698 = vmatmul.f32.gmra.mxu0 %v4544
        %v4699 = vpop.f32.mrf.mxu0
        %v4700 = vadd.f32 0.0, %v4699
        %4701 = vdwg.mxu0
        %4702 = vmatpush.msra.mxu0 0.0
        %4703 = vmatpush.msra.mxu0 0.0
        %4704 = vmatpush.msra.mxu0 0.0
        %4705 = vmatpush.msra.mxu0 0.0
        %4706 = vmatpush.msra.mxu0 0.0
        %4707 = vmatpush.msra.mxu0 0.0
        %4708 = vmatpush.msra.mxu0 0.0
        %4709 = vmatpush.msra.mxu0 0.0
        %4710 = vmatpush.msra.mxu0 0.0
        %4711 = vmatpush.msra.mxu0 0.0
        %4712 = vmatpush.msra.mxu0 0.0
        %4713 = vmatpush.msra.mxu0 0.0
        %4714 = vmatpush.msra.mxu0 0.0
        %4715 = vmatpush.msra.mxu0 0.0
        %4716 = vmatpush.msra.mxu0 0.0
        %4717 = vmatpush.msra.mxu0 %v4560
        %4718 = vmatmul.f32.gmra.mxu0 %v4544
        %v4719 = vpop.f32.mrf.mxu0
        %v4720 = vadd.f32 0.0, %v4719
        %4721 = vdwg.mxu0
        %v4722 = vadd.f32 %v4479, %v4580
        %v4723 = vadd.f32 %v4480, %v4600
        %v4724 = vadd.f32 %v4481, %v4620
        %v4725 = vadd.f32 %v4482, %v4640
        %v4726 = vadd.f32 %v4483, %v4660
        %v4727 = vadd.f32 %v4484, %v4680
        %v4728 = vadd.f32 %v4485, %v4700
        %v4729 = vadd.f32 %v4486, %v4720
        %v4730 = vld [vmem:[%s222 + $0x4] sm:$0xff]
        %v4731 = vld [vmem:[%s222 + $0xc] sm:$0xff]
        %v4732 = vld [vmem:[%s222 + $0x14] sm:$0xff]
        %v4733 = vld [vmem:[%s222 + $0x1c] sm:$0xff]
        %v4734 = vld [vmem:[%s222 + $0x24] sm:$0xf]
        %s4735 = scalar_lea.vmem %s1, 152
        %v4736 = vld [vmem:[%s4735] sm:$0xff]
        %4742 = vst [vmem:[#allocation1] ss:$2 sm:$0xff] %v4730
        %s4743 = scalar_lea.vmem [#allocation1], 16
        %4744 = vst [vmem:[%s4743] ss:$2 sm:$0xff] %v4731
        %s4745 = scalar_lea.vmem [#allocation1], 32
        %4746 = vst [vmem:[%s4745] ss:$2 sm:$0xff] %v4732
        %s4747 = scalar_lea.vmem [#allocation1], 48
        %4748 = vst [vmem:[%s4747] ss:$2 sm:$0xff] %v4733
        %v4749 = vld.sshfl [vmem:[#allocation1] sm:$0xff pattern:$0x75316420]
        %v4750 = vld.sshfl [vmem:[#allocation1 + $0x8] sm:$0xff pattern:$0x75316420]
        %v4751 = vld.sshfl [vmem:[#allocation1 + $0x10] sm:$0xff pattern:$0x75316420]
        %v4752 = vld.sshfl [vmem:[#allocation1 + $0x18] sm:$0xff pattern:$0x75316420]
        %v4753 = vld.sshfl [vmem:[#allocation1 + $0x20] sm:$0xff pattern:$0x75316420]
        %v4754 = vld.sshfl [vmem:[#allocation1 + $0x28] sm:$0xff pattern:$0x75316420]
        %v4755 = vld.sshfl [vmem:[#allocation1 + $0x30] sm:$0xff pattern:$0x75316420]
        %v4756 = vld.sshfl [vmem:[#allocation1 + $0x38] sm:$0xff pattern:$0x75316420]
        %4757 = vst [vmem:[#allocation1] ss:$2 sm:$0xff] %v4734
        %v4758 = vld.sshfl [vmem:[#allocation1] sm:$0xff pattern:$0x75316420]
        %4759 = vrot.lane.b32.xlu0 %v4749, 55
        %v4760 = vpop.permute.xlu0 %4759
        %4761 = vrot.lane.b32.xlu0 %v4750, 55
        %v4762 = vpop.permute.xlu0 %4761
        %4763 = vrot.lane.b32.xlu0 %v4751, 55
        %v4764 = vpop.permute.xlu0 %4763
        %4765 = vrot.lane.b32.xlu0 %v4752, 55
        %v4766 = vpop.permute.xlu0 %4765
        %4767 = vrot.lane.b32.xlu0 %v4753, 55
        %v4768 = vpop.permute.xlu0 %4767
        %4769 = vrot.lane.b32.xlu0 %v4754, 55
        %v4770 = vpop.permute.xlu0 %4769
        %4771 = vrot.lane.b32.xlu0 %v4755, 55
        %v4772 = vpop.permute.xlu0 %4771
        %4773 = vrot.lane.b32.xlu0 %v4756, 55
        %v4774 = vpop.permute.xlu0 %4773
        %4775 = vrot.lane.b32.xlu0 %v4758, 55
        %v4776 = vpop.permute.xlu0 %4775
        %vm4777 = vcmask 449536
        %v4778 = vsel %vm4777, %v4760, %v4762
        %v4779 = vsel %vm4777, %v4762, %v4764
        %v4780 = vsel %vm4777, %v4764, %v4766
        %v4781 = vsel %vm4777, %v4766, %v4768
        %v4782 = vsel %vm4777, %v4768, %v4770
        %v4783 = vsel %vm4777, %v4770, %v4772
        %v4784 = vsel %vm4777, %v4772, %v4774
        %v4785 = vsel %vm4777, %v4774, %v4776
        %v4787 = vsel %vm273, %v4736, 0
        %v4789 = vsel %vm277, %v4778, 0
        %v4791 = vsel %vm277, %v4779, 0
        %v4793 = vsel %vm277, %v4780, 0
        %v4795 = vsel %vm277, %v4781, 0
        %v4797 = vsel %vm277, %v4782, 0
        %v4799 = vsel %vm277, %v4783, 0
        %v4801 = vsel %vm277, %v4784, 0
        %v4803 = vsel %vm277, %v4785, 0
        %4805 = vmatpush.msra.mxu0 0.0
        %4806 = vmatpush.msra.mxu0 0.0
        %4807 = vmatpush.msra.mxu0 0.0
        %4808 = vmatpush.msra.mxu0 0.0
        %4809 = vmatpush.msra.mxu0 0.0
        %4810 = vmatpush.msra.mxu0 0.0
        %4811 = vmatpush.msra.mxu0 0.0
        %4812 = vmatpush.msra.mxu0 0.0
        %4813 = vmatpush.msra.mxu0 0.0
        %4814 = vmatpush.msra.mxu0 0.0
        %4815 = vmatpush.msra.mxu0 0.0
        %4816 = vmatpush.msra.mxu0 0.0
        %4817 = vmatpush.msra.mxu0 0.0
        %4818 = vmatpush.msra.mxu0 0.0
        %4819 = vmatpush.msra.mxu0 0.0
        %4820 = vmatpush.msra.mxu0 %v4789
        %4821 = vmatmul.f32.gmra.mxu0 %v4787
        %v4822 = vpop.f32.mrf.mxu0
        %v4823 = vadd.f32 0.0, %v4822
        %4824 = vdwg.mxu0
        %4825 = vmatpush.msra.mxu0 0.0
        %4826 = vmatpush.msra.mxu0 0.0
        %4827 = vmatpush.msra.mxu0 0.0
        %4828 = vmatpush.msra.mxu0 0.0
        %4829 = vmatpush.msra.mxu0 0.0
        %4830 = vmatpush.msra.mxu0 0.0
        %4831 = vmatpush.msra.mxu0 0.0
        %4832 = vmatpush.msra.mxu0 0.0
        %4833 = vmatpush.msra.mxu0 0.0
        %4834 = vmatpush.msra.mxu0 0.0
        %4835 = vmatpush.msra.mxu0 0.0
        %4836 = vmatpush.msra.mxu0 0.0
        %4837 = vmatpush.msra.mxu0 0.0
        %4838 = vmatpush.msra.mxu0 0.0
        %4839 = vmatpush.msra.mxu0 0.0
        %4840 = vmatpush.msra.mxu0 %v4791
        %4841 = vmatmul.f32.gmra.mxu0 %v4787
        %v4842 = vpop.f32.mrf.mxu0
        %v4843 = vadd.f32 0.0, %v4842
        %4844 = vdwg.mxu0
        %4845 = vmatpush.msra.mxu0 0.0
        %4846 = vmatpush.msra.mxu0 0.0
        %4847 = vmatpush.msra.mxu0 0.0
        %4848 = vmatpush.msra.mxu0 0.0
        %4849 = vmatpush.msra.mxu0 0.0
        %4850 = vmatpush.msra.mxu0 0.0
        %4851 = vmatpush.msra.mxu0 0.0
        %4852 = vmatpush.msra.mxu0 0.0
        %4853 = vmatpush.msra.mxu0 0.0
        %4854 = vmatpush.msra.mxu0 0.0
        %4855 = vmatpush.msra.mxu0 0.0
        %4856 = vmatpush.msra.mxu0 0.0
        %4857 = vmatpush.msra.mxu0 0.0
        %4858 = vmatpush.msra.mxu0 0.0
        %4859 = vmatpush.msra.mxu0 0.0
        %4860 = vmatpush.msra.mxu0 %v4793
        %4861 = vmatmul.f32.gmra.mxu0 %v4787
        %v4862 = vpop.f32.mrf.mxu0
        %v4863 = vadd.f32 0.0, %v4862
        %4864 = vdwg.mxu0
        %4865 = vmatpush.msra.mxu0 0.0
        %4866 = vmatpush.msra.mxu0 0.0
        %4867 = vmatpush.msra.mxu0 0.0
        %4868 = vmatpush.msra.mxu0 0.0
        %4869 = vmatpush.msra.mxu0 0.0
        %4870 = vmatpush.msra.mxu0 0.0
        %4871 = vmatpush.msra.mxu0 0.0
        %4872 = vmatpush.msra.mxu0 0.0
        %4873 = vmatpush.msra.mxu0 0.0
        %4874 = vmatpush.msra.mxu0 0.0
        %4875 = vmatpush.msra.mxu0 0.0
        %4876 = vmatpush.msra.mxu0 0.0
        %4877 = vmatpush.msra.mxu0 0.0
        %4878 = vmatpush.msra.mxu0 0.0
        %4879 = vmatpush.msra.mxu0 0.0
        %4880 = vmatpush.msra.mxu0 %v4795
        %4881 = vmatmul.f32.gmra.mxu0 %v4787
        %v4882 = vpop.f32.mrf.mxu0
        %v4883 = vadd.f32 0.0, %v4882
        %4884 = vdwg.mxu0
        %4885 = vmatpush.msra.mxu0 0.0
        %4886 = vmatpush.msra.mxu0 0.0
        %4887 = vmatpush.msra.mxu0 0.0
        %4888 = vmatpush.msra.mxu0 0.0
        %4889 = vmatpush.msra.mxu0 0.0
        %4890 = vmatpush.msra.mxu0 0.0
        %4891 = vmatpush.msra.mxu0 0.0
        %4892 = vmatpush.msra.mxu0 0.0
        %4893 = vmatpush.msra.mxu0 0.0
        %4894 = vmatpush.msra.mxu0 0.0
        %4895 = vmatpush.msra.mxu0 0.0
        %4896 = vmatpush.msra.mxu0 0.0
        %4897 = vmatpush.msra.mxu0 0.0
        %4898 = vmatpush.msra.mxu0 0.0
        %4899 = vmatpush.msra.mxu0 0.0
        %4900 = vmatpush.msra.mxu0 %v4797
        %4901 = vmatmul.f32.gmra.mxu0 %v4787
        %v4902 = vpop.f32.mrf.mxu0
        %v4903 = vadd.f32 0.0, %v4902
        %4904 = vdwg.mxu0
        %4905 = vmatpush.msra.mxu0 0.0
        %4906 = vmatpush.msra.mxu0 0.0
        %4907 = vmatpush.msra.mxu0 0.0
        %4908 = vmatpush.msra.mxu0 0.0
        %4909 = vmatpush.msra.mxu0 0.0
        %4910 = vmatpush.msra.mxu0 0.0
        %4911 = vmatpush.msra.mxu0 0.0
        %4912 = vmatpush.msra.mxu0 0.0
        %4913 = vmatpush.msra.mxu0 0.0
        %4914 = vmatpush.msra.mxu0 0.0
        %4915 = vmatpush.msra.mxu0 0.0
        %4916 = vmatpush.msra.mxu0 0.0
        %4917 = vmatpush.msra.mxu0 0.0
        %4918 = vmatpush.msra.mxu0 0.0
        %4919 = vmatpush.msra.mxu0 0.0
        %4920 = vmatpush.msra.mxu0 %v4799
        %4921 = vmatmul.f32.gmra.mxu0 %v4787
        %v4922 = vpop.f32.mrf.mxu0
        %v4923 = vadd.f32 0.0, %v4922
        %4924 = vdwg.mxu0
        %4925 = vmatpush.msra.mxu0 0.0
        %4926 = vmatpush.msra.mxu0 0.0
        %4927 = vmatpush.msra.mxu0 0.0
        %4928 = vmatpush.msra.mxu0 0.0
        %4929 = vmatpush.msra.mxu0 0.0
        %4930 = vmatpush.msra.mxu0 0.0
        %4931 = vmatpush.msra.mxu0 0.0
        %4932 = vmatpush.msra.mxu0 0.0
        %4933 = vmatpush.msra.mxu0 0.0
        %4934 = vmatpush.msra.mxu0 0.0
        %4935 = vmatpush.msra.mxu0 0.0
        %4936 = vmatpush.msra.mxu0 0.0
        %4937 = vmatpush.msra.mxu0 0.0
        %4938 = vmatpush.msra.mxu0 0.0
        %4939 = vmatpush.msra.mxu0 0.0
        %4940 = vmatpush.msra.mxu0 %v4801
        %4941 = vmatmul.f32.gmra.mxu0 %v4787
        %v4942 = vpop.f32.mrf.mxu0
        %v4943 = vadd.f32 0.0, %v4942
        %4944 = vdwg.mxu0
        %4945 = vmatpush.msra.mxu0 0.0
        %4946 = vmatpush.msra.mxu0 0.0
        %4947 = vmatpush.msra.mxu0 0.0
        %4948 = vmatpush.msra.mxu0 0.0
        %4949 = vmatpush.msra.mxu0 0.0
        %4950 = vmatpush.msra.mxu0 0.0
        %4951 = vmatpush.msra.mxu0 0.0
        %4952 = vmatpush.msra.mxu0 0.0
        %4953 = vmatpush.msra.mxu0 0.0
        %4954 = vmatpush.msra.mxu0 0.0
        %4955 = vmatpush.msra.mxu0 0.0
        %4956 = vmatpush.msra.mxu0 0.0
        %4957 = vmatpush.msra.mxu0 0.0
        %4958 = vmatpush.msra.mxu0 0.0
        %4959 = vmatpush.msra.mxu0 0.0
        %4960 = vmatpush.msra.mxu0 %v4803
        %4961 = vmatmul.f32.gmra.mxu0 %v4787
        %v4962 = vpop.f32.mrf.mxu0
        %v4963 = vadd.f32 0.0, %v4962
        %4964 = vdwg.mxu0
        %v4965 = vadd.f32 %v4722, %v4823
        %v4966 = vadd.f32 %v4723, %v4843
        %v4967 = vadd.f32 %v4724, %v4863
        %v4968 = vadd.f32 %v4725, %v4883
        %v4969 = vadd.f32 %v4726, %v4903
        %v4970 = vadd.f32 %v4727, %v4923
        %v4971 = vadd.f32 %v4728, %v4943
        %v4972 = vadd.f32 %v4729, %v4963
        %v4973 = vld [vmem:[%s222 + $0x4] sm:$0xff]
        %v4974 = vld [vmem:[%s222 + $0xc] sm:$0xff]
        %v4975 = vld [vmem:[%s222 + $0x14] sm:$0xff]
        %v4976 = vld [vmem:[%s222 + $0x1c] sm:$0xff]
        %v4977 = vld [vmem:[%s222 + $0x24] sm:$0xf]
        %s4978 = scalar_lea.vmem %s1, 160
        %v4979 = vld [vmem:[%s4978] sm:$0xff]
        %4985 = vst [vmem:[#allocation1] ss:$2 sm:$0xff] %v4973
        %s4986 = scalar_lea.vmem [#allocation1], 16
        %4987 = vst [vmem:[%s4986] ss:$2 sm:$0xff] %v4974
        %s4988 = scalar_lea.vmem [#allocation1], 32
        %4989 = vst [vmem:[%s4988] ss:$2 sm:$0xff] %v4975
        %s4990 = scalar_lea.vmem [#allocation1], 48
        %4991 = vst [vmem:[%s4990] ss:$2 sm:$0xff] %v4976
        %v4992 = vld.sshfl [vmem:[#allocation1] sm:$0xff pattern:$0x75316420]
        %v4993 = vld.sshfl [vmem:[#allocation1 + $0x8] sm:$0xff pattern:$0x75316420]
        %v4994 = vld.sshfl [vmem:[#allocation1 + $0x10] sm:$0xff pattern:$0x75316420]
        %v4995 = vld.sshfl [vmem:[#allocation1 + $0x18] sm:$0xff pattern:$0x75316420]
        %v4996 = vld.sshfl [vmem:[#allocation1 + $0x20] sm:$0xff pattern:$0x75316420]
        %v4997 = vld.sshfl [vmem:[#allocation1 + $0x28] sm:$0xff pattern:$0x75316420]
        %v4998 = vld.sshfl [vmem:[#allocation1 + $0x30] sm:$0xff pattern:$0x75316420]
        %v4999 = vld.sshfl [vmem:[#allocation1 + $0x38] sm:$0xff pattern:$0x75316420]
        %5000 = vst [vmem:[#allocation1] ss:$2 sm:$0xff] %v4977
        %v5001 = vld.sshfl [vmem:[#allocation1] sm:$0xff pattern:$0x75316420]
        %5002 = vrot.lane.b32.xlu0 %v4992, 54
        %v5003 = vpop.permute.xlu0 %5002
        %5004 = vrot.lane.b32.xlu0 %v4993, 54
        %v5005 = vpop.permute.xlu0 %5004
        %5006 = vrot.lane.b32.xlu0 %v4994, 54
        %v5007 = vpop.permute.xlu0 %5006
        %5008 = vrot.lane.b32.xlu0 %v4995, 54
        %v5009 = vpop.permute.xlu0 %5008
        %5010 = vrot.lane.b32.xlu0 %v4996, 54
        %v5011 = vpop.permute.xlu0 %5010
        %5012 = vrot.lane.b32.xlu0 %v4997, 54
        %v5013 = vpop.permute.xlu0 %5012
        %5014 = vrot.lane.b32.xlu0 %v4998, 54
        %v5015 = vpop.permute.xlu0 %5014
        %5016 = vrot.lane.b32.xlu0 %v4999, 54
        %v5017 = vpop.permute.xlu0 %5016
        %5018 = vrot.lane.b32.xlu0 %v5001, 54
        %v5019 = vpop.permute.xlu0 %5018
        %vm5020 = vcmask 441344
        %v5021 = vsel %vm5020, %v5003, %v5005
        %v5022 = vsel %vm5020, %v5005, %v5007
        %v5023 = vsel %vm5020, %v5007, %v5009
        %v5024 = vsel %vm5020, %v5009, %v5011
        %v5025 = vsel %vm5020, %v5011, %v5013
        %v5026 = vsel %vm5020, %v5013, %v5015
        %v5027 = vsel %vm5020, %v5015, %v5017
        %v5028 = vsel %vm5020, %v5017, %v5019
        %v5030 = vsel %vm273, %v4979, 0
        %v5032 = vsel %vm277, %v5021, 0
        %v5034 = vsel %vm277, %v5022, 0
        %v5036 = vsel %vm277, %v5023, 0
        %v5038 = vsel %vm277, %v5024, 0
        %v5040 = vsel %vm277, %v5025, 0
        %v5042 = vsel %vm277, %v5026, 0
        %v5044 = vsel %vm277, %v5027, 0
        %v5046 = vsel %vm277, %v5028, 0
        %5048 = vmatpush.msra.mxu0 0.0
        %5049 = vmatpush.msra.mxu0 0.0
        %5050 = vmatpush.msra.mxu0 0.0
        %5051 = vmatpush.msra.mxu0 0.0
        %5052 = vmatpush.msra.mxu0 0.0
        %5053 = vmatpush.msra.mxu0 0.0
        %5054 = vmatpush.msra.mxu0 0.0
        %5055 = vmatpush.msra.mxu0 0.0
        %5056 = vmatpush.msra.mxu0 0.0
        %5057 = vmatpush.msra.mxu0 0.0
        %5058 = vmatpush.msra.mxu0 0.0
        %5059 = vmatpush.msra.mxu0 0.0
        %5060 = vmatpush.msra.mxu0 0.0
        %5061 = vmatpush.msra.mxu0 0.0
        %5062 = vmatpush.msra.mxu0 0.0
        %5063 = vmatpush.msra.mxu0 %v5032
        %5064 = vmatmul.f32.gmra.mxu0 %v5030
        %v5065 = vpop.f32.mrf.mxu0
        %v5066 = vadd.f32 0.0, %v5065
        %5067 = vdwg.mxu0
        %5068 = vmatpush.msra.mxu0 0.0
        %5069 = vmatpush.msra.mxu0 0.0
        %5070 = vmatpush.msra.mxu0 0.0
        %5071 = vmatpush.msra.mxu0 0.0
        %5072 = vmatpush.msra.mxu0 0.0
        %5073 = vmatpush.msra.mxu0 0.0
        %5074 = vmatpush.msra.mxu0 0.0
        %5075 = vmatpush.msra.mxu0 0.0
        %5076 = vmatpush.msra.mxu0 0.0
        %5077 = vmatpush.msra.mxu0 0.0
        %5078 = vmatpush.msra.mxu0 0.0
        %5079 = vmatpush.msra.mxu0 0.0
        %5080 = vmatpush.msra.mxu0 0.0
        %5081 = vmatpush.msra.mxu0 0.0
        %5082 = vmatpush.msra.mxu0 0.0
        %5083 = vmatpush.msra.mxu0 %v5034
        %5084 = vmatmul.f32.gmra.mxu0 %v5030
        %v5085 = vpop.f32.mrf.mxu0
        %v5086 = vadd.f32 0.0, %v5085
        %5087 = vdwg.mxu0
        %5088 = vmatpush.msra.mxu0 0.0
        %5089 = vmatpush.msra.mxu0 0.0
        %5090 = vmatpush.msra.mxu0 0.0
        %5091 = vmatpush.msra.mxu0 0.0
        %5092 = vmatpush.msra.mxu0 0.0
        %5093 = vmatpush.msra.mxu0 0.0
        %5094 = vmatpush.msra.mxu0 0.0
        %5095 = vmatpush.msra.mxu0 0.0
        %5096 = vmatpush.msra.mxu0 0.0
        %5097 = vmatpush.msra.mxu0 0.0
        %5098 = vmatpush.msra.mxu0 0.0
        %5099 = vmatpush.msra.mxu0 0.0
        %5100 = vmatpush.msra.mxu0 0.0
        %5101 = vmatpush.msra.mxu0 0.0
        %5102 = vmatpush.msra.mxu0 0.0
        %5103 = vmatpush.msra.mxu0 %v5036
        %5104 = vmatmul.f32.gmra.mxu0 %v5030
        %v5105 = vpop.f32.mrf.mxu0
        %v5106 = vadd.f32 0.0, %v5105
        %5107 = vdwg.mxu0
        %5108 = vmatpush.msra.mxu0 0.0
        %5109 = vmatpush.msra.mxu0 0.0
        %5110 = vmatpush.msra.mxu0 0.0
        %5111 = vmatpush.msra.mxu0 0.0
        %5112 = vmatpush.msra.mxu0 0.0
        %5113 = vmatpush.msra.mxu0 0.0
        %5114 = vmatpush.msra.mxu0 0.0
        %5115 = vmatpush.msra.mxu0 0.0
        %5116 = vmatpush.msra.mxu0 0.0
        %5117 = vmatpush.msra.mxu0 0.0
        %5118 = vmatpush.msra.mxu0 0.0
        %5119 = vmatpush.msra.mxu0 0.0
        %5120 = vmatpush.msra.mxu0 0.0
        %5121 = vmatpush.msra.mxu0 0.0
        %5122 = vmatpush.msra.mxu0 0.0
        %5123 = vmatpush.msra.mxu0 %v5038
        %5124 = vmatmul.f32.gmra.mxu0 %v5030
        %v5125 = vpop.f32.mrf.mxu0
        %v5126 = vadd.f32 0.0, %v5125
        %5127 = vdwg.mxu0
        %5128 = vmatpush.msra.mxu0 0.0
        %5129 = vmatpush.msra.mxu0 0.0
        %5130 = vmatpush.msra.mxu0 0.0
        %5131 = vmatpush.msra.mxu0 0.0
        %5132 = vmatpush.msra.mxu0 0.0
        %5133 = vmatpush.msra.mxu0 0.0
        %5134 = vmatpush.msra.mxu0 0.0
        %5135 = vmatpush.msra.mxu0 0.0
        %5136 = vmatpush.msra.mxu0 0.0
        %5137 = vmatpush.msra.mxu0 0.0
        %5138 = vmatpush.msra.mxu0 0.0
        %5139 = vmatpush.msra.mxu0 0.0
        %5140 = vmatpush.msra.mxu0 0.0
        %5141 = vmatpush.msra.mxu0 0.0
        %5142 = vmatpush.msra.mxu0 0.0
        %5143 = vmatpush.msra.mxu0 %v5040
        %5144 = vmatmul.f32.gmra.mxu0 %v5030
        %v5145 = vpop.f32.mrf.mxu0
        %v5146 = vadd.f32 0.0, %v5145
        %5147 = vdwg.mxu0
        %5148 = vmatpush.msra.mxu0 0.0
        %5149 = vmatpush.msra.mxu0 0.0
        %5150 = vmatpush.msra.mxu0 0.0
        %5151 = vmatpush.msra.mxu0 0.0
        %5152 = vmatpush.msra.mxu0 0.0
        %5153 = vmatpush.msra.mxu0 0.0
        %5154 = vmatpush.msra.mxu0 0.0
        %5155 = vmatpush.msra.mxu0 0.0
        %5156 = vmatpush.msra.mxu0 0.0
        %5157 = vmatpush.msra.mxu0 0.0
        %5158 = vmatpush.msra.mxu0 0.0
        %5159 = vmatpush.msra.mxu0 0.0
        %5160 = vmatpush.msra.mxu0 0.0
        %5161 = vmatpush.msra.mxu0 0.0
        %5162 = vmatpush.msra.mxu0 0.0
        %5163 = vmatpush.msra.mxu0 %v5042
        %5164 = vmatmul.f32.gmra.mxu0 %v5030
        %v5165 = vpop.f32.mrf.mxu0
        %v5166 = vadd.f32 0.0, %v5165
        %5167 = vdwg.mxu0
        %5168 = vmatpush.msra.mxu0 0.0
        %5169 = vmatpush.msra.mxu0 0.0
        %5170 = vmatpush.msra.mxu0 0.0
        %5171 = vmatpush.msra.mxu0 0.0
        %5172 = vmatpush.msra.mxu0 0.0
        %5173 = vmatpush.msra.mxu0 0.0
        %5174 = vmatpush.msra.mxu0 0.0
        %5175 = vmatpush.msra.mxu0 0.0
        %5176 = vmatpush.msra.mxu0 0.0
        %5177 = vmatpush.msra.mxu0 0.0
        %5178 = vmatpush.msra.mxu0 0.0
        %5179 = vmatpush.msra.mxu0 0.0
        %5180 = vmatpush.msra.mxu0 0.0
        %5181 = vmatpush.msra.mxu0 0.0
        %5182 = vmatpush.msra.mxu0 0.0
        %5183 = vmatpush.msra.mxu0 %v5044
        %5184 = vmatmul.f32.gmra.mxu0 %v5030
        %v5185 = vpop.f32.mrf.mxu0
        %v5186 = vadd.f32 0.0, %v5185
        %5187 = vdwg.mxu0
        %5188 = vmatpush.msra.mxu0 0.0
        %5189 = vmatpush.msra.mxu0 0.0
        %5190 = vmatpush.msra.mxu0 0.0
        %5191 = vmatpush.msra.mxu0 0.0
        %5192 = vmatpush.msra.mxu0 0.0
        %5193 = vmatpush.msra.mxu0 0.0
        %5194 = vmatpush.msra.mxu0 0.0
        %5195 = vmatpush.msra.mxu0 0.0
        %5196 = vmatpush.msra.mxu0 0.0
        %5197 = vmatpush.msra.mxu0 0.0
        %5198 = vmatpush.msra.mxu0 0.0
        %5199 = vmatpush.msra.mxu0 0.0
        %5200 = vmatpush.msra.mxu0 0.0
        %5201 = vmatpush.msra.mxu0 0.0
        %5202 = vmatpush.msra.mxu0 0.0
        %5203 = vmatpush.msra.mxu0 %v5046
        %5204 = vmatmul.f32.gmra.mxu0 %v5030
        %v5205 = vpop.f32.mrf.mxu0
        %v5206 = vadd.f32 0.0, %v5205
        %5207 = vdwg.mxu0
        %v5208 = vadd.f32 %v4965, %v5066
        %v5209 = vadd.f32 %v4966, %v5086
        %v5210 = vadd.f32 %v4967, %v5106
        %v5211 = vadd.f32 %v4968, %v5126
        %v5212 = vadd.f32 %v4969, %v5146
        %v5213 = vadd.f32 %v4970, %v5166
        %v5214 = vadd.f32 %v4971, %v5186
        %v5215 = vadd.f32 %v4972, %v5206
        %v5216 = vld [vmem:[%s222 + $0x4] sm:$0xff]
        %v5217 = vld [vmem:[%s222 + $0xc] sm:$0xff]
        %v5218 = vld [vmem:[%s222 + $0x14] sm:$0xff]
        %v5219 = vld [vmem:[%s222 + $0x1c] sm:$0xff]
        %v5220 = vld [vmem:[%s222 + $0x24] sm:$0xf]
        %s5221 = scalar_lea.vmem %s1, 168
        %v5222 = vld [vmem:[%s5221] sm:$0xff]
        %5228 = vst [vmem:[#allocation1] ss:$2 sm:$0xff] %v5216
        %s5229 = scalar_lea.vmem [#allocation1], 16
        %5230 = vst [vmem:[%s5229] ss:$2 sm:$0xff] %v5217
        %s5231 = scalar_lea.vmem [#allocation1], 32
        %5232 = vst [vmem:[%s5231] ss:$2 sm:$0xff] %v5218
        %s5233 = scalar_lea.vmem [#allocation1], 48
        %5234 = vst [vmem:[%s5233] ss:$2 sm:$0xff] %v5219
        %v5235 = vld.sshfl [vmem:[#allocation1] sm:$0xff pattern:$0x75316420]
        %v5236 = vld.sshfl [vmem:[#allocation1 + $0x8] sm:$0xff pattern:$0x75316420]
        %v5237 = vld.sshfl [vmem:[#allocation1 + $0x10] sm:$0xff pattern:$0x75316420]
        %v5238 = vld.sshfl [vmem:[#allocation1 + $0x18] sm:$0xff pattern:$0x75316420]
        %v5239 = vld.sshfl [vmem:[#allocation1 + $0x20] sm:$0xff pattern:$0x75316420]
        %v5240 = vld.sshfl [vmem:[#allocation1 + $0x28] sm:$0xff pattern:$0x75316420]
        %v5241 = vld.sshfl [vmem:[#allocation1 + $0x30] sm:$0xff pattern:$0x75316420]
        %v5242 = vld.sshfl [vmem:[#allocation1 + $0x38] sm:$0xff pattern:$0x75316420]
        %5243 = vst [vmem:[#allocation1] ss:$2 sm:$0xff] %v5220
        %v5244 = vld.sshfl [vmem:[#allocation1] sm:$0xff pattern:$0x75316420]
        %5245 = vrot.lane.b32.xlu0 %v5235, 46
        %v5246 = vpop.permute.xlu0 %5245
        %5247 = vrot.lane.b32.xlu0 %v5236, 46
        %v5248 = vpop.permute.xlu0 %5247
        %5249 = vrot.lane.b32.xlu0 %v5237, 46
        %v5250 = vpop.permute.xlu0 %5249
        %5251 = vrot.lane.b32.xlu0 %v5238, 46
        %v5252 = vpop.permute.xlu0 %5251
        %5253 = vrot.lane.b32.xlu0 %v5239, 46
        %v5254 = vpop.permute.xlu0 %5253
        %5255 = vrot.lane.b32.xlu0 %v5240, 46
        %v5256 = vpop.permute.xlu0 %5255
        %5257 = vrot.lane.b32.xlu0 %v5241, 46
        %v5258 = vpop.permute.xlu0 %5257
        %5259 = vrot.lane.b32.xlu0 %v5242, 46
        %v5260 = vpop.permute.xlu0 %5259
        %5261 = vrot.lane.b32.xlu0 %v5244, 46
        %v5262 = vpop.permute.xlu0 %5261
        %vm5263 = vcmask 375808
        %v5264 = vsel %vm5263, %v5246, %v5248
        %v5265 = vsel %vm5263, %v5248, %v5250
        %v5266 = vsel %vm5263, %v5250, %v5252
        %v5267 = vsel %vm5263, %v5252, %v5254
        %v5268 = vsel %vm5263, %v5254, %v5256
        %v5269 = vsel %vm5263, %v5256, %v5258
        %v5270 = vsel %vm5263, %v5258, %v5260
        %v5271 = vsel %vm5263, %v5260, %v5262
        %v5273 = vsel %vm273, %v5222, 0
        %v5275 = vsel %vm277, %v5264, 0
        %v5277 = vsel %vm277, %v5265, 0
        %v5279 = vsel %vm277, %v5266, 0
        %v5281 = vsel %vm277, %v5267, 0
        %v5283 = vsel %vm277, %v5268, 0
        %v5285 = vsel %vm277, %v5269, 0
        %v5287 = vsel %vm277, %v5270, 0
        %v5289 = vsel %vm277, %v5271, 0
        %5291 = vmatpush.msra.mxu0 0.0
        %5292 = vmatpush.msra.mxu0 0.0
        %5293 = vmatpush.msra.mxu0 0.0
        %5294 = vmatpush.msra.mxu0 0.0
        %5295 = vmatpush.msra.mxu0 0.0
        %5296 = vmatpush.msra.mxu0 0.0
        %5297 = vmatpush.msra.mxu0 0.0
        %5298 = vmatpush.msra.mxu0 0.0
        %5299 = vmatpush.msra.mxu0 0.0
        %5300 = vmatpush.msra.mxu0 0.0
        %5301 = vmatpush.msra.mxu0 0.0
        %5302 = vmatpush.msra.mxu0 0.0
        %5303 = vmatpush.msra.mxu0 0.0
        %5304 = vmatpush.msra.mxu0 0.0
        %5305 = vmatpush.msra.mxu0 0.0
        %5306 = vmatpush.msra.mxu0 %v5275
        %5307 = vmatmul.f32.gmra.mxu0 %v5273
        %v5308 = vpop.f32.mrf.mxu0
        %v5309 = vadd.f32 0.0, %v5308
        %5310 = vdwg.mxu0
        %5311 = vmatpush.msra.mxu0 0.0
        %5312 = vmatpush.msra.mxu0 0.0
        %5313 = vmatpush.msra.mxu0 0.0
        %5314 = vmatpush.msra.mxu0 0.0
        %5315 = vmatpush.msra.mxu0 0.0
        %5316 = vmatpush.msra.mxu0 0.0
        %5317 = vmatpush.msra.mxu0 0.0
        %5318 = vmatpush.msra.mxu0 0.0
        %5319 = vmatpush.msra.mxu0 0.0
        %5320 = vmatpush.msra.mxu0 0.0
        %5321 = vmatpush.msra.mxu0 0.0
        %5322 = vmatpush.msra.mxu0 0.0
        %5323 = vmatpush.msra.mxu0 0.0
        %5324 = vmatpush.msra.mxu0 0.0
        %5325 = vmatpush.msra.mxu0 0.0
        %5326 = vmatpush.msra.mxu0 %v5277
        %5327 = vmatmul.f32.gmra.mxu0 %v5273
        %v5328 = vpop.f32.mrf.mxu0
        %v5329 = vadd.f32 0.0, %v5328
        %5330 = vdwg.mxu0
        %5331 = vmatpush.msra.mxu0 0.0
        %5332 = vmatpush.msra.mxu0 0.0
        %5333 = vmatpush.msra.mxu0 0.0
        %5334 = vmatpush.msra.mxu0 0.0
        %5335 = vmatpush.msra.mxu0 0.0
        %5336 = vmatpush.msra.mxu0 0.0
        %5337 = vmatpush.msra.mxu0 0.0
        %5338 = vmatpush.msra.mxu0 0.0
        %5339 = vmatpush.msra.mxu0 0.0
        %5340 = vmatpush.msra.mxu0 0.0
        %5341 = vmatpush.msra.mxu0 0.0
        %5342 = vmatpush.msra.mxu0 0.0
        %5343 = vmatpush.msra.mxu0 0.0
        %5344 = vmatpush.msra.mxu0 0.0
        %5345 = vmatpush.msra.mxu0 0.0
        %5346 = vmatpush.msra.mxu0 %v5279
        %5347 = vmatmul.f32.gmra.mxu0 %v5273
        %v5348 = vpop.f32.mrf.mxu0
        %v5349 = vadd.f32 0.0, %v5348
        %5350 = vdwg.mxu0
        %5351 = vmatpush.msra.mxu0 0.0
        %5352 = vmatpush.msra.mxu0 0.0
        %5353 = vmatpush.msra.mxu0 0.0
        %5354 = vmatpush.msra.mxu0 0.0
        %5355 = vmatpush.msra.mxu0 0.0
        %5356 = vmatpush.msra.mxu0 0.0
        %5357 = vmatpush.msra.mxu0 0.0
        %5358 = vmatpush.msra.mxu0 0.0
        %5359 = vmatpush.msra.mxu0 0.0
        %5360 = vmatpush.msra.mxu0 0.0
        %5361 = vmatpush.msra.mxu0 0.0
        %5362 = vmatpush.msra.mxu0 0.0
        %5363 = vmatpush.msra.mxu0 0.0
        %5364 = vmatpush.msra.mxu0 0.0
        %5365 = vmatpush.msra.mxu0 0.0
        %5366 = vmatpush.msra.mxu0 %v5281
        %5367 = vmatmul.f32.gmra.mxu0 %v5273
        %v5368 = vpop.f32.mrf.mxu0
        %v5369 = vadd.f32 0.0, %v5368
        %5370 = vdwg.mxu0
        %5371 = vmatpush.msra.mxu0 0.0
        %5372 = vmatpush.msra.mxu0 0.0
        %5373 = vmatpush.msra.mxu0 0.0
        %5374 = vmatpush.msra.mxu0 0.0
        %5375 = vmatpush.msra.mxu0 0.0
        %5376 = vmatpush.msra.mxu0 0.0
        %5377 = vmatpush.msra.mxu0 0.0
        %5378 = vmatpush.msra.mxu0 0.0
        %5379 = vmatpush.msra.mxu0 0.0
        %5380 = vmatpush.msra.mxu0 0.0
        %5381 = vmatpush.msra.mxu0 0.0
        %5382 = vmatpush.msra.mxu0 0.0
        %5383 = vmatpush.msra.mxu0 0.0
        %5384 = vmatpush.msra.mxu0 0.0
        %5385 = vmatpush.msra.mxu0 0.0
        %5386 = vmatpush.msra.mxu0 %v5283
        %5387 = vmatmul.f32.gmra.mxu0 %v5273
        %v5388 = vpop.f32.mrf.mxu0
        %v5389 = vadd.f32 0.0, %v5388
        %5390 = vdwg.mxu0
        %5391 = vmatpush.msra.mxu0 0.0
        %5392 = vmatpush.msra.mxu0 0.0
        %5393 = vmatpush.msra.mxu0 0.0
        %5394 = vmatpush.msra.mxu0 0.0
        %5395 = vmatpush.msra.mxu0 0.0
        %5396 = vmatpush.msra.mxu0 0.0
        %5397 = vmatpush.msra.mxu0 0.0
        %5398 = vmatpush.msra.mxu0 0.0
        %5399 = vmatpush.msra.mxu0 0.0
        %5400 = vmatpush.msra.mxu0 0.0
        %5401 = vmatpush.msra.mxu0 0.0
        %5402 = vmatpush.msra.mxu0 0.0
        %5403 = vmatpush.msra.mxu0 0.0
        %5404 = vmatpush.msra.mxu0 0.0
        %5405 = vmatpush.msra.mxu0 0.0
        %5406 = vmatpush.msra.mxu0 %v5285
        %5407 = vmatmul.f32.gmra.mxu0 %v5273
        %v5408 = vpop.f32.mrf.mxu0
        %v5409 = vadd.f32 0.0, %v5408
        %5410 = vdwg.mxu0
        %5411 = vmatpush.msra.mxu0 0.0
        %5412 = vmatpush.msra.mxu0 0.0
        %5413 = vmatpush.msra.mxu0 0.0
        %5414 = vmatpush.msra.mxu0 0.0
        %5415 = vmatpush.msra.mxu0 0.0
        %5416 = vmatpush.msra.mxu0 0.0
        %5417 = vmatpush.msra.mxu0 0.0
        %5418 = vmatpush.msra.mxu0 0.0
        %5419 = vmatpush.msra.mxu0 0.0
        %5420 = vmatpush.msra.mxu0 0.0
        %5421 = vmatpush.msra.mxu0 0.0
        %5422 = vmatpush.msra.mxu0 0.0
        %5423 = vmatpush.msra.mxu0 0.0
        %5424 = vmatpush.msra.mxu0 0.0
        %5425 = vmatpush.msra.mxu0 0.0
        %5426 = vmatpush.msra.mxu0 %v5287
        %5427 = vmatmul.f32.gmra.mxu0 %v5273
        %v5428 = vpop.f32.mrf.mxu0
        %v5429 = vadd.f32 0.0, %v5428
        %5430 = vdwg.mxu0
        %5431 = vmatpush.msra.mxu0 0.0
        %5432 = vmatpush.msra.mxu0 0.0
        %5433 = vmatpush.msra.mxu0 0.0
        %5434 = vmatpush.msra.mxu0 0.0
        %5435 = vmatpush.msra.mxu0 0.0
        %5436 = vmatpush.msra.mxu0 0.0
        %5437 = vmatpush.msra.mxu0 0.0
        %5438 = vmatpush.msra.mxu0 0.0
        %5439 = vmatpush.msra.mxu0 0.0
        %5440 = vmatpush.msra.mxu0 0.0
        %5441 = vmatpush.msra.mxu0 0.0
        %5442 = vmatpush.msra.mxu0 0.0
        %5443 = vmatpush.msra.mxu0 0.0
        %5444 = vmatpush.msra.mxu0 0.0
        %5445 = vmatpush.msra.mxu0 0.0
        %5446 = vmatpush.msra.mxu0 %v5289
        %5447 = vmatmul.f32.gmra.mxu0 %v5273
        %v5448 = vpop.f32.mrf.mxu0
        %v5449 = vadd.f32 0.0, %v5448
        %5450 = vdwg.mxu0
        %v5451 = vadd.f32 %v5208, %v5309
        %v5452 = vadd.f32 %v5209, %v5329
        %v5453 = vadd.f32 %v5210, %v5349
        %v5454 = vadd.f32 %v5211, %v5369
        %v5455 = vadd.f32 %v5212, %v5389
        %v5456 = vadd.f32 %v5213, %v5409
        %v5457 = vadd.f32 %v5214, %v5429
        %v5458 = vadd.f32 %v5215, %v5449
        %v5459 = vld [vmem:[%s222 + $0x4] sm:$0xff]
        %v5460 = vld [vmem:[%s222 + $0xc] sm:$0xff]
        %v5461 = vld [vmem:[%s222 + $0x14] sm:$0xff]
        %v5462 = vld [vmem:[%s222 + $0x1c] sm:$0xff]
        %v5463 = vld [vmem:[%s222 + $0x24] sm:$0xf]
        %s5464 = scalar_lea.vmem %s1, 176
        %v5465 = vld [vmem:[%s5464] sm:$0xff]
        %5471 = vst [vmem:[#allocation1] ss:$2 sm:$0xff] %v5459
        %s5472 = scalar_lea.vmem [#allocation1], 16
        %5473 = vst [vmem:[%s5472] ss:$2 sm:$0xff] %v5460
        %s5474 = scalar_lea.vmem [#allocation1], 32
        %5475 = vst [vmem:[%s5474] ss:$2 sm:$0xff] %v5461
        %s5476 = scalar_lea.vmem [#allocation1], 48
        %5477 = vst [vmem:[%s5476] ss:$2 sm:$0xff] %v5462
        %v5478 = vld.sshfl [vmem:[#allocation1] sm:$0xff pattern:$0x75316420]
        %v5479 = vld.sshfl [vmem:[#allocation1 + $0x8] sm:$0xff pattern:$0x75316420]
        %v5480 = vld.sshfl [vmem:[#allocation1 + $0x10] sm:$0xff pattern:$0x75316420]
        %v5481 = vld.sshfl [vmem:[#allocation1 + $0x18] sm:$0xff pattern:$0x75316420]
        %v5482 = vld.sshfl [vmem:[#allocation1 + $0x20] sm:$0xff pattern:$0x75316420]
        %v5483 = vld.sshfl [vmem:[#allocation1 + $0x28] sm:$0xff pattern:$0x75316420]
        %v5484 = vld.sshfl [vmem:[#allocation1 + $0x30] sm:$0xff pattern:$0x75316420]
        %v5485 = vld.sshfl [vmem:[#allocation1 + $0x38] sm:$0xff pattern:$0x75316420]
        %5486 = vst [vmem:[#allocation1] ss:$2 sm:$0xff] %v5463
        %v5487 = vld.sshfl [vmem:[#allocation1] sm:$0xff pattern:$0x75316420]
        %5488 = vrot.lane.b32.xlu0 %v5478, 45
        %v5489 = vpop.permute.xlu0 %5488
        %5490 = vrot.lane.b32.xlu0 %v5479, 45
        %v5491 = vpop.permute.xlu0 %5490
        %5492 = vrot.lane.b32.xlu0 %v5480, 45
        %v5493 = vpop.permute.xlu0 %5492
        %5494 = vrot.lane.b32.xlu0 %v5481, 45
        %v5495 = vpop.permute.xlu0 %5494
        %5496 = vrot.lane.b32.xlu0 %v5482, 45
        %v5497 = vpop.permute.xlu0 %5496
        %5498 = vrot.lane.b32.xlu0 %v5483, 45
        %v5499 = vpop.permute.xlu0 %5498
        %5500 = vrot.lane.b32.xlu0 %v5484, 45
        %v5501 = vpop.permute.xlu0 %5500
        %5502 = vrot.lane.b32.xlu0 %v5485, 45
        %v5503 = vpop.permute.xlu0 %5502
        %5504 = vrot.lane.b32.xlu0 %v5487, 45
        %v5505 = vpop.permute.xlu0 %5504
        %vm5506 = vcmask 367616
        %v5507 = vsel %vm5506, %v5489, %v5491
        %v5508 = vsel %vm5506, %v5491, %v5493
        %v5509 = vsel %vm5506, %v5493, %v5495
        %v5510 = vsel %vm5506, %v5495, %v5497
        %v5511 = vsel %vm5506, %v5497, %v5499
        %v5512 = vsel %vm5506, %v5499, %v5501
        %v5513 = vsel %vm5506, %v5501, %v5503
        %v5514 = vsel %vm5506, %v5503, %v5505
        %v5516 = vsel %vm273, %v5465, 0
        %v5518 = vsel %vm277, %v5507, 0
        %v5520 = vsel %vm277, %v5508, 0
        %v5522 = vsel %vm277, %v5509, 0
        %v5524 = vsel %vm277, %v5510, 0
        %v5526 = vsel %vm277, %v5511, 0
        %v5528 = vsel %vm277, %v5512, 0
        %v5530 = vsel %vm277, %v5513, 0
        %v5532 = vsel %vm277, %v5514, 0
        %5534 = vmatpush.msra.mxu0 0.0
        %5535 = vmatpush.msra.mxu0 0.0
        %5536 = vmatpush.msra.mxu0 0.0
        %5537 = vmatpush.msra.mxu0 0.0
        %5538 = vmatpush.msra.mxu0 0.0
        %5539 = vmatpush.msra.mxu0 0.0
        %5540 = vmatpush.msra.mxu0 0.0
        %5541 = vmatpush.msra.mxu0 0.0
        %5542 = vmatpush.msra.mxu0 0.0
        %5543 = vmatpush.msra.mxu0 0.0
        %5544 = vmatpush.msra.mxu0 0.0
        %5545 = vmatpush.msra.mxu0 0.0
        %5546 = vmatpush.msra.mxu0 0.0
        %5547 = vmatpush.msra.mxu0 0.0
        %5548 = vmatpush.msra.mxu0 0.0
        %5549 = vmatpush.msra.mxu0 %v5518
        %5550 = vmatmul.f32.gmra.mxu0 %v5516
        %v5551 = vpop.f32.mrf.mxu0
        %v5552 = vadd.f32 0.0, %v5551
        %5553 = vdwg.mxu0
        %5554 = vmatpush.msra.mxu0 0.0
        %5555 = vmatpush.msra.mxu0 0.0
        %5556 = vmatpush.msra.mxu0 0.0
        %5557 = vmatpush.msra.mxu0 0.0
        %5558 = vmatpush.msra.mxu0 0.0
        %5559 = vmatpush.msra.mxu0 0.0
        %5560 = vmatpush.msra.mxu0 0.0
        %5561 = vmatpush.msra.mxu0 0.0
        %5562 = vmatpush.msra.mxu0 0.0
        %5563 = vmatpush.msra.mxu0 0.0
        %5564 = vmatpush.msra.mxu0 0.0
        %5565 = vmatpush.msra.mxu0 0.0
        %5566 = vmatpush.msra.mxu0 0.0
        %5567 = vmatpush.msra.mxu0 0.0
        %5568 = vmatpush.msra.mxu0 0.0
        %5569 = vmatpush.msra.mxu0 %v5520
        %5570 = vmatmul.f32.gmra.mxu0 %v5516
        %v5571 = vpop.f32.mrf.mxu0
        %v5572 = vadd.f32 0.0, %v5571
        %5573 = vdwg.mxu0
        %5574 = vmatpush.msra.mxu0 0.0
        %5575 = vmatpush.msra.mxu0 0.0
        %5576 = vmatpush.msra.mxu0 0.0
        %5577 = vmatpush.msra.mxu0 0.0
        %5578 = vmatpush.msra.mxu0 0.0
        %5579 = vmatpush.msra.mxu0 0.0
        %5580 = vmatpush.msra.mxu0 0.0
        %5581 = vmatpush.msra.mxu0 0.0
        %5582 = vmatpush.msra.mxu0 0.0
        %5583 = vmatpush.msra.mxu0 0.0
        %5584 = vmatpush.msra.mxu0 0.0
        %5585 = vmatpush.msra.mxu0 0.0
        %5586 = vmatpush.msra.mxu0 0.0
        %5587 = vmatpush.msra.mxu0 0.0
        %5588 = vmatpush.msra.mxu0 0.0
        %5589 = vmatpush.msra.mxu0 %v5522
        %5590 = vmatmul.f32.gmra.mxu0 %v5516
        %v5591 = vpop.f32.mrf.mxu0
        %v5592 = vadd.f32 0.0, %v5591
        %5593 = vdwg.mxu0
        %5594 = vmatpush.msra.mxu0 0.0
        %5595 = vmatpush.msra.mxu0 0.0
        %5596 = vmatpush.msra.mxu0 0.0
        %5597 = vmatpush.msra.mxu0 0.0
        %5598 = vmatpush.msra.mxu0 0.0
        %5599 = vmatpush.msra.mxu0 0.0
        %5600 = vmatpush.msra.mxu0 0.0
        %5601 = vmatpush.msra.mxu0 0.0
        %5602 = vmatpush.msra.mxu0 0.0
        %5603 = vmatpush.msra.mxu0 0.0
        %5604 = vmatpush.msra.mxu0 0.0
        %5605 = vmatpush.msra.mxu0 0.0
        %5606 = vmatpush.msra.mxu0 0.0
        %5607 = vmatpush.msra.mxu0 0.0
        %5608 = vmatpush.msra.mxu0 0.0
        %5609 = vmatpush.msra.mxu0 %v5524
        %5610 = vmatmul.f32.gmra.mxu0 %v5516
        %v5611 = vpop.f32.mrf.mxu0
        %v5612 = vadd.f32 0.0, %v5611
        %5613 = vdwg.mxu0
        %5614 = vmatpush.msra.mxu0 0.0
        %5615 = vmatpush.msra.mxu0 0.0
        %5616 = vmatpush.msra.mxu0 0.0
        %5617 = vmatpush.msra.mxu0 0.0
        %5618 = vmatpush.msra.mxu0 0.0
        %5619 = vmatpush.msra.mxu0 0.0
        %5620 = vmatpush.msra.mxu0 0.0
        %5621 = vmatpush.msra.mxu0 0.0
        %5622 = vmatpush.msra.mxu0 0.0
        %5623 = vmatpush.msra.mxu0 0.0
        %5624 = vmatpush.msra.mxu0 0.0
        %5625 = vmatpush.msra.mxu0 0.0
        %5626 = vmatpush.msra.mxu0 0.0
        %5627 = vmatpush.msra.mxu0 0.0
        %5628 = vmatpush.msra.mxu0 0.0
        %5629 = vmatpush.msra.mxu0 %v5526
        %5630 = vmatmul.f32.gmra.mxu0 %v5516
        %v5631 = vpop.f32.mrf.mxu0
        %v5632 = vadd.f32 0.0, %v5631
        %5633 = vdwg.mxu0
        %5634 = vmatpush.msra.mxu0 0.0
        %5635 = vmatpush.msra.mxu0 0.0
        %5636 = vmatpush.msra.mxu0 0.0
        %5637 = vmatpush.msra.mxu0 0.0
        %5638 = vmatpush.msra.mxu0 0.0
        %5639 = vmatpush.msra.mxu0 0.0
        %5640 = vmatpush.msra.mxu0 0.0
        %5641 = vmatpush.msra.mxu0 0.0
        %5642 = vmatpush.msra.mxu0 0.0
        %5643 = vmatpush.msra.mxu0 0.0
        %5644 = vmatpush.msra.mxu0 0.0
        %5645 = vmatpush.msra.mxu0 0.0
        %5646 = vmatpush.msra.mxu0 0.0
        %5647 = vmatpush.msra.mxu0 0.0
        %5648 = vmatpush.msra.mxu0 0.0
        %5649 = vmatpush.msra.mxu0 %v5528
        %5650 = vmatmul.f32.gmra.mxu0 %v5516
        %v5651 = vpop.f32.mrf.mxu0
        %v5652 = vadd.f32 0.0, %v5651
        %5653 = vdwg.mxu0
        %5654 = vmatpush.msra.mxu0 0.0
        %5655 = vmatpush.msra.mxu0 0.0
        %5656 = vmatpush.msra.mxu0 0.0
        %5657 = vmatpush.msra.mxu0 0.0
        %5658 = vmatpush.msra.mxu0 0.0
        %5659 = vmatpush.msra.mxu0 0.0
        %5660 = vmatpush.msra.mxu0 0.0
        %5661 = vmatpush.msra.mxu0 0.0
        %5662 = vmatpush.msra.mxu0 0.0
        %5663 = vmatpush.msra.mxu0 0.0
        %5664 = vmatpush.msra.mxu0 0.0
        %5665 = vmatpush.msra.mxu0 0.0
        %5666 = vmatpush.msra.mxu0 0.0
        %5667 = vmatpush.msra.mxu0 0.0
        %5668 = vmatpush.msra.mxu0 0.0
        %5669 = vmatpush.msra.mxu0 %v5530
        %5670 = vmatmul.f32.gmra.mxu0 %v5516
        %v5671 = vpop.f32.mrf.mxu0
        %v5672 = vadd.f32 0.0, %v5671
        %5673 = vdwg.mxu0
        %5674 = vmatpush.msra.mxu0 0.0
        %5675 = vmatpush.msra.mxu0 0.0
        %5676 = vmatpush.msra.mxu0 0.0
        %5677 = vmatpush.msra.mxu0 0.0
        %5678 = vmatpush.msra.mxu0 0.0
        %5679 = vmatpush.msra.mxu0 0.0
        %5680 = vmatpush.msra.mxu0 0.0
        %5681 = vmatpush.msra.mxu0 0.0
        %5682 = vmatpush.msra.mxu0 0.0
        %5683 = vmatpush.msra.mxu0 0.0
        %5684 = vmatpush.msra.mxu0 0.0
        %5685 = vmatpush.msra.mxu0 0.0
        %5686 = vmatpush.msra.mxu0 0.0
        %5687 = vmatpush.msra.mxu0 0.0
        %5688 = vmatpush.msra.mxu0 0.0
        %5689 = vmatpush.msra.mxu0 %v5532
        %5690 = vmatmul.f32.gmra.mxu0 %v5516
        %v5691 = vpop.f32.mrf.mxu0
        %v5692 = vadd.f32 0.0, %v5691
        %5693 = vdwg.mxu0
        %v5694 = vadd.f32 %v5451, %v5552
        %v5695 = vadd.f32 %v5452, %v5572
        %v5696 = vadd.f32 %v5453, %v5592
        %v5697 = vadd.f32 %v5454, %v5612
        %v5698 = vadd.f32 %v5455, %v5632
        %v5699 = vadd.f32 %v5456, %v5652
        %v5700 = vadd.f32 %v5457, %v5672
        %v5701 = vadd.f32 %v5458, %v5692
        %v5702 = vld [vmem:[%s222 + $0x4] sm:$0xff]
        %v5703 = vld [vmem:[%s222 + $0xc] sm:$0xff]
        %v5704 = vld [vmem:[%s222 + $0x14] sm:$0xff]
        %v5705 = vld [vmem:[%s222 + $0x1c] sm:$0xff]
        %v5706 = vld [vmem:[%s222 + $0x24] sm:$0xf]
        %s5707 = scalar_lea.vmem %s1, 184
        %v5708 = vld [vmem:[%s5707] sm:$0xff]
        %5714 = vst [vmem:[#allocation1] ss:$2 sm:$0xff] %v5702
        %s5715 = scalar_lea.vmem [#allocation1], 16
        %5716 = vst [vmem:[%s5715] ss:$2 sm:$0xff] %v5703
        %s5717 = scalar_lea.vmem [#allocation1], 32
        %5718 = vst [vmem:[%s5717] ss:$2 sm:$0xff] %v5704
        %s5719 = scalar_lea.vmem [#allocation1], 48
        %5720 = vst [vmem:[%s5719] ss:$2 sm:$0xff] %v5705
        %v5721 = vld.sshfl [vmem:[#allocation1] sm:$0xff pattern:$0x75316420]
        %v5722 = vld.sshfl [vmem:[#allocation1 + $0x8] sm:$0xff pattern:$0x75316420]
        %v5723 = vld.sshfl [vmem:[#allocation1 + $0x10] sm:$0xff pattern:$0x75316420]
        %v5724 = vld.sshfl [vmem:[#allocation1 + $0x18] sm:$0xff pattern:$0x75316420]
        %v5725 = vld.sshfl [vmem:[#allocation1 + $0x20] sm:$0xff pattern:$0x75316420]
        %v5726 = vld.sshfl [vmem:[#allocation1 + $0x28] sm:$0xff pattern:$0x75316420]
        %v5727 = vld.sshfl [vmem:[#allocation1 + $0x30] sm:$0xff pattern:$0x75316420]
        %v5728 = vld.sshfl [vmem:[#allocation1 + $0x38] sm:$0xff pattern:$0x75316420]
        %5729 = vst [vmem:[#allocation1] ss:$2 sm:$0xff] %v5706
        %v5730 = vld.sshfl [vmem:[#allocation1] sm:$0xff pattern:$0x75316420]
        %5731 = vrot.lane.b32.xlu0 %v5721, 44
        %v5732 = vpop.permute.xlu0 %5731
        %5733 = vrot.lane.b32.xlu0 %v5722, 44
        %v5734 = vpop.permute.xlu0 %5733
        %5735 = vrot.lane.b32.xlu0 %v5723, 44
        %v5736 = vpop.permute.xlu0 %5735
        %5737 = vrot.lane.b32.xlu0 %v5724, 44
        %v5738 = vpop.permute.xlu0 %5737
        %5739 = vrot.lane.b32.xlu0 %v5725, 44
        %v5740 = vpop.permute.xlu0 %5739
        %5741 = vrot.lane.b32.xlu0 %v5726, 44
        %v5742 = vpop.permute.xlu0 %5741
        %5743 = vrot.lane.b32.xlu0 %v5727, 44
        %v5744 = vpop.permute.xlu0 %5743
        %5745 = vrot.lane.b32.xlu0 %v5728, 44
        %v5746 = vpop.permute.xlu0 %5745
        %5747 = vrot.lane.b32.xlu0 %v5730, 44
        %v5748 = vpop.permute.xlu0 %5747
        %vm5749 = vcmask 359424
        %v5750 = vsel %vm5749, %v5732, %v5734
        %v5751 = vsel %vm5749, %v5734, %v5736
        %v5752 = vsel %vm5749, %v5736, %v5738
        %v5753 = vsel %vm5749, %v5738, %v5740
        %v5754 = vsel %vm5749, %v5740, %v5742
        %v5755 = vsel %vm5749, %v5742, %v5744
        %v5756 = vsel %vm5749, %v5744, %v5746
        %v5757 = vsel %vm5749, %v5746, %v5748
        %v5759 = vsel %vm273, %v5708, 0
        %v5761 = vsel %vm277, %v5750, 0
        %v5763 = vsel %vm277, %v5751, 0
        %v5765 = vsel %vm277, %v5752, 0
        %v5767 = vsel %vm277, %v5753, 0
        %v5769 = vsel %vm277, %v5754, 0
        %v5771 = vsel %vm277, %v5755, 0
        %v5773 = vsel %vm277, %v5756, 0
        %v5775 = vsel %vm277, %v5757, 0
        %5777 = vmatpush.msra.mxu0 0.0
        %5778 = vmatpush.msra.mxu0 0.0
        %5779 = vmatpush.msra.mxu0 0.0
        %5780 = vmatpush.msra.mxu0 0.0
        %5781 = vmatpush.msra.mxu0 0.0
        %5782 = vmatpush.msra.mxu0 0.0
        %5783 = vmatpush.msra.mxu0 0.0
        %5784 = vmatpush.msra.mxu0 0.0
        %5785 = vmatpush.msra.mxu0 0.0
        %5786 = vmatpush.msra.mxu0 0.0
        %5787 = vmatpush.msra.mxu0 0.0
        %5788 = vmatpush.msra.mxu0 0.0
        %5789 = vmatpush.msra.mxu0 0.0
        %5790 = vmatpush.msra.mxu0 0.0
        %5791 = vmatpush.msra.mxu0 0.0
        %5792 = vmatpush.msra.mxu0 %v5761
        %5793 = vmatmul.f32.gmra.mxu0 %v5759
        %v5794 = vpop.f32.mrf.mxu0
        %v5795 = vadd.f32 0.0, %v5794
        %5796 = vdwg.mxu0
        %5797 = vmatpush.msra.mxu0 0.0
        %5798 = vmatpush.msra.mxu0 0.0
        %5799 = vmatpush.msra.mxu0 0.0
        %5800 = vmatpush.msra.mxu0 0.0
        %5801 = vmatpush.msra.mxu0 0.0
        %5802 = vmatpush.msra.mxu0 0.0
        %5803 = vmatpush.msra.mxu0 0.0
        %5804 = vmatpush.msra.mxu0 0.0
        %5805 = vmatpush.msra.mxu0 0.0
        %5806 = vmatpush.msra.mxu0 0.0
        %5807 = vmatpush.msra.mxu0 0.0
        %5808 = vmatpush.msra.mxu0 0.0
        %5809 = vmatpush.msra.mxu0 0.0
        %5810 = vmatpush.msra.mxu0 0.0
        %5811 = vmatpush.msra.mxu0 0.0
        %5812 = vmatpush.msra.mxu0 %v5763
        %5813 = vmatmul.f32.gmra.mxu0 %v5759
        %v5814 = vpop.f32.mrf.mxu0
        %v5815 = vadd.f32 0.0, %v5814
        %5816 = vdwg.mxu0
        %5817 = vmatpush.msra.mxu0 0.0
        %5818 = vmatpush.msra.mxu0 0.0
        %5819 = vmatpush.msra.mxu0 0.0
        %5820 = vmatpush.msra.mxu0 0.0
        %5821 = vmatpush.msra.mxu0 0.0
        %5822 = vmatpush.msra.mxu0 0.0
        %5823 = vmatpush.msra.mxu0 0.0
        %5824 = vmatpush.msra.mxu0 0.0
        %5825 = vmatpush.msra.mxu0 0.0
        %5826 = vmatpush.msra.mxu0 0.0
        %5827 = vmatpush.msra.mxu0 0.0
        %5828 = vmatpush.msra.mxu0 0.0
        %5829 = vmatpush.msra.mxu0 0.0
        %5830 = vmatpush.msra.mxu0 0.0
        %5831 = vmatpush.msra.mxu0 0.0
        %5832 = vmatpush.msra.mxu0 %v5765
        %5833 = vmatmul.f32.gmra.mxu0 %v5759
        %v5834 = vpop.f32.mrf.mxu0
        %v5835 = vadd.f32 0.0, %v5834
        %5836 = vdwg.mxu0
        %5837 = vmatpush.msra.mxu0 0.0
        %5838 = vmatpush.msra.mxu0 0.0
        %5839 = vmatpush.msra.mxu0 0.0
        %5840 = vmatpush.msra.mxu0 0.0
        %5841 = vmatpush.msra.mxu0 0.0
        %5842 = vmatpush.msra.mxu0 0.0
        %5843 = vmatpush.msra.mxu0 0.0
        %5844 = vmatpush.msra.mxu0 0.0
        %5845 = vmatpush.msra.mxu0 0.0
        %5846 = vmatpush.msra.mxu0 0.0
        %5847 = vmatpush.msra.mxu0 0.0
        %5848 = vmatpush.msra.mxu0 0.0
        %5849 = vmatpush.msra.mxu0 0.0
        %5850 = vmatpush.msra.mxu0 0.0
        %5851 = vmatpush.msra.mxu0 0.0
        %5852 = vmatpush.msra.mxu0 %v5767
        %5853 = vmatmul.f32.gmra.mxu0 %v5759
        %v5854 = vpop.f32.mrf.mxu0
        %v5855 = vadd.f32 0.0, %v5854
        %5856 = vdwg.mxu0
        %5857 = vmatpush.msra.mxu0 0.0
        %5858 = vmatpush.msra.mxu0 0.0
        %5859 = vmatpush.msra.mxu0 0.0
        %5860 = vmatpush.msra.mxu0 0.0
        %5861 = vmatpush.msra.mxu0 0.0
        %5862 = vmatpush.msra.mxu0 0.0
        %5863 = vmatpush.msra.mxu0 0.0
        %5864 = vmatpush.msra.mxu0 0.0
        %5865 = vmatpush.msra.mxu0 0.0
        %5866 = vmatpush.msra.mxu0 0.0
        %5867 = vmatpush.msra.mxu0 0.0
        %5868 = vmatpush.msra.mxu0 0.0
        %5869 = vmatpush.msra.mxu0 0.0
        %5870 = vmatpush.msra.mxu0 0.0
        %5871 = vmatpush.msra.mxu0 0.0
        %5872 = vmatpush.msra.mxu0 %v5769
        %5873 = vmatmul.f32.gmra.mxu0 %v5759
        %v5874 = vpop.f32.mrf.mxu0
        %v5875 = vadd.f32 0.0, %v5874
        %5876 = vdwg.mxu0
        %5877 = vmatpush.msra.mxu0 0.0
        %5878 = vmatpush.msra.mxu0 0.0
        %5879 = vmatpush.msra.mxu0 0.0
        %5880 = vmatpush.msra.mxu0 0.0
        %5881 = vmatpush.msra.mxu0 0.0
        %5882 = vmatpush.msra.mxu0 0.0
        %5883 = vmatpush.msra.mxu0 0.0
        %5884 = vmatpush.msra.mxu0 0.0
        %5885 = vmatpush.msra.mxu0 0.0
        %5886 = vmatpush.msra.mxu0 0.0
        %5887 = vmatpush.msra.mxu0 0.0
        %5888 = vmatpush.msra.mxu0 0.0
        %5889 = vmatpush.msra.mxu0 0.0
        %5890 = vmatpush.msra.mxu0 0.0
        %5891 = vmatpush.msra.mxu0 0.0
        %5892 = vmatpush.msra.mxu0 %v5771
        %5893 = vmatmul.f32.gmra.mxu0 %v5759
        %v5894 = vpop.f32.mrf.mxu0
        %v5895 = vadd.f32 0.0, %v5894
        %5896 = vdwg.mxu0
        %5897 = vmatpush.msra.mxu0 0.0
        %5898 = vmatpush.msra.mxu0 0.0
        %5899 = vmatpush.msra.mxu0 0.0
        %5900 = vmatpush.msra.mxu0 0.0
        %5901 = vmatpush.msra.mxu0 0.0
        %5902 = vmatpush.msra.mxu0 0.0
        %5903 = vmatpush.msra.mxu0 0.0
        %5904 = vmatpush.msra.mxu0 0.0
        %5905 = vmatpush.msra.mxu0 0.0
        %5906 = vmatpush.msra.mxu0 0.0
        %5907 = vmatpush.msra.mxu0 0.0
        %5908 = vmatpush.msra.mxu0 0.0
        %5909 = vmatpush.msra.mxu0 0.0
        %5910 = vmatpush.msra.mxu0 0.0
        %5911 = vmatpush.msra.mxu0 0.0
        %5912 = vmatpush.msra.mxu0 %v5773
        %5913 = vmatmul.f32.gmra.mxu0 %v5759
        %v5914 = vpop.f32.mrf.mxu0
        %v5915 = vadd.f32 0.0, %v5914
        %5916 = vdwg.mxu0
        %5917 = vmatpush.msra.mxu0 0.0
        %5918 = vmatpush.msra.mxu0 0.0
        %5919 = vmatpush.msra.mxu0 0.0
        %5920 = vmatpush.msra.mxu0 0.0
        %5921 = vmatpush.msra.mxu0 0.0
        %5922 = vmatpush.msra.mxu0 0.0
        %5923 = vmatpush.msra.mxu0 0.0
        %5924 = vmatpush.msra.mxu0 0.0
        %5925 = vmatpush.msra.mxu0 0.0
        %5926 = vmatpush.msra.mxu0 0.0
        %5927 = vmatpush.msra.mxu0 0.0
        %5928 = vmatpush.msra.mxu0 0.0
        %5929 = vmatpush.msra.mxu0 0.0
        %5930 = vmatpush.msra.mxu0 0.0
        %5931 = vmatpush.msra.mxu0 0.0
        %5932 = vmatpush.msra.mxu0 %v5775
        %5933 = vmatmul.f32.gmra.mxu0 %v5759
        %v5934 = vpop.f32.mrf.mxu0
        %v5935 = vadd.f32 0.0, %v5934
        %5936 = vdwg.mxu0
        %v5937 = vadd.f32 %v5694, %v5795
        %v5938 = vadd.f32 %v5695, %v5815
        %v5939 = vadd.f32 %v5696, %v5835
        %v5940 = vadd.f32 %v5697, %v5855
        %v5941 = vadd.f32 %v5698, %v5875
        %v5942 = vadd.f32 %v5699, %v5895
        %v5943 = vadd.f32 %v5700, %v5915
        %v5944 = vadd.f32 %v5701, %v5935
        %v5945 = vld [vmem:[%s222 + $0x4] sm:$0xff]
        %v5946 = vld [vmem:[%s222 + $0xc] sm:$0xff]
        %v5947 = vld [vmem:[%s222 + $0x14] sm:$0xff]
        %v5948 = vld [vmem:[%s222 + $0x1c] sm:$0xff]
        %v5949 = vld [vmem:[%s222 + $0x24] sm:$0xf]
        %s5950 = scalar_lea.vmem %s1, 192
        %v5951 = vld [vmem:[%s5950] sm:$0xff]
        %5957 = vst [vmem:[#allocation1] ss:$2 sm:$0xff] %v5945
        %s5958 = scalar_lea.vmem [#allocation1], 16
        %5959 = vst [vmem:[%s5958] ss:$2 sm:$0xff] %v5946
        %s5960 = scalar_lea.vmem [#allocation1], 32
        %5961 = vst [vmem:[%s5960] ss:$2 sm:$0xff] %v5947
        %s5962 = scalar_lea.vmem [#allocation1], 48
        %5963 = vst [vmem:[%s5962] ss:$2 sm:$0xff] %v5948
        %v5964 = vld.sshfl [vmem:[#allocation1] sm:$0xff pattern:$0x75316420]
        %v5965 = vld.sshfl [vmem:[#allocation1 + $0x8] sm:$0xff pattern:$0x75316420]
        %v5966 = vld.sshfl [vmem:[#allocation1 + $0x10] sm:$0xff pattern:$0x75316420]
        %v5967 = vld.sshfl [vmem:[#allocation1 + $0x18] sm:$0xff pattern:$0x75316420]
        %v5968 = vld.sshfl [vmem:[#allocation1 + $0x20] sm:$0xff pattern:$0x75316420]
        %v5969 = vld.sshfl [vmem:[#allocation1 + $0x28] sm:$0xff pattern:$0x75316420]
        %v5970 = vld.sshfl [vmem:[#allocation1 + $0x30] sm:$0xff pattern:$0x75316420]
        %v5971 = vld.sshfl [vmem:[#allocation1 + $0x38] sm:$0xff pattern:$0x75316420]
        %5972 = vst [vmem:[#allocation1] ss:$2 sm:$0xff] %v5949
        %v5973 = vld.sshfl [vmem:[#allocation1] sm:$0xff pattern:$0x75316420]
        %5974 = vrot.lane.b32.xlu0 %v5964, 36
        %v5975 = vpop.permute.xlu0 %5974
        %5976 = vrot.lane.b32.xlu0 %v5965, 36
        %v5977 = vpop.permute.xlu0 %5976
        %5978 = vrot.lane.b32.xlu0 %v5966, 36
        %v5979 = vpop.permute.xlu0 %5978
        %5980 = vrot.lane.b32.xlu0 %v5967, 36
        %v5981 = vpop.permute.xlu0 %5980
        %5982 = vrot.lane.b32.xlu0 %v5968, 36
        %v5983 = vpop.permute.xlu0 %5982
        %5984 = vrot.lane.b32.xlu0 %v5969, 36
        %v5985 = vpop.permute.xlu0 %5984
        %5986 = vrot.lane.b32.xlu0 %v5970, 36
        %v5987 = vpop.permute.xlu0 %5986
        %5988 = vrot.lane.b32.xlu0 %v5971, 36
        %v5989 = vpop.permute.xlu0 %5988
        %5990 = vrot.lane.b32.xlu0 %v5973, 36
        %v5991 = vpop.permute.xlu0 %5990
        %vm5992 = vcmask 293888
        %v5993 = vsel %vm5992, %v5975, %v5977
        %v5994 = vsel %vm5992, %v5977, %v5979
        %v5995 = vsel %vm5992, %v5979, %v5981
        %v5996 = vsel %vm5992, %v5981, %v5983
        %v5997 = vsel %vm5992, %v5983, %v5985
        %v5998 = vsel %vm5992, %v5985, %v5987
        %v5999 = vsel %vm5992, %v5987, %v5989
        %v6000 = vsel %vm5992, %v5989, %v5991
        %v6002 = vsel %vm273, %v5951, 0
        %v6004 = vsel %vm277, %v5993, 0
        %v6006 = vsel %vm277, %v5994, 0
        %v6008 = vsel %vm277, %v5995, 0
        %v6010 = vsel %vm277, %v5996, 0
        %v6012 = vsel %vm277, %v5997, 0
        %v6014 = vsel %vm277, %v5998, 0
        %v6016 = vsel %vm277, %v5999, 0
        %v6018 = vsel %vm277, %v6000, 0
        %6020 = vmatpush.msra.mxu0 0.0
        %6021 = vmatpush.msra.mxu0 0.0
        %6022 = vmatpush.msra.mxu0 0.0
        %6023 = vmatpush.msra.mxu0 0.0
        %6024 = vmatpush.msra.mxu0 0.0
        %6025 = vmatpush.msra.mxu0 0.0
        %6026 = vmatpush.msra.mxu0 0.0
        %6027 = vmatpush.msra.mxu0 0.0
        %6028 = vmatpush.msra.mxu0 0.0
        %6029 = vmatpush.msra.mxu0 0.0
        %6030 = vmatpush.msra.mxu0 0.0
        %6031 = vmatpush.msra.mxu0 0.0
        %6032 = vmatpush.msra.mxu0 0.0
        %6033 = vmatpush.msra.mxu0 0.0
        %6034 = vmatpush.msra.mxu0 0.0
        %6035 = vmatpush.msra.mxu0 %v6004
        %6036 = vmatmul.f32.gmra.mxu0 %v6002
        %v6037 = vpop.f32.mrf.mxu0
        %v6038 = vadd.f32 0.0, %v6037
        %6039 = vdwg.mxu0
        %6040 = vmatpush.msra.mxu0 0.0
        %6041 = vmatpush.msra.mxu0 0.0
        %6042 = vmatpush.msra.mxu0 0.0
        %6043 = vmatpush.msra.mxu0 0.0
        %6044 = vmatpush.msra.mxu0 0.0
        %6045 = vmatpush.msra.mxu0 0.0
        %6046 = vmatpush.msra.mxu0 0.0
        %6047 = vmatpush.msra.mxu0 0.0
        %6048 = vmatpush.msra.mxu0 0.0
        %6049 = vmatpush.msra.mxu0 0.0
        %6050 = vmatpush.msra.mxu0 0.0
        %6051 = vmatpush.msra.mxu0 0.0
        %6052 = vmatpush.msra.mxu0 0.0
        %6053 = vmatpush.msra.mxu0 0.0
        %6054 = vmatpush.msra.mxu0 0.0
        %6055 = vmatpush.msra.mxu0 %v6006
        %6056 = vmatmul.f32.gmra.mxu0 %v6002
        %v6057 = vpop.f32.mrf.mxu0
        %v6058 = vadd.f32 0.0, %v6057
        %6059 = vdwg.mxu0
        %6060 = vmatpush.msra.mxu0 0.0
        %6061 = vmatpush.msra.mxu0 0.0
        %6062 = vmatpush.msra.mxu0 0.0
        %6063 = vmatpush.msra.mxu0 0.0
        %6064 = vmatpush.msra.mxu0 0.0
        %6065 = vmatpush.msra.mxu0 0.0
        %6066 = vmatpush.msra.mxu0 0.0
        %6067 = vmatpush.msra.mxu0 0.0
        %6068 = vmatpush.msra.mxu0 0.0
        %6069 = vmatpush.msra.mxu0 0.0
        %6070 = vmatpush.msra.mxu0 0.0
        %6071 = vmatpush.msra.mxu0 0.0
        %6072 = vmatpush.msra.mxu0 0.0
        %6073 = vmatpush.msra.mxu0 0.0
        %6074 = vmatpush.msra.mxu0 0.0
        %6075 = vmatpush.msra.mxu0 %v6008
        %6076 = vmatmul.f32.gmra.mxu0 %v6002
        %v6077 = vpop.f32.mrf.mxu0
        %v6078 = vadd.f32 0.0, %v6077
        %6079 = vdwg.mxu0
        %6080 = vmatpush.msra.mxu0 0.0
        %6081 = vmatpush.msra.mxu0 0.0
        %6082 = vmatpush.msra.mxu0 0.0
        %6083 = vmatpush.msra.mxu0 0.0
        %6084 = vmatpush.msra.mxu0 0.0
        %6085 = vmatpush.msra.mxu0 0.0
        %6086 = vmatpush.msra.mxu0 0.0
        %6087 = vmatpush.msra.mxu0 0.0
        %6088 = vmatpush.msra.mxu0 0.0
        %6089 = vmatpush.msra.mxu0 0.0
        %6090 = vmatpush.msra.mxu0 0.0
        %6091 = vmatpush.msra.mxu0 0.0
        %6092 = vmatpush.msra.mxu0 0.0
        %6093 = vmatpush.msra.mxu0 0.0
        %6094 = vmatpush.msra.mxu0 0.0
        %6095 = vmatpush.msra.mxu0 %v6010
        %6096 = vmatmul.f32.gmra.mxu0 %v6002
        %v6097 = vpop.f32.mrf.mxu0
        %v6098 = vadd.f32 0.0, %v6097
        %6099 = vdwg.mxu0
        %6100 = vmatpush.msra.mxu0 0.0
        %6101 = vmatpush.msra.mxu0 0.0
        %6102 = vmatpush.msra.mxu0 0.0
        %6103 = vmatpush.msra.mxu0 0.0
        %6104 = vmatpush.msra.mxu0 0.0
        %6105 = vmatpush.msra.mxu0 0.0
        %6106 = vmatpush.msra.mxu0 0.0
        %6107 = vmatpush.msra.mxu0 0.0
        %6108 = vmatpush.msra.mxu0 0.0
        %6109 = vmatpush.msra.mxu0 0.0
        %6110 = vmatpush.msra.mxu0 0.0
        %6111 = vmatpush.msra.mxu0 0.0
        %6112 = vmatpush.msra.mxu0 0.0
        %6113 = vmatpush.msra.mxu0 0.0
        %6114 = vmatpush.msra.mxu0 0.0
        %6115 = vmatpush.msra.mxu0 %v6012
        %6116 = vmatmul.f32.gmra.mxu0 %v6002
        %v6117 = vpop.f32.mrf.mxu0
        %v6118 = vadd.f32 0.0, %v6117
        %6119 = vdwg.mxu0
        %6120 = vmatpush.msra.mxu0 0.0
        %6121 = vmatpush.msra.mxu0 0.0
        %6122 = vmatpush.msra.mxu0 0.0
        %6123 = vmatpush.msra.mxu0 0.0
        %6124 = vmatpush.msra.mxu0 0.0
        %6125 = vmatpush.msra.mxu0 0.0
        %6126 = vmatpush.msra.mxu0 0.0
        %6127 = vmatpush.msra.mxu0 0.0
        %6128 = vmatpush.msra.mxu0 0.0
        %6129 = vmatpush.msra.mxu0 0.0
        %6130 = vmatpush.msra.mxu0 0.0
        %6131 = vmatpush.msra.mxu0 0.0
        %6132 = vmatpush.msra.mxu0 0.0
        %6133 = vmatpush.msra.mxu0 0.0
        %6134 = vmatpush.msra.mxu0 0.0
        %6135 = vmatpush.msra.mxu0 %v6014
        %6136 = vmatmul.f32.gmra.mxu0 %v6002
        %v6137 = vpop.f32.mrf.mxu0
        %v6138 = vadd.f32 0.0, %v6137
        %6139 = vdwg.mxu0
        %6140 = vmatpush.msra.mxu0 0.0
        %6141 = vmatpush.msra.mxu0 0.0
        %6142 = vmatpush.msra.mxu0 0.0
        %6143 = vmatpush.msra.mxu0 0.0
        %6144 = vmatpush.msra.mxu0 0.0
        %6145 = vmatpush.msra.mxu0 0.0
        %6146 = vmatpush.msra.mxu0 0.0
        %6147 = vmatpush.msra.mxu0 0.0
        %6148 = vmatpush.msra.mxu0 0.0
        %6149 = vmatpush.msra.mxu0 0.0
        %6150 = vmatpush.msra.mxu0 0.0
        %6151 = vmatpush.msra.mxu0 0.0
        %6152 = vmatpush.msra.mxu0 0.0
        %6153 = vmatpush.msra.mxu0 0.0
        %6154 = vmatpush.msra.mxu0 0.0
        %6155 = vmatpush.msra.mxu0 %v6016
        %6156 = vmatmul.f32.gmra.mxu0 %v6002
        %v6157 = vpop.f32.mrf.mxu0
        %v6158 = vadd.f32 0.0, %v6157
        %6159 = vdwg.mxu0
        %6160 = vmatpush.msra.mxu0 0.0
        %6161 = vmatpush.msra.mxu0 0.0
        %6162 = vmatpush.msra.mxu0 0.0
        %6163 = vmatpush.msra.mxu0 0.0
        %6164 = vmatpush.msra.mxu0 0.0
        %6165 = vmatpush.msra.mxu0 0.0
        %6166 = vmatpush.msra.mxu0 0.0
        %6167 = vmatpush.msra.mxu0 0.0
        %6168 = vmatpush.msra.mxu0 0.0
        %6169 = vmatpush.msra.mxu0 0.0
        %6170 = vmatpush.msra.mxu0 0.0
        %6171 = vmatpush.msra.mxu0 0.0
        %6172 = vmatpush.msra.mxu0 0.0
        %6173 = vmatpush.msra.mxu0 0.0
        %6174 = vmatpush.msra.mxu0 0.0
        %6175 = vmatpush.msra.mxu0 %v6018
        %6176 = vmatmul.f32.gmra.mxu0 %v6002
        %v6177 = vpop.f32.mrf.mxu0
        %v6178 = vadd.f32 0.0, %v6177
        %6179 = vdwg.mxu0
        %v6180 = vadd.f32 %v5937, %v6038
        %v6181 = vadd.f32 %v5938, %v6058
        %v6182 = vadd.f32 %v5939, %v6078
        %v6183 = vadd.f32 %v5940, %v6098
        %v6184 = vadd.f32 %v5941, %v6118
        %v6185 = vadd.f32 %v5942, %v6138
        %v6186 = vadd.f32 %v5943, %v6158
        %v6187 = vadd.f32 %v5944, %v6178
        %v6188 = vld [vmem:[%s222 + $0x4] sm:$0xff]
        %v6189 = vld [vmem:[%s222 + $0xc] sm:$0xff]
        %v6190 = vld [vmem:[%s222 + $0x14] sm:$0xff]
        %v6191 = vld [vmem:[%s222 + $0x1c] sm:$0xff]
        %v6192 = vld [vmem:[%s222 + $0x24] sm:$0xf]
        %s6193 = scalar_lea.vmem %s1, 200
        %v6194 = vld [vmem:[%s6193] sm:$0xff]
        %6200 = vst [vmem:[#allocation1] ss:$2 sm:$0xff] %v6188
        %s6201 = scalar_lea.vmem [#allocation1], 16
        %6202 = vst [vmem:[%s6201] ss:$2 sm:$0xff] %v6189
        %s6203 = scalar_lea.vmem [#allocation1], 32
        %6204 = vst [vmem:[%s6203] ss:$2 sm:$0xff] %v6190
        %s6205 = scalar_lea.vmem [#allocation1], 48
        %6206 = vst [vmem:[%s6205] ss:$2 sm:$0xff] %v6191
        %v6207 = vld.sshfl [vmem:[#allocation1] sm:$0xff pattern:$0x75316420]
        %v6208 = vld.sshfl [vmem:[#allocation1 + $0x8] sm:$0xff pattern:$0x75316420]
        %v6209 = vld.sshfl [vmem:[#allocation1 + $0x10] sm:$0xff pattern:$0x75316420]
        %v6210 = vld.sshfl [vmem:[#allocation1 + $0x18] sm:$0xff pattern:$0x75316420]
        %v6211 = vld.sshfl [vmem:[#allocation1 + $0x20] sm:$0xff pattern:$0x75316420]
        %v6212 = vld.sshfl [vmem:[#allocation1 + $0x28] sm:$0xff pattern:$0x75316420]
        %v6213 = vld.sshfl [vmem:[#allocation1 + $0x30] sm:$0xff pattern:$0x75316420]
        %v6214 = vld.sshfl [vmem:[#allocation1 + $0x38] sm:$0xff pattern:$0x75316420]
        %6215 = vst [vmem:[#allocation1] ss:$2 sm:$0xff] %v6192
        %v6216 = vld.sshfl [vmem:[#allocation1] sm:$0xff pattern:$0x75316420]
        %6217 = vrot.lane.b32.xlu0 %v6207, 35
        %v6218 = vpop.permute.xlu0 %6217
        %6219 = vrot.lane.b32.xlu0 %v6208, 35
        %v6220 = vpop.permute.xlu0 %6219
        %6221 = vrot.lane.b32.xlu0 %v6209, 35
        %v6222 = vpop.permute.xlu0 %6221
        %6223 = vrot.lane.b32.xlu0 %v6210, 35
        %v6224 = vpop.permute.xlu0 %6223
        %6225 = vrot.lane.b32.xlu0 %v6211, 35
        %v6226 = vpop.permute.xlu0 %6225
        %6227 = vrot.lane.b32.xlu0 %v6212, 35
        %v6228 = vpop.permute.xlu0 %6227
        %6229 = vrot.lane.b32.xlu0 %v6213, 35
        %v6230 = vpop.permute.xlu0 %6229
        %6231 = vrot.lane.b32.xlu0 %v6214, 35
        %v6232 = vpop.permute.xlu0 %6231
        %6233 = vrot.lane.b32.xlu0 %v6216, 35
        %v6234 = vpop.permute.xlu0 %6233
        %vm6235 = vcmask 285696
        %v6236 = vsel %vm6235, %v6218, %v6220
        %v6237 = vsel %vm6235, %v6220, %v6222
        %v6238 = vsel %vm6235, %v6222, %v6224
        %v6239 = vsel %vm6235, %v6224, %v6226
        %v6240 = vsel %vm6235, %v6226, %v6228
        %v6241 = vsel %vm6235, %v6228, %v6230
        %v6242 = vsel %vm6235, %v6230, %v6232
        %v6243 = vsel %vm6235, %v6232, %v6234
        %v6245 = vsel %vm273, %v6194, 0
        %v6247 = vsel %vm277, %v6236, 0
        %v6249 = vsel %vm277, %v6237, 0
        %v6251 = vsel %vm277, %v6238, 0
        %v6253 = vsel %vm277, %v6239, 0
        %v6255 = vsel %vm277, %v6240, 0
        %v6257 = vsel %vm277, %v6241, 0
        %v6259 = vsel %vm277, %v6242, 0
        %v6261 = vsel %vm277, %v6243, 0
        %6263 = vmatpush.msra.mxu0 0.0
        %6264 = vmatpush.msra.mxu0 0.0
        %6265 = vmatpush.msra.mxu0 0.0
        %6266 = vmatpush.msra.mxu0 0.0
        %6267 = vmatpush.msra.mxu0 0.0
        %6268 = vmatpush.msra.mxu0 0.0
        %6269 = vmatpush.msra.mxu0 0.0
        %6270 = vmatpush.msra.mxu0 0.0
        %6271 = vmatpush.msra.mxu0 0.0
        %6272 = vmatpush.msra.mxu0 0.0
        %6273 = vmatpush.msra.mxu0 0.0
        %6274 = vmatpush.msra.mxu0 0.0
        %6275 = vmatpush.msra.mxu0 0.0
        %6276 = vmatpush.msra.mxu0 0.0
        %6277 = vmatpush.msra.mxu0 0.0
        %6278 = vmatpush.msra.mxu0 %v6247
        %6279 = vmatmul.f32.gmra.mxu0 %v6245
        %v6280 = vpop.f32.mrf.mxu0
        %v6281 = vadd.f32 0.0, %v6280
        %6282 = vdwg.mxu0
        %6283 = vmatpush.msra.mxu0 0.0
        %6284 = vmatpush.msra.mxu0 0.0
        %6285 = vmatpush.msra.mxu0 0.0
        %6286 = vmatpush.msra.mxu0 0.0
        %6287 = vmatpush.msra.mxu0 0.0
        %6288 = vmatpush.msra.mxu0 0.0
        %6289 = vmatpush.msra.mxu0 0.0
        %6290 = vmatpush.msra.mxu0 0.0
        %6291 = vmatpush.msra.mxu0 0.0
        %6292 = vmatpush.msra.mxu0 0.0
        %6293 = vmatpush.msra.mxu0 0.0
        %6294 = vmatpush.msra.mxu0 0.0
        %6295 = vmatpush.msra.mxu0 0.0
        %6296 = vmatpush.msra.mxu0 0.0
        %6297 = vmatpush.msra.mxu0 0.0
        %6298 = vmatpush.msra.mxu0 %v6249
        %6299 = vmatmul.f32.gmra.mxu0 %v6245
        %v6300 = vpop.f32.mrf.mxu0
        %v6301 = vadd.f32 0.0, %v6300
        %6302 = vdwg.mxu0
        %6303 = vmatpush.msra.mxu0 0.0
        %6304 = vmatpush.msra.mxu0 0.0
        %6305 = vmatpush.msra.mxu0 0.0
        %6306 = vmatpush.msra.mxu0 0.0
        %6307 = vmatpush.msra.mxu0 0.0
        %6308 = vmatpush.msra.mxu0 0.0
        %6309 = vmatpush.msra.mxu0 0.0
        %6310 = vmatpush.msra.mxu0 0.0
        %6311 = vmatpush.msra.mxu0 0.0
        %6312 = vmatpush.msra.mxu0 0.0
        %6313 = vmatpush.msra.mxu0 0.0
        %6314 = vmatpush.msra.mxu0 0.0
        %6315 = vmatpush.msra.mxu0 0.0
        %6316 = vmatpush.msra.mxu0 0.0
        %6317 = vmatpush.msra.mxu0 0.0
        %6318 = vmatpush.msra.mxu0 %v6251
        %6319 = vmatmul.f32.gmra.mxu0 %v6245
        %v6320 = vpop.f32.mrf.mxu0
        %v6321 = vadd.f32 0.0, %v6320
        %6322 = vdwg.mxu0
        %6323 = vmatpush.msra.mxu0 0.0
        %6324 = vmatpush.msra.mxu0 0.0
        %6325 = vmatpush.msra.mxu0 0.0
        %6326 = vmatpush.msra.mxu0 0.0
        %6327 = vmatpush.msra.mxu0 0.0
        %6328 = vmatpush.msra.mxu0 0.0
        %6329 = vmatpush.msra.mxu0 0.0
        %6330 = vmatpush.msra.mxu0 0.0
        %6331 = vmatpush.msra.mxu0 0.0
        %6332 = vmatpush.msra.mxu0 0.0
        %6333 = vmatpush.msra.mxu0 0.0
        %6334 = vmatpush.msra.mxu0 0.0
        %6335 = vmatpush.msra.mxu0 0.0
        %6336 = vmatpush.msra.mxu0 0.0
        %6337 = vmatpush.msra.mxu0 0.0
        %6338 = vmatpush.msra.mxu0 %v6253
        %6339 = vmatmul.f32.gmra.mxu0 %v6245
        %v6340 = vpop.f32.mrf.mxu0
        %v6341 = vadd.f32 0.0, %v6340
        %6342 = vdwg.mxu0
        %6343 = vmatpush.msra.mxu0 0.0
        %6344 = vmatpush.msra.mxu0 0.0
        %6345 = vmatpush.msra.mxu0 0.0
        %6346 = vmatpush.msra.mxu0 0.0
        %6347 = vmatpush.msra.mxu0 0.0
        %6348 = vmatpush.msra.mxu0 0.0
        %6349 = vmatpush.msra.mxu0 0.0
        %6350 = vmatpush.msra.mxu0 0.0
        %6351 = vmatpush.msra.mxu0 0.0
        %6352 = vmatpush.msra.mxu0 0.0
        %6353 = vmatpush.msra.mxu0 0.0
        %6354 = vmatpush.msra.mxu0 0.0
        %6355 = vmatpush.msra.mxu0 0.0
        %6356 = vmatpush.msra.mxu0 0.0
        %6357 = vmatpush.msra.mxu0 0.0
        %6358 = vmatpush.msra.mxu0 %v6255
        %6359 = vmatmul.f32.gmra.mxu0 %v6245
        %v6360 = vpop.f32.mrf.mxu0
        %v6361 = vadd.f32 0.0, %v6360
        %6362 = vdwg.mxu0
        %6363 = vmatpush.msra.mxu0 0.0
        %6364 = vmatpush.msra.mxu0 0.0
        %6365 = vmatpush.msra.mxu0 0.0
        %6366 = vmatpush.msra.mxu0 0.0
        %6367 = vmatpush.msra.mxu0 0.0
        %6368 = vmatpush.msra.mxu0 0.0
        %6369 = vmatpush.msra.mxu0 0.0
        %6370 = vmatpush.msra.mxu0 0.0
        %6371 = vmatpush.msra.mxu0 0.0
        %6372 = vmatpush.msra.mxu0 0.0
        %6373 = vmatpush.msra.mxu0 0.0
        %6374 = vmatpush.msra.mxu0 0.0
        %6375 = vmatpush.msra.mxu0 0.0
        %6376 = vmatpush.msra.mxu0 0.0
        %6377 = vmatpush.msra.mxu0 0.0
        %6378 = vmatpush.msra.mxu0 %v6257
        %6379 = vmatmul.f32.gmra.mxu0 %v6245
        %v6380 = vpop.f32.mrf.mxu0
        %v6381 = vadd.f32 0.0, %v6380
        %6382 = vdwg.mxu0
        %6383 = vmatpush.msra.mxu0 0.0
        %6384 = vmatpush.msra.mxu0 0.0
        %6385 = vmatpush.msra.mxu0 0.0
        %6386 = vmatpush.msra.mxu0 0.0
        %6387 = vmatpush.msra.mxu0 0.0
        %6388 = vmatpush.msra.mxu0 0.0
        %6389 = vmatpush.msra.mxu0 0.0
        %6390 = vmatpush.msra.mxu0 0.0
        %6391 = vmatpush.msra.mxu0 0.0
        %6392 = vmatpush.msra.mxu0 0.0
        %6393 = vmatpush.msra.mxu0 0.0
        %6394 = vmatpush.msra.mxu0 0.0
        %6395 = vmatpush.msra.mxu0 0.0
        %6396 = vmatpush.msra.mxu0 0.0
        %6397 = vmatpush.msra.mxu0 0.0
        %6398 = vmatpush.msra.mxu0 %v6259
        %6399 = vmatmul.f32.gmra.mxu0 %v6245
        %v6400 = vpop.f32.mrf.mxu0
        %v6401 = vadd.f32 0.0, %v6400
        %6402 = vdwg.mxu0
        %6403 = vmatpush.msra.mxu0 0.0
        %6404 = vmatpush.msra.mxu0 0.0
        %6405 = vmatpush.msra.mxu0 0.0
        %6406 = vmatpush.msra.mxu0 0.0
        %6407 = vmatpush.msra.mxu0 0.0
        %6408 = vmatpush.msra.mxu0 0.0
        %6409 = vmatpush.msra.mxu0 0.0
        %6410 = vmatpush.msra.mxu0 0.0
        %6411 = vmatpush.msra.mxu0 0.0
        %6412 = vmatpush.msra.mxu0 0.0
        %6413 = vmatpush.msra.mxu0 0.0
        %6414 = vmatpush.msra.mxu0 0.0
        %6415 = vmatpush.msra.mxu0 0.0
        %6416 = vmatpush.msra.mxu0 0.0
        %6417 = vmatpush.msra.mxu0 0.0
        %6418 = vmatpush.msra.mxu0 %v6261
        %6419 = vmatmul.f32.gmra.mxu0 %v6245
        %v6420 = vpop.f32.mrf.mxu0
        %v6421 = vadd.f32 0.0, %v6420
        %6422 = vdwg.mxu0
        %v6423 = vadd.f32 %v6180, %v6281
        %v6424 = vadd.f32 %v6181, %v6301
        %v6425 = vadd.f32 %v6182, %v6321
        %v6426 = vadd.f32 %v6183, %v6341
        %v6427 = vadd.f32 %v6184, %v6361
        %v6428 = vadd.f32 %v6185, %v6381
        %v6429 = vadd.f32 %v6186, %v6401
        %v6430 = vadd.f32 %v6187, %v6421
        %v6431 = vld [vmem:[%s222 + $0x4] sm:$0xff]
        %v6432 = vld [vmem:[%s222 + $0xc] sm:$0xff]
        %v6433 = vld [vmem:[%s222 + $0x14] sm:$0xff]
        %v6434 = vld [vmem:[%s222 + $0x1c] sm:$0xff]
        %v6435 = vld [vmem:[%s222 + $0x24] sm:$0xf]
        %s6436 = scalar_lea.vmem %s1, 208
        %v6437 = vld [vmem:[%s6436] sm:$0xff]
        %6443 = vst [vmem:[#allocation1] ss:$2 sm:$0xff] %v6431
        %s6444 = scalar_lea.vmem [#allocation1], 16
        %6445 = vst [vmem:[%s6444] ss:$2 sm:$0xff] %v6432
        %s6446 = scalar_lea.vmem [#allocation1], 32
        %6447 = vst [vmem:[%s6446] ss:$2 sm:$0xff] %v6433
        %s6448 = scalar_lea.vmem [#allocation1], 48
        %6449 = vst [vmem:[%s6448] ss:$2 sm:$0xff] %v6434
        %v6450 = vld.sshfl [vmem:[#allocation1] sm:$0xff pattern:$0x75316420]
        %v6451 = vld.sshfl [vmem:[#allocation1 + $0x8] sm:$0xff pattern:$0x75316420]
        %v6452 = vld.sshfl [vmem:[#allocation1 + $0x10] sm:$0xff pattern:$0x75316420]
        %v6453 = vld.sshfl [vmem:[#allocation1 + $0x18] sm:$0xff pattern:$0x75316420]
        %v6454 = vld.sshfl [vmem:[#allocation1 + $0x20] sm:$0xff pattern:$0x75316420]
        %v6455 = vld.sshfl [vmem:[#allocation1 + $0x28] sm:$0xff pattern:$0x75316420]
        %v6456 = vld.sshfl [vmem:[#allocation1 + $0x30] sm:$0xff pattern:$0x75316420]
        %v6457 = vld.sshfl [vmem:[#allocation1 + $0x38] sm:$0xff pattern:$0x75316420]
        %6458 = vst [vmem:[#allocation1] ss:$2 sm:$0xff] %v6435
        %v6459 = vld.sshfl [vmem:[#allocation1] sm:$0xff pattern:$0x75316420]
        %6460 = vrot.lane.b32.xlu0 %v6450, 34
        %v6461 = vpop.permute.xlu0 %6460
        %6462 = vrot.lane.b32.xlu0 %v6451, 34
        %v6463 = vpop.permute.xlu0 %6462
        %6464 = vrot.lane.b32.xlu0 %v6452, 34
        %v6465 = vpop.permute.xlu0 %6464
        %6466 = vrot.lane.b32.xlu0 %v6453, 34
        %v6467 = vpop.permute.xlu0 %6466
        %6468 = vrot.lane.b32.xlu0 %v6454, 34
        %v6469 = vpop.permute.xlu0 %6468
        %6470 = vrot.lane.b32.xlu0 %v6455, 34
        %v6471 = vpop.permute.xlu0 %6470
        %6472 = vrot.lane.b32.xlu0 %v6456, 34
        %v6473 = vpop.permute.xlu0 %6472
        %6474 = vrot.lane.b32.xlu0 %v6457, 34
        %v6475 = vpop.permute.xlu0 %6474
        %6476 = vrot.lane.b32.xlu0 %v6459, 34
        %v6477 = vpop.permute.xlu0 %6476
        %vm6478 = vcmask 277504
        %v6479 = vsel %vm6478, %v6461, %v6463
        %v6480 = vsel %vm6478, %v6463, %v6465
        %v6481 = vsel %vm6478, %v6465, %v6467
        %v6482 = vsel %vm6478, %v6467, %v6469
        %v6483 = vsel %vm6478, %v6469, %v6471
        %v6484 = vsel %vm6478, %v6471, %v6473
        %v6485 = vsel %vm6478, %v6473, %v6475
        %v6486 = vsel %vm6478, %v6475, %v6477
        %v6488 = vsel %vm273, %v6437, 0
        %v6490 = vsel %vm277, %v6479, 0
        %v6492 = vsel %vm277, %v6480, 0
        %v6494 = vsel %vm277, %v6481, 0
        %v6496 = vsel %vm277, %v6482, 0
        %v6498 = vsel %vm277, %v6483, 0
        %v6500 = vsel %vm277, %v6484, 0
        %v6502 = vsel %vm277, %v6485, 0
        %v6504 = vsel %vm277, %v6486, 0
        %6506 = vmatpush.msra.mxu0 0.0
        %6507 = vmatpush.msra.mxu0 0.0
        %6508 = vmatpush.msra.mxu0 0.0
        %6509 = vmatpush.msra.mxu0 0.0
        %6510 = vmatpush.msra.mxu0 0.0
        %6511 = vmatpush.msra.mxu0 0.0
        %6512 = vmatpush.msra.mxu0 0.0
        %6513 = vmatpush.msra.mxu0 0.0
        %6514 = vmatpush.msra.mxu0 0.0
        %6515 = vmatpush.msra.mxu0 0.0
        %6516 = vmatpush.msra.mxu0 0.0
        %6517 = vmatpush.msra.mxu0 0.0
        %6518 = vmatpush.msra.mxu0 0.0
        %6519 = vmatpush.msra.mxu0 0.0
        %6520 = vmatpush.msra.mxu0 0.0
        %6521 = vmatpush.msra.mxu0 %v6490
        %6522 = vmatmul.f32.gmra.mxu0 %v6488
        %v6523 = vpop.f32.mrf.mxu0
        %v6524 = vadd.f32 0.0, %v6523
        %6525 = vdwg.mxu0
        %6526 = vmatpush.msra.mxu0 0.0
        %6527 = vmatpush.msra.mxu0 0.0
        %6528 = vmatpush.msra.mxu0 0.0
        %6529 = vmatpush.msra.mxu0 0.0
        %6530 = vmatpush.msra.mxu0 0.0
        %6531 = vmatpush.msra.mxu0 0.0
        %6532 = vmatpush.msra.mxu0 0.0
        %6533 = vmatpush.msra.mxu0 0.0
        %6534 = vmatpush.msra.mxu0 0.0
        %6535 = vmatpush.msra.mxu0 0.0
        %6536 = vmatpush.msra.mxu0 0.0
        %6537 = vmatpush.msra.mxu0 0.0
        %6538 = vmatpush.msra.mxu0 0.0
        %6539 = vmatpush.msra.mxu0 0.0
        %6540 = vmatpush.msra.mxu0 0.0
        %6541 = vmatpush.msra.mxu0 %v6492
        %6542 = vmatmul.f32.gmra.mxu0 %v6488
        %v6543 = vpop.f32.mrf.mxu0
        %v6544 = vadd.f32 0.0, %v6543
        %6545 = vdwg.mxu0
        %6546 = vmatpush.msra.mxu0 0.0
        %6547 = vmatpush.msra.mxu0 0.0
        %6548 = vmatpush.msra.mxu0 0.0
        %6549 = vmatpush.msra.mxu0 0.0
        %6550 = vmatpush.msra.mxu0 0.0
        %6551 = vmatpush.msra.mxu0 0.0
        %6552 = vmatpush.msra.mxu0 0.0
        %6553 = vmatpush.msra.mxu0 0.0
        %6554 = vmatpush.msra.mxu0 0.0
        %6555 = vmatpush.msra.mxu0 0.0
        %6556 = vmatpush.msra.mxu0 0.0
        %6557 = vmatpush.msra.mxu0 0.0
        %6558 = vmatpush.msra.mxu0 0.0
        %6559 = vmatpush.msra.mxu0 0.0
        %6560 = vmatpush.msra.mxu0 0.0
        %6561 = vmatpush.msra.mxu0 %v6494
        %6562 = vmatmul.f32.gmra.mxu0 %v6488
        %v6563 = vpop.f32.mrf.mxu0
        %v6564 = vadd.f32 0.0, %v6563
        %6565 = vdwg.mxu0
        %6566 = vmatpush.msra.mxu0 0.0
        %6567 = vmatpush.msra.mxu0 0.0
        %6568 = vmatpush.msra.mxu0 0.0
        %6569 = vmatpush.msra.mxu0 0.0
        %6570 = vmatpush.msra.mxu0 0.0
        %6571 = vmatpush.msra.mxu0 0.0
        %6572 = vmatpush.msra.mxu0 0.0
        %6573 = vmatpush.msra.mxu0 0.0
        %6574 = vmatpush.msra.mxu0 0.0
        %6575 = vmatpush.msra.mxu0 0.0
        %6576 = vmatpush.msra.mxu0 0.0
        %6577 = vmatpush.msra.mxu0 0.0
        %6578 = vmatpush.msra.mxu0 0.0
        %6579 = vmatpush.msra.mxu0 0.0
        %6580 = vmatpush.msra.mxu0 0.0
        %6581 = vmatpush.msra.mxu0 %v6496
        %6582 = vmatmul.f32.gmra.mxu0 %v6488
        %v6583 = vpop.f32.mrf.mxu0
        %v6584 = vadd.f32 0.0, %v6583
        %6585 = vdwg.mxu0
        %6586 = vmatpush.msra.mxu0 0.0
        %6587 = vmatpush.msra.mxu0 0.0
        %6588 = vmatpush.msra.mxu0 0.0
        %6589 = vmatpush.msra.mxu0 0.0
        %6590 = vmatpush.msra.mxu0 0.0
        %6591 = vmatpush.msra.mxu0 0.0
        %6592 = vmatpush.msra.mxu0 0.0
        %6593 = vmatpush.msra.mxu0 0.0
        %6594 = vmatpush.msra.mxu0 0.0
        %6595 = vmatpush.msra.mxu0 0.0
        %6596 = vmatpush.msra.mxu0 0.0
        %6597 = vmatpush.msra.mxu0 0.0
        %6598 = vmatpush.msra.mxu0 0.0
        %6599 = vmatpush.msra.mxu0 0.0
        %6600 = vmatpush.msra.mxu0 0.0
        %6601 = vmatpush.msra.mxu0 %v6498
        %6602 = vmatmul.f32.gmra.mxu0 %v6488
        %v6603 = vpop.f32.mrf.mxu0
        %v6604 = vadd.f32 0.0, %v6603
        %6605 = vdwg.mxu0
        %6606 = vmatpush.msra.mxu0 0.0
        %6607 = vmatpush.msra.mxu0 0.0
        %6608 = vmatpush.msra.mxu0 0.0
        %6609 = vmatpush.msra.mxu0 0.0
        %6610 = vmatpush.msra.mxu0 0.0
        %6611 = vmatpush.msra.mxu0 0.0
        %6612 = vmatpush.msra.mxu0 0.0
        %6613 = vmatpush.msra.mxu0 0.0
        %6614 = vmatpush.msra.mxu0 0.0
        %6615 = vmatpush.msra.mxu0 0.0
        %6616 = vmatpush.msra.mxu0 0.0
        %6617 = vmatpush.msra.mxu0 0.0
        %6618 = vmatpush.msra.mxu0 0.0
        %6619 = vmatpush.msra.mxu0 0.0
        %6620 = vmatpush.msra.mxu0 0.0
        %6621 = vmatpush.msra.mxu0 %v6500
        %6622 = vmatmul.f32.gmra.mxu0 %v6488
        %v6623 = vpop.f32.mrf.mxu0
        %v6624 = vadd.f32 0.0, %v6623
        %6625 = vdwg.mxu0
        %6626 = vmatpush.msra.mxu0 0.0
        %6627 = vmatpush.msra.mxu0 0.0
        %6628 = vmatpush.msra.mxu0 0.0
        %6629 = vmatpush.msra.mxu0 0.0
        %6630 = vmatpush.msra.mxu0 0.0
        %6631 = vmatpush.msra.mxu0 0.0
        %6632 = vmatpush.msra.mxu0 0.0
        %6633 = vmatpush.msra.mxu0 0.0
        %6634 = vmatpush.msra.mxu0 0.0
        %6635 = vmatpush.msra.mxu0 0.0
        %6636 = vmatpush.msra.mxu0 0.0
        %6637 = vmatpush.msra.mxu0 0.0
        %6638 = vmatpush.msra.mxu0 0.0
        %6639 = vmatpush.msra.mxu0 0.0
        %6640 = vmatpush.msra.mxu0 0.0
        %6641 = vmatpush.msra.mxu0 %v6502
        %6642 = vmatmul.f32.gmra.mxu0 %v6488
        %v6643 = vpop.f32.mrf.mxu0
        %v6644 = vadd.f32 0.0, %v6643
        %6645 = vdwg.mxu0
        %6646 = vmatpush.msra.mxu0 0.0
        %6647 = vmatpush.msra.mxu0 0.0
        %6648 = vmatpush.msra.mxu0 0.0
        %6649 = vmatpush.msra.mxu0 0.0
        %6650 = vmatpush.msra.mxu0 0.0
        %6651 = vmatpush.msra.mxu0 0.0
        %6652 = vmatpush.msra.mxu0 0.0
        %6653 = vmatpush.msra.mxu0 0.0
        %6654 = vmatpush.msra.mxu0 0.0
        %6655 = vmatpush.msra.mxu0 0.0
        %6656 = vmatpush.msra.mxu0 0.0
        %6657 = vmatpush.msra.mxu0 0.0
        %6658 = vmatpush.msra.mxu0 0.0
        %6659 = vmatpush.msra.mxu0 0.0
        %6660 = vmatpush.msra.mxu0 0.0
        %6661 = vmatpush.msra.mxu0 %v6504
        %6662 = vmatmul.f32.gmra.mxu0 %v6488
        %v6663 = vpop.f32.mrf.mxu0
        %v6664 = vadd.f32 0.0, %v6663
        %6665 = vdwg.mxu0
        %v6666 = vadd.f32 %v6423, %v6524
        %v6667 = vadd.f32 %v6424, %v6544
        %v6668 = vadd.f32 %v6425, %v6564
        %v6669 = vadd.f32 %v6426, %v6584
        %v6670 = vadd.f32 %v6427, %v6604
        %v6671 = vadd.f32 %v6428, %v6624
        %v6672 = vadd.f32 %v6429, %v6644
        %v6673 = vadd.f32 %v6430, %v6664
        %v6674 = vld [vmem:[%s2] sm:$0xff]
        %6676 = vset.pattern.permute.xlu0 0
        %6677 = vperm.xlu0 %6676, %v6674
        %v6678 = vpop.permute.xlu0 %6677
        %v6680 = vadd.f32 %v6666, %v6678
        %v6681 = vadd.f32 %v6667, %v6678
        %v6682 = vadd.f32 %v6668, %v6678
        %v6683 = vadd.f32 %v6669, %v6678
        %v6684 = vadd.f32 %v6670, %v6678
        %v6685 = vadd.f32 %v6671, %v6678
        %v6686 = vadd.f32 %v6672, %v6678
        %v6687 = vadd.f32 %v6673, %v6678
        %v6688 = vld [vmem:[%s3] sm:$0xff]
        %v6690 = vperm.slane %v6688, 0
        %v6691 = vperm.slane %v6688, 1
        %v6692 = vperm.slane %v6688, 2
        %v6693 = vperm.slane %v6688, 3
        %v6694 = vperm.slane %v6688, 4
        %v6695 = vperm.slane %v6688, 5
        %v6696 = vperm.slane %v6688, 6
        %v6697 = vperm.slane %v6688, 7
        %v6706 = vmul.f32 %v6680, %v6690
        %v6707 = vmul.f32 %v6681, %v6691
        %v6708 = vmul.f32 %v6682, %v6692
        %v6709 = vmul.f32 %v6683, %v6693
        %v6710 = vmul.f32 %v6684, %v6694
        %v6711 = vmul.f32 %v6685, %v6695
        %v6712 = vmul.f32 %v6686, %v6696
        %v6713 = vmul.f32 %v6687, %v6697
        %v6714 = vadd.f32 %v6706, %v6707
        %v6715 = vadd.f32 %v6714, %v6708
        %v6716 = vadd.f32 %v6715, %v6709
        %v6717 = vadd.f32 %v6716, %v6710
        %v6718 = vadd.f32 %v6717, %v6711
        %v6719 = vadd.f32 %v6718, %v6712
        %vm6720 = vcmask 850944
        %v6721 = vsel %vm6720, %v6713, 0.0
        %v6722 = vadd.f32 %v6719, %v6721
        %6723 = vadd.xlane.f32.xlu0 %v6722
        %v6724 = vpop.xlane.xlu0 %6723
        %v6725 = vmul.f32 %v6724, 0.001953125
        %v6726 = vsub.f32 %v6680, %v6725
        %v6727 = vsub.f32 %v6681, %v6725
        %v6728 = vsub.f32 %v6682, %v6725
        %v6729 = vsub.f32 %v6683, %v6725
        %v6730 = vsub.f32 %v6684, %v6725
        %v6731 = vsub.f32 %v6685, %v6725
        %v6732 = vsub.f32 %v6686, %v6725
        %v6733 = vsub.f32 %v6687, %v6725
        %v6734 = vmul.f32 %v6726, %v6726
        %v6735 = vmul.f32 %v6727, %v6727
        %v6736 = vmul.f32 %v6728, %v6728
        %v6737 = vmul.f32 %v6729, %v6729
        %v6738 = vmul.f32 %v6730, %v6730
        %v6739 = vmul.f32 %v6731, %v6731
        %v6740 = vmul.f32 %v6732, %v6732
        %v6741 = vmul.f32 %v6733, %v6733
        %v6742 = vmul.f32 %v6734, %v6690
        %v6743 = vmul.f32 %v6735, %v6691
        %v6744 = vmul.f32 %v6736, %v6692
        %v6745 = vmul.f32 %v6737, %v6693
        %v6746 = vmul.f32 %v6738, %v6694
        %v6747 = vmul.f32 %v6739, %v6695
        %v6748 = vmul.f32 %v6740, %v6696
        %v6749 = vmul.f32 %v6741, %v6697
        %v6750 = vadd.f32 %v6742, %v6743
        %v6751 = vadd.f32 %v6750, %v6744
        %v6752 = vadd.f32 %v6751, %v6745
        %v6753 = vadd.f32 %v6752, %v6746
        %v6754 = vadd.f32 %v6753, %v6747
        %v6755 = vadd.f32 %v6754, %v6748
        %v6756 = vsel %vm6720, %v6749, 0.0
        %v6757 = vadd.f32 %v6755, %v6756
        %6758 = vadd.xlane.f32.xlu0 %v6757
        %v6759 = vpop.xlane.xlu0 %6758
        %v6760 = vmul.f32 %v6759, 0.001953125
        %v6761 = vadd.f32 %v6760, 1e-05
        %v6762 = vrsqrt.pop %v6761
        %v6763 = vmul.f32 %v6762, %v6761
        %v6764 = vmul.f32 %v6763, %v6762
        %v6765 = vmul.f32 0.5, %v6764
        %v6766 = vsub.f32 1.5, %v6765
        %v6767 = vmul.f32 %v6762, %v6766
        %vm6768 = vweird.f32 %v6761
        %vm6769 = vweird.f32 %v6762
        %vm6770 = vmor %vm6768, %vm6769
        %v6771 = vsel %vm6770, %v6762, %v6767
        %v6772 = vmul.f32 %v6726, %v6771
        %v6773 = vmul.f32 %v6727, %v6771
        %v6774 = vmul.f32 %v6728, %v6771
        %v6775 = vmul.f32 %v6729, %v6771
        %v6776 = vmul.f32 %v6730, %v6771
        %v6777 = vmul.f32 %v6731, %v6771
        %v6778 = vmul.f32 %v6732, %v6771
        %v6779 = vmul.f32 %v6733, %v6771
        %v6780 = vmax.f32 %v6772, 0.0
        %v6781 = vmax.f32 %v6773, 0.0
        %v6782 = vmax.f32 %v6774, 0.0
        %v6783 = vmax.f32 %v6775, 0.0
        %v6784 = vmax.f32 %v6776, 0.0
        %v6785 = vmax.f32 %v6777, 0.0
        %v6786 = vmax.f32 %v6778, 0.0
        %v6787 = vmax.f32 %v6779, 0.0
        %v6788 = vmul.f32 %v6780, %v6690
        %v6789 = vmul.f32 %v6781, %v6691
        %v6790 = vmul.f32 %v6782, %v6692
        %v6791 = vmul.f32 %v6783, %v6693
        %v6792 = vmul.f32 %v6784, %v6694
        %v6793 = vmul.f32 %v6785, %v6695
        %v6794 = vmul.f32 %v6786, %v6696
        %v6795 = vmul.f32 %v6787, %v6697
        %6796 = vst [vmem:[#allocation2] sm:$0xff] 0.0
        %6797 = vst [vmem:[#allocation2 + $0x8] sm:$0xff] 0.0
        %6798 = vst [vmem:[#allocation2 + $0x10] sm:$0xff] 0.0
        %6799 = vst [vmem:[#allocation2 + $0x18] sm:$0xff] 0.0
        %6800 = vst [vmem:[#allocation2 + $0x20] sm:$0xff] 0.0
        %6801 = vst [vmem:[#allocation2 + $0x28] sm:$0xff] 0.0
        %6802 = vst [vmem:[#allocation2 + $0x30] sm:$0xff] 0.0
        %6803 = vst [vmem:[#allocation2 + $0x38] sm:$0xff] 0.0
        %6804 = vst [vmem:[#allocation2 + $0x40] sm:$0xff] 0.0
        %6805 = vst [vmem:[#allocation2 + $0x48] sm:$0xff] 0.0
        %6806 = vst [vmem:[#allocation3] sm:$0xff] 0.0
        %6807 = vst [vmem:[#allocation3 + $0x8] sm:$0xff] 0.0
        %6808 = vst [vmem:[#allocation3 + $0x10] sm:$0xff] 0.0
        %6809 = vst [vmem:[#allocation3 + $0x18] sm:$0xff] 0.0
        %6810 = vst [vmem:[#allocation3 + $0x20] sm:$0xff] 0.0
        %6811 = vst [vmem:[#allocation3 + $0x28] sm:$0xff] 0.0
        %6812 = vst [vmem:[#allocation3 + $0x30] sm:$0xff] 0.0
        %6813 = vst [vmem:[#allocation3 + $0x38] sm:$0xff] 0.0
        %6814 = vst [vmem:[#allocation3 + $0x40] sm:$0xff] 0.0
        %6815 = vst [vmem:[#allocation3 + $0x48] sm:$0xff] 0.0
        %6816 = vst [vmem:[#allocation4] sm:$0xff] 0.0
        %6817 = vst [vmem:[#allocation4 + $0x8] sm:$0xff] 0.0
        %6818 = vst [vmem:[#allocation4 + $0x10] sm:$0xff] 0.0
        %6819 = vst [vmem:[#allocation4 + $0x18] sm:$0xff] 0.0
        %6820 = vst [vmem:[#allocation4 + $0x20] sm:$0xff] 0.0
        %6821 = vst [vmem:[#allocation4 + $0x28] sm:$0xff] 0.0
        %6822 = vst [vmem:[#allocation4 + $0x30] sm:$0xff] 0.0
        %6823 = vst [vmem:[#allocation4 + $0x38] sm:$0xff] 0.0
        %6824 = vst [vmem:[#allocation4 + $0x40] sm:$0xff] 0.0
        %6825 = vst [vmem:[#allocation4 + $0x48] sm:$0xff] 0.0
        %6826 = vst [vmem:[#allocation2 + $0x8] sm:$0xff] %v6788
        %6827 = vst [vmem:[#allocation2 + $0x10] sm:$0xff] %v6789
        %6828 = vst [vmem:[#allocation2 + $0x18] sm:$0xff] %v6790
        %6829 = vst [vmem:[#allocation2 + $0x20] sm:$0xff] %v6791
        %6830 = vst [vmem:[#allocation2 + $0x28] sm:$0xff] %v6792
        %6831 = vst [vmem:[#allocation2 + $0x30] sm:$0xff] %v6793
        %6832 = vst [vmem:[#allocation2 + $0x38] sm:$0xff] %v6794
        %6833 = vst.msk [vmem:[#allocation2 + $0x40] sm:$0xff] %vm6720, %v6795
        %v6834 = vld [vmem:[#allocation2] sm:$0xff]
        %v6835 = vld [vmem:[#allocation2 + $0x8] sm:$0xff]
        %v6836 = vld [vmem:[#allocation2 + $0x10] sm:$0xff]
        %v6837 = vld [vmem:[#allocation2 + $0x18] sm:$0xff]
        %v6838 = vld [vmem:[#allocation2 + $0x20] sm:$0xff]
        %v6839 = vld [vmem:[#allocation2 + $0x28] sm:$0xff]
        %v6840 = vld [vmem:[#allocation2 + $0x30] sm:$0xff]
        %v6841 = vld [vmem:[#allocation2 + $0x38] sm:$0xff]
        %v6842 = vld [vmem:[#allocation2 + $0x40] sm:$0xff]
        %6851 = vrot.lane.b32.xlu0 %v6788, 127
        %v6852 = vpop.permute.xlu0 %6851
        %6853 = vrot.lane.b32.xlu0 %v6789, 127
        %v6854 = vpop.permute.xlu0 %6853
        %6855 = vrot.lane.b32.xlu0 %v6790, 127
        %v6856 = vpop.permute.xlu0 %6855
        %6857 = vrot.lane.b32.xlu0 %v6791, 127
        %v6858 = vpop.permute.xlu0 %6857
        %6859 = vrot.lane.b32.xlu0 %v6792, 127
        %v6860 = vpop.permute.xlu0 %6859
        %6861 = vrot.lane.b32.xlu0 %v6793, 127
        %v6862 = vpop.permute.xlu0 %6861
        %6863 = vrot.lane.b32.xlu0 %v6794, 127
        %v6864 = vpop.permute.xlu0 %6863
        %6865 = vrot.lane.b32.xlu0 %v6795, 127
        %v6866 = vpop.permute.xlu0 %6865
        %v6867 = vsel %vm265, %v6852, %v6854
        %v6868 = vsel %vm265, %v6854, %v6856
        %v6869 = vsel %vm265, %v6856, %v6858
        %v6870 = vsel %vm265, %v6858, %v6860
        %v6871 = vsel %vm265, %v6860, %v6862
        %v6872 = vsel %vm265, %v6862, %v6864
        %v6873 = vsel %vm265, %v6864, %v6866
        %v6883 = vmax.f32 %v6834, %v6852
        %v6884 = vmax.f32 %v6835, %v6867
        %v6885 = vmax.f32 %v6836, %v6868
        %v6886 = vmax.f32 %v6837, %v6869
        %v6887 = vmax.f32 %v6838, %v6870
        %v6888 = vmax.f32 %v6839, %v6871
        %v6889 = vmax.f32 %v6840, %v6872
        %v6890 = vmax.f32 %v6841, %v6873
        %v6891 = vmax.f32 %v6842, %v6866
        %6900 = vrot.lane.b32.xlu0 %v6835, 126
        %v6901 = vpop.permute.xlu0 %6900
        %6902 = vrot.lane.b32.xlu0 %v6836, 126
        %v6903 = vpop.permute.xlu0 %6902
        %6904 = vrot.lane.b32.xlu0 %v6837, 126
        %v6905 = vpop.permute.xlu0 %6904
        %6906 = vrot.lane.b32.xlu0 %v6838, 126
        %v6907 = vpop.permute.xlu0 %6906
        %6908 = vrot.lane.b32.xlu0 %v6839, 126
        %v6909 = vpop.permute.xlu0 %6908
        %6910 = vrot.lane.b32.xlu0 %v6840, 126
        %v6911 = vpop.permute.xlu0 %6910
        %6912 = vrot.lane.b32.xlu0 %v6841, 126
        %v6913 = vpop.permute.xlu0 %6912
        %6914 = vrot.lane.b32.xlu0 %v6842, 126
        %v6915 = vpop.permute.xlu0 %6914
        %v6916 = vsel %vm689, %v6901, %v6903
        %v6917 = vsel %vm689, %v6903, %v6905
        %v6918 = vsel %vm689, %v6905, %v6907
        %v6919 = vsel %vm689, %v6907, %v6909
        %v6920 = vsel %vm689, %v6909, %v6911
        %v6921 = vsel %vm689, %v6911, %v6913
        %v6922 = vsel %vm689, %v6913, %v6915
        %v6932 = vmax.f32 %v6883, %v6901
        %v6933 = vmax.f32 %v6884, %v6916
        %v6934 = vmax.f32 %v6885, %v6917
        %v6935 = vmax.f32 %v6886, %v6918
        %v6936 = vmax.f32 %v6887, %v6919
        %v6937 = vmax.f32 %v6888, %v6920
        %v6938 = vmax.f32 %v6889, %v6921
        %v6939 = vmax.f32 %v6890, %v6922
        %v6940 = vmax.f32 %v6891, %v6915
        %6950 = vrot.lane.b32.xlu0 %v6932, 1
        %v6951 = vpop.permute.xlu0 %6950
        %6952 = vrot.lane.b32.xlu0 %v6933, 1
        %v6953 = vpop.permute.xlu0 %6952
        %6954 = vrot.lane.b32.xlu0 %v6934, 1
        %v6955 = vpop.permute.xlu0 %6954
        %6956 = vrot.lane.b32.xlu0 %v6935, 1
        %v6957 = vpop.permute.xlu0 %6956
        %6958 = vrot.lane.b32.xlu0 %v6936, 1
        %v6959 = vpop.permute.xlu0 %6958
        %6960 = vrot.lane.b32.xlu0 %v6937, 1
        %v6961 = vpop.permute.xlu0 %6960
        %6962 = vrot.lane.b32.xlu0 %v6938, 1
        %v6963 = vpop.permute.xlu0 %6962
        %6964 = vrot.lane.b32.xlu0 %v6939, 1
        %v6965 = vpop.permute.xlu0 %6964
        %6966 = vrot.lane.b32.xlu0 %v6940, 1
        %v6967 = vpop.permute.xlu0 %6966
        %vm6968 = vcmask 7168
        %v6969 = vsel %vm6968, %v6951, %v6953
        %v6970 = vsel %vm6968, %v6953, %v6955
        %v6971 = vsel %vm6968, %v6955, %v6957
        %v6972 = vsel %vm6968, %v6957, %v6959
        %v6973 = vsel %vm6968, %v6959, %v6961
        %v6974 = vsel %vm6968, %v6961, %v6963
        %v6975 = vsel %vm6968, %v6963, %v6965
        %v6976 = vsel %vm6968, %v6965, %v6967
        %6985 = vst [vmem:[#allocation3 + $0x8] sm:$0xff] %v6969
        %6986 = vst [vmem:[#allocation3 + $0x10] sm:$0xff] %v6970
        %6987 = vst [vmem:[#allocation3 + $0x18] sm:$0xff] %v6971
        %6988 = vst [vmem:[#allocation3 + $0x20] sm:$0xff] %v6972
        %6989 = vst [vmem:[#allocation3 + $0x28] sm:$0xff] %v6973
        %6990 = vst [vmem:[#allocation3 + $0x30] sm:$0xff] %v6974
        %6991 = vst [vmem:[#allocation3 + $0x38] sm:$0xff] %v6975
        %6992 = vst.msk [vmem:[#allocation3 + $0x40] sm:$0xff] %vm6720, %v6976
        %v6993 = vld [vmem:[#allocation3] sm:$0xff]
        %v6994 = vld [vmem:[#allocation3 + $0x8] sm:$0xff]
        %v6995 = vld [vmem:[#allocation3 + $0x10] sm:$0xff]
        %v6996 = vld [vmem:[#allocation3 + $0x18] sm:$0xff]
        %v6997 = vld [vmem:[#allocation3 + $0x20] sm:$0xff]
        %v6998 = vld [vmem:[#allocation3 + $0x28] sm:$0xff]
        %v6999 = vld [vmem:[#allocation3 + $0x30] sm:$0xff]
        %v7000 = vld [vmem:[#allocation3 + $0x38] sm:$0xff]
        %v7001 = vld [vmem:[#allocation3 + $0x40] sm:$0xff]
        %7002 = vrot.lane.b32.xlu0 %v6932, 119
        %v7003 = vpop.permute.xlu0 %7002
        %7004 = vrot.lane.b32.xlu0 %v6933, 119
        %v7005 = vpop.permute.xlu0 %7004
        %7006 = vrot.lane.b32.xlu0 %v6934, 119
        %v7007 = vpop.permute.xlu0 %7006
        %7008 = vrot.lane.b32.xlu0 %v6935, 119
        %v7009 = vpop.permute.xlu0 %7008
        %7010 = vrot.lane.b32.xlu0 %v6936, 119
        %v7011 = vpop.permute.xlu0 %7010
        %7012 = vrot.lane.b32.xlu0 %v6937, 119
        %v7013 = vpop.permute.xlu0 %7012
        %7014 = vrot.lane.b32.xlu0 %v6938, 119
        %v7015 = vpop.permute.xlu0 %7014
        %7016 = vrot.lane.b32.xlu0 %v6939, 119
        %v7017 = vpop.permute.xlu0 %7016
        %7018 = vrot.lane.b32.xlu0 %v6940, 119
        %v7019 = vpop.permute.xlu0 %7018
        %vm7020 = vcmask 973824
        %v7021 = vsel %vm7020, %v7003, %v7005
        %v7022 = vsel %vm7020, %v7005, %v7007
        %v7023 = vsel %vm7020, %v7007, %v7009
        %v7024 = vsel %vm7020, %v7009, %v7011
        %v7025 = vsel %vm7020, %v7011, %v7013
        %v7026 = vsel %vm7020, %v7013, %v7015
        %v7027 = vsel %vm7020, %v7015, %v7017
        %v7028 = vsel %vm7020, %v7017, %v7019
        %v7038 = vmax.f32 %v6993, %v7021
        %v7039 = vmax.f32 %v6994, %v7022
        %v7040 = vmax.f32 %v6995, %v7023
        %v7041 = vmax.f32 %v6996, %v7024
        %v7042 = vmax.f32 %v6997, %v7025
        %v7043 = vmax.f32 %v6998, %v7026
        %v7044 = vmax.f32 %v6999, %v7027
        %v7045 = vmax.f32 %v7000, %v7028
        %v7046 = vmax.f32 %v7001, %v7019
        %7055 = vrot.lane.b32.xlu0 %v6994, 108
        %v7056 = vpop.permute.xlu0 %7055
        %7057 = vrot.lane.b32.xlu0 %v6995, 108
        %v7058 = vpop.permute.xlu0 %7057
        %7059 = vrot.lane.b32.xlu0 %v6996, 108
        %v7060 = vpop.permute.xlu0 %7059
        %7061 = vrot.lane.b32.xlu0 %v6997, 108
        %v7062 = vpop.permute.xlu0 %7061
        %7063 = vrot.lane.b32.xlu0 %v6998, 108
        %v7064 = vpop.permute.xlu0 %7063
        %7065 = vrot.lane.b32.xlu0 %v6999, 108
        %v7066 = vpop.permute.xlu0 %7065
        %7067 = vrot.lane.b32.xlu0 %v7000, 108
        %v7068 = vpop.permute.xlu0 %7067
        %7069 = vrot.lane.b32.xlu0 %v7001, 108
        %v7070 = vpop.permute.xlu0 %7069
        %v7071 = vsel %vm1633, %v7056, %v7058
        %v7072 = vsel %vm1633, %v7058, %v7060
        %v7073 = vsel %vm1633, %v7060, %v7062
        %v7074 = vsel %vm1633, %v7062, %v7064
        %v7075 = vsel %vm1633, %v7064, %v7066
        %v7076 = vsel %vm1633, %v7066, %v7068
        %v7077 = vsel %vm1633, %v7068, %v7070
        %v7087 = vmax.f32 %v7038, %v7056
        %v7088 = vmax.f32 %v7039, %v7071
        %v7089 = vmax.f32 %v7040, %v7072
        %v7090 = vmax.f32 %v7041, %v7073
        %v7091 = vmax.f32 %v7042, %v7074
        %v7092 = vmax.f32 %v7043, %v7075
        %v7093 = vmax.f32 %v7044, %v7076
        %v7094 = vmax.f32 %v7045, %v7077
        %v7095 = vmax.f32 %v7046, %v7070
        %7105 = vrot.lane.b32.xlu0 %v7087, 10
        %v7106 = vpop.permute.xlu0 %7105
        %7107 = vrot.lane.b32.xlu0 %v7088, 10
        %v7108 = vpop.permute.xlu0 %7107
        %7109 = vrot.lane.b32.xlu0 %v7089, 10
        %v7110 = vpop.permute.xlu0 %7109
        %7111 = vrot.lane.b32.xlu0 %v7090, 10
        %v7112 = vpop.permute.xlu0 %7111
        %7113 = vrot.lane.b32.xlu0 %v7091, 10
        %v7114 = vpop.permute.xlu0 %7113
        %7115 = vrot.lane.b32.xlu0 %v7092, 10
        %v7116 = vpop.permute.xlu0 %7115
        %7117 = vrot.lane.b32.xlu0 %v7093, 10
        %v7118 = vpop.permute.xlu0 %7117
        %7119 = vrot.lane.b32.xlu0 %v7094, 10
        %v7120 = vpop.permute.xlu0 %7119
        %7121 = vrot.lane.b32.xlu0 %v7095, 10
        %v7122 = vpop.permute.xlu0 %7121
        %vm7123 = vcmask 80896
        %v7124 = vsel %vm7123, %v7106, %v7108
        %v7125 = vsel %vm7123, %v7108, %v7110
        %v7126 = vsel %vm7123, %v7110, %v7112
        %v7127 = vsel %vm7123, %v7112, %v7114
        %v7128 = vsel %vm7123, %v7114, %v7116
        %v7129 = vsel %vm7123, %v7116, %v7118
        %v7130 = vsel %vm7123, %v7118, %v7120
        %v7131 = vsel %vm7123, %v7120, %v7122
        %7140 = vst [vmem:[#allocation4 + $0x8] sm:$0xff] %v7124
        %7141 = vst [vmem:[#allocation4 + $0x10] sm:$0xff] %v7125
        %7142 = vst [vmem:[#allocation4 + $0x18] sm:$0xff] %v7126
        %7143 = vst [vmem:[#allocation4 + $0x20] sm:$0xff] %v7127
        %7144 = vst [vmem:[#allocation4 + $0x28] sm:$0xff] %v7128
        %7145 = vst [vmem:[#allocation4 + $0x30] sm:$0xff] %v7129
        %7146 = vst [vmem:[#allocation4 + $0x38] sm:$0xff] %v7130
        %7147 = vst.msk [vmem:[#allocation4 + $0x40] sm:$0xff] %vm6720, %v7131
        %v7148 = vld [vmem:[#allocation4] sm:$0xff]
        %v7149 = vld [vmem:[#allocation4 + $0x8] sm:$0xff]
        %v7150 = vld [vmem:[#allocation4 + $0x10] sm:$0xff]
        %v7151 = vld [vmem:[#allocation4 + $0x18] sm:$0xff]
        %v7152 = vld [vmem:[#allocation4 + $0x20] sm:$0xff]
        %v7153 = vld [vmem:[#allocation4 + $0x28] sm:$0xff]
        %v7154 = vld [vmem:[#allocation4 + $0x30] sm:$0xff]
        %v7155 = vld [vmem:[#allocation4 + $0x38] sm:$0xff]
        %v7156 = vld [vmem:[#allocation4 + $0x40] sm:$0xff]
        %7157 = vrot.lane.b32.xlu0 %v7087, 38
        %v7158 = vpop.permute.xlu0 %7157
        %7159 = vrot.lane.b32.xlu0 %v7088, 38
        %v7160 = vpop.permute.xlu0 %7159
        %7161 = vrot.lane.b32.xlu0 %v7089, 38
        %v7162 = vpop.permute.xlu0 %7161
        %7163 = vrot.lane.b32.xlu0 %v7090, 38
        %v7164 = vpop.permute.xlu0 %7163
        %7165 = vrot.lane.b32.xlu0 %v7091, 38
        %v7166 = vpop.permute.xlu0 %7165
        %7167 = vrot.lane.b32.xlu0 %v7092, 38
        %v7168 = vpop.permute.xlu0 %7167
        %7169 = vrot.lane.b32.xlu0 %v7093, 38
        %v7170 = vpop.permute.xlu0 %7169
        %7171 = vrot.lane.b32.xlu0 %v7094, 38
        %v7172 = vpop.permute.xlu0 %7171
        %7173 = vrot.lane.b32.xlu0 %v7095, 38
        %v7174 = vpop.permute.xlu0 %7173
        %vm7175 = vcmask 310272
        %v7176 = vsel %vm7175, %v7158, %v7160
        %v7177 = vsel %vm7175, %v7160, %v7162
        %v7178 = vsel %vm7175, %v7162, %v7164
        %v7179 = vsel %vm7175, %v7164, %v7166
        %v7180 = vsel %vm7175, %v7166, %v7168
        %v7181 = vsel %vm7175, %v7168, %v7170
        %v7182 = vsel %vm7175, %v7170, %v7172
        %v7183 = vsel %vm7175, %v7172, %v7174
        %v7193 = vmax.f32 %v7148, %v7176
        %v7194 = vmax.f32 %v7149, %v7177
        %v7195 = vmax.f32 %v7150, %v7178
        %v7196 = vmax.f32 %v7151, %v7179
        %v7197 = vmax.f32 %v7152, %v7180
        %v7198 = vmax.f32 %v7153, %v7181
        %v7199 = vmax.f32 %v7154, %v7182
        %v7200 = vmax.f32 %v7155, %v7183
        %v7201 = vmax.f32 %v7156, %v7174
        %v7202 = vld [vmem:[#allocation4 + $0x8] sm:$0xff]
        %v7203 = vld [vmem:[#allocation4 + $0x10] sm:$0xff]
        %v7204 = vld [vmem:[#allocation4 + $0x18] sm:$0xff]
        %v7205 = vld [vmem:[#allocation4 + $0x20] sm:$0xff]
        %v7206 = vld [vmem:[#allocation4 + $0x28] sm:$0xff]
        %v7207 = vld [vmem:[#allocation4 + $0x30] sm:$0xff]
        %v7208 = vld [vmem:[#allocation4 + $0x38] sm:$0xff]
        %v7209 = vld [vmem:[#allocation4 + $0x40] sm:$0xff]
        %v7210 = vld [vmem:[#allocation4 + $0x48] sm:$0xff]
        %7220 = vrot.lane.b32.xlu0 %v7202, 56
        %v7221 = vpop.permute.xlu0 %7220
        %7222 = vrot.lane.b32.xlu0 %v7203, 56
        %v7223 = vpop.permute.xlu0 %7222
        %7224 = vrot.lane.b32.xlu0 %v7204, 56
        %v7225 = vpop.permute.xlu0 %7224
        %7226 = vrot.lane.b32.xlu0 %v7205, 56
        %v7227 = vpop.permute.xlu0 %7226
        %7228 = vrot.lane.b32.xlu0 %v7206, 56
        %v7229 = vpop.permute.xlu0 %7228
        %7230 = vrot.lane.b32.xlu0 %v7207, 56
        %v7231 = vpop.permute.xlu0 %7230
        %7232 = vrot.lane.b32.xlu0 %v7208, 56
        %v7233 = vpop.permute.xlu0 %7232
        %7234 = vrot.lane.b32.xlu0 %v7209, 56
        %v7235 = vpop.permute.xlu0 %7234
        %7236 = vrot.lane.b32.xlu0 %v7210, 56
        %v7237 = vpop.permute.xlu0 %7236
        %v7238 = vsel %vm4534, %v7221, %v7223
        %v7239 = vsel %vm4534, %v7223, %v7225
        %v7240 = vsel %vm4534, %v7225, %v7227
        %v7241 = vsel %vm4534, %v7227, %v7229
        %v7242 = vsel %vm4534, %v7229, %v7231
        %v7243 = vsel %vm4534, %v7231, %v7233
        %v7244 = vsel %vm4534, %v7233, %v7235
        %v7245 = vsel %vm4534, %v7235, %v7237
        %v7255 = vmax.f32 %v7193, %v7238
        %v7256 = vmax.f32 %v7194, %v7239
        %v7257 = vmax.f32 %v7195, %v7240
        %v7258 = vmax.f32 %v7196, %v7241
        %v7259 = vmax.f32 %v7197, %v7242
        %v7260 = vmax.f32 %v7198, %v7243
        %v7261 = vmax.f32 %v7199, %v7244
        %v7262 = vmax.f32 %v7200, %v7245
        %v7263 = vmax.f32 %v7201, %v7237
        %vm7264 = vcmp.gt.f32.partialorder %v6688, 0.5
        %v7265 = vsel %vm7264, 1, 0
        %v7266 = vperm.slane %v7265, 0
        %v7267 = vperm.slane %v7265, 1
        %v7268 = vperm.slane %v7265, 2
        %v7269 = vperm.slane %v7265, 3
        %v7270 = vperm.slane %v7265, 4
        %v7271 = vperm.slane %v7265, 5
        %v7272 = vperm.slane %v7265, 6
        %v7273 = vperm.slane %v7265, 7
        %vm7274 = vcmp.eq.s32.totalorder %v7266, 1
        %vm7275 = vcmp.eq.s32.totalorder %v7267, 1
        %vm7276 = vcmp.eq.s32.totalorder %v7268, 1
        %vm7277 = vcmp.eq.s32.totalorder %v7269, 1
        %vm7278 = vcmp.eq.s32.totalorder %v7270, 1
        %vm7279 = vcmp.eq.s32.totalorder %v7271, 1
        %vm7280 = vcmp.eq.s32.totalorder %v7272, 1
        %vm7281 = vcmp.eq.s32.totalorder %v7273, 1
        %7291 = vrot.lane.b32.xlu0 %v7255, 100
        %v7292 = vpop.permute.xlu0 %7291
        %7293 = vrot.lane.b32.xlu0 %v7256, 100
        %v7294 = vpop.permute.xlu0 %7293
        %7295 = vrot.lane.b32.xlu0 %v7257, 100
        %v7296 = vpop.permute.xlu0 %7295
        %7297 = vrot.lane.b32.xlu0 %v7258, 100
        %v7298 = vpop.permute.xlu0 %7297
        %7299 = vrot.lane.b32.xlu0 %v7259, 100
        %v7300 = vpop.permute.xlu0 %7299
        %7301 = vrot.lane.b32.xlu0 %v7260, 100
        %v7302 = vpop.permute.xlu0 %7301
        %7303 = vrot.lane.b32.xlu0 %v7261, 100
        %v7304 = vpop.permute.xlu0 %7303
        %7305 = vrot.lane.b32.xlu0 %v7262, 100
        %v7306 = vpop.permute.xlu0 %7305
        %7307 = vrot.lane.b32.xlu0 %v7263, 100
        %v7308 = vpop.permute.xlu0 %7307
        %vm7309 = vcmask 818176
        %v7310 = vsel %vm7309, %v7292, %v7294
        %v7311 = vsel %vm7309, %v7294, %v7296
        %v7312 = vsel %vm7309, %v7296, %v7298
        %v7313 = vsel %vm7309, %v7298, %v7300
        %v7314 = vsel %vm7309, %v7300, %v7302
        %v7315 = vsel %vm7309, %v7302, %v7304
        %v7316 = vsel %vm7309, %v7304, %v7306
        %v7317 = vsel %vm7309, %v7306, %v7308
        %v7326 = vsel %vm7274, %v7310, 0.0
        %v7327 = vsel %vm7275, %v7311, 0.0
        %v7328 = vsel %vm7276, %v7312, 0.0
        %v7329 = vsel %vm7277, %v7313, 0.0
        %v7330 = vsel %vm7278, %v7314, 0.0
        %v7331 = vsel %vm7279, %v7315, 0.0
        %v7332 = vsel %vm7280, %v7316, 0.0
        %v7333 = vsel %vm7281, %v7317, 0.0
        %v7334 = vld [vmem:[%s4] sm:$0xff]
        %v7335 = vld [vmem:[%s4 + $0x8] sm:$0xff]
        %v7336 = vld [vmem:[%s4 + $0x10] sm:$0xff]
        %v7337 = vld [vmem:[%s4 + $0x18] sm:$0xff]
        %v7338 = vld [vmem:[%s4 + $0x20] sm:$0xff]
        %v7339 = vld [vmem:[%s4 + $0x28] sm:$0xff]
        %v7340 = vld [vmem:[%s4 + $0x30] sm:$0xff]
        %v7341 = vld [vmem:[%s4 + $0x38] sm:$0xff]
        %v7342 = vld [vmem:[%s4 + $0x40] sm:$0xff]
        %v7343 = vld [vmem:[%s4 + $0x48] sm:$0xff]
        %v7344 = vld [vmem:[%s4 + $0x50] sm:$0xff]
        %v7345 = vld [vmem:[%s4 + $0x58] sm:$0xff]
        %v7346 = vld [vmem:[%s4 + $0x60] sm:$0xff]
        %v7347 = vld [vmem:[%s4 + $0x68] sm:$0xff]
        %v7348 = vld [vmem:[%s4 + $0x70] sm:$0xff]
        %v7349 = vld [vmem:[%s4 + $0x78] sm:$0xff]
        %v7350 = vld [vmem:[%s4 + $0x80] sm:$0xff]
        %v7351 = vld [vmem:[%s4 + $0x88] sm:$0xff]
        %v7352 = vld [vmem:[%s4 + $0x90] sm:$0xff]
        %v7353 = vld [vmem:[%s4 + $0x98] sm:$0xff]
        %v7354 = vld [vmem:[%s4 + $0xa0] sm:$0xff]
        %v7355 = vld [vmem:[%s4 + $0xa8] sm:$0xff]
        %v7356 = vld [vmem:[%s4 + $0xb0] sm:$0xff]
        %v7357 = vld [vmem:[%s4 + $0xb8] sm:$0xff]
        %v7358 = vld [vmem:[%s4 + $0xc0] sm:$0xff]
        %v7359 = vld [vmem:[%s4 + $0xc8] sm:$0xff]
        %v7360 = vld [vmem:[%s4 + $0xd0] sm:$0xff]
        %v7361 = vld [vmem:[%s4 + $0xd8] sm:$0xff]
        %v7362 = vld [vmem:[%s4 + $0xe0] sm:$0xff]
        %v7363 = vld [vmem:[%s4 + $0xe8] sm:$0xff]
        %v7364 = vld [vmem:[%s4 + $0xf0] sm:$0xff]
        %v7365 = vld [vmem:[%s4 + $0xf8] sm:$0xff]
        %v7366 = vld [vmem:[%s4 + $0x100] sm:$0xff]
        %v7367 = vld [vmem:[%s4 + $0x108] sm:$0xff]
        %v7368 = vld [vmem:[%s4 + $0x110] sm:$0xff]
        %v7369 = vld [vmem:[%s4 + $0x118] sm:$0xff]
        %v7370 = vld [vmem:[%s4 + $0x120] sm:$0xff]
        %v7371 = vld [vmem:[%s4 + $0x128] sm:$0xff]
        %v7372 = vld [vmem:[%s4 + $0x130] sm:$0xff]
        %v7373 = vld [vmem:[%s4 + $0x138] sm:$0xff]
        %v7374 = vld [vmem:[%s4 + $0x140] sm:$0xff]
        %v7375 = vld [vmem:[%s4 + $0x148] sm:$0xff]
        %v7376 = vld [vmem:[%s4 + $0x150] sm:$0xff]
        %v7377 = vld [vmem:[%s4 + $0x158] sm:$0xff]
        %v7378 = vld [vmem:[%s4 + $0x160] sm:$0xff]
        %v7379 = vld [vmem:[%s4 + $0x168] sm:$0xff]
        %v7380 = vld [vmem:[%s4 + $0x170] sm:$0xff]
        %v7381 = vld [vmem:[%s4 + $0x178] sm:$0xff]
        %v7382 = vld [vmem:[%s4 + $0x180] sm:$0xff]
        %v7383 = vld [vmem:[%s4 + $0x188] sm:$0xff]
        %v7384 = vld [vmem:[%s4 + $0x190] sm:$0xff]
        %v7385 = vld [vmem:[%s4 + $0x198] sm:$0xff]
        %v7386 = vld [vmem:[%s4 + $0x1a0] sm:$0xff]
        %v7387 = vld [vmem:[%s4 + $0x1a8] sm:$0xff]
        %v7388 = vld [vmem:[%s4 + $0x1b0] sm:$0xff]
        %v7389 = vld [vmem:[%s4 + $0x1b8] sm:$0xff]
        %v7390 = vld [vmem:[%s4 + $0x1c0] sm:$0xff]
        %v7391 = vld [vmem:[%s4 + $0x1c8] sm:$0xff]
        %v7392 = vld [vmem:[%s4 + $0x1d0] sm:$0xff]
        %v7393 = vld [vmem:[%s4 + $0x1d8] sm:$0xff]
        %v7394 = vld [vmem:[%s4 + $0x1e0] sm:$0xff]
        %v7395 = vld [vmem:[%s4 + $0x1e8] sm:$0xff]
        %v7396 = vld [vmem:[%s4 + $0x1f0] sm:$0xff]
        %v7397 = vld [vmem:[%s4 + $0x1f8] sm:$0xff]
        %v7398 = vld [vmem:[%s4 + $0x200] sm:$0xff]
        %v7399 = vld [vmem:[%s4 + $0x208] sm:$0xff]
        %v7400 = vld [vmem:[%s4 + $0x210] sm:$0xff]
        %v7401 = vld [vmem:[%s4 + $0x218] sm:$0xff]
        %v7402 = vld [vmem:[%s4 + $0x220] sm:$0xff]
        %v7403 = vld [vmem:[%s4 + $0x228] sm:$0xff]
        %v7404 = vld [vmem:[%s4 + $0x230] sm:$0xff]
        %v7405 = vld [vmem:[%s4 + $0x238] sm:$0xff]
        %v7406 = vld [vmem:[%s4 + $0x240] sm:$0xff]
        %v7407 = vld [vmem:[%s4 + $0x248] sm:$0xff]
        %v7408 = vld [vmem:[%s4 + $0x250] sm:$0xff]
        %v7409 = vld [vmem:[%s4 + $0x258] sm:$0xff]
        %v7410 = vld [vmem:[%s4 + $0x260] sm:$0xff]
        %v7411 = vld [vmem:[%s4 + $0x268] sm:$0xff]
        %v7412 = vld [vmem:[%s4 + $0x270] sm:$0xff]
        %v7413 = vld [vmem:[%s4 + $0x278] sm:$0xff]
        %v7414 = vld [vmem:[%s4 + $0x280] sm:$0xff]
        %v7415 = vld [vmem:[%s4 + $0x288] sm:$0xff]
        %v7416 = vld [vmem:[%s4 + $0x290] sm:$0xff]
        %v7417 = vld [vmem:[%s4 + $0x298] sm:$0xff]
        %v7418 = vld [vmem:[%s4 + $0x2a0] sm:$0xff]
        %v7419 = vld [vmem:[%s4 + $0x2a8] sm:$0xff]
        %v7420 = vld [vmem:[%s4 + $0x2b0] sm:$0xff]
        %v7421 = vld [vmem:[%s4 + $0x2b8] sm:$0xff]
        %v7422 = vld [vmem:[%s4 + $0x2c0] sm:$0xff]
        %v7423 = vld [vmem:[%s4 + $0x2c8] sm:$0xff]
        %v7424 = vld [vmem:[%s4 + $0x2d0] sm:$0xff]
        %v7425 = vld [vmem:[%s4 + $0x2d8] sm:$0xff]
        %v7426 = vld [vmem:[%s4 + $0x2e0] sm:$0xff]
        %v7427 = vld [vmem:[%s4 + $0x2e8] sm:$0xff]
        %v7428 = vld [vmem:[%s4 + $0x2f0] sm:$0xff]
        %v7429 = vld [vmem:[%s4 + $0x2f8] sm:$0xff]
        %v7430 = vld [vmem:[%s4 + $0x300] sm:$0xff]
        %v7431 = vld [vmem:[%s4 + $0x308] sm:$0xff]
        %v7432 = vld [vmem:[%s4 + $0x310] sm:$0xff]
        %v7433 = vld [vmem:[%s4 + $0x318] sm:$0xff]
        %v7434 = vld [vmem:[%s4 + $0x320] sm:$0xff]
        %v7435 = vld [vmem:[%s4 + $0x328] sm:$0xff]
        %v7436 = vld [vmem:[%s4 + $0x330] sm:$0xff]
        %v7437 = vld [vmem:[%s4 + $0x338] sm:$0xff]
        %v7438 = vld [vmem:[%s4 + $0x340] sm:$0xff]
        %v7439 = vld [vmem:[%s4 + $0x348] sm:$0xff]
        %v7440 = vld [vmem:[%s4 + $0x350] sm:$0xff]
        %v7441 = vld [vmem:[%s4 + $0x358] sm:$0xff]
        %v7442 = vld [vmem:[%s4 + $0x360] sm:$0xff]
        %v7443 = vld [vmem:[%s4 + $0x368] sm:$0xff]
        %v7444 = vld [vmem:[%s4 + $0x370] sm:$0xff]
        %v7445 = vld [vmem:[%s4 + $0x378] sm:$0xff]
        %v7446 = vld [vmem:[%s4 + $0x380] sm:$0xff]
        %v7447 = vld [vmem:[%s4 + $0x388] sm:$0xff]
        %v7448 = vld [vmem:[%s4 + $0x390] sm:$0xff]
        %v7449 = vld [vmem:[%s4 + $0x398] sm:$0xff]
        %v7450 = vld [vmem:[%s4 + $0x3a0] sm:$0xff]
        %v7451 = vld [vmem:[%s4 + $0x3a8] sm:$0xff]
        %v7452 = vld [vmem:[%s4 + $0x3b0] sm:$0xff]
        %v7453 = vld [vmem:[%s4 + $0x3b8] sm:$0xff]
        %v7454 = vld [vmem:[%s4 + $0x3c0] sm:$0xff]
        %v7455 = vld [vmem:[%s4 + $0x3c8] sm:$0xff]
        %v7456 = vld [vmem:[%s4 + $0x3d0] sm:$0xff]
        %v7457 = vld [vmem:[%s4 + $0x3d8] sm:$0xff]
        %v7458 = vld [vmem:[%s4 + $0x3e0] sm:$0xff]
        %v7460 = vsel %vm6720, %v7333, 0
        %7462 = vmatpush.msra.mxu0 %v7349
        %7463 = vmatpush.msra.mxu0 %v7348
        %7464 = vmatpush.msra.mxu0 %v7347
        %7465 = vmatpush.msra.mxu0 %v7346
        %7466 = vmatpush.msra.mxu0 %v7345
        %7467 = vmatpush.msra.mxu0 %v7344
        %7468 = vmatpush.msra.mxu0 %v7343
        %7469 = vmatpush.msra.mxu0 %v7342
        %7470 = vmatpush.msra.mxu0 %v7341
        %7471 = vmatpush.msra.mxu0 %v7340
        %7472 = vmatpush.msra.mxu0 %v7339
        %7473 = vmatpush.msra.mxu0 %v7338
        %7474 = vmatpush.msra.mxu0 %v7337
        %7475 = vmatpush.msra.mxu0 %v7336
        %7476 = vmatpush.msra.mxu0 %v7335
        %7477 = vmatpush.msra.mxu0 %v7334
        %7478 = vmatmul.f32.gmra.mxu0 %v7326
        %v7479 = vpop.f32.mrf.mxu0
        %v7480 = vadd.f32 0.0, %v7479
        %7481 = vdwg.mxu0
        %7482 = vmatpush.msra.mxu0 %v7365
        %7483 = vmatpush.msra.mxu0 %v7364
        %7484 = vmatpush.msra.mxu0 %v7363
        %7485 = vmatpush.msra.mxu0 %v7362
        %7486 = vmatpush.msra.mxu0 %v7361
        %7487 = vmatpush.msra.mxu0 %v7360
        %7488 = vmatpush.msra.mxu0 %v7359
        %7489 = vmatpush.msra.mxu0 %v7358
        %7490 = vmatpush.msra.mxu0 %v7357
        %7491 = vmatpush.msra.mxu0 %v7356
        %7492 = vmatpush.msra.mxu0 %v7355
        %7493 = vmatpush.msra.mxu0 %v7354
        %7494 = vmatpush.msra.mxu0 %v7353
        %7495 = vmatpush.msra.mxu0 %v7352
        %7496 = vmatpush.msra.mxu0 %v7351
        %7497 = vmatpush.msra.mxu0 %v7350
        %7498 = vmatmul.f32.gmra.mxu0 %v7327
        %v7499 = vpop.f32.mrf.mxu0
        %v7500 = vadd.f32 %v7480, %v7499
        %7501 = vdwg.mxu0
        %7502 = vmatpush.msra.mxu0 %v7381
        %7503 = vmatpush.msra.mxu0 %v7380
        %7504 = vmatpush.msra.mxu0 %v7379
        %7505 = vmatpush.msra.mxu0 %v7378
        %7506 = vmatpush.msra.mxu0 %v7377
        %7507 = vmatpush.msra.mxu0 %v7376
        %7508 = vmatpush.msra.mxu0 %v7375
        %7509 = vmatpush.msra.mxu0 %v7374
        %7510 = vmatpush.msra.mxu0 %v7373
        %7511 = vmatpush.msra.mxu0 %v7372
        %7512 = vmatpush.msra.mxu0 %v7371
        %7513 = vmatpush.msra.mxu0 %v7370
        %7514 = vmatpush.msra.mxu0 %v7369
        %7515 = vmatpush.msra.mxu0 %v7368
        %7516 = vmatpush.msra.mxu0 %v7367
        %7517 = vmatpush.msra.mxu0 %v7366
        %7518 = vmatmul.f32.gmra.mxu0 %v7328
        %v7519 = vpop.f32.mrf.mxu0
        %v7520 = vadd.f32 %v7500, %v7519
        %7521 = vdwg.mxu0
        %7522 = vmatpush.msra.mxu0 %v7397
        %7523 = vmatpush.msra.mxu0 %v7396
        %7524 = vmatpush.msra.mxu0 %v7395
        %7525 = vmatpush.msra.mxu0 %v7394
        %7526 = vmatpush.msra.mxu0 %v7393
        %7527 = vmatpush.msra.mxu0 %v7392
        %7528 = vmatpush.msra.mxu0 %v7391
        %7529 = vmatpush.msra.mxu0 %v7390
        %7530 = vmatpush.msra.mxu0 %v7389
        %7531 = vmatpush.msra.mxu0 %v7388
        %7532 = vmatpush.msra.mxu0 %v7387
        %7533 = vmatpush.msra.mxu0 %v7386
        %7534 = vmatpush.msra.mxu0 %v7385
        %7535 = vmatpush.msra.mxu0 %v7384
        %7536 = vmatpush.msra.mxu0 %v7383
        %7537 = vmatpush.msra.mxu0 %v7382
        %7538 = vmatmul.f32.gmra.mxu0 %v7329
        %v7539 = vpop.f32.mrf.mxu0
        %v7540 = vadd.f32 %v7520, %v7539
        %7541 = vdwg.mxu0
        %7542 = vmatpush.msra.mxu0 %v7413
        %7543 = vmatpush.msra.mxu0 %v7412
        %7544 = vmatpush.msra.mxu0 %v7411
        %7545 = vmatpush.msra.mxu0 %v7410
        %7546 = vmatpush.msra.mxu0 %v7409
        %7547 = vmatpush.msra.mxu0 %v7408
        %7548 = vmatpush.msra.mxu0 %v7407
        %7549 = vmatpush.msra.mxu0 %v7406
        %7550 = vmatpush.msra.mxu0 %v7405
        %7551 = vmatpush.msra.mxu0 %v7404
        %7552 = vmatpush.msra.mxu0 %v7403
        %7553 = vmatpush.msra.mxu0 %v7402
        %7554 = vmatpush.msra.mxu0 %v7401
        %7555 = vmatpush.msra.mxu0 %v7400
        %7556 = vmatpush.msra.mxu0 %v7399
        %7557 = vmatpush.msra.mxu0 %v7398
        %7558 = vmatmul.f32.gmra.mxu0 %v7330
        %v7559 = vpop.f32.mrf.mxu0
        %v7560 = vadd.f32 %v7540, %v7559
        %7561 = vdwg.mxu0
        %7562 = vmatpush.msra.mxu0 %v7429
        %7563 = vmatpush.msra.mxu0 %v7428
        %7564 = vmatpush.msra.mxu0 %v7427
        %7565 = vmatpush.msra.mxu0 %v7426
        %7566 = vmatpush.msra.mxu0 %v7425
        %7567 = vmatpush.msra.mxu0 %v7424
        %7568 = vmatpush.msra.mxu0 %v7423
        %7569 = vmatpush.msra.mxu0 %v7422
        %7570 = vmatpush.msra.mxu0 %v7421
        %7571 = vmatpush.msra.mxu0 %v7420
        %7572 = vmatpush.msra.mxu0 %v7419
        %7573 = vmatpush.msra.mxu0 %v7418
        %7574 = vmatpush.msra.mxu0 %v7417
        %7575 = vmatpush.msra.mxu0 %v7416
        %7576 = vmatpush.msra.mxu0 %v7415
        %7577 = vmatpush.msra.mxu0 %v7414
        %7578 = vmatmul.f32.gmra.mxu0 %v7331
        %v7579 = vpop.f32.mrf.mxu0
        %v7580 = vadd.f32 %v7560, %v7579
        %7581 = vdwg.mxu0
        %7582 = vmatpush.msra.mxu0 %v7445
        %7583 = vmatpush.msra.mxu0 %v7444
        %7584 = vmatpush.msra.mxu0 %v7443
        %7585 = vmatpush.msra.mxu0 %v7442
        %7586 = vmatpush.msra.mxu0 %v7441
        %7587 = vmatpush.msra.mxu0 %v7440
        %7588 = vmatpush.msra.mxu0 %v7439
        %7589 = vmatpush.msra.mxu0 %v7438
        %7590 = vmatpush.msra.mxu0 %v7437
        %7591 = vmatpush.msra.mxu0 %v7436
        %7592 = vmatpush.msra.mxu0 %v7435
        %7593 = vmatpush.msra.mxu0 %v7434
        %7594 = vmatpush.msra.mxu0 %v7433
        %7595 = vmatpush.msra.mxu0 %v7432
        %7596 = vmatpush.msra.mxu0 %v7431
        %7597 = vmatpush.msra.mxu0 %v7430
        %7598 = vmatmul.f32.gmra.mxu0 %v7332
        %v7599 = vpop.f32.mrf.mxu0
        %v7600 = vadd.f32 %v7580, %v7599
        %7601 = vdwg.mxu0
        %7602 = vmatpush.msra.mxu0 0.0
        %7603 = vmatpush.msra.mxu0 0.0
        %7604 = vmatpush.msra.mxu0 0.0
        %7605 = vmatpush.msra.mxu0 %v7458
        %7606 = vmatpush.msra.mxu0 %v7457
        %7607 = vmatpush.msra.mxu0 %v7456
        %7608 = vmatpush.msra.mxu0 %v7455
        %7609 = vmatpush.msra.mxu0 %v7454
        %7610 = vmatpush.msra.mxu0 %v7453
        %7611 = vmatpush.msra.mxu0 %v7452
        %7612 = vmatpush.msra.mxu0 %v7451
        %7613 = vmatpush.msra.mxu0 %v7450
        %7614 = vmatpush.msra.mxu0 %v7449
        %7615 = vmatpush.msra.mxu0 %v7448
        %7616 = vmatpush.msra.mxu0 %v7447
        %7617 = vmatpush.msra.mxu0 %v7446
        %7618 = vmatmul.f32.gmra.mxu0 %v7460
        %v7619 = vpop.f32.mrf.mxu0
        %v7620 = vadd.f32 %v7600, %v7619
        %7621 = vdwg.mxu0
        %vm7622 = vcmask 523264
        %7623 = vst.msk [vmem:[%s217] sm:$0xff] %vm7622, %v7620
        %s7624 = sand.u32 %s137, 1
        %s7625 = scalar_lea.sflag [#allocation6], %s7624
        %s7626 = sand.u32 %s137, 1
        %s7627 = smul.addr %s7626, 8
        %s7628 = scalar_lea.vmem [#allocation5], %s7627
        // Predicated region
        $region41: #{tpu_custom_call.1} parent=39 // pred_check
          %p7629 = pneg %p147
        $region42: #{tpu_custom_call.1} parent=39 // pred_check_branch
          %7631 = sbr.rel (%p7629) target = $region44
        $region43: #{tpu_custom_call.1} parent=39 // pred_region
          %7633 = vsyncadd %s7625, 0
          %s7634 = smul.addr %s19, 8
          %s7635 = scalar_lea.hbm %s5, %s7634
          %s7637 = sshll.u32 %s7628, 4
          %s7638 = int_to_ptr.vmem [resolvable:$true] %s7637
          %s7639 = sshll.u32 %s7635, 4
          %s7640 = int_to_ptr.hbm [resolvable:$true] %s7639
          %7642 = dma.vmem_to_hbm [thread:$0]  %s7638, 128, %s7640, %s7625
        $region44: #{tpu_custom_call.1} parent=39 // pred_fallthru
          _
      $region40: #{tpu_custom_call.1} parent=5 // pred_fallthru
        _
      %p7643 = scmp.le.s32.totalorder 2, %s14
      // Predicated region
      $region45: #{tpu_custom_call.1} parent=5 // pred_check
        %p7644 = pneg %p7643
      $region46: #{tpu_custom_call.1} parent=5 // pred_check_branch
        %7646 = sbr.rel (%p7644) target = $region48
      $region47: #{tpu_custom_call.1} parent=5 // pred_region
        %s7647 = ssub.s32 %s14, 2
        // Predicated region
        $region49: #{tpu_custom_call.1} parent=47 // pred_check
          %p7648 = pneg %p153
        $region50: #{tpu_custom_call.1} parent=47 // pred_check_branch
          %7650 = sbr.rel (%p7648) target = $region52
        $region51: #{tpu_custom_call.1} parent=47 // pred_region
          %s7651 = sand.u32 %s138, 1
          %s7652 = scalar_lea.sflag [#allocation6], %s7651
          %s7653 = sand.u32 %s138, 1
          %s7654 = smul.addr %s7653, 8
          %s7655 = scalar_lea.vmem [#allocation5], %s7654
          %7657 = dma.done %s7652, 128
        $region52: #{tpu_custom_call.1} parent=47 // pred_fallthru
          _
      $region48: #{tpu_custom_call.1} parent=5 // pred_fallthru
        _
    $region6: #{tpu_custom_call.1} parent=1 // loop_footer
      %s18 = sadd.s32 1, %s14
    $region7: #{tpu_custom_call.1} parent=1 // loop_footer_branch
      %13 = sbr.rel target = $region3
    $region8: #{tpu_custom_call.1} parent=1 // loop_exit
      _
    %7658 = vsyncpa [#allocation6], 1
    %s7659 = scalar_lea.sflag [#allocation6], 1
    %7660 = vsyncpa %s7659, 1

</llo_original>
